<compile_context>
chip_gen: v7x
topology: tpu7x:2x2x1
jax: 0.10.0
libtpu: 0.0.40
codegen_flags: <defaults>
</compile_context>

<pallas_src>
import functools

import jax
import jax.numpy as jnp
import numpy as np
from jax.experimental import pallas as pl
from jax.experimental.pallas import tpu as pltpu


def _resblock_kernel(x_ref, w1_ref, b1_ref, w2_ref, b2_ref, o_ref,
                     xpad_ref, mid_ref, *, H, W, C, K, res_scale):
    """One batch element per grid step.

    x_ref:   (1, H, W, C)       input block (also the residual)
    w*_ref:  (K, K, C, C)       conv weights, HWIO
    b*_ref:  (1, C)             conv biases
    o_ref:   (1, H, W, C)       output block
    xpad_ref:(H+2P, W+2P, C)    VMEM scratch: zero-bordered padded input
    mid_ref: (H+2P, W+2P, C)    VMEM scratch: zero-bordered padded ReLU(conv1)
    """
    P = K // 2
    Hp, Wp = H + 2 * P, W + 2 * P

    # Zero only the P-wide borders of both padded scratches.  The interiors are
    # fully overwritten below, so only the border needs zeros.  Done every step
    # (cheap) rather than under program_id==0 so it stays correct when the
    # batch axis is split across TensorCores ("parallel" semantics).
    if P > 0:
        zrow = jnp.zeros((P, Wp, C), jnp.float32)
        zcol = jnp.zeros((Hp, P, C), jnp.float32)
        for pad in (xpad_ref, mid_ref):
            pad[0:P, :, :] = zrow
            pad[P + H:, :, :] = zrow
            pad[:, 0:P, :] = zcol
            pad[:, P + W:, :] = zcol

    # In-kernel "same" padding: copy the input into the scratch interior.
    x = x_ref[0]                                   # (H, W, C), f32
    xpad_ref[P:P + H, P:P + W, :] = x

    # ---- conv1 + bias + ReLU: one whole-image MXU matmul per tap ----
    acc = jnp.zeros((H * W, C), jnp.float32)
    for kh in range(K):
        for kw in range(K):
            patch = xpad_ref[kh:kh + H, kw:kw + W, :].reshape(H * W, C)
            acc += jnp.dot(patch, w1_ref[kh, kw],
                           preferred_element_type=jnp.float32)
    relu = jnp.maximum(acc + b1_ref[...], 0.0)     # (H*W, C)
    mid_ref[P:P + H, P:P + W, :] = relu.reshape(H, W, C)

    # ---- conv2 + bias, then residual scale-and-add (single dense store) ----
    acc = jnp.zeros((H * W, C), jnp.float32)
    for kh in range(K):
        for kw in range(K):
            patch = mid_ref[kh:kh + H, kw:kw + W, :].reshape(H * W, C)
            acc += jnp.dot(patch, w2_ref[kh, kw],
                           preferred_element_type=jnp.float32)
    res = (acc + b2_ref[...]) * res_scale          # (H*W, C)
    o_ref[0] = res.reshape(H, W, C) + x


def resblock_pallas(x_nchw, w1, b1, w2, b2, *, res_scale=0.1):
    N, C, H, W = x_nchw.shape
    K = w1.shape[0]
    P = K // 2
    Hp, Wp = H + 2 * P, W + 2 * P

    x_nhwc = jnp.transpose(x_nchw, (0, 2, 3, 1)).astype(jnp.float32)

    kernel = functools.partial(_resblock_kernel, H=H, W=W, C=C, K=K,
                               res_scale=float(res_scale))

    out_nhwc = pl.pallas_call(
        kernel,
        out_shape=jax.ShapeDtypeStruct((N, H, W, C), jnp.float32),
        grid_spec=pltpu.PrefetchScalarGridSpec(
            num_scalar_prefetch=0,
            grid=(N,),
            in_specs=[
                pl.BlockSpec((1, H, W, C), lambda n: (n, 0, 0, 0)),  # x
                pl.BlockSpec((K, K, C, C), lambda n: (0, 0, 0, 0)),  # w1
                pl.BlockSpec((1, C), lambda n: (0, 0)),              # b1
                pl.BlockSpec((K, K, C, C), lambda n: (0, 0, 0, 0)),  # w2
                pl.BlockSpec((1, C), lambda n: (0, 0)),              # b2
            ],
            out_specs=pl.BlockSpec((1, H, W, C), lambda n: (n, 0, 0, 0)),
            scratch_shapes=[
                pltpu.VMEM((Hp, Wp, C), jnp.float32),   # padded input
                pltpu.VMEM((Hp, Wp, C), jnp.float32),   # padded ReLU(conv1)
            ],
        ),
        compiler_params=pltpu.CompilerParams(
            dimension_semantics=("parallel",),          # batch is embarrassingly parallel
            vmem_limit_bytes=48 * 1024 * 1024,
        ),
    )(x_nhwc, w1, b1.reshape(1, C), w2, b2.reshape(1, C))

    return jnp.transpose(out_nhwc, (0, 3, 1, 2))  # back to NCHW


def resblock_ref(x_nchw, w1, b1, w2, b2, *, res_scale=0.1):
    """Pure-JAX reference (matches PyTorch Conv2d cross-correlation semantics)."""
    x = jnp.transpose(x_nchw, (0, 2, 3, 1)).astype(jnp.float32)
    dn = jax.lax.conv_dimension_numbers(x.shape, w1.shape,
                                        ('NHWC', 'HWIO', 'NHWC'))
    y = jax.lax.conv_general_dilated(x, w1, (1, 1), 'SAME',
                                     dimension_numbers=dn) + b1
    y = jnp.maximum(y, 0.0)
    y = jax.lax.conv_general_dilated(y, w2, (1, 1), 'SAME',
                                     dimension_numbers=dn) + b2
    out = y * res_scale + x
    return jnp.transpose(out, (0, 3, 1, 2))


if __name__ == "__main__":
    # Small shapes consistent with the module: batch=2, n_feats=4, 16x16 spatial,
    # kernel_size=3, bias=True, bn=False, act=ReLU, res_scale=0.1.
    N, C, H, W, K = 2, 4, 16, 16, 3

    key = jax.random.PRNGKey(0)
    kx, kw1, kb1, kw2, kb2 = jax.random.split(key, 5)
    x = jax.random.normal(kx, (N, C, H, W), jnp.float32)
    w1 = jax.random.normal(kw1, (K, K, C, C), jnp.float32) * 0.1   # HWIO
    b1 = jax.random.normal(kb1, (C,), jnp.float32) * 0.1
    w2 = jax.random.normal(kw2, (K, K, C, C), jnp.float32) * 0.1   # HWIO
    b2 = jax.random.normal(kb2, (C,), jnp.float32) * 0.1

    out = jax.block_until_ready(resblock_pallas(x, w1, b1, w2, b2, res_scale=0.1))
    ref = jax.block_until_ready(resblock_ref(x, w1, b1, w2, b2, res_scale=0.1))

    assert out.shape == (N, C, H, W) and out.dtype == jnp.float32
    np.testing.assert_allclose(np.asarray(out), np.asarray(ref),
                               atol=1e-4, rtol=1e-4)
    print("KERNEL_OK")
</pallas_src>

<mosaic_0001>
module attributes {stable_mosaic.version = 11 : i64} {
  func.func @_resblock_kernel(%arg0: i32, %arg1: memref<1x16x16x4xf32, #tpu.memory_space<vmem>>, %arg2: memref<3x3x4x4xf32, #tpu.memory_space<vmem>>, %arg3: memref<1x4xf32, #tpu.memory_space<vmem>>, %arg4: memref<3x3x4x4xf32, #tpu.memory_space<vmem>>, %arg5: memref<1x4xf32, #tpu.memory_space<vmem>>, %arg6: memref<1x16x16x4xf32, #tpu.memory_space<vmem>>, %arg7: memref<18x18x4xf32, #tpu.memory_space<vmem>>, %arg8: memref<18x18x4xf32, #tpu.memory_space<vmem>>) attributes {dimension_semantics = [#tpu.dimension_semantics<parallel>], iteration_bounds = array<i64: 2>, scalar_prefetch = 0 : i64, scratch_operands = 2 : i64, tpu.core_type = #tpu.core_type<tc>, window_params = [{transform_indices = @transform_0, window_bounds = array<i64: 1, 16, 16, 4>}, {pipeline_mode = #tpu.pipeline_mode<synchronous>, transform_indices = @transform_1, window_bounds = array<i64: 3, 3, 4, 4>}, {pipeline_mode = #tpu.pipeline_mode<synchronous>, transform_indices = @transform_2, window_bounds = array<i64: 1, 4>}, {pipeline_mode = #tpu.pipeline_mode<synchronous>, transform_indices = @transform_3, window_bounds = array<i64: 3, 3, 4, 4>}, {pipeline_mode = #tpu.pipeline_mode<synchronous>, transform_indices = @transform_4, window_bounds = array<i64: 1, 4>}, {transform_indices = @transform_5, window_bounds = array<i64: 1, 16, 16, 4>}]} {
    %cst = arith.constant 0.000000e+00 : f32
    %0 = vector.broadcast %cst : f32 to vector<1x18x4xf32>
    %cst_0 = arith.constant 0.000000e+00 : f32
    %1 = vector.broadcast %cst_0 : f32 to vector<18x1x4xf32>
    %c0 = arith.constant 0 : index
    %c0_1 = arith.constant 0 : index
    %c0_2 = arith.constant 0 : index
    %2 = vector.load %arg7[%c0, %c0_1, %c0_2] : memref<18x18x4xf32, #tpu.memory_space<vmem>>, vector<1x18x4xf32>
    tpu.vector_store %arg7[%c0, %c0_1, %c0_2], %0 {strides = array<i32>} : memref<18x18x4xf32, #tpu.memory_space<vmem>>, vector<1x18x4xf32>,
    %c17 = arith.constant 17 : index
    %c0_3 = arith.constant 0 : index
    %c0_4 = arith.constant 0 : index
    %3 = vector.load %arg7[%c17, %c0_3, %c0_4] : memref<18x18x4xf32, #tpu.memory_space<vmem>>, vector<1x18x4xf32>
    tpu.vector_store %arg7[%c17, %c0_3, %c0_4], %0 {strides = array<i32>} : memref<18x18x4xf32, #tpu.memory_space<vmem>>, vector<1x18x4xf32>,
    %c0_5 = arith.constant 0 : index
    %c0_6 = arith.constant 0 : index
    %c0_7 = arith.constant 0 : index
    %4 = vector.load %arg7[%c0_5, %c0_6, %c0_7] : memref<18x18x4xf32, #tpu.memory_space<vmem>>, vector<18x1x4xf32>
    tpu.vector_store %arg7[%c0_5, %c0_6, %c0_7], %1 {strides = array<i32>} : memref<18x18x4xf32, #tpu.memory_space<vmem>>, vector<18x1x4xf32>,
    %c0_8 = arith.constant 0 : index
    %c17_9 = arith.constant 17 : index
    %c0_10 = arith.constant 0 : index
    %5 = vector.load %arg7[%c0_8, %c17_9, %c0_10] : memref<18x18x4xf32, #tpu.memory_space<vmem>>, vector<18x1x4xf32>
    tpu.vector_store %arg7[%c0_8, %c17_9, %c0_10], %1 {strides = array<i32>} : memref<18x18x4xf32, #tpu.memory_space<vmem>>, vector<18x1x4xf32>,
    %c0_11 = arith.constant 0 : index
    %c0_12 = arith.constant 0 : index
    %c0_13 = arith.constant 0 : index
    %6 = vector.load %arg8[%c0_11, %c0_12, %c0_13] : memref<18x18x4xf32, #tpu.memory_space<vmem>>, vector<1x18x4xf32>
    tpu.vector_store %arg8[%c0_11, %c0_12, %c0_13], %0 {strides = array<i32>} : memref<18x18x4xf32, #tpu.memory_space<vmem>>, vector<1x18x4xf32>,
    %c17_14 = arith.constant 17 : index
    %c0_15 = arith.constant 0 : index
    %c0_16 = arith.constant 0 : index
    %7 = vector.load %arg8[%c17_14, %c0_15, %c0_16] : memref<18x18x4xf32, #tpu.memory_space<vmem>>, vector<1x18x4xf32>
    tpu.vector_store %arg8[%c17_14, %c0_15, %c0_16], %0 {strides = array<i32>} : memref<18x18x4xf32, #tpu.memory_space<vmem>>, vector<1x18x4xf32>,
    %c0_17 = arith.constant 0 : index
    %c0_18 = arith.constant 0 : index
    %c0_19 = arith.constant 0 : index
    %8 = vector.load %arg8[%c0_17, %c0_18, %c0_19] : memref<18x18x4xf32, #tpu.memory_space<vmem>>, vector<18x1x4xf32>
    tpu.vector_store %arg8[%c0_17, %c0_18, %c0_19], %1 {strides = array<i32>} : memref<18x18x4xf32, #tpu.memory_space<vmem>>, vector<18x1x4xf32>,
    %c0_20 = arith.constant 0 : index
    %c17_21 = arith.constant 17 : index
    %c0_22 = arith.constant 0 : index
    %9 = vector.load %arg8[%c0_20, %c17_21, %c0_22] : memref<18x18x4xf32, #tpu.memory_space<vmem>>, vector<18x1x4xf32>
    tpu.vector_store %arg8[%c0_20, %c17_21, %c0_22], %1 {strides = array<i32>} : memref<18x18x4xf32, #tpu.memory_space<vmem>>, vector<18x1x4xf32>,
    %c0_23 = arith.constant 0 : index
    %c0_24 = arith.constant 0 : index
    %c0_25 = arith.constant 0 : index
    %c0_26 = arith.constant 0 : index
    %10 = vector.load %arg1[%c0_23, %c0_24, %c0_25, %c0_26] : memref<1x16x16x4xf32, #tpu.memory_space<vmem>>, vector<1x16x16x4xf32>
    %11 = vector.shape_cast %10 : vector<1x16x16x4xf32> to vector<16x16x4xf32>
    %c1 = arith.constant 1 : index
    %c1_27 = arith.constant 1 : index
    %c0_28 = arith.constant 0 : index
    %12 = vector.load %arg7[%c1, %c1_27, %c0_28] : memref<18x18x4xf32, #tpu.memory_space<vmem>>, vector<16x16x4xf32>
    tpu.vector_store %arg7[%c1, %c1_27, %c0_28], %11 {strides = array<i32>} : memref<18x18x4xf32, #tpu.memory_space<vmem>>, vector<16x16x4xf32>,
    %cst_29 = arith.constant 0.000000e+00 : f32
    %13 = vector.broadcast %cst_29 : f32 to vector<256x4xf32>
    %c0_30 = arith.constant 0 : index
    %c0_31 = arith.constant 0 : index
    %c0_32 = arith.constant 0 : index
    %14 = vector.load %arg7[%c0_30, %c0_31, %c0_32] : memref<18x18x4xf32, #tpu.memory_space<vmem>>, vector<16x16x4xf32>
    %15 = vector.shape_cast %14 : vector<16x16x4xf32> to vector<256x4xf32>
    %c0_33 = arith.constant 0 : index
    %c0_34 = arith.constant 0 : index
    %c0_35 = arith.constant 0 : index
    %c0_36 = arith.constant 0 : index
    %16 = vector.load %arg2[%c0_33, %c0_34, %c0_35, %c0_36] : memref<3x3x4x4xf32, #tpu.memory_space<vmem>>, vector<1x1x4x4xf32>
    %17 = vector.shape_cast %16 : vector<1x1x4x4xf32> to vector<4x4xf32>
    %cst_37 = arith.constant dense<0.000000e+00> : vector<256x4xf32>
    %18 = tpu.matmul %15, %17, %cst_37 {dimension_numbers = #tpu.dot_dimension_numbers<[1], [0], [0], [1], [0, 0, 1, 1], [], []>} : vector<256x4xf32>, vector<4x4xf32>, vector<256x4xf32> -> vector<256x4xf32>
    %19 = arith.addf %13, %18 : vector<256x4xf32>
    %c0_38 = arith.constant 0 : index
    %c1_39 = arith.constant 1 : index
    %c0_40 = arith.constant 0 : index
    %20 = vector.load %arg7[%c0_38, %c1_39, %c0_40] : memref<18x18x4xf32, #tpu.memory_space<vmem>>, vector<16x16x4xf32>
    %21 = vector.shape_cast %20 : vector<16x16x4xf32> to vector<256x4xf32>
    %c0_41 = arith.constant 0 : index
    %c1_42 = arith.constant 1 : index
    %c0_43 = arith.constant 0 : index
    %c0_44 = arith.constant 0 : index
    %22 = vector.load %arg2[%c0_41, %c1_42, %c0_43, %c0_44] : memref<3x3x4x4xf32, #tpu.memory_space<vmem>>, vector<1x1x4x4xf32>
    %23 = vector.shape_cast %22 : vector<1x1x4x4xf32> to vector<4x4xf32>
    %cst_45 = arith.constant dense<0.000000e+00> : vector<256x4xf32>
    %24 = tpu.matmul %21, %23, %cst_45 {dimension_numbers = #tpu.dot_dimension_numbers<[1], [0], [0], [1], [0, 0, 1, 1], [], []>} : vector<256x4xf32>, vector<4x4xf32>, vector<256x4xf32> -> vector<256x4xf32>
    %25 = arith.addf %19, %24 : vector<256x4xf32>
    %c0_46 = arith.constant 0 : index
    %c2 = arith.constant 2 : index
    %c0_47 = arith.constant 0 : index
    %26 = vector.load %arg7[%c0_46, %c2, %c0_47] : memref<18x18x4xf32, #tpu.memory_space<vmem>>, vector<16x16x4xf32>
    %27 = vector.shape_cast %26 : vector<16x16x4xf32> to vector<256x4xf32>
    %c0_48 = arith.constant 0 : index
    %c2_49 = arith.constant 2 : index
    %c0_50 = arith.constant 0 : index
    %c0_51 = arith.constant 0 : index
    %28 = vector.load %arg2[%c0_48, %c2_49, %c0_50, %c0_51] : memref<3x3x4x4xf32, #tpu.memory_space<vmem>>, vector<1x1x4x4xf32>
    %29 = vector.shape_cast %28 : vector<1x1x4x4xf32> to vector<4x4xf32>
    %cst_52 = arith.constant dense<0.000000e+00> : vector<256x4xf32>
    %30 = tpu.matmul %27, %29, %cst_52 {dimension_numbers = #tpu.dot_dimension_numbers<[1], [0], [0], [1], [0, 0, 1, 1], [], []>} : vector<256x4xf32>, vector<4x4xf32>, vector<256x4xf32> -> vector<256x4xf32>
    %31 = arith.addf %25, %30 : vector<256x4xf32>
    %c1_53 = arith.constant 1 : index
    %c0_54 = arith.constant 0 : index
    %c0_55 = arith.constant 0 : index
    %32 = vector.load %arg7[%c1_53, %c0_54, %c0_55] : memref<18x18x4xf32, #tpu.memory_space<vmem>>, vector<16x16x4xf32>
    %33 = vector.shape_cast %32 : vector<16x16x4xf32> to vector<256x4xf32>
    %c1_56 = arith.constant 1 : index
    %c0_57 = arith.constant 0 : index
    %c0_58 = arith.constant 0 : index
    %c0_59 = arith.constant 0 : index
    %34 = vector.load %arg2[%c1_56, %c0_57, %c0_58, %c0_59] : memref<3x3x4x4xf32, #tpu.memory_space<vmem>>, vector<1x1x4x4xf32>
    %35 = vector.shape_cast %34 : vector<1x1x4x4xf32> to vector<4x4xf32>
    %cst_60 = arith.constant dense<0.000000e+00> : vector<256x4xf32>
    %36 = tpu.matmul %33, %35, %cst_60 {dimension_numbers = #tpu.dot_dimension_numbers<[1], [0], [0], [1], [0, 0, 1, 1], [], []>} : vector<256x4xf32>, vector<4x4xf32>, vector<256x4xf32> -> vector<256x4xf32>
    %37 = arith.addf %31, %36 : vector<256x4xf32>
    %c1_61 = arith.constant 1 : index
    %c1_62 = arith.constant 1 : index
    %c0_63 = arith.constant 0 : index
    %38 = vector.load %arg7[%c1_61, %c1_62, %c0_63] : memref<18x18x4xf32, #tpu.memory_space<vmem>>, vector<16x16x4xf32>
    %39 = vector.shape_cast %38 : vector<16x16x4xf32> to vector<256x4xf32>
    %c1_64 = arith.constant 1 : index
    %c1_65 = arith.constant 1 : index
    %c0_66 = arith.constant 0 : index
    %c0_67 = arith.constant 0 : index
    %40 = vector.load %arg2[%c1_64, %c1_65, %c0_66, %c0_67] : memref<3x3x4x4xf32, #tpu.memory_space<vmem>>, vector<1x1x4x4xf32>
    %41 = vector.shape_cast %40 : vector<1x1x4x4xf32> to vector<4x4xf32>
    %cst_68 = arith.constant dense<0.000000e+00> : vector<256x4xf32>
    %42 = tpu.matmul %39, %41, %cst_68 {dimension_numbers = #tpu.dot_dimension_numbers<[1], [0], [0], [1], [0, 0, 1, 1], [], []>} : vector<256x4xf32>, vector<4x4xf32>, vector<256x4xf32> -> vector<256x4xf32>
    %43 = arith.addf %37, %42 : vector<256x4xf32>
    %c1_69 = arith.constant 1 : index
    %c2_70 = arith.constant 2 : index
    %c0_71 = arith.constant 0 : index
    %44 = vector.load %arg7[%c1_69, %c2_70, %c0_71] : memref<18x18x4xf32, #tpu.memory_space<vmem>>, vector<16x16x4xf32>
    %45 = vector.shape_cast %44 : vector<16x16x4xf32> to vector<256x4xf32>
    %c1_72 = arith.constant 1 : index
    %c2_73 = arith.constant 2 : index
    %c0_74 = arith.constant 0 : index
    %c0_75 = arith.constant 0 : index
    %46 = vector.load %arg2[%c1_72, %c2_73, %c0_74, %c0_75] : memref<3x3x4x4xf32, #tpu.memory_space<vmem>>, vector<1x1x4x4xf32>
    %47 = vector.shape_cast %46 : vector<1x1x4x4xf32> to vector<4x4xf32>
    %cst_76 = arith.constant dense<0.000000e+00> : vector<256x4xf32>
    %48 = tpu.matmul %45, %47, %cst_76 {dimension_numbers = #tpu.dot_dimension_numbers<[1], [0], [0], [1], [0, 0, 1, 1], [], []>} : vector<256x4xf32>, vector<4x4xf32>, vector<256x4xf32> -> vector<256x4xf32>
    %49 = arith.addf %43, %48 : vector<256x4xf32>
    %c2_77 = arith.constant 2 : index
    %c0_78 = arith.constant 0 : index
    %c0_79 = arith.constant 0 : index
    %50 = vector.load %arg7[%c2_77, %c0_78, %c0_79] : memref<18x18x4xf32, #tpu.memory_space<vmem>>, vector<16x16x4xf32>
    %51 = vector.shape_cast %50 : vector<16x16x4xf32> to vector<256x4xf32>
    %c2_80 = arith.constant 2 : index
    %c0_81 = arith.constant 0 : index
    %c0_82 = arith.constant 0 : index
    %c0_83 = arith.constant 0 : index
    %52 = vector.load %arg2[%c2_80, %c0_81, %c0_82, %c0_83] : memref<3x3x4x4xf32, #tpu.memory_space<vmem>>, vector<1x1x4x4xf32>
    %53 = vector.shape_cast %52 : vector<1x1x4x4xf32> to vector<4x4xf32>
    %cst_84 = arith.constant dense<0.000000e+00> : vector<256x4xf32>
    %54 = tpu.matmul %51, %53, %cst_84 {dimension_numbers = #tpu.dot_dimension_numbers<[1], [0], [0], [1], [0, 0, 1, 1], [], []>} : vector<256x4xf32>, vector<4x4xf32>, vector<256x4xf32> -> vector<256x4xf32>
    %55 = arith.addf %49, %54 : vector<256x4xf32>
    %c2_85 = arith.constant 2 : index
    %c1_86 = arith.constant 1 : index
    %c0_87 = arith.constant 0 : index
    %56 = vector.load %arg7[%c2_85, %c1_86, %c0_87] : memref<18x18x4xf32, #tpu.memory_space<vmem>>, vector<16x16x4xf32>
    %57 = vector.shape_cast %56 : vector<16x16x4xf32> to vector<256x4xf32>
    %c2_88 = arith.constant 2 : index
    %c1_89 = arith.constant 1 : index
    %c0_90 = arith.constant 0 : index
    %c0_91 = arith.constant 0 : index
    %58 = vector.load %arg2[%c2_88, %c1_89, %c0_90, %c0_91] : memref<3x3x4x4xf32, #tpu.memory_space<vmem>>, vector<1x1x4x4xf32>
    %59 = vector.shape_cast %58 : vector<1x1x4x4xf32> to vector<4x4xf32>
    %cst_92 = arith.constant dense<0.000000e+00> : vector<256x4xf32>
    %60 = tpu.matmul %57, %59, %cst_92 {dimension_numbers = #tpu.dot_dimension_numbers<[1], [0], [0], [1], [0, 0, 1, 1], [], []>} : vector<256x4xf32>, vector<4x4xf32>, vector<256x4xf32> -> vector<256x4xf32>
    %61 = arith.addf %55, %60 : vector<256x4xf32>
    %c2_93 = arith.constant 2 : index
    %c2_94 = arith.constant 2 : index
    %c0_95 = arith.constant 0 : index
    %62 = vector.load %arg7[%c2_93, %c2_94, %c0_95] : memref<18x18x4xf32, #tpu.memory_space<vmem>>, vector<16x16x4xf32>
    %63 = vector.shape_cast %62 : vector<16x16x4xf32> to vector<256x4xf32>
    %c2_96 = arith.constant 2 : index
    %c2_97 = arith.constant 2 : index
    %c0_98 = arith.constant 0 : index
    %c0_99 = arith.constant 0 : index
    %64 = vector.load %arg2[%c2_96, %c2_97, %c0_98, %c0_99] : memref<3x3x4x4xf32, #tpu.memory_space<vmem>>, vector<1x1x4x4xf32>
    %65 = vector.shape_cast %64 : vector<1x1x4x4xf32> to vector<4x4xf32>
    %cst_100 = arith.constant dense<0.000000e+00> : vector<256x4xf32>
    %66 = tpu.matmul %63, %65, %cst_100 {dimension_numbers = #tpu.dot_dimension_numbers<[1], [0], [0], [1], [0, 0, 1, 1], [], []>} : vector<256x4xf32>, vector<4x4xf32>, vector<256x4xf32> -> vector<256x4xf32>
    %67 = arith.addf %61, %66 : vector<256x4xf32>
    %c0_101 = arith.constant 0 : index
    %c0_102 = arith.constant 0 : index
    %68 = vector.load %arg3[%c0_101, %c0_102] : memref<1x4xf32, #tpu.memory_space<vmem>>, vector<1x4xf32>
    %69 = vector.broadcast %68 : vector<1x4xf32> to vector<256x4xf32>
    %70 = arith.addf %67, %69 : vector<256x4xf32>
    %cst_103 = arith.constant 0.000000e+00 : f32
    %71 = vector.broadcast %cst_103 : f32 to vector<256x4xf32>
    %72 = arith.maximumf %70, %71 : vector<256x4xf32>
    %73 = vector.shape_cast %72 : vector<256x4xf32> to vector<16x16x4xf32>
    %c1_104 = arith.constant 1 : index
    %c1_105 = arith.constant 1 : index
    %c0_106 = arith.constant 0 : index
    %74 = vector.load %arg8[%c1_104, %c1_105, %c0_106] : memref<18x18x4xf32, #tpu.memory_space<vmem>>, vector<16x16x4xf32>
    tpu.vector_store %arg8[%c1_104, %c1_105, %c0_106], %73 {strides = array<i32>} : memref<18x18x4xf32, #tpu.memory_space<vmem>>, vector<16x16x4xf32>,
    %cst_107 = arith.constant 0.000000e+00 : f32
    %75 = vector.broadcast %cst_107 : f32 to vector<256x4xf32>
    %c0_108 = arith.constant 0 : index
    %c0_109 = arith.constant 0 : index
    %c0_110 = arith.constant 0 : index
    %76 = vector.load %arg8[%c0_108, %c0_109, %c0_110] : memref<18x18x4xf32, #tpu.memory_space<vmem>>, vector<16x16x4xf32>
    %77 = vector.shape_cast %76 : vector<16x16x4xf32> to vector<256x4xf32>
    %c0_111 = arith.constant 0 : index
    %c0_112 = arith.constant 0 : index
    %c0_113 = arith.constant 0 : index
    %c0_114 = arith.constant 0 : index
    %78 = vector.load %arg4[%c0_111, %c0_112, %c0_113, %c0_114] : memref<3x3x4x4xf32, #tpu.memory_space<vmem>>, vector<1x1x4x4xf32>
    %79 = vector.shape_cast %78 : vector<1x1x4x4xf32> to vector<4x4xf32>
    %cst_115 = arith.constant dense<0.000000e+00> : vector<256x4xf32>
    %80 = tpu.matmul %77, %79, %cst_115 {dimension_numbers = #tpu.dot_dimension_numbers<[1], [0], [0], [1], [0, 0, 1, 1], [], []>} : vector<256x4xf32>, vector<4x4xf32>, vector<256x4xf32> -> vector<256x4xf32>
    %81 = arith.addf %75, %80 : vector<256x4xf32>
    %c0_116 = arith.constant 0 : index
    %c1_117 = arith.constant 1 : index
    %c0_118 = arith.constant 0 : index
    %82 = vector.load %arg8[%c0_116, %c1_117, %c0_118] : memref<18x18x4xf32, #tpu.memory_space<vmem>>, vector<16x16x4xf32>
    %83 = vector.shape_cast %82 : vector<16x16x4xf32> to vector<256x4xf32>
    %c0_119 = arith.constant 0 : index
    %c1_120 = arith.constant 1 : index
    %c0_121 = arith.constant 0 : index
    %c0_122 = arith.constant 0 : index
    %84 = vector.load %arg4[%c0_119, %c1_120, %c0_121, %c0_122] : memref<3x3x4x4xf32, #tpu.memory_space<vmem>>, vector<1x1x4x4xf32>
    %85 = vector.shape_cast %84 : vector<1x1x4x4xf32> to vector<4x4xf32>
    %cst_123 = arith.constant dense<0.000000e+00> : vector<256x4xf32>
    %86 = tpu.matmul %83, %85, %cst_123 {dimension_numbers = #tpu.dot_dimension_numbers<[1], [0], [0], [1], [0, 0, 1, 1], [], []>} : vector<256x4xf32>, vector<4x4xf32>, vector<256x4xf32> -> vector<256x4xf32>
    %87 = arith.addf %81, %86 : vector<256x4xf32>
    %c0_124 = arith.constant 0 : index
    %c2_125 = arith.constant 2 : index
    %c0_126 = arith.constant 0 : index
    %88 = vector.load %arg8[%c0_124, %c2_125, %c0_126] : memref<18x18x4xf32, #tpu.memory_space<vmem>>, vector<16x16x4xf32>
    %89 = vector.shape_cast %88 : vector<16x16x4xf32> to vector<256x4xf32>
    %c0_127 = arith.constant 0 : index
    %c2_128 = arith.constant 2 : index
    %c0_129 = arith.constant 0 : index
    %c0_130 = arith.constant 0 : index
    %90 = vector.load %arg4[%c0_127, %c2_128, %c0_129, %c0_130] : memref<3x3x4x4xf32, #tpu.memory_space<vmem>>, vector<1x1x4x4xf32>
    %91 = vector.shape_cast %90 : vector<1x1x4x4xf32> to vector<4x4xf32>
    %cst_131 = arith.constant dense<0.000000e+00> : vector<256x4xf32>
    %92 = tpu.matmul %89, %91, %cst_131 {dimension_numbers = #tpu.dot_dimension_numbers<[1], [0], [0], [1], [0, 0, 1, 1], [], []>} : vector<256x4xf32>, vector<4x4xf32>, vector<256x4xf32> -> vector<256x4xf32>
    %93 = arith.addf %87, %92 : vector<256x4xf32>
    %c1_132 = arith.constant 1 : index
    %c0_133 = arith.constant 0 : index
    %c0_134 = arith.constant 0 : index
    %94 = vector.load %arg8[%c1_132, %c0_133, %c0_134] : memref<18x18x4xf32, #tpu.memory_space<vmem>>, vector<16x16x4xf32>
    %95 = vector.shape_cast %94 : vector<16x16x4xf32> to vector<256x4xf32>
    %c1_135 = arith.constant 1 : index
    %c0_136 = arith.constant 0 : index
    %c0_137 = arith.constant 0 : index
    %c0_138 = arith.constant 0 : index
    %96 = vector.load %arg4[%c1_135, %c0_136, %c0_137, %c0_138] : memref<3x3x4x4xf32, #tpu.memory_space<vmem>>, vector<1x1x4x4xf32>
    %97 = vector.shape_cast %96 : vector<1x1x4x4xf32> to vector<4x4xf32>
    %cst_139 = arith.constant dense<0.000000e+00> : vector<256x4xf32>
    %98 = tpu.matmul %95, %97, %cst_139 {dimension_numbers = #tpu.dot_dimension_numbers<[1], [0], [0], [1], [0, 0, 1, 1], [], []>} : vector<256x4xf32>, vector<4x4xf32>, vector<256x4xf32> -> vector<256x4xf32>
    %99 = arith.addf %93, %98 : vector<256x4xf32>
    %c1_140 = arith.constant 1 : index
    %c1_141 = arith.constant 1 : index
    %c0_142 = arith.constant 0 : index
    %100 = vector.load %arg8[%c1_140, %c1_141, %c0_142] : memref<18x18x4xf32, #tpu.memory_space<vmem>>, vector<16x16x4xf32>
    %101 = vector.shape_cast %100 : vector<16x16x4xf32> to vector<256x4xf32>
    %c1_143 = arith.constant 1 : index
    %c1_144 = arith.constant 1 : index
    %c0_145 = arith.constant 0 : index
    %c0_146 = arith.constant 0 : index
    %102 = vector.load %arg4[%c1_143, %c1_144, %c0_145, %c0_146] : memref<3x3x4x4xf32, #tpu.memory_space<vmem>>, vector<1x1x4x4xf32>
    %103 = vector.shape_cast %102 : vector<1x1x4x4xf32> to vector<4x4xf32>
    %cst_147 = arith.constant dense<0.000000e+00> : vector<256x4xf32>
    %104 = tpu.matmul %101, %103, %cst_147 {dimension_numbers = #tpu.dot_dimension_numbers<[1], [0], [0], [1], [0, 0, 1, 1], [], []>} : vector<256x4xf32>, vector<4x4xf32>, vector<256x4xf32> -> vector<256x4xf32>
    %105 = arith.addf %99, %104 : vector<256x4xf32>
    %c1_148 = arith.constant 1 : index
    %c2_149 = arith.constant 2 : index
    %c0_150 = arith.constant 0 : index
    %106 = vector.load %arg8[%c1_148, %c2_149, %c0_150] : memref<18x18x4xf32, #tpu.memory_space<vmem>>, vector<16x16x4xf32>
    %107 = vector.shape_cast %106 : vector<16x16x4xf32> to vector<256x4xf32>
    %c1_151 = arith.constant 1 : index
    %c2_152 = arith.constant 2 : index
    %c0_153 = arith.constant 0 : index
    %c0_154 = arith.constant 0 : index
    %108 = vector.load %arg4[%c1_151, %c2_152, %c0_153, %c0_154] : memref<3x3x4x4xf32, #tpu.memory_space<vmem>>, vector<1x1x4x4xf32>
    %109 = vector.shape_cast %108 : vector<1x1x4x4xf32> to vector<4x4xf32>
    %cst_155 = arith.constant dense<0.000000e+00> : vector<256x4xf32>
    %110 = tpu.matmul %107, %109, %cst_155 {dimension_numbers = #tpu.dot_dimension_numbers<[1], [0], [0], [1], [0, 0, 1, 1], [], []>} : vector<256x4xf32>, vector<4x4xf32>, vector<256x4xf32> -> vector<256x4xf32>
    %111 = arith.addf %105, %110 : vector<256x4xf32>
    %c2_156 = arith.constant 2 : index
    %c0_157 = arith.constant 0 : index
    %c0_158 = arith.constant 0 : index
    %112 = vector.load %arg8[%c2_156, %c0_157, %c0_158] : memref<18x18x4xf32, #tpu.memory_space<vmem>>, vector<16x16x4xf32>
    %113 = vector.shape_cast %112 : vector<16x16x4xf32> to vector<256x4xf32>
    %c2_159 = arith.constant 2 : index
    %c0_160 = arith.constant 0 : index
    %c0_161 = arith.constant 0 : index
    %c0_162 = arith.constant 0 : index
    %114 = vector.load %arg4[%c2_159, %c0_160, %c0_161, %c0_162] : memref<3x3x4x4xf32, #tpu.memory_space<vmem>>, vector<1x1x4x4xf32>
    %115 = vector.shape_cast %114 : vector<1x1x4x4xf32> to vector<4x4xf32>
    %cst_163 = arith.constant dense<0.000000e+00> : vector<256x4xf32>
    %116 = tpu.matmul %113, %115, %cst_163 {dimension_numbers = #tpu.dot_dimension_numbers<[1], [0], [0], [1], [0, 0, 1, 1], [], []>} : vector<256x4xf32>, vector<4x4xf32>, vector<256x4xf32> -> vector<256x4xf32>
    %117 = arith.addf %111, %116 : vector<256x4xf32>
    %c2_164 = arith.constant 2 : index
    %c1_165 = arith.constant 1 : index
    %c0_166 = arith.constant 0 : index
    %118 = vector.load %arg8[%c2_164, %c1_165, %c0_166] : memref<18x18x4xf32, #tpu.memory_space<vmem>>, vector<16x16x4xf32>
    %119 = vector.shape_cast %118 : vector<16x16x4xf32> to vector<256x4xf32>
    %c2_167 = arith.constant 2 : index
    %c1_168 = arith.constant 1 : index
    %c0_169 = arith.constant 0 : index
    %c0_170 = arith.constant 0 : index
    %120 = vector.load %arg4[%c2_167, %c1_168, %c0_169, %c0_170] : memref<3x3x4x4xf32, #tpu.memory_space<vmem>>, vector<1x1x4x4xf32>
    %121 = vector.shape_cast %120 : vector<1x1x4x4xf32> to vector<4x4xf32>
    %cst_171 = arith.constant dense<0.000000e+00> : vector<256x4xf32>
    %122 = tpu.matmul %119, %121, %cst_171 {dimension_numbers = #tpu.dot_dimension_numbers<[1], [0], [0], [1], [0, 0, 1, 1], [], []>} : vector<256x4xf32>, vector<4x4xf32>, vector<256x4xf32> -> vector<256x4xf32>
    %123 = arith.addf %117, %122 : vector<256x4xf32>
    %c2_172 = arith.constant 2 : index
    %c2_173 = arith.constant 2 : index
    %c0_174 = arith.constant 0 : index
    %124 = vector.load %arg8[%c2_172, %c2_173, %c0_174] : memref<18x18x4xf32, #tpu.memory_space<vmem>>, vector<16x16x4xf32>
    %125 = vector.shape_cast %124 : vector<16x16x4xf32> to vector<256x4xf32>
    %c2_175 = arith.constant 2 : index
    %c2_176 = arith.constant 2 : index
    %c0_177 = arith.constant 0 : index
    %c0_178 = arith.constant 0 : index
    %126 = vector.load %arg4[%c2_175, %c2_176, %c0_177, %c0_178] : memref<3x3x4x4xf32, #tpu.memory_space<vmem>>, vector<1x1x4x4xf32>
    %127 = vector.shape_cast %126 : vector<1x1x4x4xf32> to vector<4x4xf32>
    %cst_179 = arith.constant dense<0.000000e+00> : vector<256x4xf32>
    %128 = tpu.matmul %125, %127, %cst_179 {dimension_numbers = #tpu.dot_dimension_numbers<[1], [0], [0], [1], [0, 0, 1, 1], [], []>} : vector<256x4xf32>, vector<4x4xf32>, vector<256x4xf32> -> vector<256x4xf32>
    %129 = arith.addf %123, %128 : vector<256x4xf32>
    %c0_180 = arith.constant 0 : index
    %c0_181 = arith.constant 0 : index
    %130 = vector.load %arg5[%c0_180, %c0_181] : memref<1x4xf32, #tpu.memory_space<vmem>>, vector<1x4xf32>
    %131 = vector.broadcast %130 : vector<1x4xf32> to vector<256x4xf32>
    %132 = arith.addf %129, %131 : vector<256x4xf32>
    %cst_182 = arith.constant 1.000000e-01 : f32
    %133 = vector.broadcast %cst_182 : f32 to vector<256x4xf32>
    %134 = arith.mulf %132, %133 : vector<256x4xf32>
    %135 = vector.shape_cast %134 : vector<256x4xf32> to vector<16x16x4xf32>
    %136 = arith.addf %135, %11 : vector<16x16x4xf32>
    %c0_183 = arith.constant 0 : index
    %c0_184 = arith.constant 0 : index
    %c0_185 = arith.constant 0 : index
    %c0_186 = arith.constant 0 : index
    %137 = vector.load %arg6[%c0_183, %c0_184, %c0_185, %c0_186] : memref<1x16x16x4xf32, #tpu.memory_space<vmem>>, vector<1x16x16x4xf32>
    %138 = vector.shape_cast %137 : vector<1x16x16x4xf32> to vector<16x16x4xf32>
    %139 = vector.shape_cast %136 : vector<16x16x4xf32> to vector<1x16x16x4xf32>
    tpu.vector_store %arg6[%c0_183, %c0_184, %c0_185, %c0_186], %139 {strides = array<i32>} : memref<1x16x16x4xf32, #tpu.memory_space<vmem>>, vector<1x16x16x4xf32>,
    return
  }
  func.func @transform_0(%arg0: i32) -> (i32, i32, i32, i32) {
    %c0_i32 = arith.constant 0 : i32
    %c0_i32_0 = arith.constant 0 : i32
    %c0_i32_1 = arith.constant 0 : i32
    %c0_i32_2 = arith.constant 0 : i32
    return %arg0, %c0_i32, %c0_i32_0, %c0_i32_1 : i32, i32, i32, i32
  }
  func.func @transform_1(%arg0: i32) -> (i32, i32, i32, i32) {
    %c0_i32 = arith.constant 0 : i32
    %c0_i32_0 = arith.constant 0 : i32
    %c0_i32_1 = arith.constant 0 : i32
    %c0_i32_2 = arith.constant 0 : i32
    %c0_i32_3 = arith.constant 0 : i32
    return %c0_i32, %c0_i32_0, %c0_i32_1, %c0_i32_2 : i32, i32, i32, i32
  }
  func.func @transform_2(%arg0: i32) -> (i32, i32) {
    %c0_i32 = arith.constant 0 : i32
    %c0_i32_0 = arith.constant 0 : i32
    %c0_i32_1 = arith.constant 0 : i32
    return %c0_i32, %c0_i32_0 : i32, i32
  }
  func.func @transform_3(%arg0: i32) -> (i32, i32, i32, i32) {
    %c0_i32 = arith.constant 0 : i32
    %c0_i32_0 = arith.constant 0 : i32
    %c0_i32_1 = arith.constant 0 : i32
    %c0_i32_2 = arith.constant 0 : i32
    %c0_i32_3 = arith.constant 0 : i32
    return %c0_i32, %c0_i32_0, %c0_i32_1, %c0_i32_2 : i32, i32, i32, i32
  }
  func.func @transform_4(%arg0: i32) -> (i32, i32) {
    %c0_i32 = arith.constant 0 : i32
    %c0_i32_0 = arith.constant 0 : i32
    %c0_i32_1 = arith.constant 0 : i32
    return %c0_i32, %c0_i32_0 : i32, i32
  }
  func.func @transform_5(%arg0: i32) -> (i32, i32, i32, i32) {
    %c0_i32 = arith.constant 0 : i32
    %c0_i32_0 = arith.constant 0 : i32
    %c0_i32_1 = arith.constant 0 : i32
    %c0_i32_2 = arith.constant 0 : i32
    return %arg0, %c0_i32, %c0_i32_0, %c0_i32_1 : i32, i32, i32, i32
  }
}

</mosaic_0001>

<llo_original>
// kernel: tpu_custom_call.1
$region0: #{tpu_custom_call.1}
  #allocation0 [shape = 'u32[]', space=smem, size = 0x4, offset = 0x4, fixed_abs, tag = 'smem constant byte address 0x4 - core index']
  #allocation1 [shape = 'u32[144,128]{1,0:T(1,128)}', space=vmem, size = 0x12000, scoped, tag = 'internal scratch']
  #allocation2 [shape = 'f32[18,18,4]{2,1,0:T(8,128)}', space=vmem, size = 0x36000, scoped, tag = 'scratch operand']
  #allocation3 [shape = 'f32[18,18,4]{2,1,0:T(8,128)}', space=vmem, size = 0x36000, scoped, tag = 'scratch operand']
  %s0 = inlined_call_operand.vmem [shape: f32[2,16,16,4], index: 0, kind: input, shape index: {}]
  %s1 = inlined_call_operand.vmem [shape: f32[3,3,4,4], index: 1, kind: input, shape index: {}]
  %s2 = inlined_call_operand.vmem [shape: f32[1,4], index: 2, kind: input, shape index: {}]
  %s3 = inlined_call_operand.vmem [shape: f32[3,3,4,4], index: 3, kind: input, shape index: {}]
  %s4 = inlined_call_operand.vmem [shape: f32[1,4], index: 4, kind: input, shape index: {}]
  %s5 = inlined_call_operand.vmem [shape: f32[2,16,16,4], index: 5, kind: output, shape index: {}]
  %s6 = sld [smem:[#allocation0]]
  $region53: #{tpu_custom_call.1} parent=0
    _
  %s8 = ssub.s32 1, %s6
  %s9 = scalar_select 0, %s8, %s6
  loop: start=0, step=1, limit=4
  $region2: #{tpu_custom_call.1} parent=0 // loop_pre_header
    _
  $region3: #{tpu_custom_call.1} parent=0 // loop_header
    %s11 = sphi 0, %s15
    %p12 = scmp.ge.s32.totalorder %s11, 4
    %s21 = sphi 0, %s23
    %s24 = sphi 0, %s21
    %s25 = sphi 0, %s24
    %s41 = sphi 0, %s25
    %s45 = sphi 0, %s45
    %s47 = sphi 0, %s45
    %s48 = sphi 0, %s47
    %s62 = sphi 0, %s48
    %s66 = sphi 0, %s66
    %s68 = sphi 0, %s66
    %s69 = sphi 0, %s68
    %s83 = sphi 0, %s69
    %s87 = sphi 0, %s87
    %s89 = sphi 0, %s87
    %s90 = sphi 0, %s89
    %s104 = sphi 0, %s90
    %s108 = sphi 0, %s108
    %s110 = sphi 0, %s108
    %s111 = sphi 0, %s110
    %s125 = sphi 0, %s111
    %s131 = sphi 0, %s133
    %s134 = sphi 0, %s131
    %s135 = sphi 0, %s134
    %s151 = sphi 0, %s135
  $region4: #{tpu_custom_call.1} parent=0 // loop_header_branch
    %14 = sbr.rel (%p12) target = $region8
  $region5: #{tpu_custom_call.1} parent=0 // loop_body
    %s16 = ssub.s32 %s11, 1
    %s17 = ssub.s32 %s11, 2
    %s18 = sadd.s32 %s11, 1
    %s19 = ssub.s32 %s11, %s18
    %p20 = scmp.eq.s32.totalorder %s19, 0
    %s22 = sadd.s32 %s21, 1
    %s23 = scalar_select %p20, %s21, %s22
    %p26 = pneg %p20
    %p27 = scmp.eq.s32.totalorder %s11, 1
    %p28 = por %p26, %p27
    %p29 = scmp.ne.s32.totalorder %s21, %s24
    %p30 = scmp.eq.s32.totalorder %s11, 0
    %p31 = por %p29, %p30
    %p32 = scmp.ne.s32.totalorder %s21, %s24
    %p33 = scmp.eq.s32.totalorder %s16, 1
    %p34 = por %p32, %p33
    %p35 = scmp.ne.s32.totalorder %s24, %s25
    %p36 = scmp.eq.s32.totalorder %s16, 0
    %p37 = por %p35, %p36
    %p38 = scmp.ne.s32.totalorder %s24, %s25
    %p39 = scmp.eq.s32.totalorder %s17, 1
    %p40 = por %p38, %p39
    %p42 = scmp.ne.s32.totalorder %s25, %s41
    %p43 = scmp.eq.s32.totalorder %s17, 0
    %p44 = por %p42, %p43
    %s46 = sadd.s32 %s45, 1
    %p49 = scmp.eq.s32.totalorder %s11, 1
    %p50 = scmp.ne.s32.totalorder %s45, %s47
    %p51 = scmp.eq.s32.totalorder %s11, 0
    %p52 = por %p50, %p51
    %p53 = scmp.ne.s32.totalorder %s45, %s47
    %p54 = scmp.eq.s32.totalorder %s16, 1
    %p55 = por %p53, %p54
    %p56 = scmp.ne.s32.totalorder %s47, %s48
    %p57 = scmp.eq.s32.totalorder %s16, 0
    %p58 = por %p56, %p57
    %p59 = scmp.ne.s32.totalorder %s47, %s48
    %p60 = scmp.eq.s32.totalorder %s17, 1
    %p61 = por %p59, %p60
    %p63 = scmp.ne.s32.totalorder %s48, %s62
    %p64 = scmp.eq.s32.totalorder %s17, 0
    %p65 = por %p63, %p64
    %s67 = sadd.s32 %s66, 1
    %p70 = scmp.eq.s32.totalorder %s11, 1
    %p71 = scmp.ne.s32.totalorder %s66, %s68
    %p72 = scmp.eq.s32.totalorder %s11, 0
    %p73 = por %p71, %p72
    %p74 = scmp.ne.s32.totalorder %s66, %s68
    %p75 = scmp.eq.s32.totalorder %s16, 1
    %p76 = por %p74, %p75
    %p77 = scmp.ne.s32.totalorder %s68, %s69
    %p78 = scmp.eq.s32.totalorder %s16, 0
    %p79 = por %p77, %p78
    %p80 = scmp.ne.s32.totalorder %s68, %s69
    %p81 = scmp.eq.s32.totalorder %s17, 1
    %p82 = por %p80, %p81
    %p84 = scmp.ne.s32.totalorder %s69, %s83
    %p85 = scmp.eq.s32.totalorder %s17, 0
    %p86 = por %p84, %p85
    %s88 = sadd.s32 %s87, 1
    %p91 = scmp.eq.s32.totalorder %s11, 1
    %p92 = scmp.ne.s32.totalorder %s87, %s89
    %p93 = scmp.eq.s32.totalorder %s11, 0
    %p94 = por %p92, %p93
    %p95 = scmp.ne.s32.totalorder %s87, %s89
    %p96 = scmp.eq.s32.totalorder %s16, 1
    %p97 = por %p95, %p96
    %p98 = scmp.ne.s32.totalorder %s89, %s90
    %p99 = scmp.eq.s32.totalorder %s16, 0
    %p100 = por %p98, %p99
    %p101 = scmp.ne.s32.totalorder %s89, %s90
    %p102 = scmp.eq.s32.totalorder %s17, 1
    %p103 = por %p101, %p102
    %p105 = scmp.ne.s32.totalorder %s90, %s104
    %p106 = scmp.eq.s32.totalorder %s17, 0
    %p107 = por %p105, %p106
    %s109 = sadd.s32 %s108, 1
    %p112 = scmp.eq.s32.totalorder %s11, 1
    %p113 = scmp.ne.s32.totalorder %s108, %s110
    %p114 = scmp.eq.s32.totalorder %s11, 0
    %p115 = por %p113, %p114
    %p116 = scmp.ne.s32.totalorder %s108, %s110
    %p117 = scmp.eq.s32.totalorder %s16, 1
    %p118 = por %p116, %p117
    %p119 = scmp.ne.s32.totalorder %s110, %s111
    %p120 = scmp.eq.s32.totalorder %s16, 0
    %p121 = por %p119, %p120
    %p122 = scmp.ne.s32.totalorder %s110, %s111
    %p123 = scmp.eq.s32.totalorder %s17, 1
    %p124 = por %p122, %p123
    %p126 = scmp.ne.s32.totalorder %s111, %s125
    %p127 = scmp.eq.s32.totalorder %s17, 0
    %p128 = por %p126, %p127
    %s129 = ssub.s32 %s11, %s18
    %p130 = scmp.eq.s32.totalorder %s129, 0
    %s132 = sadd.s32 %s131, 1
    %s133 = scalar_select %p130, %s131, %s132
    %p136 = pneg %p130
    %p137 = scmp.eq.s32.totalorder %s11, 1
    %p138 = por %p136, %p137
    %p139 = scmp.ne.s32.totalorder %s131, %s134
    %p140 = scmp.eq.s32.totalorder %s11, 0
    %p141 = por %p139, %p140
    %p142 = scmp.ne.s32.totalorder %s131, %s134
    %p143 = scmp.eq.s32.totalorder %s16, 1
    %p144 = por %p142, %p143
    %p145 = scmp.ne.s32.totalorder %s134, %s135
    %p146 = scmp.eq.s32.totalorder %s16, 0
    %p147 = por %p145, %p146
    %p148 = scmp.ne.s32.totalorder %s134, %s135
    %p149 = scmp.eq.s32.totalorder %s17, 1
    %p150 = por %p148, %p149
    %p152 = scmp.ne.s32.totalorder %s135, %s151
    %p153 = scmp.eq.s32.totalorder %s17, 0
    %p154 = por %p152, %p153
    %p155 = scmp.le.s32.totalorder 1, %s11
    %p156 = scmp.lt.s32.totalorder %s11, 3
    %p157 = pnand %p155, %p156
    %p158 = pneg %p157
    // Predicated region
    $region9: #{tpu_custom_call.1} parent=5 // pred_check
      _
    $region10: #{tpu_custom_call.1} parent=5 // pred_check_branch
      %160 = sbr.rel (%p157) target = $region12
    $region11: #{tpu_custom_call.1} parent=5 // pred_region
      %s161 = ssub.s32 %s11, 1
      // Predicated region
      $region13: #{tpu_custom_call.1} parent=11 // pred_check
        %p162 = pneg %p58
      $region14: #{tpu_custom_call.1} parent=11 // pred_check_branch
        %164 = sbr.rel (%p162) target = $region16
      $region15: #{tpu_custom_call.1} parent=11 // pred_region
        _
      $region16: #{tpu_custom_call.1} parent=11 // pred_fallthru
        _
      // Predicated region
      $region17: #{tpu_custom_call.1} parent=11 // pred_check
        %p165 = pneg %p79
      $region18: #{tpu_custom_call.1} parent=11 // pred_check_branch
        %167 = sbr.rel (%p165) target = $region20
      $region19: #{tpu_custom_call.1} parent=11 // pred_region
        _
      $region20: #{tpu_custom_call.1} parent=11 // pred_fallthru
        _
      // Predicated region
      $region21: #{tpu_custom_call.1} parent=11 // pred_check
        %p168 = pneg %p100
      $region22: #{tpu_custom_call.1} parent=11 // pred_check_branch
        %170 = sbr.rel (%p168) target = $region24
      $region23: #{tpu_custom_call.1} parent=11 // pred_region
        _
      $region24: #{tpu_custom_call.1} parent=11 // pred_fallthru
        _
      // Predicated region
      $region25: #{tpu_custom_call.1} parent=11 // pred_check
        %p171 = pneg %p121
      $region26: #{tpu_custom_call.1} parent=11 // pred_check_branch
        %173 = sbr.rel (%p171) target = $region28
      $region27: #{tpu_custom_call.1} parent=11 // pred_region
        _
      $region28: #{tpu_custom_call.1} parent=11 // pred_fallthru
        _
    $region12: #{tpu_custom_call.1} parent=5 // pred_fallthru
      _
    %p174 = scmp.lt.s32.totalorder %s11, 2
    // Predicated region
    $region29: #{tpu_custom_call.1} parent=5 // pred_check
      %p175 = pneg %p174
    $region30: #{tpu_custom_call.1} parent=5 // pred_check_branch
      %177 = sbr.rel (%p175) target = $region32
    $region31: #{tpu_custom_call.1} parent=5 // pred_region
      // Predicated region
      $region33: #{tpu_custom_call.1} parent=31 // pred_check
        %p178 = pneg %p31
      $region34: #{tpu_custom_call.1} parent=31 // pred_check_branch
        %180 = sbr.rel (%p178) target = $region36
      $region35: #{tpu_custom_call.1} parent=31 // pred_region
        %p181 = scmp.lt.s32.totalorder %s11, 1
        %s182 = scalar_select %p181, %s11, 1
        %s183 = smul.addr %s182, 32
        %s184 = smul.addr %s183, 8
        %s185 = scalar_lea.vmem %s0, %s184
      $region36: #{tpu_custom_call.1} parent=31 // pred_fallthru
        _
    $region32: #{tpu_custom_call.1} parent=5 // pred_fallthru
      _
    %p186 = scmp.le.s32.totalorder 1, %s11
    %p187 = scmp.lt.s32.totalorder %s11, 3
    %p188 = pnand %p186, %p187
    %p189 = pneg %p188
    // Predicated region
    $region37: #{tpu_custom_call.1} parent=5 // pred_check
      _
    $region38: #{tpu_custom_call.1} parent=5 // pred_check_branch
      %191 = sbr.rel (%p188) target = $region40
    $region39: #{tpu_custom_call.1} parent=5 // pred_region
      %s192 = ssub.s32 %s11, 1
      %p193 = scmp.lt.s32.totalorder %s16, 1
      %s194 = scalar_select %p193, %s16, 1
      %s195 = smul.addr %s194, 32
      %s196 = smul.addr %s195, 8
      %s197 = scalar_lea.vmem %s0, %s196
      %p198 = pneg %p37
      %p199 = pneg %p34
      %p200 = pneg %p58
      %p201 = pneg %p55
      %p202 = pneg %p79
      %p203 = pneg %p76
      %p204 = pneg %p100
      %p205 = pneg %p97
      %p206 = pneg %p121
      %p207 = pneg %p118
      %p208 = pneg %p147
      %p209 = pneg %p144
      %p210 = scmp.lt.s32.totalorder %s16, 1
      %s211 = scalar_select %p210, %s16, 1
      %s212 = smul.addr %s211, 32
      %s213 = smul.addr %s212, 8
      %s214 = scalar_lea.vmem %s5, %s213
      %p215 = scmp.lt.s32.totalorder %s16, 1
      %s216 = scalar_select %p215, %s16, 1
      %s217 = smul.addr %s216, 32
      %s218 = smul.addr %s217, 8
      %s219 = scalar_lea.vmem %s0, %s218
      %p220 = scmp.lt.s32.totalorder %s16, 1
      %s221 = scalar_select %p220, %s16, 1
      %s222 = smul.addr %s221, 32
      %s223 = smul.addr %s222, 8
      %s224 = scalar_lea.vmem %s5, %s223
      %vm225 = vcmask 31744
      %226 = vst.msk [vmem:[#allocation2] sm:$0xff] %vm225, 0.0
      %227 = vst.msk [vmem:[#allocation2 + $0x8] sm:$0xff] %vm225, 0.0
      %vm228 = vcmask 25600
      %229 = vst.msk [vmem:[#allocation2 + $0x10] sm:$0x3] %vm228, 0.0
      %s230 = scalar_lea.vmem [#allocation2], 408
      %231 = vst.msk [vmem:[%s230] sm:$0xff] %vm225, 0.0
      %232 = vst.msk [vmem:[%s230 + $0x8] sm:$0xff] %vm225, 0.0
      %233 = vst.msk [vmem:[%s230 + $0x10] sm:$0x3] %vm228, 0.0
      %vm234 = vcmask 24576
      %235 = vst.msk [vmem:[#allocation2] sm:$0x1] %vm234, 0.0
      %236 = vst.msk [vmem:[#allocation2 + $0x18] sm:$0x1] %vm234, 0.0
      %237 = vst.msk [vmem:[#allocation2 + $0x30] sm:$0x1] %vm234, 0.0
      %238 = vst.msk [vmem:[#allocation2 + $0x48] sm:$0x1] %vm234, 0.0
      %239 = vst.msk [vmem:[#allocation2 + $0x60] sm:$0x1] %vm234, 0.0
      %240 = vst.msk [vmem:[#allocation2 + $0x78] sm:$0x1] %vm234, 0.0
      %241 = vst.msk [vmem:[#allocation2 + $0x90] sm:$0x1] %vm234, 0.0
      %242 = vst.msk [vmem:[#allocation2 + $0xa8] sm:$0x1] %vm234, 0.0
      %243 = vst.msk [vmem:[#allocation2 + $0xc0] sm:$0x1] %vm234, 0.0
      %244 = vst.msk [vmem:[#allocation2 + $0xd8] sm:$0x1] %vm234, 0.0
      %245 = vst.msk [vmem:[#allocation2 + $0xf0] sm:$0x1] %vm234, 0.0
      %246 = vst.msk [vmem:[#allocation2 + $0x108] sm:$0x1] %vm234, 0.0
      %247 = vst.msk [vmem:[#allocation2 + $0x120] sm:$0x1] %vm234, 0.0
      %248 = vst.msk [vmem:[#allocation2 + $0x138] sm:$0x1] %vm234, 0.0
      %249 = vst.msk [vmem:[#allocation2 + $0x150] sm:$0x1] %vm234, 0.0
      %250 = vst.msk [vmem:[#allocation2 + $0x168] sm:$0x1] %vm234, 0.0
      %251 = vst.msk [vmem:[#allocation2 + $0x180] sm:$0x1] %vm234, 0.0
      %252 = vst.msk [vmem:[#allocation2 + $0x198] sm:$0x1] %vm234, 0.0
      %253 = vst.msk [vmem:[#allocation2 + $0x11] sm:$0x1] %vm234, 0.0
      %254 = vst.msk [vmem:[#allocation2 + $0x29] sm:$0x1] %vm234, 0.0
      %255 = vst.msk [vmem:[#allocation2 + $0x41] sm:$0x1] %vm234, 0.0
      %256 = vst.msk [vmem:[#allocation2 + $0x59] sm:$0x1] %vm234, 0.0
      %257 = vst.msk [vmem:[#allocation2 + $0x71] sm:$0x1] %vm234, 0.0
      %258 = vst.msk [vmem:[#allocation2 + $0x89] sm:$0x1] %vm234, 0.0
      %259 = vst.msk [vmem:[#allocation2 + $0xa1] sm:$0x1] %vm234, 0.0
      %260 = vst.msk [vmem:[#allocation2 + $0xb9] sm:$0x1] %vm234, 0.0
      %261 = vst.msk [vmem:[#allocation2 + $0xd1] sm:$0x1] %vm234, 0.0
      %262 = vst.msk [vmem:[#allocation2 + $0xe9] sm:$0x1] %vm234, 0.0
      %263 = vst.msk [vmem:[#allocation2 + $0x101] sm:$0x1] %vm234, 0.0
      %264 = vst.msk [vmem:[#allocation2 + $0x119] sm:$0x1] %vm234, 0.0
      %265 = vst.msk [vmem:[#allocation2 + $0x131] sm:$0x1] %vm234, 0.0
      %266 = vst.msk [vmem:[#allocation2 + $0x149] sm:$0x1] %vm234, 0.0
      %267 = vst.msk [vmem:[#allocation2 + $0x161] sm:$0x1] %vm234, 0.0
      %268 = vst.msk [vmem:[#allocation2 + $0x179] sm:$0x1] %vm234, 0.0
      %269 = vst.msk [vmem:[#allocation2 + $0x191] sm:$0x1] %vm234, 0.0
      %270 = vst.msk [vmem:[#allocation2 + $0x1a9] sm:$0x1] %vm234, 0.0
      %271 = vst.msk [vmem:[#allocation3] sm:$0xff] %vm225, 0.0
      %272 = vst.msk [vmem:[#allocation3 + $0x8] sm:$0xff] %vm225, 0.0
      %273 = vst.msk [vmem:[#allocation3 + $0x10] sm:$0x3] %vm228, 0.0
      %s274 = scalar_lea.vmem [#allocation3], 408
      %275 = vst.msk [vmem:[%s274] sm:$0xff] %vm225, 0.0
      %276 = vst.msk [vmem:[%s274 + $0x8] sm:$0xff] %vm225, 0.0
      %277 = vst.msk [vmem:[%s274 + $0x10] sm:$0x3] %vm228, 0.0
      %278 = vst.msk [vmem:[#allocation3] sm:$0x1] %vm234, 0.0
      %279 = vst.msk [vmem:[#allocation3 + $0x18] sm:$0x1] %vm234, 0.0
      %280 = vst.msk [vmem:[#allocation3 + $0x30] sm:$0x1] %vm234, 0.0
      %281 = vst.msk [vmem:[#allocation3 + $0x48] sm:$0x1] %vm234, 0.0
      %282 = vst.msk [vmem:[#allocation3 + $0x60] sm:$0x1] %vm234, 0.0
      %283 = vst.msk [vmem:[#allocation3 + $0x78] sm:$0x1] %vm234, 0.0
      %284 = vst.msk [vmem:[#allocation3 + $0x90] sm:$0x1] %vm234, 0.0
      %285 = vst.msk [vmem:[#allocation3 + $0xa8] sm:$0x1] %vm234, 0.0
      %286 = vst.msk [vmem:[#allocation3 + $0xc0] sm:$0x1] %vm234, 0.0
      %287 = vst.msk [vmem:[#allocation3 + $0xd8] sm:$0x1] %vm234, 0.0
      %288 = vst.msk [vmem:[#allocation3 + $0xf0] sm:$0x1] %vm234, 0.0
      %289 = vst.msk [vmem:[#allocation3 + $0x108] sm:$0x1] %vm234, 0.0
      %290 = vst.msk [vmem:[#allocation3 + $0x120] sm:$0x1] %vm234, 0.0
      %291 = vst.msk [vmem:[#allocation3 + $0x138] sm:$0x1] %vm234, 0.0
      %292 = vst.msk [vmem:[#allocation3 + $0x150] sm:$0x1] %vm234, 0.0
      %293 = vst.msk [vmem:[#allocation3 + $0x168] sm:$0x1] %vm234, 0.0
      %294 = vst.msk [vmem:[#allocation3 + $0x180] sm:$0x1] %vm234, 0.0
      %295 = vst.msk [vmem:[#allocation3 + $0x198] sm:$0x1] %vm234, 0.0
      %296 = vst.msk [vmem:[#allocation3 + $0x11] sm:$0x1] %vm234, 0.0
      %297 = vst.msk [vmem:[#allocation3 + $0x29] sm:$0x1] %vm234, 0.0
      %298 = vst.msk [vmem:[#allocation3 + $0x41] sm:$0x1] %vm234, 0.0
      %299 = vst.msk [vmem:[#allocation3 + $0x59] sm:$0x1] %vm234, 0.0
      %300 = vst.msk [vmem:[#allocation3 + $0x71] sm:$0x1] %vm234, 0.0
      %301 = vst.msk [vmem:[#allocation3 + $0x89] sm:$0x1] %vm234, 0.0
      %302 = vst.msk [vmem:[#allocation3 + $0xa1] sm:$0x1] %vm234, 0.0
      %303 = vst.msk [vmem:[#allocation3 + $0xb9] sm:$0x1] %vm234, 0.0
      %304 = vst.msk [vmem:[#allocation3 + $0xd1] sm:$0x1] %vm234, 0.0
      %305 = vst.msk [vmem:[#allocation3 + $0xe9] sm:$0x1] %vm234, 0.0
      %306 = vst.msk [vmem:[#allocation3 + $0x101] sm:$0x1] %vm234, 0.0
      %307 = vst.msk [vmem:[#allocation3 + $0x119] sm:$0x1] %vm234, 0.0
      %308 = vst.msk [vmem:[#allocation3 + $0x131] sm:$0x1] %vm234, 0.0
      %309 = vst.msk [vmem:[#allocation3 + $0x149] sm:$0x1] %vm234, 0.0
      %310 = vst.msk [vmem:[#allocation3 + $0x161] sm:$0x1] %vm234, 0.0
      %311 = vst.msk [vmem:[#allocation3 + $0x179] sm:$0x1] %vm234, 0.0
      %312 = vst.msk [vmem:[#allocation3 + $0x191] sm:$0x1] %vm234, 0.0
      %313 = vst.msk [vmem:[#allocation3 + $0x1a9] sm:$0x1] %vm234, 0.0
      %v314 = vld [vmem:[%s219] sm:$0xff]
      %v315 = vld [vmem:[%s219 + $0x8] sm:$0xff]
      %v316 = vld [vmem:[%s219 + $0x10] sm:$0xff]
      %v317 = vld [vmem:[%s219 + $0x18] sm:$0xff]
      %v318 = vld [vmem:[%s219 + $0x20] sm:$0xff]
      %v319 = vld [vmem:[%s219 + $0x28] sm:$0xff]
      %v320 = vld [vmem:[%s219 + $0x30] sm:$0xff]
      %v321 = vld [vmem:[%s219 + $0x38] sm:$0xff]
      %v322 = vld [vmem:[%s219 + $0x40] sm:$0xff]
      %v323 = vld [vmem:[%s219 + $0x48] sm:$0xff]
      %v324 = vld [vmem:[%s219 + $0x50] sm:$0xff]
      %v325 = vld [vmem:[%s219 + $0x58] sm:$0xff]
      %v326 = vld [vmem:[%s219 + $0x60] sm:$0xff]
      %v327 = vld [vmem:[%s219 + $0x68] sm:$0xff]
      %v328 = vld [vmem:[%s219 + $0x70] sm:$0xff]
      %v329 = vld [vmem:[%s219 + $0x78] sm:$0xff]
      %v330 = vld [vmem:[%s219 + $0x80] sm:$0xff]
      %v331 = vld [vmem:[%s219 + $0x88] sm:$0xff]
      %v332 = vld [vmem:[%s219 + $0x90] sm:$0xff]
      %v333 = vld [vmem:[%s219 + $0x98] sm:$0xff]
      %v334 = vld [vmem:[%s219 + $0xa0] sm:$0xff]
      %v335 = vld [vmem:[%s219 + $0xa8] sm:$0xff]
      %v336 = vld [vmem:[%s219 + $0xb0] sm:$0xff]
      %v337 = vld [vmem:[%s219 + $0xb8] sm:$0xff]
      %v338 = vld [vmem:[%s219 + $0xc0] sm:$0xff]
      %v339 = vld [vmem:[%s219 + $0xc8] sm:$0xff]
      %v340 = vld [vmem:[%s219 + $0xd0] sm:$0xff]
      %v341 = vld [vmem:[%s219 + $0xd8] sm:$0xff]
      %v342 = vld [vmem:[%s219 + $0xe0] sm:$0xff]
      %v343 = vld [vmem:[%s219 + $0xe8] sm:$0xff]
      %v344 = vld [vmem:[%s219 + $0xf0] sm:$0xff]
      %v345 = vld [vmem:[%s219 + $0xf8] sm:$0xff]
      %s346 = scalar_lea.vmem [#allocation2], 24
      %347 = vst.msk [vmem:[%s346 + $0x1] sm:$0xff] %vm225, %v314
      %348 = vst.msk [vmem:[%s346 + $0x9] sm:$0xff] %vm225, %v315
      %349 = vst.msk [vmem:[%s346 + $0x19] sm:$0xff] %vm225, %v316
      %350 = vst.msk [vmem:[%s346 + $0x21] sm:$0xff] %vm225, %v317
      %351 = vst.msk [vmem:[%s346 + $0x31] sm:$0xff] %vm225, %v318
      %352 = vst.msk [vmem:[%s346 + $0x39] sm:$0xff] %vm225, %v319
      %353 = vst.msk [vmem:[%s346 + $0x49] sm:$0xff] %vm225, %v320
      %354 = vst.msk [vmem:[%s346 + $0x51] sm:$0xff] %vm225, %v321
      %355 = vst.msk [vmem:[%s346 + $0x61] sm:$0xff] %vm225, %v322
      %356 = vst.msk [vmem:[%s346 + $0x69] sm:$0xff] %vm225, %v323
      %357 = vst.msk [vmem:[%s346 + $0x79] sm:$0xff] %vm225, %v324
      %358 = vst.msk [vmem:[%s346 + $0x81] sm:$0xff] %vm225, %v325
      %359 = vst.msk [vmem:[%s346 + $0x91] sm:$0xff] %vm225, %v326
      %360 = vst.msk [vmem:[%s346 + $0x99] sm:$0xff] %vm225, %v327
      %361 = vst.msk [vmem:[%s346 + $0xa9] sm:$0xff] %vm225, %v328
      %362 = vst.msk [vmem:[%s346 + $0xb1] sm:$0xff] %vm225, %v329
      %363 = vst.msk [vmem:[%s346 + $0xc1] sm:$0xff] %vm225, %v330
      %364 = vst.msk [vmem:[%s346 + $0xc9] sm:$0xff] %vm225, %v331
      %365 = vst.msk [vmem:[%s346 + $0xd9] sm:$0xff] %vm225, %v332
      %366 = vst.msk [vmem:[%s346 + $0xe1] sm:$0xff] %vm225, %v333
      %367 = vst.msk [vmem:[%s346 + $0xf1] sm:$0xff] %vm225, %v334
      %368 = vst.msk [vmem:[%s346 + $0xf9] sm:$0xff] %vm225, %v335
      %369 = vst.msk [vmem:[%s346 + $0x109] sm:$0xff] %vm225, %v336
      %370 = vst.msk [vmem:[%s346 + $0x111] sm:$0xff] %vm225, %v337
      %371 = vst.msk [vmem:[%s346 + $0x121] sm:$0xff] %vm225, %v338
      %372 = vst.msk [vmem:[%s346 + $0x129] sm:$0xff] %vm225, %v339
      %373 = vst.msk [vmem:[%s346 + $0x139] sm:$0xff] %vm225, %v340
      %374 = vst.msk [vmem:[%s346 + $0x141] sm:$0xff] %vm225, %v341
      %375 = vst.msk [vmem:[%s346 + $0x151] sm:$0xff] %vm225, %v342
      %376 = vst.msk [vmem:[%s346 + $0x159] sm:$0xff] %vm225, %v343
      %377 = vst.msk [vmem:[%s346 + $0x169] sm:$0xff] %vm225, %v344
      %378 = vst.msk [vmem:[%s346 + $0x171] sm:$0xff] %vm225, %v345
      %v379 = vld [vmem:[#allocation2] sm:$0xff]
      %v380 = vld [vmem:[#allocation2 + $0x8] sm:$0xff]
      %v381 = vld [vmem:[#allocation2 + $0x18] sm:$0xff]
      %v382 = vld [vmem:[#allocation2 + $0x20] sm:$0xff]
      %v383 = vld [vmem:[#allocation2 + $0x30] sm:$0xff]
      %v384 = vld [vmem:[#allocation2 + $0x38] sm:$0xff]
      %v385 = vld [vmem:[#allocation2 + $0x48] sm:$0xff]
      %v386 = vld [vmem:[#allocation2 + $0x50] sm:$0xff]
      %v387 = vld [vmem:[#allocation2 + $0x60] sm:$0xff]
      %v388 = vld [vmem:[#allocation2 + $0x68] sm:$0xff]
      %v389 = vld [vmem:[#allocation2 + $0x78] sm:$0xff]
      %v390 = vld [vmem:[#allocation2 + $0x80] sm:$0xff]
      %v391 = vld [vmem:[#allocation2 + $0x90] sm:$0xff]
      %v392 = vld [vmem:[#allocation2 + $0x98] sm:$0xff]
      %v393 = vld [vmem:[#allocation2 + $0xa8] sm:$0xff]
      %v394 = vld [vmem:[#allocation2 + $0xb0] sm:$0xff]
      %v395 = vld [vmem:[#allocation2 + $0xc0] sm:$0xff]
      %v396 = vld [vmem:[#allocation2 + $0xc8] sm:$0xff]
      %v397 = vld [vmem:[#allocation2 + $0xd8] sm:$0xff]
      %v398 = vld [vmem:[#allocation2 + $0xe0] sm:$0xff]
      %v399 = vld [vmem:[#allocation2 + $0xf0] sm:$0xff]
      %v400 = vld [vmem:[#allocation2 + $0xf8] sm:$0xff]
      %v401 = vld [vmem:[#allocation2 + $0x108] sm:$0xff]
      %v402 = vld [vmem:[#allocation2 + $0x110] sm:$0xff]
      %v403 = vld [vmem:[#allocation2 + $0x120] sm:$0xff]
      %v404 = vld [vmem:[#allocation2 + $0x128] sm:$0xff]
      %v405 = vld [vmem:[#allocation2 + $0x138] sm:$0xff]
      %v406 = vld [vmem:[#allocation2 + $0x140] sm:$0xff]
      %v407 = vld [vmem:[#allocation2 + $0x150] sm:$0xff]
      %v408 = vld [vmem:[#allocation2 + $0x158] sm:$0xff]
      %v409 = vld [vmem:[#allocation2 + $0x168] sm:$0xff]
      %v410 = vld [vmem:[#allocation2 + $0x170] sm:$0xff]
      %v411 = vld [vmem:[%s1] sm:$0xf]
      %v412 = vld [vmem:[#allocation2 + $0x1] sm:$0xff]
      %v413 = vld [vmem:[#allocation2 + $0x9] sm:$0xff]
      %v414 = vld [vmem:[#allocation2 + $0x19] sm:$0xff]
      %v415 = vld [vmem:[#allocation2 + $0x21] sm:$0xff]
      %v416 = vld [vmem:[#allocation2 + $0x31] sm:$0xff]
      %v417 = vld [vmem:[#allocation2 + $0x39] sm:$0xff]
      %v418 = vld [vmem:[#allocation2 + $0x49] sm:$0xff]
      %v419 = vld [vmem:[#allocation2 + $0x51] sm:$0xff]
      %v420 = vld [vmem:[#allocation2 + $0x61] sm:$0xff]
      %v421 = vld [vmem:[#allocation2 + $0x69] sm:$0xff]
      %v422 = vld [vmem:[#allocation2 + $0x79] sm:$0xff]
      %v423 = vld [vmem:[#allocation2 + $0x81] sm:$0xff]
      %v424 = vld [vmem:[#allocation2 + $0x91] sm:$0xff]
      %v425 = vld [vmem:[#allocation2 + $0x99] sm:$0xff]
      %v426 = vld [vmem:[#allocation2 + $0xa9] sm:$0xff]
      %v427 = vld [vmem:[#allocation2 + $0xb1] sm:$0xff]
      %v428 = vld [vmem:[#allocation2 + $0xc1] sm:$0xff]
      %v429 = vld [vmem:[#allocation2 + $0xc9] sm:$0xff]
      %v430 = vld [vmem:[#allocation2 + $0xd9] sm:$0xff]
      %v431 = vld [vmem:[#allocation2 + $0xe1] sm:$0xff]
      %v432 = vld [vmem:[#allocation2 + $0xf1] sm:$0xff]
      %v433 = vld [vmem:[#allocation2 + $0xf9] sm:$0xff]
      %v434 = vld [vmem:[#allocation2 + $0x109] sm:$0xff]
      %v435 = vld [vmem:[#allocation2 + $0x111] sm:$0xff]
      %v436 = vld [vmem:[#allocation2 + $0x121] sm:$0xff]
      %v437 = vld [vmem:[#allocation2 + $0x129] sm:$0xff]
      %v438 = vld [vmem:[#allocation2 + $0x139] sm:$0xff]
      %v439 = vld [vmem:[#allocation2 + $0x141] sm:$0xff]
      %v440 = vld [vmem:[#allocation2 + $0x151] sm:$0xff]
      %v441 = vld [vmem:[#allocation2 + $0x159] sm:$0xff]
      %v442 = vld [vmem:[#allocation2 + $0x169] sm:$0xff]
      %v443 = vld [vmem:[#allocation2 + $0x171] sm:$0xff]
      %s444 = scalar_lea.vmem %s1, 4
      %v445 = vld [vmem:[%s444] sm:$0xf]
      %v447 = vsel %vm225, %v412, 0
      %v450 = vsel %vm225, %v413, 0
      %v453 = vsel %vm225, %v414, 0
      %v456 = vsel %vm225, %v415, 0
      %v459 = vsel %vm225, %v416, 0
      %v462 = vsel %vm225, %v417, 0
      %v465 = vsel %vm225, %v418, 0
      %v468 = vsel %vm225, %v419, 0
      %v471 = vsel %vm225, %v420, 0
      %v474 = vsel %vm225, %v421, 0
      %v477 = vsel %vm225, %v422, 0
      %v480 = vsel %vm225, %v423, 0
      %v483 = vsel %vm225, %v424, 0
      %v486 = vsel %vm225, %v425, 0
      %v489 = vsel %vm225, %v426, 0
      %v492 = vsel %vm225, %v427, 0
      %v495 = vsel %vm225, %v428, 0
      %v498 = vsel %vm225, %v429, 0
      %v501 = vsel %vm225, %v430, 0
      %v504 = vsel %vm225, %v431, 0
      %v507 = vsel %vm225, %v432, 0
      %v510 = vsel %vm225, %v433, 0
      %v513 = vsel %vm225, %v434, 0
      %v516 = vsel %vm225, %v435, 0
      %v519 = vsel %vm225, %v436, 0
      %v522 = vsel %vm225, %v437, 0
      %v525 = vsel %vm225, %v438, 0
      %v528 = vsel %vm225, %v439, 0
      %v531 = vsel %vm225, %v440, 0
      %v534 = vsel %vm225, %v441, 0
      %v537 = vsel %vm225, %v442, 0
      %v540 = vsel %vm225, %v443, 0
      %vm542 = vcmask 1043456
      %v544 = vsel %vm542, %v445, 0
      %546 = vmatprep.subr.mxu0 0.0
      %547 = vmatpush1.msra.mxu0 %v544
      %548 = vmatprep.subr.mxu0 0.0
      %549 = vmatpush1.msra.mxu0 0.0
      %550 = vmatprep.subr.mxu0 0.0
      %551 = vmatpush1.msra.mxu0 0.0
      %552 = vmatprep.subr.mxu0 0.0
      %553 = vmatpush1.msra.mxu0 0.0
      %554 = vmatprep.subr.mxu0 0.0
      %555 = vmatpush1.msra.mxu0 0.0
      %556 = vmatprep.subr.mxu0 0.0
      %557 = vmatpush1.msra.mxu0 0.0
      %558 = vmatprep.subr.mxu0 0.0
      %559 = vmatpush1.msra.mxu0 0.0
      %560 = vmatprep.subr.mxu0 0.0
      %561 = vmatpush1.msra.mxu0 0.0
      %562 = vmatprep.subr.mxu0 0.0
      %563 = vmatpush1.msra.mxu0 0.0
      %564 = vmatprep.subr.mxu0 0.0
      %565 = vmatpush1.msra.mxu0 0.0
      %566 = vmatprep.subr.mxu0 0.0
      %567 = vmatpush1.msra.mxu0 0.0
      %568 = vmatprep.subr.mxu0 0.0
      %569 = vmatpush1.msra.mxu0 0.0
      %570 = vmatprep.subr.mxu0 0.0
      %571 = vmatpush1.msra.mxu0 0.0
      %572 = vmatprep.subr.mxu0 0.0
      %573 = vmatpush1.msra.mxu0 0.0
      %574 = vmatprep.subr.mxu0 0.0
      %575 = vmatpush1.msra.mxu0 0.0
      %576 = vmatprep.subr.mxu0 0.0
      %577 = vmatpush1.msra.mxu0 0.0
      %578 = vmatprep.subr.mxu0 0.0
      %579 = vmatpush1.msra.mxu0 0.0
      %580 = vmatprep.subr.mxu0 0.0
      %581 = vmatpush1.msra.mxu0 0.0
      %582 = vmatprep.subr.mxu0 0.0
      %583 = vmatpush1.msra.mxu0 0.0
      %584 = vmatprep.subr.mxu0 0.0
      %585 = vmatpush1.msra.mxu0 0.0
      %586 = vmatprep.subr.mxu0 0.0
      %587 = vmatpush1.msra.mxu0 0.0
      %588 = vmatprep.subr.mxu0 0.0
      %589 = vmatpush1.msra.mxu0 0.0
      %590 = vmatprep.subr.mxu0 0.0
      %591 = vmatpush1.msra.mxu0 0.0
      %592 = vmatprep.subr.mxu0 0.0
      %593 = vmatpush1.msra.mxu0 0.0
      %594 = vmatprep.subr.mxu0 0.0
      %595 = vmatpush1.msra.mxu0 0.0
      %596 = vmatprep.subr.mxu0 0.0
      %597 = vmatpush1.msra.mxu0 0.0
      %598 = vmatprep.subr.mxu0 0.0
      %599 = vmatpush1.msra.mxu0 0.0
      %600 = vmatprep.subr.mxu0 0.0
      %601 = vmatpush1.msra.mxu0 0.0
      %602 = vmatprep.subr.mxu0 0.0
      %603 = vmatpush1.msra.mxu0 0.0
      %604 = vmatprep.subr.mxu0 0.0
      %605 = vmatpush1.msra.mxu0 0.0
      %606 = vmatprep.subr.mxu0 0.0
      %607 = vmatpush1.msra.mxu0 0.0
      %608 = vmatprep.subr.mxu0 0.0
      %609 = vmatpush1.msra.mxu0 0.0
      %610 = vmatprep.mubr.f32.mxu0 0.0
      %611 = vmatmul.mubr.f32.gmra.mrb[0].mxu0 %v447
      %v612 = vpop.f32.mrb[0].mxu0
      %v613 = vadd.f32 0.0, %v612
      %v614 = vpop.f32.mrb[0].mxu0
      %615 = vmatprep.mubr.f32.mxu0 0.0
      %616 = vmatmul.mubr.f32.gmra.mrb[0].mxu0 %v450
      %v617 = vpop.f32.mrb[0].mxu0
      %v618 = vadd.f32 0.0, %v617
      %v619 = vpop.f32.mrb[0].mxu0
      %620 = vmatprep.mubr.f32.mxu0 0.0
      %621 = vmatmul.mubr.f32.gmra.mrb[0].mxu0 %v453
      %v622 = vpop.f32.mrb[0].mxu0
      %v623 = vadd.f32 0.0, %v622
      %v624 = vpop.f32.mrb[0].mxu0
      %625 = vmatprep.mubr.f32.mxu0 0.0
      %626 = vmatmul.mubr.f32.gmra.mrb[0].mxu0 %v456
      %v627 = vpop.f32.mrb[0].mxu0
      %v628 = vadd.f32 0.0, %v627
      %v629 = vpop.f32.mrb[0].mxu0
      %630 = vmatprep.mubr.f32.mxu0 0.0
      %631 = vmatmul.mubr.f32.gmra.mrb[0].mxu0 %v459
      %v632 = vpop.f32.mrb[0].mxu0
      %v633 = vadd.f32 0.0, %v632
      %v634 = vpop.f32.mrb[0].mxu0
      %635 = vmatprep.mubr.f32.mxu0 0.0
      %636 = vmatmul.mubr.f32.gmra.mrb[0].mxu0 %v462
      %v637 = vpop.f32.mrb[0].mxu0
      %v638 = vadd.f32 0.0, %v637
      %v639 = vpop.f32.mrb[0].mxu0
      %640 = vmatprep.mubr.f32.mxu0 0.0
      %641 = vmatmul.mubr.f32.gmra.mrb[0].mxu0 %v465
      %v642 = vpop.f32.mrb[0].mxu0
      %v643 = vadd.f32 0.0, %v642
      %v644 = vpop.f32.mrb[0].mxu0
      %645 = vmatprep.mubr.f32.mxu0 0.0
      %646 = vmatmul.mubr.f32.gmra.mrb[0].mxu0 %v468
      %v647 = vpop.f32.mrb[0].mxu0
      %v648 = vadd.f32 0.0, %v647
      %v649 = vpop.f32.mrb[0].mxu0
      %650 = vmatprep.mubr.f32.mxu0 0.0
      %651 = vmatmul.mubr.f32.gmra.mrb[0].mxu0 %v471
      %v652 = vpop.f32.mrb[0].mxu0
      %v653 = vadd.f32 0.0, %v652
      %v654 = vpop.f32.mrb[0].mxu0
      %655 = vmatprep.mubr.f32.mxu0 0.0
      %656 = vmatmul.mubr.f32.gmra.mrb[0].mxu0 %v474
      %v657 = vpop.f32.mrb[0].mxu0
      %v658 = vadd.f32 0.0, %v657
      %v659 = vpop.f32.mrb[0].mxu0
      %660 = vmatprep.mubr.f32.mxu0 0.0
      %661 = vmatmul.mubr.f32.gmra.mrb[0].mxu0 %v477
      %v662 = vpop.f32.mrb[0].mxu0
      %v663 = vadd.f32 0.0, %v662
      %v664 = vpop.f32.mrb[0].mxu0
      %665 = vmatprep.mubr.f32.mxu0 0.0
      %666 = vmatmul.mubr.f32.gmra.mrb[0].mxu0 %v480
      %v667 = vpop.f32.mrb[0].mxu0
      %v668 = vadd.f32 0.0, %v667
      %v669 = vpop.f32.mrb[0].mxu0
      %670 = vmatprep.mubr.f32.mxu0 0.0
      %671 = vmatmul.mubr.f32.gmra.mrb[0].mxu0 %v483
      %v672 = vpop.f32.mrb[0].mxu0
      %v673 = vadd.f32 0.0, %v672
      %v674 = vpop.f32.mrb[0].mxu0
      %675 = vmatprep.mubr.f32.mxu0 0.0
      %676 = vmatmul.mubr.f32.gmra.mrb[0].mxu0 %v486
      %v677 = vpop.f32.mrb[0].mxu0
      %v678 = vadd.f32 0.0, %v677
      %v679 = vpop.f32.mrb[0].mxu0
      %680 = vmatprep.mubr.f32.mxu0 0.0
      %681 = vmatmul.mubr.f32.gmra.mrb[0].mxu0 %v489
      %v682 = vpop.f32.mrb[0].mxu0
      %v683 = vadd.f32 0.0, %v682
      %v684 = vpop.f32.mrb[0].mxu0
      %685 = vmatprep.mubr.f32.mxu0 0.0
      %686 = vmatmul.mubr.f32.gmra.mrb[0].mxu0 %v492
      %v687 = vpop.f32.mrb[0].mxu0
      %v688 = vadd.f32 0.0, %v687
      %v689 = vpop.f32.mrb[0].mxu0
      %690 = vmatprep.mubr.f32.mxu0 0.0
      %691 = vmatmul.mubr.f32.gmra.mrb[0].mxu0 %v495
      %v692 = vpop.f32.mrb[0].mxu0
      %v693 = vadd.f32 0.0, %v692
      %v694 = vpop.f32.mrb[0].mxu0
      %695 = vmatprep.mubr.f32.mxu0 0.0
      %696 = vmatmul.mubr.f32.gmra.mrb[0].mxu0 %v498
      %v697 = vpop.f32.mrb[0].mxu0
      %v698 = vadd.f32 0.0, %v697
      %v699 = vpop.f32.mrb[0].mxu0
      %700 = vmatprep.mubr.f32.mxu0 0.0
      %701 = vmatmul.mubr.f32.gmra.mrb[0].mxu0 %v501
      %v702 = vpop.f32.mrb[0].mxu0
      %v703 = vadd.f32 0.0, %v702
      %v704 = vpop.f32.mrb[0].mxu0
      %705 = vmatprep.mubr.f32.mxu0 0.0
      %706 = vmatmul.mubr.f32.gmra.mrb[0].mxu0 %v504
      %v707 = vpop.f32.mrb[0].mxu0
      %v708 = vadd.f32 0.0, %v707
      %v709 = vpop.f32.mrb[0].mxu0
      %710 = vmatprep.mubr.f32.mxu0 0.0
      %711 = vmatmul.mubr.f32.gmra.mrb[0].mxu0 %v507
      %v712 = vpop.f32.mrb[0].mxu0
      %v713 = vadd.f32 0.0, %v712
      %v714 = vpop.f32.mrb[0].mxu0
      %715 = vmatprep.mubr.f32.mxu0 0.0
      %716 = vmatmul.mubr.f32.gmra.mrb[0].mxu0 %v510
      %v717 = vpop.f32.mrb[0].mxu0
      %v718 = vadd.f32 0.0, %v717
      %v719 = vpop.f32.mrb[0].mxu0
      %720 = vmatprep.mubr.f32.mxu0 0.0
      %721 = vmatmul.mubr.f32.gmra.mrb[0].mxu0 %v513
      %v722 = vpop.f32.mrb[0].mxu0
      %v723 = vadd.f32 0.0, %v722
      %v724 = vpop.f32.mrb[0].mxu0
      %725 = vmatprep.mubr.f32.mxu0 0.0
      %726 = vmatmul.mubr.f32.gmra.mrb[0].mxu0 %v516
      %v727 = vpop.f32.mrb[0].mxu0
      %v728 = vadd.f32 0.0, %v727
      %v729 = vpop.f32.mrb[0].mxu0
      %730 = vmatprep.mubr.f32.mxu0 0.0
      %731 = vmatmul.mubr.f32.gmra.mrb[0].mxu0 %v519
      %v732 = vpop.f32.mrb[0].mxu0
      %v733 = vadd.f32 0.0, %v732
      %v734 = vpop.f32.mrb[0].mxu0
      %735 = vmatprep.mubr.f32.mxu0 0.0
      %736 = vmatmul.mubr.f32.gmra.mrb[0].mxu0 %v522
      %v737 = vpop.f32.mrb[0].mxu0
      %v738 = vadd.f32 0.0, %v737
      %v739 = vpop.f32.mrb[0].mxu0
      %740 = vmatprep.mubr.f32.mxu0 0.0
      %741 = vmatmul.mubr.f32.gmra.mrb[0].mxu0 %v525
      %v742 = vpop.f32.mrb[0].mxu0
      %v743 = vadd.f32 0.0, %v742
      %v744 = vpop.f32.mrb[0].mxu0
      %745 = vmatprep.mubr.f32.mxu0 0.0
      %746 = vmatmul.mubr.f32.gmra.mrb[0].mxu0 %v528
      %v747 = vpop.f32.mrb[0].mxu0
      %v748 = vadd.f32 0.0, %v747
      %v749 = vpop.f32.mrb[0].mxu0
      %750 = vmatprep.mubr.f32.mxu0 0.0
      %751 = vmatmul.mubr.f32.gmra.mrb[0].mxu0 %v531
      %v752 = vpop.f32.mrb[0].mxu0
      %v753 = vadd.f32 0.0, %v752
      %v754 = vpop.f32.mrb[0].mxu0
      %755 = vmatprep.mubr.f32.mxu0 0.0
      %756 = vmatmul.mubr.f32.gmra.mrb[0].mxu0 %v534
      %v757 = vpop.f32.mrb[0].mxu0
      %v758 = vadd.f32 0.0, %v757
      %v759 = vpop.f32.mrb[0].mxu0
      %760 = vmatprep.mubr.f32.mxu0 0.0
      %761 = vmatmul.mubr.f32.gmra.mrb[0].mxu0 %v537
      %v762 = vpop.f32.mrb[0].mxu0
      %v763 = vadd.f32 0.0, %v762
      %v764 = vpop.f32.mrb[0].mxu0
      %765 = vmatprep.mubr.f32.mxu0 0.0
      %766 = vmatmul.mubr.f32.gmra.mrb[0].mxu0 %v540
      %v767 = vpop.f32.mrb[0].mxu0
      %v768 = vadd.f32 0.0, %v767
      %v769 = vpop.f32.mrb[0].mxu0
      %770 = vdwg.mxu0
      %v772 = vsel %vm225, %v379, 0
      %v775 = vsel %vm225, %v380, 0
      %v778 = vsel %vm225, %v381, 0
      %v781 = vsel %vm225, %v382, 0
      %v784 = vsel %vm225, %v383, 0
      %v787 = vsel %vm225, %v384, 0
      %v790 = vsel %vm225, %v385, 0
      %v793 = vsel %vm225, %v386, 0
      %v796 = vsel %vm225, %v387, 0
      %v799 = vsel %vm225, %v388, 0
      %v802 = vsel %vm225, %v389, 0
      %v805 = vsel %vm225, %v390, 0
      %v808 = vsel %vm225, %v391, 0
      %v811 = vsel %vm225, %v392, 0
      %v814 = vsel %vm225, %v393, 0
      %v817 = vsel %vm225, %v394, 0
      %v820 = vsel %vm225, %v395, 0
      %v823 = vsel %vm225, %v396, 0
      %v826 = vsel %vm225, %v397, 0
      %v829 = vsel %vm225, %v398, 0
      %v832 = vsel %vm225, %v399, 0
      %v835 = vsel %vm225, %v400, 0
      %v838 = vsel %vm225, %v401, 0
      %v841 = vsel %vm225, %v402, 0
      %v844 = vsel %vm225, %v403, 0
      %v847 = vsel %vm225, %v404, 0
      %v850 = vsel %vm225, %v405, 0
      %v853 = vsel %vm225, %v406, 0
      %v856 = vsel %vm225, %v407, 0
      %v859 = vsel %vm225, %v408, 0
      %v862 = vsel %vm225, %v409, 0
      %v865 = vsel %vm225, %v410, 0
      %v868 = vsel %vm542, %v411, 0
      %870 = vmatprep.subr.mxu0 0.0
      %871 = vmatpush1.msra.mxu0 %v868
      %872 = vmatprep.subr.mxu0 0.0
      %873 = vmatpush1.msra.mxu0 0.0
      %874 = vmatprep.subr.mxu0 0.0
      %875 = vmatpush1.msra.mxu0 0.0
      %876 = vmatprep.subr.mxu0 0.0
      %877 = vmatpush1.msra.mxu0 0.0
      %878 = vmatprep.subr.mxu0 0.0
      %879 = vmatpush1.msra.mxu0 0.0
      %880 = vmatprep.subr.mxu0 0.0
      %881 = vmatpush1.msra.mxu0 0.0
      %882 = vmatprep.subr.mxu0 0.0
      %883 = vmatpush1.msra.mxu0 0.0
      %884 = vmatprep.subr.mxu0 0.0
      %885 = vmatpush1.msra.mxu0 0.0
      %886 = vmatprep.subr.mxu0 0.0
      %887 = vmatpush1.msra.mxu0 0.0
      %888 = vmatprep.subr.mxu0 0.0
      %889 = vmatpush1.msra.mxu0 0.0
      %890 = vmatprep.subr.mxu0 0.0
      %891 = vmatpush1.msra.mxu0 0.0
      %892 = vmatprep.subr.mxu0 0.0
      %893 = vmatpush1.msra.mxu0 0.0
      %894 = vmatprep.subr.mxu0 0.0
      %895 = vmatpush1.msra.mxu0 0.0
      %896 = vmatprep.subr.mxu0 0.0
      %897 = vmatpush1.msra.mxu0 0.0
      %898 = vmatprep.subr.mxu0 0.0
      %899 = vmatpush1.msra.mxu0 0.0
      %900 = vmatprep.subr.mxu0 0.0
      %901 = vmatpush1.msra.mxu0 0.0
      %902 = vmatprep.subr.mxu0 0.0
      %903 = vmatpush1.msra.mxu0 0.0
      %904 = vmatprep.subr.mxu0 0.0
      %905 = vmatpush1.msra.mxu0 0.0
      %906 = vmatprep.subr.mxu0 0.0
      %907 = vmatpush1.msra.mxu0 0.0
      %908 = vmatprep.subr.mxu0 0.0
      %909 = vmatpush1.msra.mxu0 0.0
      %910 = vmatprep.subr.mxu0 0.0
      %911 = vmatpush1.msra.mxu0 0.0
      %912 = vmatprep.subr.mxu0 0.0
      %913 = vmatpush1.msra.mxu0 0.0
      %914 = vmatprep.subr.mxu0 0.0
      %915 = vmatpush1.msra.mxu0 0.0
      %916 = vmatprep.subr.mxu0 0.0
      %917 = vmatpush1.msra.mxu0 0.0
      %918 = vmatprep.subr.mxu0 0.0
      %919 = vmatpush1.msra.mxu0 0.0
      %920 = vmatprep.subr.mxu0 0.0
      %921 = vmatpush1.msra.mxu0 0.0
      %922 = vmatprep.subr.mxu0 0.0
      %923 = vmatpush1.msra.mxu0 0.0
      %924 = vmatprep.subr.mxu0 0.0
      %925 = vmatpush1.msra.mxu0 0.0
      %926 = vmatprep.subr.mxu0 0.0
      %927 = vmatpush1.msra.mxu0 0.0
      %928 = vmatprep.subr.mxu0 0.0
      %929 = vmatpush1.msra.mxu0 0.0
      %930 = vmatprep.subr.mxu0 0.0
      %931 = vmatpush1.msra.mxu0 0.0
      %932 = vmatprep.subr.mxu0 0.0
      %933 = vmatpush1.msra.mxu0 0.0
      %934 = vmatprep.mubr.f32.mxu0 0.0
      %935 = vmatmul.mubr.f32.gmra.mrb[0].mxu0 %v772
      %v936 = vpop.f32.mrb[0].mxu0
      %v937 = vadd.f32 %v613, %v936
      %v938 = vpop.f32.mrb[0].mxu0
      %939 = vmatprep.mubr.f32.mxu0 0.0
      %940 = vmatmul.mubr.f32.gmra.mrb[0].mxu0 %v775
      %v941 = vpop.f32.mrb[0].mxu0
      %v942 = vadd.f32 %v618, %v941
      %v943 = vpop.f32.mrb[0].mxu0
      %944 = vmatprep.mubr.f32.mxu0 0.0
      %945 = vmatmul.mubr.f32.gmra.mrb[0].mxu0 %v778
      %v946 = vpop.f32.mrb[0].mxu0
      %v947 = vadd.f32 %v623, %v946
      %v948 = vpop.f32.mrb[0].mxu0
      %949 = vmatprep.mubr.f32.mxu0 0.0
      %950 = vmatmul.mubr.f32.gmra.mrb[0].mxu0 %v781
      %v951 = vpop.f32.mrb[0].mxu0
      %v952 = vadd.f32 %v628, %v951
      %v953 = vpop.f32.mrb[0].mxu0
      %954 = vmatprep.mubr.f32.mxu0 0.0
      %955 = vmatmul.mubr.f32.gmra.mrb[0].mxu0 %v784
      %v956 = vpop.f32.mrb[0].mxu0
      %v957 = vadd.f32 %v633, %v956
      %v958 = vpop.f32.mrb[0].mxu0
      %959 = vmatprep.mubr.f32.mxu0 0.0
      %960 = vmatmul.mubr.f32.gmra.mrb[0].mxu0 %v787
      %v961 = vpop.f32.mrb[0].mxu0
      %v962 = vadd.f32 %v638, %v961
      %v963 = vpop.f32.mrb[0].mxu0
      %964 = vmatprep.mubr.f32.mxu0 0.0
      %965 = vmatmul.mubr.f32.gmra.mrb[0].mxu0 %v790
      %v966 = vpop.f32.mrb[0].mxu0
      %v967 = vadd.f32 %v643, %v966
      %v968 = vpop.f32.mrb[0].mxu0
      %969 = vmatprep.mubr.f32.mxu0 0.0
      %970 = vmatmul.mubr.f32.gmra.mrb[0].mxu0 %v793
      %v971 = vpop.f32.mrb[0].mxu0
      %v972 = vadd.f32 %v648, %v971
      %v973 = vpop.f32.mrb[0].mxu0
      %974 = vmatprep.mubr.f32.mxu0 0.0
      %975 = vmatmul.mubr.f32.gmra.mrb[0].mxu0 %v796
      %v976 = vpop.f32.mrb[0].mxu0
      %v977 = vadd.f32 %v653, %v976
      %v978 = vpop.f32.mrb[0].mxu0
      %979 = vmatprep.mubr.f32.mxu0 0.0
      %980 = vmatmul.mubr.f32.gmra.mrb[0].mxu0 %v799
      %v981 = vpop.f32.mrb[0].mxu0
      %v982 = vadd.f32 %v658, %v981
      %v983 = vpop.f32.mrb[0].mxu0
      %984 = vmatprep.mubr.f32.mxu0 0.0
      %985 = vmatmul.mubr.f32.gmra.mrb[0].mxu0 %v802
      %v986 = vpop.f32.mrb[0].mxu0
      %v987 = vadd.f32 %v663, %v986
      %v988 = vpop.f32.mrb[0].mxu0
      %989 = vmatprep.mubr.f32.mxu0 0.0
      %990 = vmatmul.mubr.f32.gmra.mrb[0].mxu0 %v805
      %v991 = vpop.f32.mrb[0].mxu0
      %v992 = vadd.f32 %v668, %v991
      %v993 = vpop.f32.mrb[0].mxu0
      %994 = vmatprep.mubr.f32.mxu0 0.0
      %995 = vmatmul.mubr.f32.gmra.mrb[0].mxu0 %v808
      %v996 = vpop.f32.mrb[0].mxu0
      %v997 = vadd.f32 %v673, %v996
      %v998 = vpop.f32.mrb[0].mxu0
      %999 = vmatprep.mubr.f32.mxu0 0.0
      %1000 = vmatmul.mubr.f32.gmra.mrb[0].mxu0 %v811
      %v1001 = vpop.f32.mrb[0].mxu0
      %v1002 = vadd.f32 %v678, %v1001
      %v1003 = vpop.f32.mrb[0].mxu0
      %1004 = vmatprep.mubr.f32.mxu0 0.0
      %1005 = vmatmul.mubr.f32.gmra.mrb[0].mxu0 %v814
      %v1006 = vpop.f32.mrb[0].mxu0
      %v1007 = vadd.f32 %v683, %v1006
      %v1008 = vpop.f32.mrb[0].mxu0
      %1009 = vmatprep.mubr.f32.mxu0 0.0
      %1010 = vmatmul.mubr.f32.gmra.mrb[0].mxu0 %v817
      %v1011 = vpop.f32.mrb[0].mxu0
      %v1012 = vadd.f32 %v688, %v1011
      %v1013 = vpop.f32.mrb[0].mxu0
      %1014 = vmatprep.mubr.f32.mxu0 0.0
      %1015 = vmatmul.mubr.f32.gmra.mrb[0].mxu0 %v820
      %v1016 = vpop.f32.mrb[0].mxu0
      %v1017 = vadd.f32 %v693, %v1016
      %v1018 = vpop.f32.mrb[0].mxu0
      %1019 = vmatprep.mubr.f32.mxu0 0.0
      %1020 = vmatmul.mubr.f32.gmra.mrb[0].mxu0 %v823
      %v1021 = vpop.f32.mrb[0].mxu0
      %v1022 = vadd.f32 %v698, %v1021
      %v1023 = vpop.f32.mrb[0].mxu0
      %1024 = vmatprep.mubr.f32.mxu0 0.0
      %1025 = vmatmul.mubr.f32.gmra.mrb[0].mxu0 %v826
      %v1026 = vpop.f32.mrb[0].mxu0
      %v1027 = vadd.f32 %v703, %v1026
      %v1028 = vpop.f32.mrb[0].mxu0
      %1029 = vmatprep.mubr.f32.mxu0 0.0
      %1030 = vmatmul.mubr.f32.gmra.mrb[0].mxu0 %v829
      %v1031 = vpop.f32.mrb[0].mxu0
      %v1032 = vadd.f32 %v708, %v1031
      %v1033 = vpop.f32.mrb[0].mxu0
      %1034 = vmatprep.mubr.f32.mxu0 0.0
      %1035 = vmatmul.mubr.f32.gmra.mrb[0].mxu0 %v832
      %v1036 = vpop.f32.mrb[0].mxu0
      %v1037 = vadd.f32 %v713, %v1036
      %v1038 = vpop.f32.mrb[0].mxu0
      %1039 = vmatprep.mubr.f32.mxu0 0.0
      %1040 = vmatmul.mubr.f32.gmra.mrb[0].mxu0 %v835
      %v1041 = vpop.f32.mrb[0].mxu0
      %v1042 = vadd.f32 %v718, %v1041
      %v1043 = vpop.f32.mrb[0].mxu0
      %1044 = vmatprep.mubr.f32.mxu0 0.0
      %1045 = vmatmul.mubr.f32.gmra.mrb[0].mxu0 %v838
      %v1046 = vpop.f32.mrb[0].mxu0
      %v1047 = vadd.f32 %v723, %v1046
      %v1048 = vpop.f32.mrb[0].mxu0
      %1049 = vmatprep.mubr.f32.mxu0 0.0
      %1050 = vmatmul.mubr.f32.gmra.mrb[0].mxu0 %v841
      %v1051 = vpop.f32.mrb[0].mxu0
      %v1052 = vadd.f32 %v728, %v1051
      %v1053 = vpop.f32.mrb[0].mxu0
      %1054 = vmatprep.mubr.f32.mxu0 0.0
      %1055 = vmatmul.mubr.f32.gmra.mrb[0].mxu0 %v844
      %v1056 = vpop.f32.mrb[0].mxu0
      %v1057 = vadd.f32 %v733, %v1056
      %v1058 = vpop.f32.mrb[0].mxu0
      %1059 = vmatprep.mubr.f32.mxu0 0.0
      %1060 = vmatmul.mubr.f32.gmra.mrb[0].mxu0 %v847
      %v1061 = vpop.f32.mrb[0].mxu0
      %v1062 = vadd.f32 %v738, %v1061
      %v1063 = vpop.f32.mrb[0].mxu0
      %1064 = vmatprep.mubr.f32.mxu0 0.0
      %1065 = vmatmul.mubr.f32.gmra.mrb[0].mxu0 %v850
      %v1066 = vpop.f32.mrb[0].mxu0
      %v1067 = vadd.f32 %v743, %v1066
      %v1068 = vpop.f32.mrb[0].mxu0
      %1069 = vmatprep.mubr.f32.mxu0 0.0
      %1070 = vmatmul.mubr.f32.gmra.mrb[0].mxu0 %v853
      %v1071 = vpop.f32.mrb[0].mxu0
      %v1072 = vadd.f32 %v748, %v1071
      %v1073 = vpop.f32.mrb[0].mxu0
      %1074 = vmatprep.mubr.f32.mxu0 0.0
      %1075 = vmatmul.mubr.f32.gmra.mrb[0].mxu0 %v856
      %v1076 = vpop.f32.mrb[0].mxu0
      %v1077 = vadd.f32 %v753, %v1076
      %v1078 = vpop.f32.mrb[0].mxu0
      %1079 = vmatprep.mubr.f32.mxu0 0.0
      %1080 = vmatmul.mubr.f32.gmra.mrb[0].mxu0 %v859
      %v1081 = vpop.f32.mrb[0].mxu0
      %v1082 = vadd.f32 %v758, %v1081
      %v1083 = vpop.f32.mrb[0].mxu0
      %1084 = vmatprep.mubr.f32.mxu0 0.0
      %1085 = vmatmul.mubr.f32.gmra.mrb[0].mxu0 %v862
      %v1086 = vpop.f32.mrb[0].mxu0
      %v1087 = vadd.f32 %v763, %v1086
      %v1088 = vpop.f32.mrb[0].mxu0
      %1089 = vmatprep.mubr.f32.mxu0 0.0
      %1090 = vmatmul.mubr.f32.gmra.mrb[0].mxu0 %v865
      %v1091 = vpop.f32.mrb[0].mxu0
      %v1092 = vadd.f32 %v768, %v1091
      %v1093 = vpop.f32.mrb[0].mxu0
      %1094 = vdwg.mxu0
      %v1095 = vld [vmem:[#allocation2 + $0x2] sm:$0xff]
      %v1096 = vld [vmem:[#allocation2 + $0xa] sm:$0xff]
      %v1097 = vld [vmem:[#allocation2 + $0x1a] sm:$0xff]
      %v1098 = vld [vmem:[#allocation2 + $0x22] sm:$0xff]
      %v1099 = vld [vmem:[#allocation2 + $0x32] sm:$0xff]
      %v1100 = vld [vmem:[#allocation2 + $0x3a] sm:$0xff]
      %v1101 = vld [vmem:[#allocation2 + $0x4a] sm:$0xff]
      %v1102 = vld [vmem:[#allocation2 + $0x52] sm:$0xff]
      %v1103 = vld [vmem:[#allocation2 + $0x62] sm:$0xff]
      %v1104 = vld [vmem:[#allocation2 + $0x6a] sm:$0xff]
      %v1105 = vld [vmem:[#allocation2 + $0x7a] sm:$0xff]
      %v1106 = vld [vmem:[#allocation2 + $0x82] sm:$0xff]
      %v1107 = vld [vmem:[#allocation2 + $0x92] sm:$0xff]
      %v1108 = vld [vmem:[#allocation2 + $0x9a] sm:$0xff]
      %v1109 = vld [vmem:[#allocation2 + $0xaa] sm:$0xff]
      %v1110 = vld [vmem:[#allocation2 + $0xb2] sm:$0xff]
      %v1111 = vld [vmem:[#allocation2 + $0xc2] sm:$0xff]
      %v1112 = vld [vmem:[#allocation2 + $0xca] sm:$0xff]
      %v1113 = vld [vmem:[#allocation2 + $0xda] sm:$0xff]
      %v1114 = vld [vmem:[#allocation2 + $0xe2] sm:$0xff]
      %v1115 = vld [vmem:[#allocation2 + $0xf2] sm:$0xff]
      %v1116 = vld [vmem:[#allocation2 + $0xfa] sm:$0xff]
      %v1117 = vld [vmem:[#allocation2 + $0x10a] sm:$0xff]
      %v1118 = vld [vmem:[#allocation2 + $0x112] sm:$0xff]
      %v1119 = vld [vmem:[#allocation2 + $0x122] sm:$0xff]
      %v1120 = vld [vmem:[#allocation2 + $0x12a] sm:$0xff]
      %v1121 = vld [vmem:[#allocation2 + $0x13a] sm:$0xff]
      %v1122 = vld [vmem:[#allocation2 + $0x142] sm:$0xff]
      %v1123 = vld [vmem:[#allocation2 + $0x152] sm:$0xff]
      %v1124 = vld [vmem:[#allocation2 + $0x15a] sm:$0xff]
      %v1125 = vld [vmem:[#allocation2 + $0x16a] sm:$0xff]
      %v1126 = vld [vmem:[#allocation2 + $0x172] sm:$0xff]
      %s1127 = scalar_lea.vmem %s1, 8
      %v1128 = vld [vmem:[%s1127] sm:$0xf]
      %v1130 = vsel %vm225, %v1095, 0
      %v1133 = vsel %vm225, %v1096, 0
      %v1136 = vsel %vm225, %v1097, 0
      %v1139 = vsel %vm225, %v1098, 0
      %v1142 = vsel %vm225, %v1099, 0
      %v1145 = vsel %vm225, %v1100, 0
      %v1148 = vsel %vm225, %v1101, 0
      %v1151 = vsel %vm225, %v1102, 0
      %v1154 = vsel %vm225, %v1103, 0
      %v1157 = vsel %vm225, %v1104, 0
      %v1160 = vsel %vm225, %v1105, 0
      %v1163 = vsel %vm225, %v1106, 0
      %v1166 = vsel %vm225, %v1107, 0
      %v1169 = vsel %vm225, %v1108, 0
      %v1172 = vsel %vm225, %v1109, 0
      %v1175 = vsel %vm225, %v1110, 0
      %v1178 = vsel %vm225, %v1111, 0
      %v1181 = vsel %vm225, %v1112, 0
      %v1184 = vsel %vm225, %v1113, 0
      %v1187 = vsel %vm225, %v1114, 0
      %v1190 = vsel %vm225, %v1115, 0
      %v1193 = vsel %vm225, %v1116, 0
      %v1196 = vsel %vm225, %v1117, 0
      %v1199 = vsel %vm225, %v1118, 0
      %v1202 = vsel %vm225, %v1119, 0
      %v1205 = vsel %vm225, %v1120, 0
      %v1208 = vsel %vm225, %v1121, 0
      %v1211 = vsel %vm225, %v1122, 0
      %v1214 = vsel %vm225, %v1123, 0
      %v1217 = vsel %vm225, %v1124, 0
      %v1220 = vsel %vm225, %v1125, 0
      %v1223 = vsel %vm225, %v1126, 0
      %v1226 = vsel %vm542, %v1128, 0
      %1228 = vmatprep.subr.mxu0 0.0
      %1229 = vmatpush1.msra.mxu0 %v1226
      %1230 = vmatprep.subr.mxu0 0.0
      %1231 = vmatpush1.msra.mxu0 0.0
      %1232 = vmatprep.subr.mxu0 0.0
      %1233 = vmatpush1.msra.mxu0 0.0
      %1234 = vmatprep.subr.mxu0 0.0
      %1235 = vmatpush1.msra.mxu0 0.0
      %1236 = vmatprep.subr.mxu0 0.0
      %1237 = vmatpush1.msra.mxu0 0.0
      %1238 = vmatprep.subr.mxu0 0.0
      %1239 = vmatpush1.msra.mxu0 0.0
      %1240 = vmatprep.subr.mxu0 0.0
      %1241 = vmatpush1.msra.mxu0 0.0
      %1242 = vmatprep.subr.mxu0 0.0
      %1243 = vmatpush1.msra.mxu0 0.0
      %1244 = vmatprep.subr.mxu0 0.0
      %1245 = vmatpush1.msra.mxu0 0.0
      %1246 = vmatprep.subr.mxu0 0.0
      %1247 = vmatpush1.msra.mxu0 0.0
      %1248 = vmatprep.subr.mxu0 0.0
      %1249 = vmatpush1.msra.mxu0 0.0
      %1250 = vmatprep.subr.mxu0 0.0
      %1251 = vmatpush1.msra.mxu0 0.0
      %1252 = vmatprep.subr.mxu0 0.0
      %1253 = vmatpush1.msra.mxu0 0.0
      %1254 = vmatprep.subr.mxu0 0.0
      %1255 = vmatpush1.msra.mxu0 0.0
      %1256 = vmatprep.subr.mxu0 0.0
      %1257 = vmatpush1.msra.mxu0 0.0
      %1258 = vmatprep.subr.mxu0 0.0
      %1259 = vmatpush1.msra.mxu0 0.0
      %1260 = vmatprep.subr.mxu0 0.0
      %1261 = vmatpush1.msra.mxu0 0.0
      %1262 = vmatprep.subr.mxu0 0.0
      %1263 = vmatpush1.msra.mxu0 0.0
      %1264 = vmatprep.subr.mxu0 0.0
      %1265 = vmatpush1.msra.mxu0 0.0
      %1266 = vmatprep.subr.mxu0 0.0
      %1267 = vmatpush1.msra.mxu0 0.0
      %1268 = vmatprep.subr.mxu0 0.0
      %1269 = vmatpush1.msra.mxu0 0.0
      %1270 = vmatprep.subr.mxu0 0.0
      %1271 = vmatpush1.msra.mxu0 0.0
      %1272 = vmatprep.subr.mxu0 0.0
      %1273 = vmatpush1.msra.mxu0 0.0
      %1274 = vmatprep.subr.mxu0 0.0
      %1275 = vmatpush1.msra.mxu0 0.0
      %1276 = vmatprep.subr.mxu0 0.0
      %1277 = vmatpush1.msra.mxu0 0.0
      %1278 = vmatprep.subr.mxu0 0.0
      %1279 = vmatpush1.msra.mxu0 0.0
      %1280 = vmatprep.subr.mxu0 0.0
      %1281 = vmatpush1.msra.mxu0 0.0
      %1282 = vmatprep.subr.mxu0 0.0
      %1283 = vmatpush1.msra.mxu0 0.0
      %1284 = vmatprep.subr.mxu0 0.0
      %1285 = vmatpush1.msra.mxu0 0.0
      %1286 = vmatprep.subr.mxu0 0.0
      %1287 = vmatpush1.msra.mxu0 0.0
      %1288 = vmatprep.subr.mxu0 0.0
      %1289 = vmatpush1.msra.mxu0 0.0
      %1290 = vmatprep.subr.mxu0 0.0
      %1291 = vmatpush1.msra.mxu0 0.0
      %1292 = vmatprep.mubr.f32.mxu0 0.0
      %1293 = vmatmul.mubr.f32.gmra.mrb[0].mxu0 %v1130
      %v1294 = vpop.f32.mrb[0].mxu0
      %v1295 = vadd.f32 0.0, %v1294
      %v1296 = vpop.f32.mrb[0].mxu0
      %1297 = vmatprep.mubr.f32.mxu0 0.0
      %1298 = vmatmul.mubr.f32.gmra.mrb[0].mxu0 %v1133
      %v1299 = vpop.f32.mrb[0].mxu0
      %v1300 = vadd.f32 0.0, %v1299
      %v1301 = vpop.f32.mrb[0].mxu0
      %1302 = vmatprep.mubr.f32.mxu0 0.0
      %1303 = vmatmul.mubr.f32.gmra.mrb[0].mxu0 %v1136
      %v1304 = vpop.f32.mrb[0].mxu0
      %v1305 = vadd.f32 0.0, %v1304
      %v1306 = vpop.f32.mrb[0].mxu0
      %1307 = vmatprep.mubr.f32.mxu0 0.0
      %1308 = vmatmul.mubr.f32.gmra.mrb[0].mxu0 %v1139
      %v1309 = vpop.f32.mrb[0].mxu0
      %v1310 = vadd.f32 0.0, %v1309
      %v1311 = vpop.f32.mrb[0].mxu0
      %1312 = vmatprep.mubr.f32.mxu0 0.0
      %1313 = vmatmul.mubr.f32.gmra.mrb[0].mxu0 %v1142
      %v1314 = vpop.f32.mrb[0].mxu0
      %v1315 = vadd.f32 0.0, %v1314
      %v1316 = vpop.f32.mrb[0].mxu0
      %1317 = vmatprep.mubr.f32.mxu0 0.0
      %1318 = vmatmul.mubr.f32.gmra.mrb[0].mxu0 %v1145
      %v1319 = vpop.f32.mrb[0].mxu0
      %v1320 = vadd.f32 0.0, %v1319
      %v1321 = vpop.f32.mrb[0].mxu0
      %1322 = vmatprep.mubr.f32.mxu0 0.0
      %1323 = vmatmul.mubr.f32.gmra.mrb[0].mxu0 %v1148
      %v1324 = vpop.f32.mrb[0].mxu0
      %v1325 = vadd.f32 0.0, %v1324
      %v1326 = vpop.f32.mrb[0].mxu0
      %1327 = vmatprep.mubr.f32.mxu0 0.0
      %1328 = vmatmul.mubr.f32.gmra.mrb[0].mxu0 %v1151
      %v1329 = vpop.f32.mrb[0].mxu0
      %v1330 = vadd.f32 0.0, %v1329
      %v1331 = vpop.f32.mrb[0].mxu0
      %1332 = vmatprep.mubr.f32.mxu0 0.0
      %1333 = vmatmul.mubr.f32.gmra.mrb[0].mxu0 %v1154
      %v1334 = vpop.f32.mrb[0].mxu0
      %v1335 = vadd.f32 0.0, %v1334
      %v1336 = vpop.f32.mrb[0].mxu0
      %1337 = vmatprep.mubr.f32.mxu0 0.0
      %1338 = vmatmul.mubr.f32.gmra.mrb[0].mxu0 %v1157
      %v1339 = vpop.f32.mrb[0].mxu0
      %v1340 = vadd.f32 0.0, %v1339
      %v1341 = vpop.f32.mrb[0].mxu0
      %1342 = vmatprep.mubr.f32.mxu0 0.0
      %1343 = vmatmul.mubr.f32.gmra.mrb[0].mxu0 %v1160
      %v1344 = vpop.f32.mrb[0].mxu0
      %v1345 = vadd.f32 0.0, %v1344
      %v1346 = vpop.f32.mrb[0].mxu0
      %1347 = vmatprep.mubr.f32.mxu0 0.0
      %1348 = vmatmul.mubr.f32.gmra.mrb[0].mxu0 %v1163
      %v1349 = vpop.f32.mrb[0].mxu0
      %v1350 = vadd.f32 0.0, %v1349
      %v1351 = vpop.f32.mrb[0].mxu0
      %1352 = vmatprep.mubr.f32.mxu0 0.0
      %1353 = vmatmul.mubr.f32.gmra.mrb[0].mxu0 %v1166
      %v1354 = vpop.f32.mrb[0].mxu0
      %v1355 = vadd.f32 0.0, %v1354
      %v1356 = vpop.f32.mrb[0].mxu0
      %1357 = vmatprep.mubr.f32.mxu0 0.0
      %1358 = vmatmul.mubr.f32.gmra.mrb[0].mxu0 %v1169
      %v1359 = vpop.f32.mrb[0].mxu0
      %v1360 = vadd.f32 0.0, %v1359
      %v1361 = vpop.f32.mrb[0].mxu0
      %1362 = vmatprep.mubr.f32.mxu0 0.0
      %1363 = vmatmul.mubr.f32.gmra.mrb[0].mxu0 %v1172
      %v1364 = vpop.f32.mrb[0].mxu0
      %v1365 = vadd.f32 0.0, %v1364
      %v1366 = vpop.f32.mrb[0].mxu0
      %1367 = vmatprep.mubr.f32.mxu0 0.0
      %1368 = vmatmul.mubr.f32.gmra.mrb[0].mxu0 %v1175
      %v1369 = vpop.f32.mrb[0].mxu0
      %v1370 = vadd.f32 0.0, %v1369
      %v1371 = vpop.f32.mrb[0].mxu0
      %1372 = vmatprep.mubr.f32.mxu0 0.0
      %1373 = vmatmul.mubr.f32.gmra.mrb[0].mxu0 %v1178
      %v1374 = vpop.f32.mrb[0].mxu0
      %v1375 = vadd.f32 0.0, %v1374
      %v1376 = vpop.f32.mrb[0].mxu0
      %1377 = vmatprep.mubr.f32.mxu0 0.0
      %1378 = vmatmul.mubr.f32.gmra.mrb[0].mxu0 %v1181
      %v1379 = vpop.f32.mrb[0].mxu0
      %v1380 = vadd.f32 0.0, %v1379
      %v1381 = vpop.f32.mrb[0].mxu0
      %1382 = vmatprep.mubr.f32.mxu0 0.0
      %1383 = vmatmul.mubr.f32.gmra.mrb[0].mxu0 %v1184
      %v1384 = vpop.f32.mrb[0].mxu0
      %v1385 = vadd.f32 0.0, %v1384
      %v1386 = vpop.f32.mrb[0].mxu0
      %1387 = vmatprep.mubr.f32.mxu0 0.0
      %1388 = vmatmul.mubr.f32.gmra.mrb[0].mxu0 %v1187
      %v1389 = vpop.f32.mrb[0].mxu0
      %v1390 = vadd.f32 0.0, %v1389
      %v1391 = vpop.f32.mrb[0].mxu0
      %1392 = vmatprep.mubr.f32.mxu0 0.0
      %1393 = vmatmul.mubr.f32.gmra.mrb[0].mxu0 %v1190
      %v1394 = vpop.f32.mrb[0].mxu0
      %v1395 = vadd.f32 0.0, %v1394
      %v1396 = vpop.f32.mrb[0].mxu0
      %1397 = vmatprep.mubr.f32.mxu0 0.0
      %1398 = vmatmul.mubr.f32.gmra.mrb[0].mxu0 %v1193
      %v1399 = vpop.f32.mrb[0].mxu0
      %v1400 = vadd.f32 0.0, %v1399
      %v1401 = vpop.f32.mrb[0].mxu0
      %1402 = vmatprep.mubr.f32.mxu0 0.0
      %1403 = vmatmul.mubr.f32.gmra.mrb[0].mxu0 %v1196
      %v1404 = vpop.f32.mrb[0].mxu0
      %v1405 = vadd.f32 0.0, %v1404
      %v1406 = vpop.f32.mrb[0].mxu0
      %1407 = vmatprep.mubr.f32.mxu0 0.0
      %1408 = vmatmul.mubr.f32.gmra.mrb[0].mxu0 %v1199
      %v1409 = vpop.f32.mrb[0].mxu0
      %v1410 = vadd.f32 0.0, %v1409
      %v1411 = vpop.f32.mrb[0].mxu0
      %1412 = vmatprep.mubr.f32.mxu0 0.0
      %1413 = vmatmul.mubr.f32.gmra.mrb[0].mxu0 %v1202
      %v1414 = vpop.f32.mrb[0].mxu0
      %v1415 = vadd.f32 0.0, %v1414
      %v1416 = vpop.f32.mrb[0].mxu0
      %1417 = vmatprep.mubr.f32.mxu0 0.0
      %1418 = vmatmul.mubr.f32.gmra.mrb[0].mxu0 %v1205
      %v1419 = vpop.f32.mrb[0].mxu0
      %v1420 = vadd.f32 0.0, %v1419
      %v1421 = vpop.f32.mrb[0].mxu0
      %1422 = vmatprep.mubr.f32.mxu0 0.0
      %1423 = vmatmul.mubr.f32.gmra.mrb[0].mxu0 %v1208
      %v1424 = vpop.f32.mrb[0].mxu0
      %v1425 = vadd.f32 0.0, %v1424
      %v1426 = vpop.f32.mrb[0].mxu0
      %1427 = vmatprep.mubr.f32.mxu0 0.0
      %1428 = vmatmul.mubr.f32.gmra.mrb[0].mxu0 %v1211
      %v1429 = vpop.f32.mrb[0].mxu0
      %v1430 = vadd.f32 0.0, %v1429
      %v1431 = vpop.f32.mrb[0].mxu0
      %1432 = vmatprep.mubr.f32.mxu0 0.0
      %1433 = vmatmul.mubr.f32.gmra.mrb[0].mxu0 %v1214
      %v1434 = vpop.f32.mrb[0].mxu0
      %v1435 = vadd.f32 0.0, %v1434
      %v1436 = vpop.f32.mrb[0].mxu0
      %1437 = vmatprep.mubr.f32.mxu0 0.0
      %1438 = vmatmul.mubr.f32.gmra.mrb[0].mxu0 %v1217
      %v1439 = vpop.f32.mrb[0].mxu0
      %v1440 = vadd.f32 0.0, %v1439
      %v1441 = vpop.f32.mrb[0].mxu0
      %1442 = vmatprep.mubr.f32.mxu0 0.0
      %1443 = vmatmul.mubr.f32.gmra.mrb[0].mxu0 %v1220
      %v1444 = vpop.f32.mrb[0].mxu0
      %v1445 = vadd.f32 0.0, %v1444
      %v1446 = vpop.f32.mrb[0].mxu0
      %1447 = vmatprep.mubr.f32.mxu0 0.0
      %1448 = vmatmul.mubr.f32.gmra.mrb[0].mxu0 %v1223
      %v1449 = vpop.f32.mrb[0].mxu0
      %v1450 = vadd.f32 0.0, %v1449
      %v1451 = vpop.f32.mrb[0].mxu0
      %1452 = vdwg.mxu0
      %v1453 = vadd.f32 %v937, %v1295
      %v1454 = vadd.f32 %v942, %v1300
      %v1455 = vadd.f32 %v947, %v1305
      %v1456 = vadd.f32 %v952, %v1310
      %v1457 = vadd.f32 %v957, %v1315
      %v1458 = vadd.f32 %v962, %v1320
      %v1459 = vadd.f32 %v967, %v1325
      %v1460 = vadd.f32 %v972, %v1330
      %v1461 = vadd.f32 %v977, %v1335
      %v1462 = vadd.f32 %v982, %v1340
      %v1463 = vadd.f32 %v987, %v1345
      %v1464 = vadd.f32 %v992, %v1350
      %v1465 = vadd.f32 %v997, %v1355
      %v1466 = vadd.f32 %v1002, %v1360
      %v1467 = vadd.f32 %v1007, %v1365
      %v1468 = vadd.f32 %v1012, %v1370
      %v1469 = vadd.f32 %v1017, %v1375
      %v1470 = vadd.f32 %v1022, %v1380
      %v1471 = vadd.f32 %v1027, %v1385
      %v1472 = vadd.f32 %v1032, %v1390
      %v1473 = vadd.f32 %v1037, %v1395
      %v1474 = vadd.f32 %v1042, %v1400
      %v1475 = vadd.f32 %v1047, %v1405
      %v1476 = vadd.f32 %v1052, %v1410
      %v1477 = vadd.f32 %v1057, %v1415
      %v1478 = vadd.f32 %v1062, %v1420
      %v1479 = vadd.f32 %v1067, %v1425
      %v1480 = vadd.f32 %v1072, %v1430
      %v1481 = vadd.f32 %v1077, %v1435
      %v1482 = vadd.f32 %v1082, %v1440
      %v1483 = vadd.f32 %v1087, %v1445
      %v1484 = vadd.f32 %v1092, %v1450
      %v1485 = vld [vmem:[%s346] sm:$0xff]
      %v1486 = vld [vmem:[%s346 + $0x8] sm:$0xff]
      %v1487 = vld [vmem:[%s346 + $0x18] sm:$0xff]
      %v1488 = vld [vmem:[%s346 + $0x20] sm:$0xff]
      %v1489 = vld [vmem:[%s346 + $0x30] sm:$0xff]
      %v1490 = vld [vmem:[%s346 + $0x38] sm:$0xff]
      %v1491 = vld [vmem:[%s346 + $0x48] sm:$0xff]
      %v1492 = vld [vmem:[%s346 + $0x50] sm:$0xff]
      %v1493 = vld [vmem:[%s346 + $0x60] sm:$0xff]
      %v1494 = vld [vmem:[%s346 + $0x68] sm:$0xff]
      %v1495 = vld [vmem:[%s346 + $0x78] sm:$0xff]
      %v1496 = vld [vmem:[%s346 + $0x80] sm:$0xff]
      %v1497 = vld [vmem:[%s346 + $0x90] sm:$0xff]
      %v1498 = vld [vmem:[%s346 + $0x98] sm:$0xff]
      %v1499 = vld [vmem:[%s346 + $0xa8] sm:$0xff]
      %v1500 = vld [vmem:[%s346 + $0xb0] sm:$0xff]
      %v1501 = vld [vmem:[%s346 + $0xc0] sm:$0xff]
      %v1502 = vld [vmem:[%s346 + $0xc8] sm:$0xff]
      %v1503 = vld [vmem:[%s346 + $0xd8] sm:$0xff]
      %v1504 = vld [vmem:[%s346 + $0xe0] sm:$0xff]
      %v1505 = vld [vmem:[%s346 + $0xf0] sm:$0xff]
      %v1506 = vld [vmem:[%s346 + $0xf8] sm:$0xff]
      %v1507 = vld [vmem:[%s346 + $0x108] sm:$0xff]
      %v1508 = vld [vmem:[%s346 + $0x110] sm:$0xff]
      %v1509 = vld [vmem:[%s346 + $0x120] sm:$0xff]
      %v1510 = vld [vmem:[%s346 + $0x128] sm:$0xff]
      %v1511 = vld [vmem:[%s346 + $0x138] sm:$0xff]
      %v1512 = vld [vmem:[%s346 + $0x140] sm:$0xff]
      %v1513 = vld [vmem:[%s346 + $0x150] sm:$0xff]
      %v1514 = vld [vmem:[%s346 + $0x158] sm:$0xff]
      %v1515 = vld [vmem:[%s346 + $0x168] sm:$0xff]
      %v1516 = vld [vmem:[%s346 + $0x170] sm:$0xff]
      %s1517 = scalar_lea.vmem %s1, 12
      %v1518 = vld [vmem:[%s1517] sm:$0xf]
      %v1520 = vsel %vm225, %v1485, 0
      %v1523 = vsel %vm225, %v1486, 0
      %v1526 = vsel %vm225, %v1487, 0
      %v1529 = vsel %vm225, %v1488, 0
      %v1532 = vsel %vm225, %v1489, 0
      %v1535 = vsel %vm225, %v1490, 0
      %v1538 = vsel %vm225, %v1491, 0
      %v1541 = vsel %vm225, %v1492, 0
      %v1544 = vsel %vm225, %v1493, 0
      %v1547 = vsel %vm225, %v1494, 0
      %v1550 = vsel %vm225, %v1495, 0
      %v1553 = vsel %vm225, %v1496, 0
      %v1556 = vsel %vm225, %v1497, 0
      %v1559 = vsel %vm225, %v1498, 0
      %v1562 = vsel %vm225, %v1499, 0
      %v1565 = vsel %vm225, %v1500, 0
      %v1568 = vsel %vm225, %v1501, 0
      %v1571 = vsel %vm225, %v1502, 0
      %v1574 = vsel %vm225, %v1503, 0
      %v1577 = vsel %vm225, %v1504, 0
      %v1580 = vsel %vm225, %v1505, 0
      %v1583 = vsel %vm225, %v1506, 0
      %v1586 = vsel %vm225, %v1507, 0
      %v1589 = vsel %vm225, %v1508, 0
      %v1592 = vsel %vm225, %v1509, 0
      %v1595 = vsel %vm225, %v1510, 0
      %v1598 = vsel %vm225, %v1511, 0
      %v1601 = vsel %vm225, %v1512, 0
      %v1604 = vsel %vm225, %v1513, 0
      %v1607 = vsel %vm225, %v1514, 0
      %v1610 = vsel %vm225, %v1515, 0
      %v1613 = vsel %vm225, %v1516, 0
      %v1616 = vsel %vm542, %v1518, 0
      %1618 = vmatprep.subr.mxu0 0.0
      %1619 = vmatpush1.msra.mxu0 %v1616
      %1620 = vmatprep.subr.mxu0 0.0
      %1621 = vmatpush1.msra.mxu0 0.0
      %1622 = vmatprep.subr.mxu0 0.0
      %1623 = vmatpush1.msra.mxu0 0.0
      %1624 = vmatprep.subr.mxu0 0.0
      %1625 = vmatpush1.msra.mxu0 0.0
      %1626 = vmatprep.subr.mxu0 0.0
      %1627 = vmatpush1.msra.mxu0 0.0
      %1628 = vmatprep.subr.mxu0 0.0
      %1629 = vmatpush1.msra.mxu0 0.0
      %1630 = vmatprep.subr.mxu0 0.0
      %1631 = vmatpush1.msra.mxu0 0.0
      %1632 = vmatprep.subr.mxu0 0.0
      %1633 = vmatpush1.msra.mxu0 0.0
      %1634 = vmatprep.subr.mxu0 0.0
      %1635 = vmatpush1.msra.mxu0 0.0
      %1636 = vmatprep.subr.mxu0 0.0
      %1637 = vmatpush1.msra.mxu0 0.0
      %1638 = vmatprep.subr.mxu0 0.0
      %1639 = vmatpush1.msra.mxu0 0.0
      %1640 = vmatprep.subr.mxu0 0.0
      %1641 = vmatpush1.msra.mxu0 0.0
      %1642 = vmatprep.subr.mxu0 0.0
      %1643 = vmatpush1.msra.mxu0 0.0
      %1644 = vmatprep.subr.mxu0 0.0
      %1645 = vmatpush1.msra.mxu0 0.0
      %1646 = vmatprep.subr.mxu0 0.0
      %1647 = vmatpush1.msra.mxu0 0.0
      %1648 = vmatprep.subr.mxu0 0.0
      %1649 = vmatpush1.msra.mxu0 0.0
      %1650 = vmatprep.subr.mxu0 0.0
      %1651 = vmatpush1.msra.mxu0 0.0
      %1652 = vmatprep.subr.mxu0 0.0
      %1653 = vmatpush1.msra.mxu0 0.0
      %1654 = vmatprep.subr.mxu0 0.0
      %1655 = vmatpush1.msra.mxu0 0.0
      %1656 = vmatprep.subr.mxu0 0.0
      %1657 = vmatpush1.msra.mxu0 0.0
      %1658 = vmatprep.subr.mxu0 0.0
      %1659 = vmatpush1.msra.mxu0 0.0
      %1660 = vmatprep.subr.mxu0 0.0
      %1661 = vmatpush1.msra.mxu0 0.0
      %1662 = vmatprep.subr.mxu0 0.0
      %1663 = vmatpush1.msra.mxu0 0.0
      %1664 = vmatprep.subr.mxu0 0.0
      %1665 = vmatpush1.msra.mxu0 0.0
      %1666 = vmatprep.subr.mxu0 0.0
      %1667 = vmatpush1.msra.mxu0 0.0
      %1668 = vmatprep.subr.mxu0 0.0
      %1669 = vmatpush1.msra.mxu0 0.0
      %1670 = vmatprep.subr.mxu0 0.0
      %1671 = vmatpush1.msra.mxu0 0.0
      %1672 = vmatprep.subr.mxu0 0.0
      %1673 = vmatpush1.msra.mxu0 0.0
      %1674 = vmatprep.subr.mxu0 0.0
      %1675 = vmatpush1.msra.mxu0 0.0
      %1676 = vmatprep.subr.mxu0 0.0
      %1677 = vmatpush1.msra.mxu0 0.0
      %1678 = vmatprep.subr.mxu0 0.0
      %1679 = vmatpush1.msra.mxu0 0.0
      %1680 = vmatprep.subr.mxu0 0.0
      %1681 = vmatpush1.msra.mxu0 0.0
      %1682 = vmatprep.mubr.f32.mxu0 0.0
      %1683 = vmatmul.mubr.f32.gmra.mrb[0].mxu0 %v1520
      %v1684 = vpop.f32.mrb[0].mxu0
      %v1685 = vadd.f32 0.0, %v1684
      %v1686 = vpop.f32.mrb[0].mxu0
      %1687 = vmatprep.mubr.f32.mxu0 0.0
      %1688 = vmatmul.mubr.f32.gmra.mrb[0].mxu0 %v1523
      %v1689 = vpop.f32.mrb[0].mxu0
      %v1690 = vadd.f32 0.0, %v1689
      %v1691 = vpop.f32.mrb[0].mxu0
      %1692 = vmatprep.mubr.f32.mxu0 0.0
      %1693 = vmatmul.mubr.f32.gmra.mrb[0].mxu0 %v1526
      %v1694 = vpop.f32.mrb[0].mxu0
      %v1695 = vadd.f32 0.0, %v1694
      %v1696 = vpop.f32.mrb[0].mxu0
      %1697 = vmatprep.mubr.f32.mxu0 0.0
      %1698 = vmatmul.mubr.f32.gmra.mrb[0].mxu0 %v1529
      %v1699 = vpop.f32.mrb[0].mxu0
      %v1700 = vadd.f32 0.0, %v1699
      %v1701 = vpop.f32.mrb[0].mxu0
      %1702 = vmatprep.mubr.f32.mxu0 0.0
      %1703 = vmatmul.mubr.f32.gmra.mrb[0].mxu0 %v1532
      %v1704 = vpop.f32.mrb[0].mxu0
      %v1705 = vadd.f32 0.0, %v1704
      %v1706 = vpop.f32.mrb[0].mxu0
      %1707 = vmatprep.mubr.f32.mxu0 0.0
      %1708 = vmatmul.mubr.f32.gmra.mrb[0].mxu0 %v1535
      %v1709 = vpop.f32.mrb[0].mxu0
      %v1710 = vadd.f32 0.0, %v1709
      %v1711 = vpop.f32.mrb[0].mxu0
      %1712 = vmatprep.mubr.f32.mxu0 0.0
      %1713 = vmatmul.mubr.f32.gmra.mrb[0].mxu0 %v1538
      %v1714 = vpop.f32.mrb[0].mxu0
      %v1715 = vadd.f32 0.0, %v1714
      %v1716 = vpop.f32.mrb[0].mxu0
      %1717 = vmatprep.mubr.f32.mxu0 0.0
      %1718 = vmatmul.mubr.f32.gmra.mrb[0].mxu0 %v1541
      %v1719 = vpop.f32.mrb[0].mxu0
      %v1720 = vadd.f32 0.0, %v1719
      %v1721 = vpop.f32.mrb[0].mxu0
      %1722 = vmatprep.mubr.f32.mxu0 0.0
      %1723 = vmatmul.mubr.f32.gmra.mrb[0].mxu0 %v1544
      %v1724 = vpop.f32.mrb[0].mxu0
      %v1725 = vadd.f32 0.0, %v1724
      %v1726 = vpop.f32.mrb[0].mxu0
      %1727 = vmatprep.mubr.f32.mxu0 0.0
      %1728 = vmatmul.mubr.f32.gmra.mrb[0].mxu0 %v1547
      %v1729 = vpop.f32.mrb[0].mxu0
      %v1730 = vadd.f32 0.0, %v1729
      %v1731 = vpop.f32.mrb[0].mxu0
      %1732 = vmatprep.mubr.f32.mxu0 0.0
      %1733 = vmatmul.mubr.f32.gmra.mrb[0].mxu0 %v1550
      %v1734 = vpop.f32.mrb[0].mxu0
      %v1735 = vadd.f32 0.0, %v1734
      %v1736 = vpop.f32.mrb[0].mxu0
      %1737 = vmatprep.mubr.f32.mxu0 0.0
      %1738 = vmatmul.mubr.f32.gmra.mrb[0].mxu0 %v1553
      %v1739 = vpop.f32.mrb[0].mxu0
      %v1740 = vadd.f32 0.0, %v1739
      %v1741 = vpop.f32.mrb[0].mxu0
      %1742 = vmatprep.mubr.f32.mxu0 0.0
      %1743 = vmatmul.mubr.f32.gmra.mrb[0].mxu0 %v1556
      %v1744 = vpop.f32.mrb[0].mxu0
      %v1745 = vadd.f32 0.0, %v1744
      %v1746 = vpop.f32.mrb[0].mxu0
      %1747 = vmatprep.mubr.f32.mxu0 0.0
      %1748 = vmatmul.mubr.f32.gmra.mrb[0].mxu0 %v1559
      %v1749 = vpop.f32.mrb[0].mxu0
      %v1750 = vadd.f32 0.0, %v1749
      %v1751 = vpop.f32.mrb[0].mxu0
      %1752 = vmatprep.mubr.f32.mxu0 0.0
      %1753 = vmatmul.mubr.f32.gmra.mrb[0].mxu0 %v1562
      %v1754 = vpop.f32.mrb[0].mxu0
      %v1755 = vadd.f32 0.0, %v1754
      %v1756 = vpop.f32.mrb[0].mxu0
      %1757 = vmatprep.mubr.f32.mxu0 0.0
      %1758 = vmatmul.mubr.f32.gmra.mrb[0].mxu0 %v1565
      %v1759 = vpop.f32.mrb[0].mxu0
      %v1760 = vadd.f32 0.0, %v1759
      %v1761 = vpop.f32.mrb[0].mxu0
      %1762 = vmatprep.mubr.f32.mxu0 0.0
      %1763 = vmatmul.mubr.f32.gmra.mrb[0].mxu0 %v1568
      %v1764 = vpop.f32.mrb[0].mxu0
      %v1765 = vadd.f32 0.0, %v1764
      %v1766 = vpop.f32.mrb[0].mxu0
      %1767 = vmatprep.mubr.f32.mxu0 0.0
      %1768 = vmatmul.mubr.f32.gmra.mrb[0].mxu0 %v1571
      %v1769 = vpop.f32.mrb[0].mxu0
      %v1770 = vadd.f32 0.0, %v1769
      %v1771 = vpop.f32.mrb[0].mxu0
      %1772 = vmatprep.mubr.f32.mxu0 0.0
      %1773 = vmatmul.mubr.f32.gmra.mrb[0].mxu0 %v1574
      %v1774 = vpop.f32.mrb[0].mxu0
      %v1775 = vadd.f32 0.0, %v1774
      %v1776 = vpop.f32.mrb[0].mxu0
      %1777 = vmatprep.mubr.f32.mxu0 0.0
      %1778 = vmatmul.mubr.f32.gmra.mrb[0].mxu0 %v1577
      %v1779 = vpop.f32.mrb[0].mxu0
      %v1780 = vadd.f32 0.0, %v1779
      %v1781 = vpop.f32.mrb[0].mxu0
      %1782 = vmatprep.mubr.f32.mxu0 0.0
      %1783 = vmatmul.mubr.f32.gmra.mrb[0].mxu0 %v1580
      %v1784 = vpop.f32.mrb[0].mxu0
      %v1785 = vadd.f32 0.0, %v1784
      %v1786 = vpop.f32.mrb[0].mxu0
      %1787 = vmatprep.mubr.f32.mxu0 0.0
      %1788 = vmatmul.mubr.f32.gmra.mrb[0].mxu0 %v1583
      %v1789 = vpop.f32.mrb[0].mxu0
      %v1790 = vadd.f32 0.0, %v1789
      %v1791 = vpop.f32.mrb[0].mxu0
      %1792 = vmatprep.mubr.f32.mxu0 0.0
      %1793 = vmatmul.mubr.f32.gmra.mrb[0].mxu0 %v1586
      %v1794 = vpop.f32.mrb[0].mxu0
      %v1795 = vadd.f32 0.0, %v1794
      %v1796 = vpop.f32.mrb[0].mxu0
      %1797 = vmatprep.mubr.f32.mxu0 0.0
      %1798 = vmatmul.mubr.f32.gmra.mrb[0].mxu0 %v1589
      %v1799 = vpop.f32.mrb[0].mxu0
      %v1800 = vadd.f32 0.0, %v1799
      %v1801 = vpop.f32.mrb[0].mxu0
      %1802 = vmatprep.mubr.f32.mxu0 0.0
      %1803 = vmatmul.mubr.f32.gmra.mrb[0].mxu0 %v1592
      %v1804 = vpop.f32.mrb[0].mxu0
      %v1805 = vadd.f32 0.0, %v1804
      %v1806 = vpop.f32.mrb[0].mxu0
      %1807 = vmatprep.mubr.f32.mxu0 0.0
      %1808 = vmatmul.mubr.f32.gmra.mrb[0].mxu0 %v1595
      %v1809 = vpop.f32.mrb[0].mxu0
      %v1810 = vadd.f32 0.0, %v1809
      %v1811 = vpop.f32.mrb[0].mxu0
      %1812 = vmatprep.mubr.f32.mxu0 0.0
      %1813 = vmatmul.mubr.f32.gmra.mrb[0].mxu0 %v1598
      %v1814 = vpop.f32.mrb[0].mxu0
      %v1815 = vadd.f32 0.0, %v1814
      %v1816 = vpop.f32.mrb[0].mxu0
      %1817 = vmatprep.mubr.f32.mxu0 0.0
      %1818 = vmatmul.mubr.f32.gmra.mrb[0].mxu0 %v1601
      %v1819 = vpop.f32.mrb[0].mxu0
      %v1820 = vadd.f32 0.0, %v1819
      %v1821 = vpop.f32.mrb[0].mxu0
      %1822 = vmatprep.mubr.f32.mxu0 0.0
      %1823 = vmatmul.mubr.f32.gmra.mrb[0].mxu0 %v1604
      %v1824 = vpop.f32.mrb[0].mxu0
      %v1825 = vadd.f32 0.0, %v1824
      %v1826 = vpop.f32.mrb[0].mxu0
      %1827 = vmatprep.mubr.f32.mxu0 0.0
      %1828 = vmatmul.mubr.f32.gmra.mrb[0].mxu0 %v1607
      %v1829 = vpop.f32.mrb[0].mxu0
      %v1830 = vadd.f32 0.0, %v1829
      %v1831 = vpop.f32.mrb[0].mxu0
      %1832 = vmatprep.mubr.f32.mxu0 0.0
      %1833 = vmatmul.mubr.f32.gmra.mrb[0].mxu0 %v1610
      %v1834 = vpop.f32.mrb[0].mxu0
      %v1835 = vadd.f32 0.0, %v1834
      %v1836 = vpop.f32.mrb[0].mxu0
      %1837 = vmatprep.mubr.f32.mxu0 0.0
      %1838 = vmatmul.mubr.f32.gmra.mrb[0].mxu0 %v1613
      %v1839 = vpop.f32.mrb[0].mxu0
      %v1840 = vadd.f32 0.0, %v1839
      %v1841 = vpop.f32.mrb[0].mxu0
      %1842 = vdwg.mxu0
      %v1843 = vadd.f32 %v1453, %v1685
      %v1844 = vadd.f32 %v1454, %v1690
      %v1845 = vadd.f32 %v1455, %v1695
      %v1846 = vadd.f32 %v1456, %v1700
      %v1847 = vadd.f32 %v1457, %v1705
      %v1848 = vadd.f32 %v1458, %v1710
      %v1849 = vadd.f32 %v1459, %v1715
      %v1850 = vadd.f32 %v1460, %v1720
      %v1851 = vadd.f32 %v1461, %v1725
      %v1852 = vadd.f32 %v1462, %v1730
      %v1853 = vadd.f32 %v1463, %v1735
      %v1854 = vadd.f32 %v1464, %v1740
      %v1855 = vadd.f32 %v1465, %v1745
      %v1856 = vadd.f32 %v1466, %v1750
      %v1857 = vadd.f32 %v1467, %v1755
      %v1858 = vadd.f32 %v1468, %v1760
      %v1859 = vadd.f32 %v1469, %v1765
      %v1860 = vadd.f32 %v1470, %v1770
      %v1861 = vadd.f32 %v1471, %v1775
      %v1862 = vadd.f32 %v1472, %v1780
      %v1863 = vadd.f32 %v1473, %v1785
      %v1864 = vadd.f32 %v1474, %v1790
      %v1865 = vadd.f32 %v1475, %v1795
      %v1866 = vadd.f32 %v1476, %v1800
      %v1867 = vadd.f32 %v1477, %v1805
      %v1868 = vadd.f32 %v1478, %v1810
      %v1869 = vadd.f32 %v1479, %v1815
      %v1870 = vadd.f32 %v1480, %v1820
      %v1871 = vadd.f32 %v1481, %v1825
      %v1872 = vadd.f32 %v1482, %v1830
      %v1873 = vadd.f32 %v1483, %v1835
      %v1874 = vadd.f32 %v1484, %v1840
      %v1875 = vld [vmem:[%s346 + $0x1] sm:$0xff]
      %v1876 = vld [vmem:[%s346 + $0x9] sm:$0xff]
      %v1877 = vld [vmem:[%s346 + $0x19] sm:$0xff]
      %v1878 = vld [vmem:[%s346 + $0x21] sm:$0xff]
      %v1879 = vld [vmem:[%s346 + $0x31] sm:$0xff]
      %v1880 = vld [vmem:[%s346 + $0x39] sm:$0xff]
      %v1881 = vld [vmem:[%s346 + $0x49] sm:$0xff]
      %v1882 = vld [vmem:[%s346 + $0x51] sm:$0xff]
      %v1883 = vld [vmem:[%s346 + $0x61] sm:$0xff]
      %v1884 = vld [vmem:[%s346 + $0x69] sm:$0xff]
      %v1885 = vld [vmem:[%s346 + $0x79] sm:$0xff]
      %v1886 = vld [vmem:[%s346 + $0x81] sm:$0xff]
      %v1887 = vld [vmem:[%s346 + $0x91] sm:$0xff]
      %v1888 = vld [vmem:[%s346 + $0x99] sm:$0xff]
      %v1889 = vld [vmem:[%s346 + $0xa9] sm:$0xff]
      %v1890 = vld [vmem:[%s346 + $0xb1] sm:$0xff]
      %v1891 = vld [vmem:[%s346 + $0xc1] sm:$0xff]
      %v1892 = vld [vmem:[%s346 + $0xc9] sm:$0xff]
      %v1893 = vld [vmem:[%s346 + $0xd9] sm:$0xff]
      %v1894 = vld [vmem:[%s346 + $0xe1] sm:$0xff]
      %v1895 = vld [vmem:[%s346 + $0xf1] sm:$0xff]
      %v1896 = vld [vmem:[%s346 + $0xf9] sm:$0xff]
      %v1897 = vld [vmem:[%s346 + $0x109] sm:$0xff]
      %v1898 = vld [vmem:[%s346 + $0x111] sm:$0xff]
      %v1899 = vld [vmem:[%s346 + $0x121] sm:$0xff]
      %v1900 = vld [vmem:[%s346 + $0x129] sm:$0xff]
      %v1901 = vld [vmem:[%s346 + $0x139] sm:$0xff]
      %v1902 = vld [vmem:[%s346 + $0x141] sm:$0xff]
      %v1903 = vld [vmem:[%s346 + $0x151] sm:$0xff]
      %v1904 = vld [vmem:[%s346 + $0x159] sm:$0xff]
      %v1905 = vld [vmem:[%s346 + $0x169] sm:$0xff]
      %v1906 = vld [vmem:[%s346 + $0x171] sm:$0xff]
      %s1907 = scalar_lea.vmem %s1, 16
      %v1908 = vld [vmem:[%s1907] sm:$0xf]
      %v1910 = vsel %vm225, %v1875, 0
      %v1913 = vsel %vm225, %v1876, 0
      %v1916 = vsel %vm225, %v1877, 0
      %v1919 = vsel %vm225, %v1878, 0
      %v1922 = vsel %vm225, %v1879, 0
      %v1925 = vsel %vm225, %v1880, 0
      %v1928 = vsel %vm225, %v1881, 0
      %v1931 = vsel %vm225, %v1882, 0
      %v1934 = vsel %vm225, %v1883, 0
      %v1937 = vsel %vm225, %v1884, 0
      %v1940 = vsel %vm225, %v1885, 0
      %v1943 = vsel %vm225, %v1886, 0
      %v1946 = vsel %vm225, %v1887, 0
      %v1949 = vsel %vm225, %v1888, 0
      %v1952 = vsel %vm225, %v1889, 0
      %v1955 = vsel %vm225, %v1890, 0
      %v1958 = vsel %vm225, %v1891, 0
      %v1961 = vsel %vm225, %v1892, 0
      %v1964 = vsel %vm225, %v1893, 0
      %v1967 = vsel %vm225, %v1894, 0
      %v1970 = vsel %vm225, %v1895, 0
      %v1973 = vsel %vm225, %v1896, 0
      %v1976 = vsel %vm225, %v1897, 0
      %v1979 = vsel %vm225, %v1898, 0
      %v1982 = vsel %vm225, %v1899, 0
      %v1985 = vsel %vm225, %v1900, 0
      %v1988 = vsel %vm225, %v1901, 0
      %v1991 = vsel %vm225, %v1902, 0
      %v1994 = vsel %vm225, %v1903, 0
      %v1997 = vsel %vm225, %v1904, 0
      %v2000 = vsel %vm225, %v1905, 0
      %v2003 = vsel %vm225, %v1906, 0
      %v2006 = vsel %vm542, %v1908, 0
      %2008 = vmatprep.subr.mxu0 0.0
      %2009 = vmatpush1.msra.mxu0 %v2006
      %2010 = vmatprep.subr.mxu0 0.0
      %2011 = vmatpush1.msra.mxu0 0.0
      %2012 = vmatprep.subr.mxu0 0.0
      %2013 = vmatpush1.msra.mxu0 0.0
      %2014 = vmatprep.subr.mxu0 0.0
      %2015 = vmatpush1.msra.mxu0 0.0
      %2016 = vmatprep.subr.mxu0 0.0
      %2017 = vmatpush1.msra.mxu0 0.0
      %2018 = vmatprep.subr.mxu0 0.0
      %2019 = vmatpush1.msra.mxu0 0.0
      %2020 = vmatprep.subr.mxu0 0.0
      %2021 = vmatpush1.msra.mxu0 0.0
      %2022 = vmatprep.subr.mxu0 0.0
      %2023 = vmatpush1.msra.mxu0 0.0
      %2024 = vmatprep.subr.mxu0 0.0
      %2025 = vmatpush1.msra.mxu0 0.0
      %2026 = vmatprep.subr.mxu0 0.0
      %2027 = vmatpush1.msra.mxu0 0.0
      %2028 = vmatprep.subr.mxu0 0.0
      %2029 = vmatpush1.msra.mxu0 0.0
      %2030 = vmatprep.subr.mxu0 0.0
      %2031 = vmatpush1.msra.mxu0 0.0
      %2032 = vmatprep.subr.mxu0 0.0
      %2033 = vmatpush1.msra.mxu0 0.0
      %2034 = vmatprep.subr.mxu0 0.0
      %2035 = vmatpush1.msra.mxu0 0.0
      %2036 = vmatprep.subr.mxu0 0.0
      %2037 = vmatpush1.msra.mxu0 0.0
      %2038 = vmatprep.subr.mxu0 0.0
      %2039 = vmatpush1.msra.mxu0 0.0
      %2040 = vmatprep.subr.mxu0 0.0
      %2041 = vmatpush1.msra.mxu0 0.0
      %2042 = vmatprep.subr.mxu0 0.0
      %2043 = vmatpush1.msra.mxu0 0.0
      %2044 = vmatprep.subr.mxu0 0.0
      %2045 = vmatpush1.msra.mxu0 0.0
      %2046 = vmatprep.subr.mxu0 0.0
      %2047 = vmatpush1.msra.mxu0 0.0
      %2048 = vmatprep.subr.mxu0 0.0
      %2049 = vmatpush1.msra.mxu0 0.0
      %2050 = vmatprep.subr.mxu0 0.0
      %2051 = vmatpush1.msra.mxu0 0.0
      %2052 = vmatprep.subr.mxu0 0.0
      %2053 = vmatpush1.msra.mxu0 0.0
      %2054 = vmatprep.subr.mxu0 0.0
      %2055 = vmatpush1.msra.mxu0 0.0
      %2056 = vmatprep.subr.mxu0 0.0
      %2057 = vmatpush1.msra.mxu0 0.0
      %2058 = vmatprep.subr.mxu0 0.0
      %2059 = vmatpush1.msra.mxu0 0.0
      %2060 = vmatprep.subr.mxu0 0.0
      %2061 = vmatpush1.msra.mxu0 0.0
      %2062 = vmatprep.subr.mxu0 0.0
      %2063 = vmatpush1.msra.mxu0 0.0
      %2064 = vmatprep.subr.mxu0 0.0
      %2065 = vmatpush1.msra.mxu0 0.0
      %2066 = vmatprep.subr.mxu0 0.0
      %2067 = vmatpush1.msra.mxu0 0.0
      %2068 = vmatprep.subr.mxu0 0.0
      %2069 = vmatpush1.msra.mxu0 0.0
      %2070 = vmatprep.subr.mxu0 0.0
      %2071 = vmatpush1.msra.mxu0 0.0
      %2072 = vmatprep.mubr.f32.mxu0 0.0
      %2073 = vmatmul.mubr.f32.gmra.mrb[0].mxu0 %v1910
      %v2074 = vpop.f32.mrb[0].mxu0
      %v2075 = vadd.f32 0.0, %v2074
      %v2076 = vpop.f32.mrb[0].mxu0
      %2077 = vmatprep.mubr.f32.mxu0 0.0
      %2078 = vmatmul.mubr.f32.gmra.mrb[0].mxu0 %v1913
      %v2079 = vpop.f32.mrb[0].mxu0
      %v2080 = vadd.f32 0.0, %v2079
      %v2081 = vpop.f32.mrb[0].mxu0
      %2082 = vmatprep.mubr.f32.mxu0 0.0
      %2083 = vmatmul.mubr.f32.gmra.mrb[0].mxu0 %v1916
      %v2084 = vpop.f32.mrb[0].mxu0
      %v2085 = vadd.f32 0.0, %v2084
      %v2086 = vpop.f32.mrb[0].mxu0
      %2087 = vmatprep.mubr.f32.mxu0 0.0
      %2088 = vmatmul.mubr.f32.gmra.mrb[0].mxu0 %v1919
      %v2089 = vpop.f32.mrb[0].mxu0
      %v2090 = vadd.f32 0.0, %v2089
      %v2091 = vpop.f32.mrb[0].mxu0
      %2092 = vmatprep.mubr.f32.mxu0 0.0
      %2093 = vmatmul.mubr.f32.gmra.mrb[0].mxu0 %v1922
      %v2094 = vpop.f32.mrb[0].mxu0
      %v2095 = vadd.f32 0.0, %v2094
      %v2096 = vpop.f32.mrb[0].mxu0
      %2097 = vmatprep.mubr.f32.mxu0 0.0
      %2098 = vmatmul.mubr.f32.gmra.mrb[0].mxu0 %v1925
      %v2099 = vpop.f32.mrb[0].mxu0
      %v2100 = vadd.f32 0.0, %v2099
      %v2101 = vpop.f32.mrb[0].mxu0
      %2102 = vmatprep.mubr.f32.mxu0 0.0
      %2103 = vmatmul.mubr.f32.gmra.mrb[0].mxu0 %v1928
      %v2104 = vpop.f32.mrb[0].mxu0
      %v2105 = vadd.f32 0.0, %v2104
      %v2106 = vpop.f32.mrb[0].mxu0
      %2107 = vmatprep.mubr.f32.mxu0 0.0
      %2108 = vmatmul.mubr.f32.gmra.mrb[0].mxu0 %v1931
      %v2109 = vpop.f32.mrb[0].mxu0
      %v2110 = vadd.f32 0.0, %v2109
      %v2111 = vpop.f32.mrb[0].mxu0
      %2112 = vmatprep.mubr.f32.mxu0 0.0
      %2113 = vmatmul.mubr.f32.gmra.mrb[0].mxu0 %v1934
      %v2114 = vpop.f32.mrb[0].mxu0
      %v2115 = vadd.f32 0.0, %v2114
      %v2116 = vpop.f32.mrb[0].mxu0
      %2117 = vmatprep.mubr.f32.mxu0 0.0
      %2118 = vmatmul.mubr.f32.gmra.mrb[0].mxu0 %v1937
      %v2119 = vpop.f32.mrb[0].mxu0
      %v2120 = vadd.f32 0.0, %v2119
      %v2121 = vpop.f32.mrb[0].mxu0
      %2122 = vmatprep.mubr.f32.mxu0 0.0
      %2123 = vmatmul.mubr.f32.gmra.mrb[0].mxu0 %v1940
      %v2124 = vpop.f32.mrb[0].mxu0
      %v2125 = vadd.f32 0.0, %v2124
      %v2126 = vpop.f32.mrb[0].mxu0
      %2127 = vmatprep.mubr.f32.mxu0 0.0
      %2128 = vmatmul.mubr.f32.gmra.mrb[0].mxu0 %v1943
      %v2129 = vpop.f32.mrb[0].mxu0
      %v2130 = vadd.f32 0.0, %v2129
      %v2131 = vpop.f32.mrb[0].mxu0
      %2132 = vmatprep.mubr.f32.mxu0 0.0
      %2133 = vmatmul.mubr.f32.gmra.mrb[0].mxu0 %v1946
      %v2134 = vpop.f32.mrb[0].mxu0
      %v2135 = vadd.f32 0.0, %v2134
      %v2136 = vpop.f32.mrb[0].mxu0
      %2137 = vmatprep.mubr.f32.mxu0 0.0
      %2138 = vmatmul.mubr.f32.gmra.mrb[0].mxu0 %v1949
      %v2139 = vpop.f32.mrb[0].mxu0
      %v2140 = vadd.f32 0.0, %v2139
      %v2141 = vpop.f32.mrb[0].mxu0
      %2142 = vmatprep.mubr.f32.mxu0 0.0
      %2143 = vmatmul.mubr.f32.gmra.mrb[0].mxu0 %v1952
      %v2144 = vpop.f32.mrb[0].mxu0
      %v2145 = vadd.f32 0.0, %v2144
      %v2146 = vpop.f32.mrb[0].mxu0
      %2147 = vmatprep.mubr.f32.mxu0 0.0
      %2148 = vmatmul.mubr.f32.gmra.mrb[0].mxu0 %v1955
      %v2149 = vpop.f32.mrb[0].mxu0
      %v2150 = vadd.f32 0.0, %v2149
      %v2151 = vpop.f32.mrb[0].mxu0
      %2152 = vmatprep.mubr.f32.mxu0 0.0
      %2153 = vmatmul.mubr.f32.gmra.mrb[0].mxu0 %v1958
      %v2154 = vpop.f32.mrb[0].mxu0
      %v2155 = vadd.f32 0.0, %v2154
      %v2156 = vpop.f32.mrb[0].mxu0
      %2157 = vmatprep.mubr.f32.mxu0 0.0
      %2158 = vmatmul.mubr.f32.gmra.mrb[0].mxu0 %v1961
      %v2159 = vpop.f32.mrb[0].mxu0
      %v2160 = vadd.f32 0.0, %v2159
      %v2161 = vpop.f32.mrb[0].mxu0
      %2162 = vmatprep.mubr.f32.mxu0 0.0
      %2163 = vmatmul.mubr.f32.gmra.mrb[0].mxu0 %v1964
      %v2164 = vpop.f32.mrb[0].mxu0
      %v2165 = vadd.f32 0.0, %v2164
      %v2166 = vpop.f32.mrb[0].mxu0
      %2167 = vmatprep.mubr.f32.mxu0 0.0
      %2168 = vmatmul.mubr.f32.gmra.mrb[0].mxu0 %v1967
      %v2169 = vpop.f32.mrb[0].mxu0
      %v2170 = vadd.f32 0.0, %v2169
      %v2171 = vpop.f32.mrb[0].mxu0
      %2172 = vmatprep.mubr.f32.mxu0 0.0
      %2173 = vmatmul.mubr.f32.gmra.mrb[0].mxu0 %v1970
      %v2174 = vpop.f32.mrb[0].mxu0
      %v2175 = vadd.f32 0.0, %v2174
      %v2176 = vpop.f32.mrb[0].mxu0
      %2177 = vmatprep.mubr.f32.mxu0 0.0
      %2178 = vmatmul.mubr.f32.gmra.mrb[0].mxu0 %v1973
      %v2179 = vpop.f32.mrb[0].mxu0
      %v2180 = vadd.f32 0.0, %v2179
      %v2181 = vpop.f32.mrb[0].mxu0
      %2182 = vmatprep.mubr.f32.mxu0 0.0
      %2183 = vmatmul.mubr.f32.gmra.mrb[0].mxu0 %v1976
      %v2184 = vpop.f32.mrb[0].mxu0
      %v2185 = vadd.f32 0.0, %v2184
      %v2186 = vpop.f32.mrb[0].mxu0
      %2187 = vmatprep.mubr.f32.mxu0 0.0
      %2188 = vmatmul.mubr.f32.gmra.mrb[0].mxu0 %v1979
      %v2189 = vpop.f32.mrb[0].mxu0
      %v2190 = vadd.f32 0.0, %v2189
      %v2191 = vpop.f32.mrb[0].mxu0
      %2192 = vmatprep.mubr.f32.mxu0 0.0
      %2193 = vmatmul.mubr.f32.gmra.mrb[0].mxu0 %v1982
      %v2194 = vpop.f32.mrb[0].mxu0
      %v2195 = vadd.f32 0.0, %v2194
      %v2196 = vpop.f32.mrb[0].mxu0
      %2197 = vmatprep.mubr.f32.mxu0 0.0
      %2198 = vmatmul.mubr.f32.gmra.mrb[0].mxu0 %v1985
      %v2199 = vpop.f32.mrb[0].mxu0
      %v2200 = vadd.f32 0.0, %v2199
      %v2201 = vpop.f32.mrb[0].mxu0
      %2202 = vmatprep.mubr.f32.mxu0 0.0
      %2203 = vmatmul.mubr.f32.gmra.mrb[0].mxu0 %v1988
      %v2204 = vpop.f32.mrb[0].mxu0
      %v2205 = vadd.f32 0.0, %v2204
      %v2206 = vpop.f32.mrb[0].mxu0
      %2207 = vmatprep.mubr.f32.mxu0 0.0
      %2208 = vmatmul.mubr.f32.gmra.mrb[0].mxu0 %v1991
      %v2209 = vpop.f32.mrb[0].mxu0
      %v2210 = vadd.f32 0.0, %v2209
      %v2211 = vpop.f32.mrb[0].mxu0
      %2212 = vmatprep.mubr.f32.mxu0 0.0
      %2213 = vmatmul.mubr.f32.gmra.mrb[0].mxu0 %v1994
      %v2214 = vpop.f32.mrb[0].mxu0
      %v2215 = vadd.f32 0.0, %v2214
      %v2216 = vpop.f32.mrb[0].mxu0
      %2217 = vmatprep.mubr.f32.mxu0 0.0
      %2218 = vmatmul.mubr.f32.gmra.mrb[0].mxu0 %v1997
      %v2219 = vpop.f32.mrb[0].mxu0
      %v2220 = vadd.f32 0.0, %v2219
      %v2221 = vpop.f32.mrb[0].mxu0
      %2222 = vmatprep.mubr.f32.mxu0 0.0
      %2223 = vmatmul.mubr.f32.gmra.mrb[0].mxu0 %v2000
      %v2224 = vpop.f32.mrb[0].mxu0
      %v2225 = vadd.f32 0.0, %v2224
      %v2226 = vpop.f32.mrb[0].mxu0
      %2227 = vmatprep.mubr.f32.mxu0 0.0
      %2228 = vmatmul.mubr.f32.gmra.mrb[0].mxu0 %v2003
      %v2229 = vpop.f32.mrb[0].mxu0
      %v2230 = vadd.f32 0.0, %v2229
      %v2231 = vpop.f32.mrb[0].mxu0
      %2232 = vdwg.mxu0
      %v2233 = vadd.f32 %v1843, %v2075
      %v2234 = vadd.f32 %v1844, %v2080
      %v2235 = vadd.f32 %v1845, %v2085
      %v2236 = vadd.f32 %v1846, %v2090
      %v2237 = vadd.f32 %v1847, %v2095
      %v2238 = vadd.f32 %v1848, %v2100
      %v2239 = vadd.f32 %v1849, %v2105
      %v2240 = vadd.f32 %v1850, %v2110
      %v2241 = vadd.f32 %v1851, %v2115
      %v2242 = vadd.f32 %v1852, %v2120
      %v2243 = vadd.f32 %v1853, %v2125
      %v2244 = vadd.f32 %v1854, %v2130
      %v2245 = vadd.f32 %v1855, %v2135
      %v2246 = vadd.f32 %v1856, %v2140
      %v2247 = vadd.f32 %v1857, %v2145
      %v2248 = vadd.f32 %v1858, %v2150
      %v2249 = vadd.f32 %v1859, %v2155
      %v2250 = vadd.f32 %v1860, %v2160
      %v2251 = vadd.f32 %v1861, %v2165
      %v2252 = vadd.f32 %v1862, %v2170
      %v2253 = vadd.f32 %v1863, %v2175
      %v2254 = vadd.f32 %v1864, %v2180
      %v2255 = vadd.f32 %v1865, %v2185
      %v2256 = vadd.f32 %v1866, %v2190
      %v2257 = vadd.f32 %v1867, %v2195
      %v2258 = vadd.f32 %v1868, %v2200
      %v2259 = vadd.f32 %v1869, %v2205
      %v2260 = vadd.f32 %v1870, %v2210
      %v2261 = vadd.f32 %v1871, %v2215
      %v2262 = vadd.f32 %v1872, %v2220
      %v2263 = vadd.f32 %v1873, %v2225
      %v2264 = vadd.f32 %v1874, %v2230
      %v2265 = vld [vmem:[%s346 + $0x2] sm:$0xff]
      %v2266 = vld [vmem:[%s346 + $0xa] sm:$0xff]
      %v2267 = vld [vmem:[%s346 + $0x1a] sm:$0xff]
      %v2268 = vld [vmem:[%s346 + $0x22] sm:$0xff]
      %v2269 = vld [vmem:[%s346 + $0x32] sm:$0xff]
      %v2270 = vld [vmem:[%s346 + $0x3a] sm:$0xff]
      %v2271 = vld [vmem:[%s346 + $0x4a] sm:$0xff]
      %v2272 = vld [vmem:[%s346 + $0x52] sm:$0xff]
      %v2273 = vld [vmem:[%s346 + $0x62] sm:$0xff]
      %v2274 = vld [vmem:[%s346 + $0x6a] sm:$0xff]
      %v2275 = vld [vmem:[%s346 + $0x7a] sm:$0xff]
      %v2276 = vld [vmem:[%s346 + $0x82] sm:$0xff]
      %v2277 = vld [vmem:[%s346 + $0x92] sm:$0xff]
      %v2278 = vld [vmem:[%s346 + $0x9a] sm:$0xff]
      %v2279 = vld [vmem:[%s346 + $0xaa] sm:$0xff]
      %v2280 = vld [vmem:[%s346 + $0xb2] sm:$0xff]
      %v2281 = vld [vmem:[%s346 + $0xc2] sm:$0xff]
      %v2282 = vld [vmem:[%s346 + $0xca] sm:$0xff]
      %v2283 = vld [vmem:[%s346 + $0xda] sm:$0xff]
      %v2284 = vld [vmem:[%s346 + $0xe2] sm:$0xff]
      %v2285 = vld [vmem:[%s346 + $0xf2] sm:$0xff]
      %v2286 = vld [vmem:[%s346 + $0xfa] sm:$0xff]
      %v2287 = vld [vmem:[%s346 + $0x10a] sm:$0xff]
      %v2288 = vld [vmem:[%s346 + $0x112] sm:$0xff]
      %v2289 = vld [vmem:[%s346 + $0x122] sm:$0xff]
      %v2290 = vld [vmem:[%s346 + $0x12a] sm:$0xff]
      %v2291 = vld [vmem:[%s346 + $0x13a] sm:$0xff]
      %v2292 = vld [vmem:[%s346 + $0x142] sm:$0xff]
      %v2293 = vld [vmem:[%s346 + $0x152] sm:$0xff]
      %v2294 = vld [vmem:[%s346 + $0x15a] sm:$0xff]
      %v2295 = vld [vmem:[%s346 + $0x16a] sm:$0xff]
      %v2296 = vld [vmem:[%s346 + $0x172] sm:$0xff]
      %s2297 = scalar_lea.vmem %s1, 20
      %v2298 = vld [vmem:[%s2297] sm:$0xf]
      %v2300 = vsel %vm225, %v2265, 0
      %v2303 = vsel %vm225, %v2266, 0
      %v2306 = vsel %vm225, %v2267, 0
      %v2309 = vsel %vm225, %v2268, 0
      %v2312 = vsel %vm225, %v2269, 0
      %v2315 = vsel %vm225, %v2270, 0
      %v2318 = vsel %vm225, %v2271, 0
      %v2321 = vsel %vm225, %v2272, 0
      %v2324 = vsel %vm225, %v2273, 0
      %v2327 = vsel %vm225, %v2274, 0
      %v2330 = vsel %vm225, %v2275, 0
      %v2333 = vsel %vm225, %v2276, 0
      %v2336 = vsel %vm225, %v2277, 0
      %v2339 = vsel %vm225, %v2278, 0
      %v2342 = vsel %vm225, %v2279, 0
      %v2345 = vsel %vm225, %v2280, 0
      %v2348 = vsel %vm225, %v2281, 0
      %v2351 = vsel %vm225, %v2282, 0
      %v2354 = vsel %vm225, %v2283, 0
      %v2357 = vsel %vm225, %v2284, 0
      %v2360 = vsel %vm225, %v2285, 0
      %v2363 = vsel %vm225, %v2286, 0
      %v2366 = vsel %vm225, %v2287, 0
      %v2369 = vsel %vm225, %v2288, 0
      %v2372 = vsel %vm225, %v2289, 0
      %v2375 = vsel %vm225, %v2290, 0
      %v2378 = vsel %vm225, %v2291, 0
      %v2381 = vsel %vm225, %v2292, 0
      %v2384 = vsel %vm225, %v2293, 0
      %v2387 = vsel %vm225, %v2294, 0
      %v2390 = vsel %vm225, %v2295, 0
      %v2393 = vsel %vm225, %v2296, 0
      %v2396 = vsel %vm542, %v2298, 0
      %2398 = vmatprep.subr.mxu0 0.0
      %2399 = vmatpush1.msra.mxu0 %v2396
      %2400 = vmatprep.subr.mxu0 0.0
      %2401 = vmatpush1.msra.mxu0 0.0
      %2402 = vmatprep.subr.mxu0 0.0
      %2403 = vmatpush1.msra.mxu0 0.0
      %2404 = vmatprep.subr.mxu0 0.0
      %2405 = vmatpush1.msra.mxu0 0.0
      %2406 = vmatprep.subr.mxu0 0.0
      %2407 = vmatpush1.msra.mxu0 0.0
      %2408 = vmatprep.subr.mxu0 0.0
      %2409 = vmatpush1.msra.mxu0 0.0
      %2410 = vmatprep.subr.mxu0 0.0
      %2411 = vmatpush1.msra.mxu0 0.0
      %2412 = vmatprep.subr.mxu0 0.0
      %2413 = vmatpush1.msra.mxu0 0.0
      %2414 = vmatprep.subr.mxu0 0.0
      %2415 = vmatpush1.msra.mxu0 0.0
      %2416 = vmatprep.subr.mxu0 0.0
      %2417 = vmatpush1.msra.mxu0 0.0
      %2418 = vmatprep.subr.mxu0 0.0
      %2419 = vmatpush1.msra.mxu0 0.0
      %2420 = vmatprep.subr.mxu0 0.0
      %2421 = vmatpush1.msra.mxu0 0.0
      %2422 = vmatprep.subr.mxu0 0.0
      %2423 = vmatpush1.msra.mxu0 0.0
      %2424 = vmatprep.subr.mxu0 0.0
      %2425 = vmatpush1.msra.mxu0 0.0
      %2426 = vmatprep.subr.mxu0 0.0
      %2427 = vmatpush1.msra.mxu0 0.0
      %2428 = vmatprep.subr.mxu0 0.0
      %2429 = vmatpush1.msra.mxu0 0.0
      %2430 = vmatprep.subr.mxu0 0.0
      %2431 = vmatpush1.msra.mxu0 0.0
      %2432 = vmatprep.subr.mxu0 0.0
      %2433 = vmatpush1.msra.mxu0 0.0
      %2434 = vmatprep.subr.mxu0 0.0
      %2435 = vmatpush1.msra.mxu0 0.0
      %2436 = vmatprep.subr.mxu0 0.0
      %2437 = vmatpush1.msra.mxu0 0.0
      %2438 = vmatprep.subr.mxu0 0.0
      %2439 = vmatpush1.msra.mxu0 0.0
      %2440 = vmatprep.subr.mxu0 0.0
      %2441 = vmatpush1.msra.mxu0 0.0
      %2442 = vmatprep.subr.mxu0 0.0
      %2443 = vmatpush1.msra.mxu0 0.0
      %2444 = vmatprep.subr.mxu0 0.0
      %2445 = vmatpush1.msra.mxu0 0.0
      %2446 = vmatprep.subr.mxu0 0.0
      %2447 = vmatpush1.msra.mxu0 0.0
      %2448 = vmatprep.subr.mxu0 0.0
      %2449 = vmatpush1.msra.mxu0 0.0
      %2450 = vmatprep.subr.mxu0 0.0
      %2451 = vmatpush1.msra.mxu0 0.0
      %2452 = vmatprep.subr.mxu0 0.0
      %2453 = vmatpush1.msra.mxu0 0.0
      %2454 = vmatprep.subr.mxu0 0.0
      %2455 = vmatpush1.msra.mxu0 0.0
      %2456 = vmatprep.subr.mxu0 0.0
      %2457 = vmatpush1.msra.mxu0 0.0
      %2458 = vmatprep.subr.mxu0 0.0
      %2459 = vmatpush1.msra.mxu0 0.0
      %2460 = vmatprep.subr.mxu0 0.0
      %2461 = vmatpush1.msra.mxu0 0.0
      %2462 = vmatprep.mubr.f32.mxu0 0.0
      %2463 = vmatmul.mubr.f32.gmra.mrb[0].mxu0 %v2300
      %v2464 = vpop.f32.mrb[0].mxu0
      %v2465 = vadd.f32 0.0, %v2464
      %v2466 = vpop.f32.mrb[0].mxu0
      %2467 = vmatprep.mubr.f32.mxu0 0.0
      %2468 = vmatmul.mubr.f32.gmra.mrb[0].mxu0 %v2303
      %v2469 = vpop.f32.mrb[0].mxu0
      %v2470 = vadd.f32 0.0, %v2469
      %v2471 = vpop.f32.mrb[0].mxu0
      %2472 = vmatprep.mubr.f32.mxu0 0.0
      %2473 = vmatmul.mubr.f32.gmra.mrb[0].mxu0 %v2306
      %v2474 = vpop.f32.mrb[0].mxu0
      %v2475 = vadd.f32 0.0, %v2474
      %v2476 = vpop.f32.mrb[0].mxu0
      %2477 = vmatprep.mubr.f32.mxu0 0.0
      %2478 = vmatmul.mubr.f32.gmra.mrb[0].mxu0 %v2309
      %v2479 = vpop.f32.mrb[0].mxu0
      %v2480 = vadd.f32 0.0, %v2479
      %v2481 = vpop.f32.mrb[0].mxu0
      %2482 = vmatprep.mubr.f32.mxu0 0.0
      %2483 = vmatmul.mubr.f32.gmra.mrb[0].mxu0 %v2312
      %v2484 = vpop.f32.mrb[0].mxu0
      %v2485 = vadd.f32 0.0, %v2484
      %v2486 = vpop.f32.mrb[0].mxu0
      %2487 = vmatprep.mubr.f32.mxu0 0.0
      %2488 = vmatmul.mubr.f32.gmra.mrb[0].mxu0 %v2315
      %v2489 = vpop.f32.mrb[0].mxu0
      %v2490 = vadd.f32 0.0, %v2489
      %v2491 = vpop.f32.mrb[0].mxu0
      %2492 = vmatprep.mubr.f32.mxu0 0.0
      %2493 = vmatmul.mubr.f32.gmra.mrb[0].mxu0 %v2318
      %v2494 = vpop.f32.mrb[0].mxu0
      %v2495 = vadd.f32 0.0, %v2494
      %v2496 = vpop.f32.mrb[0].mxu0
      %2497 = vmatprep.mubr.f32.mxu0 0.0
      %2498 = vmatmul.mubr.f32.gmra.mrb[0].mxu0 %v2321
      %v2499 = vpop.f32.mrb[0].mxu0
      %v2500 = vadd.f32 0.0, %v2499
      %v2501 = vpop.f32.mrb[0].mxu0
      %2502 = vmatprep.mubr.f32.mxu0 0.0
      %2503 = vmatmul.mubr.f32.gmra.mrb[0].mxu0 %v2324
      %v2504 = vpop.f32.mrb[0].mxu0
      %v2505 = vadd.f32 0.0, %v2504
      %v2506 = vpop.f32.mrb[0].mxu0
      %2507 = vmatprep.mubr.f32.mxu0 0.0
      %2508 = vmatmul.mubr.f32.gmra.mrb[0].mxu0 %v2327
      %v2509 = vpop.f32.mrb[0].mxu0
      %v2510 = vadd.f32 0.0, %v2509
      %v2511 = vpop.f32.mrb[0].mxu0
      %2512 = vmatprep.mubr.f32.mxu0 0.0
      %2513 = vmatmul.mubr.f32.gmra.mrb[0].mxu0 %v2330
      %v2514 = vpop.f32.mrb[0].mxu0
      %v2515 = vadd.f32 0.0, %v2514
      %v2516 = vpop.f32.mrb[0].mxu0
      %2517 = vmatprep.mubr.f32.mxu0 0.0
      %2518 = vmatmul.mubr.f32.gmra.mrb[0].mxu0 %v2333
      %v2519 = vpop.f32.mrb[0].mxu0
      %v2520 = vadd.f32 0.0, %v2519
      %v2521 = vpop.f32.mrb[0].mxu0
      %2522 = vmatprep.mubr.f32.mxu0 0.0
      %2523 = vmatmul.mubr.f32.gmra.mrb[0].mxu0 %v2336
      %v2524 = vpop.f32.mrb[0].mxu0
      %v2525 = vadd.f32 0.0, %v2524
      %v2526 = vpop.f32.mrb[0].mxu0
      %2527 = vmatprep.mubr.f32.mxu0 0.0
      %2528 = vmatmul.mubr.f32.gmra.mrb[0].mxu0 %v2339
      %v2529 = vpop.f32.mrb[0].mxu0
      %v2530 = vadd.f32 0.0, %v2529
      %v2531 = vpop.f32.mrb[0].mxu0
      %2532 = vmatprep.mubr.f32.mxu0 0.0
      %2533 = vmatmul.mubr.f32.gmra.mrb[0].mxu0 %v2342
      %v2534 = vpop.f32.mrb[0].mxu0
      %v2535 = vadd.f32 0.0, %v2534
      %v2536 = vpop.f32.mrb[0].mxu0
      %2537 = vmatprep.mubr.f32.mxu0 0.0
      %2538 = vmatmul.mubr.f32.gmra.mrb[0].mxu0 %v2345
      %v2539 = vpop.f32.mrb[0].mxu0
      %v2540 = vadd.f32 0.0, %v2539
      %v2541 = vpop.f32.mrb[0].mxu0
      %2542 = vmatprep.mubr.f32.mxu0 0.0
      %2543 = vmatmul.mubr.f32.gmra.mrb[0].mxu0 %v2348
      %v2544 = vpop.f32.mrb[0].mxu0
      %v2545 = vadd.f32 0.0, %v2544
      %v2546 = vpop.f32.mrb[0].mxu0
      %2547 = vmatprep.mubr.f32.mxu0 0.0
      %2548 = vmatmul.mubr.f32.gmra.mrb[0].mxu0 %v2351
      %v2549 = vpop.f32.mrb[0].mxu0
      %v2550 = vadd.f32 0.0, %v2549
      %v2551 = vpop.f32.mrb[0].mxu0
      %2552 = vmatprep.mubr.f32.mxu0 0.0
      %2553 = vmatmul.mubr.f32.gmra.mrb[0].mxu0 %v2354
      %v2554 = vpop.f32.mrb[0].mxu0
      %v2555 = vadd.f32 0.0, %v2554
      %v2556 = vpop.f32.mrb[0].mxu0
      %2557 = vmatprep.mubr.f32.mxu0 0.0
      %2558 = vmatmul.mubr.f32.gmra.mrb[0].mxu0 %v2357
      %v2559 = vpop.f32.mrb[0].mxu0
      %v2560 = vadd.f32 0.0, %v2559
      %v2561 = vpop.f32.mrb[0].mxu0
      %2562 = vmatprep.mubr.f32.mxu0 0.0
      %2563 = vmatmul.mubr.f32.gmra.mrb[0].mxu0 %v2360
      %v2564 = vpop.f32.mrb[0].mxu0
      %v2565 = vadd.f32 0.0, %v2564
      %v2566 = vpop.f32.mrb[0].mxu0
      %2567 = vmatprep.mubr.f32.mxu0 0.0
      %2568 = vmatmul.mubr.f32.gmra.mrb[0].mxu0 %v2363
      %v2569 = vpop.f32.mrb[0].mxu0
      %v2570 = vadd.f32 0.0, %v2569
      %v2571 = vpop.f32.mrb[0].mxu0
      %2572 = vmatprep.mubr.f32.mxu0 0.0
      %2573 = vmatmul.mubr.f32.gmra.mrb[0].mxu0 %v2366
      %v2574 = vpop.f32.mrb[0].mxu0
      %v2575 = vadd.f32 0.0, %v2574
      %v2576 = vpop.f32.mrb[0].mxu0
      %2577 = vmatprep.mubr.f32.mxu0 0.0
      %2578 = vmatmul.mubr.f32.gmra.mrb[0].mxu0 %v2369
      %v2579 = vpop.f32.mrb[0].mxu0
      %v2580 = vadd.f32 0.0, %v2579
      %v2581 = vpop.f32.mrb[0].mxu0
      %2582 = vmatprep.mubr.f32.mxu0 0.0
      %2583 = vmatmul.mubr.f32.gmra.mrb[0].mxu0 %v2372
      %v2584 = vpop.f32.mrb[0].mxu0
      %v2585 = vadd.f32 0.0, %v2584
      %v2586 = vpop.f32.mrb[0].mxu0
      %2587 = vmatprep.mubr.f32.mxu0 0.0
      %2588 = vmatmul.mubr.f32.gmra.mrb[0].mxu0 %v2375
      %v2589 = vpop.f32.mrb[0].mxu0
      %v2590 = vadd.f32 0.0, %v2589
      %v2591 = vpop.f32.mrb[0].mxu0
      %2592 = vmatprep.mubr.f32.mxu0 0.0
      %2593 = vmatmul.mubr.f32.gmra.mrb[0].mxu0 %v2378
      %v2594 = vpop.f32.mrb[0].mxu0
      %v2595 = vadd.f32 0.0, %v2594
      %v2596 = vpop.f32.mrb[0].mxu0
      %2597 = vmatprep.mubr.f32.mxu0 0.0
      %2598 = vmatmul.mubr.f32.gmra.mrb[0].mxu0 %v2381
      %v2599 = vpop.f32.mrb[0].mxu0
      %v2600 = vadd.f32 0.0, %v2599
      %v2601 = vpop.f32.mrb[0].mxu0
      %2602 = vmatprep.mubr.f32.mxu0 0.0
      %2603 = vmatmul.mubr.f32.gmra.mrb[0].mxu0 %v2384
      %v2604 = vpop.f32.mrb[0].mxu0
      %v2605 = vadd.f32 0.0, %v2604
      %v2606 = vpop.f32.mrb[0].mxu0
      %2607 = vmatprep.mubr.f32.mxu0 0.0
      %2608 = vmatmul.mubr.f32.gmra.mrb[0].mxu0 %v2387
      %v2609 = vpop.f32.mrb[0].mxu0
      %v2610 = vadd.f32 0.0, %v2609
      %v2611 = vpop.f32.mrb[0].mxu0
      %2612 = vmatprep.mubr.f32.mxu0 0.0
      %2613 = vmatmul.mubr.f32.gmra.mrb[0].mxu0 %v2390
      %v2614 = vpop.f32.mrb[0].mxu0
      %v2615 = vadd.f32 0.0, %v2614
      %v2616 = vpop.f32.mrb[0].mxu0
      %2617 = vmatprep.mubr.f32.mxu0 0.0
      %2618 = vmatmul.mubr.f32.gmra.mrb[0].mxu0 %v2393
      %v2619 = vpop.f32.mrb[0].mxu0
      %v2620 = vadd.f32 0.0, %v2619
      %v2621 = vpop.f32.mrb[0].mxu0
      %2622 = vdwg.mxu0
      %v2623 = vadd.f32 %v2233, %v2465
      %v2624 = vadd.f32 %v2234, %v2470
      %v2625 = vadd.f32 %v2235, %v2475
      %v2626 = vadd.f32 %v2236, %v2480
      %v2627 = vadd.f32 %v2237, %v2485
      %v2628 = vadd.f32 %v2238, %v2490
      %v2629 = vadd.f32 %v2239, %v2495
      %v2630 = vadd.f32 %v2240, %v2500
      %v2631 = vadd.f32 %v2241, %v2505
      %v2632 = vadd.f32 %v2242, %v2510
      %v2633 = vadd.f32 %v2243, %v2515
      %v2634 = vadd.f32 %v2244, %v2520
      %v2635 = vadd.f32 %v2245, %v2525
      %v2636 = vadd.f32 %v2246, %v2530
      %v2637 = vadd.f32 %v2247, %v2535
      %v2638 = vadd.f32 %v2248, %v2540
      %v2639 = vadd.f32 %v2249, %v2545
      %v2640 = vadd.f32 %v2250, %v2550
      %v2641 = vadd.f32 %v2251, %v2555
      %v2642 = vadd.f32 %v2252, %v2560
      %v2643 = vadd.f32 %v2253, %v2565
      %v2644 = vadd.f32 %v2254, %v2570
      %v2645 = vadd.f32 %v2255, %v2575
      %v2646 = vadd.f32 %v2256, %v2580
      %v2647 = vadd.f32 %v2257, %v2585
      %v2648 = vadd.f32 %v2258, %v2590
      %v2649 = vadd.f32 %v2259, %v2595
      %v2650 = vadd.f32 %v2260, %v2600
      %v2651 = vadd.f32 %v2261, %v2605
      %v2652 = vadd.f32 %v2262, %v2610
      %v2653 = vadd.f32 %v2263, %v2615
      %v2654 = vadd.f32 %v2264, %v2620
      %s2655 = scalar_lea.vmem [#allocation2], 48
      %v2656 = vld [vmem:[%s2655] sm:$0xff]
      %v2657 = vld [vmem:[%s2655 + $0x8] sm:$0xff]
      %v2658 = vld [vmem:[%s2655 + $0x18] sm:$0xff]
      %v2659 = vld [vmem:[%s2655 + $0x20] sm:$0xff]
      %v2660 = vld [vmem:[%s2655 + $0x30] sm:$0xff]
      %v2661 = vld [vmem:[%s2655 + $0x38] sm:$0xff]
      %v2662 = vld [vmem:[%s2655 + $0x48] sm:$0xff]
      %v2663 = vld [vmem:[%s2655 + $0x50] sm:$0xff]
      %v2664 = vld [vmem:[%s2655 + $0x60] sm:$0xff]
      %v2665 = vld [vmem:[%s2655 + $0x68] sm:$0xff]
      %v2666 = vld [vmem:[%s2655 + $0x78] sm:$0xff]
      %v2667 = vld [vmem:[%s2655 + $0x80] sm:$0xff]
      %v2668 = vld [vmem:[%s2655 + $0x90] sm:$0xff]
      %v2669 = vld [vmem:[%s2655 + $0x98] sm:$0xff]
      %v2670 = vld [vmem:[%s2655 + $0xa8] sm:$0xff]
      %v2671 = vld [vmem:[%s2655 + $0xb0] sm:$0xff]
      %v2672 = vld [vmem:[%s2655 + $0xc0] sm:$0xff]
      %v2673 = vld [vmem:[%s2655 + $0xc8] sm:$0xff]
      %v2674 = vld [vmem:[%s2655 + $0xd8] sm:$0xff]
      %v2675 = vld [vmem:[%s2655 + $0xe0] sm:$0xff]
      %v2676 = vld [vmem:[%s2655 + $0xf0] sm:$0xff]
      %v2677 = vld [vmem:[%s2655 + $0xf8] sm:$0xff]
      %v2678 = vld [vmem:[%s2655 + $0x108] sm:$0xff]
      %v2679 = vld [vmem:[%s2655 + $0x110] sm:$0xff]
      %v2680 = vld [vmem:[%s2655 + $0x120] sm:$0xff]
      %v2681 = vld [vmem:[%s2655 + $0x128] sm:$0xff]
      %v2682 = vld [vmem:[%s2655 + $0x138] sm:$0xff]
      %v2683 = vld [vmem:[%s2655 + $0x140] sm:$0xff]
      %v2684 = vld [vmem:[%s2655 + $0x150] sm:$0xff]
      %v2685 = vld [vmem:[%s2655 + $0x158] sm:$0xff]
      %v2686 = vld [vmem:[%s2655 + $0x168] sm:$0xff]
      %v2687 = vld [vmem:[%s2655 + $0x170] sm:$0xff]
      %s2688 = scalar_lea.vmem %s1, 24
      %v2689 = vld [vmem:[%s2688] sm:$0xf]
      %v2691 = vsel %vm225, %v2656, 0
      %v2694 = vsel %vm225, %v2657, 0
      %v2697 = vsel %vm225, %v2658, 0
      %v2700 = vsel %vm225, %v2659, 0
      %v2703 = vsel %vm225, %v2660, 0
      %v2706 = vsel %vm225, %v2661, 0
      %v2709 = vsel %vm225, %v2662, 0
      %v2712 = vsel %vm225, %v2663, 0
      %v2715 = vsel %vm225, %v2664, 0
      %v2718 = vsel %vm225, %v2665, 0
      %v2721 = vsel %vm225, %v2666, 0
      %v2724 = vsel %vm225, %v2667, 0
      %v2727 = vsel %vm225, %v2668, 0
      %v2730 = vsel %vm225, %v2669, 0
      %v2733 = vsel %vm225, %v2670, 0
      %v2736 = vsel %vm225, %v2671, 0
      %v2739 = vsel %vm225, %v2672, 0
      %v2742 = vsel %vm225, %v2673, 0
      %v2745 = vsel %vm225, %v2674, 0
      %v2748 = vsel %vm225, %v2675, 0
      %v2751 = vsel %vm225, %v2676, 0
      %v2754 = vsel %vm225, %v2677, 0
      %v2757 = vsel %vm225, %v2678, 0
      %v2760 = vsel %vm225, %v2679, 0
      %v2763 = vsel %vm225, %v2680, 0
      %v2766 = vsel %vm225, %v2681, 0
      %v2769 = vsel %vm225, %v2682, 0
      %v2772 = vsel %vm225, %v2683, 0
      %v2775 = vsel %vm225, %v2684, 0
      %v2778 = vsel %vm225, %v2685, 0
      %v2781 = vsel %vm225, %v2686, 0
      %v2784 = vsel %vm225, %v2687, 0
      %v2787 = vsel %vm542, %v2689, 0
      %2789 = vmatprep.subr.mxu0 0.0
      %2790 = vmatpush1.msra.mxu0 %v2787
      %2791 = vmatprep.subr.mxu0 0.0
      %2792 = vmatpush1.msra.mxu0 0.0
      %2793 = vmatprep.subr.mxu0 0.0
      %2794 = vmatpush1.msra.mxu0 0.0
      %2795 = vmatprep.subr.mxu0 0.0
      %2796 = vmatpush1.msra.mxu0 0.0
      %2797 = vmatprep.subr.mxu0 0.0
      %2798 = vmatpush1.msra.mxu0 0.0
      %2799 = vmatprep.subr.mxu0 0.0
      %2800 = vmatpush1.msra.mxu0 0.0
      %2801 = vmatprep.subr.mxu0 0.0
      %2802 = vmatpush1.msra.mxu0 0.0
      %2803 = vmatprep.subr.mxu0 0.0
      %2804 = vmatpush1.msra.mxu0 0.0
      %2805 = vmatprep.subr.mxu0 0.0
      %2806 = vmatpush1.msra.mxu0 0.0
      %2807 = vmatprep.subr.mxu0 0.0
      %2808 = vmatpush1.msra.mxu0 0.0
      %2809 = vmatprep.subr.mxu0 0.0
      %2810 = vmatpush1.msra.mxu0 0.0
      %2811 = vmatprep.subr.mxu0 0.0
      %2812 = vmatpush1.msra.mxu0 0.0
      %2813 = vmatprep.subr.mxu0 0.0
      %2814 = vmatpush1.msra.mxu0 0.0
      %2815 = vmatprep.subr.mxu0 0.0
      %2816 = vmatpush1.msra.mxu0 0.0
      %2817 = vmatprep.subr.mxu0 0.0
      %2818 = vmatpush1.msra.mxu0 0.0
      %2819 = vmatprep.subr.mxu0 0.0
      %2820 = vmatpush1.msra.mxu0 0.0
      %2821 = vmatprep.subr.mxu0 0.0
      %2822 = vmatpush1.msra.mxu0 0.0
      %2823 = vmatprep.subr.mxu0 0.0
      %2824 = vmatpush1.msra.mxu0 0.0
      %2825 = vmatprep.subr.mxu0 0.0
      %2826 = vmatpush1.msra.mxu0 0.0
      %2827 = vmatprep.subr.mxu0 0.0
      %2828 = vmatpush1.msra.mxu0 0.0
      %2829 = vmatprep.subr.mxu0 0.0
      %2830 = vmatpush1.msra.mxu0 0.0
      %2831 = vmatprep.subr.mxu0 0.0
      %2832 = vmatpush1.msra.mxu0 0.0
      %2833 = vmatprep.subr.mxu0 0.0
      %2834 = vmatpush1.msra.mxu0 0.0
      %2835 = vmatprep.subr.mxu0 0.0
      %2836 = vmatpush1.msra.mxu0 0.0
      %2837 = vmatprep.subr.mxu0 0.0
      %2838 = vmatpush1.msra.mxu0 0.0
      %2839 = vmatprep.subr.mxu0 0.0
      %2840 = vmatpush1.msra.mxu0 0.0
      %2841 = vmatprep.subr.mxu0 0.0
      %2842 = vmatpush1.msra.mxu0 0.0
      %2843 = vmatprep.subr.mxu0 0.0
      %2844 = vmatpush1.msra.mxu0 0.0
      %2845 = vmatprep.subr.mxu0 0.0
      %2846 = vmatpush1.msra.mxu0 0.0
      %2847 = vmatprep.subr.mxu0 0.0
      %2848 = vmatpush1.msra.mxu0 0.0
      %2849 = vmatprep.subr.mxu0 0.0
      %2850 = vmatpush1.msra.mxu0 0.0
      %2851 = vmatprep.subr.mxu0 0.0
      %2852 = vmatpush1.msra.mxu0 0.0
      %2853 = vmatprep.mubr.f32.mxu0 0.0
      %2854 = vmatmul.mubr.f32.gmra.mrb[0].mxu0 %v2691
      %v2855 = vpop.f32.mrb[0].mxu0
      %v2856 = vadd.f32 0.0, %v2855
      %v2857 = vpop.f32.mrb[0].mxu0
      %2858 = vmatprep.mubr.f32.mxu0 0.0
      %2859 = vmatmul.mubr.f32.gmra.mrb[0].mxu0 %v2694
      %v2860 = vpop.f32.mrb[0].mxu0
      %v2861 = vadd.f32 0.0, %v2860
      %v2862 = vpop.f32.mrb[0].mxu0
      %2863 = vmatprep.mubr.f32.mxu0 0.0
      %2864 = vmatmul.mubr.f32.gmra.mrb[0].mxu0 %v2697
      %v2865 = vpop.f32.mrb[0].mxu0
      %v2866 = vadd.f32 0.0, %v2865
      %v2867 = vpop.f32.mrb[0].mxu0
      %2868 = vmatprep.mubr.f32.mxu0 0.0
      %2869 = vmatmul.mubr.f32.gmra.mrb[0].mxu0 %v2700
      %v2870 = vpop.f32.mrb[0].mxu0
      %v2871 = vadd.f32 0.0, %v2870
      %v2872 = vpop.f32.mrb[0].mxu0
      %2873 = vmatprep.mubr.f32.mxu0 0.0
      %2874 = vmatmul.mubr.f32.gmra.mrb[0].mxu0 %v2703
      %v2875 = vpop.f32.mrb[0].mxu0
      %v2876 = vadd.f32 0.0, %v2875
      %v2877 = vpop.f32.mrb[0].mxu0
      %2878 = vmatprep.mubr.f32.mxu0 0.0
      %2879 = vmatmul.mubr.f32.gmra.mrb[0].mxu0 %v2706
      %v2880 = vpop.f32.mrb[0].mxu0
      %v2881 = vadd.f32 0.0, %v2880
      %v2882 = vpop.f32.mrb[0].mxu0
      %2883 = vmatprep.mubr.f32.mxu0 0.0
      %2884 = vmatmul.mubr.f32.gmra.mrb[0].mxu0 %v2709
      %v2885 = vpop.f32.mrb[0].mxu0
      %v2886 = vadd.f32 0.0, %v2885
      %v2887 = vpop.f32.mrb[0].mxu0
      %2888 = vmatprep.mubr.f32.mxu0 0.0
      %2889 = vmatmul.mubr.f32.gmra.mrb[0].mxu0 %v2712
      %v2890 = vpop.f32.mrb[0].mxu0
      %v2891 = vadd.f32 0.0, %v2890
      %v2892 = vpop.f32.mrb[0].mxu0
      %2893 = vmatprep.mubr.f32.mxu0 0.0
      %2894 = vmatmul.mubr.f32.gmra.mrb[0].mxu0 %v2715
      %v2895 = vpop.f32.mrb[0].mxu0
      %v2896 = vadd.f32 0.0, %v2895
      %v2897 = vpop.f32.mrb[0].mxu0
      %2898 = vmatprep.mubr.f32.mxu0 0.0
      %2899 = vmatmul.mubr.f32.gmra.mrb[0].mxu0 %v2718
      %v2900 = vpop.f32.mrb[0].mxu0
      %v2901 = vadd.f32 0.0, %v2900
      %v2902 = vpop.f32.mrb[0].mxu0
      %2903 = vmatprep.mubr.f32.mxu0 0.0
      %2904 = vmatmul.mubr.f32.gmra.mrb[0].mxu0 %v2721
      %v2905 = vpop.f32.mrb[0].mxu0
      %v2906 = vadd.f32 0.0, %v2905
      %v2907 = vpop.f32.mrb[0].mxu0
      %2908 = vmatprep.mubr.f32.mxu0 0.0
      %2909 = vmatmul.mubr.f32.gmra.mrb[0].mxu0 %v2724
      %v2910 = vpop.f32.mrb[0].mxu0
      %v2911 = vadd.f32 0.0, %v2910
      %v2912 = vpop.f32.mrb[0].mxu0
      %2913 = vmatprep.mubr.f32.mxu0 0.0
      %2914 = vmatmul.mubr.f32.gmra.mrb[0].mxu0 %v2727
      %v2915 = vpop.f32.mrb[0].mxu0
      %v2916 = vadd.f32 0.0, %v2915
      %v2917 = vpop.f32.mrb[0].mxu0
      %2918 = vmatprep.mubr.f32.mxu0 0.0
      %2919 = vmatmul.mubr.f32.gmra.mrb[0].mxu0 %v2730
      %v2920 = vpop.f32.mrb[0].mxu0
      %v2921 = vadd.f32 0.0, %v2920
      %v2922 = vpop.f32.mrb[0].mxu0
      %2923 = vmatprep.mubr.f32.mxu0 0.0
      %2924 = vmatmul.mubr.f32.gmra.mrb[0].mxu0 %v2733
      %v2925 = vpop.f32.mrb[0].mxu0
      %v2926 = vadd.f32 0.0, %v2925
      %v2927 = vpop.f32.mrb[0].mxu0
      %2928 = vmatprep.mubr.f32.mxu0 0.0
      %2929 = vmatmul.mubr.f32.gmra.mrb[0].mxu0 %v2736
      %v2930 = vpop.f32.mrb[0].mxu0
      %v2931 = vadd.f32 0.0, %v2930
      %v2932 = vpop.f32.mrb[0].mxu0
      %2933 = vmatprep.mubr.f32.mxu0 0.0
      %2934 = vmatmul.mubr.f32.gmra.mrb[0].mxu0 %v2739
      %v2935 = vpop.f32.mrb[0].mxu0
      %v2936 = vadd.f32 0.0, %v2935
      %v2937 = vpop.f32.mrb[0].mxu0
      %2938 = vmatprep.mubr.f32.mxu0 0.0
      %2939 = vmatmul.mubr.f32.gmra.mrb[0].mxu0 %v2742
      %v2940 = vpop.f32.mrb[0].mxu0
      %v2941 = vadd.f32 0.0, %v2940
      %v2942 = vpop.f32.mrb[0].mxu0
      %2943 = vmatprep.mubr.f32.mxu0 0.0
      %2944 = vmatmul.mubr.f32.gmra.mrb[0].mxu0 %v2745
      %v2945 = vpop.f32.mrb[0].mxu0
      %v2946 = vadd.f32 0.0, %v2945
      %v2947 = vpop.f32.mrb[0].mxu0
      %2948 = vmatprep.mubr.f32.mxu0 0.0
      %2949 = vmatmul.mubr.f32.gmra.mrb[0].mxu0 %v2748
      %v2950 = vpop.f32.mrb[0].mxu0
      %v2951 = vadd.f32 0.0, %v2950
      %v2952 = vpop.f32.mrb[0].mxu0
      %2953 = vmatprep.mubr.f32.mxu0 0.0
      %2954 = vmatmul.mubr.f32.gmra.mrb[0].mxu0 %v2751
      %v2955 = vpop.f32.mrb[0].mxu0
      %v2956 = vadd.f32 0.0, %v2955
      %v2957 = vpop.f32.mrb[0].mxu0
      %2958 = vmatprep.mubr.f32.mxu0 0.0
      %2959 = vmatmul.mubr.f32.gmra.mrb[0].mxu0 %v2754
      %v2960 = vpop.f32.mrb[0].mxu0
      %v2961 = vadd.f32 0.0, %v2960
      %v2962 = vpop.f32.mrb[0].mxu0
      %2963 = vmatprep.mubr.f32.mxu0 0.0
      %2964 = vmatmul.mubr.f32.gmra.mrb[0].mxu0 %v2757
      %v2965 = vpop.f32.mrb[0].mxu0
      %v2966 = vadd.f32 0.0, %v2965
      %v2967 = vpop.f32.mrb[0].mxu0
      %2968 = vmatprep.mubr.f32.mxu0 0.0
      %2969 = vmatmul.mubr.f32.gmra.mrb[0].mxu0 %v2760
      %v2970 = vpop.f32.mrb[0].mxu0
      %v2971 = vadd.f32 0.0, %v2970
      %v2972 = vpop.f32.mrb[0].mxu0
      %2973 = vmatprep.mubr.f32.mxu0 0.0
      %2974 = vmatmul.mubr.f32.gmra.mrb[0].mxu0 %v2763
      %v2975 = vpop.f32.mrb[0].mxu0
      %v2976 = vadd.f32 0.0, %v2975
      %v2977 = vpop.f32.mrb[0].mxu0
      %2978 = vmatprep.mubr.f32.mxu0 0.0
      %2979 = vmatmul.mubr.f32.gmra.mrb[0].mxu0 %v2766
      %v2980 = vpop.f32.mrb[0].mxu0
      %v2981 = vadd.f32 0.0, %v2980
      %v2982 = vpop.f32.mrb[0].mxu0
      %2983 = vmatprep.mubr.f32.mxu0 0.0
      %2984 = vmatmul.mubr.f32.gmra.mrb[0].mxu0 %v2769
      %v2985 = vpop.f32.mrb[0].mxu0
      %v2986 = vadd.f32 0.0, %v2985
      %v2987 = vpop.f32.mrb[0].mxu0
      %2988 = vmatprep.mubr.f32.mxu0 0.0
      %2989 = vmatmul.mubr.f32.gmra.mrb[0].mxu0 %v2772
      %v2990 = vpop.f32.mrb[0].mxu0
      %v2991 = vadd.f32 0.0, %v2990
      %v2992 = vpop.f32.mrb[0].mxu0
      %2993 = vmatprep.mubr.f32.mxu0 0.0
      %2994 = vmatmul.mubr.f32.gmra.mrb[0].mxu0 %v2775
      %v2995 = vpop.f32.mrb[0].mxu0
      %v2996 = vadd.f32 0.0, %v2995
      %v2997 = vpop.f32.mrb[0].mxu0
      %2998 = vmatprep.mubr.f32.mxu0 0.0
      %2999 = vmatmul.mubr.f32.gmra.mrb[0].mxu0 %v2778
      %v3000 = vpop.f32.mrb[0].mxu0
      %v3001 = vadd.f32 0.0, %v3000
      %v3002 = vpop.f32.mrb[0].mxu0
      %3003 = vmatprep.mubr.f32.mxu0 0.0
      %3004 = vmatmul.mubr.f32.gmra.mrb[0].mxu0 %v2781
      %v3005 = vpop.f32.mrb[0].mxu0
      %v3006 = vadd.f32 0.0, %v3005
      %v3007 = vpop.f32.mrb[0].mxu0
      %3008 = vmatprep.mubr.f32.mxu0 0.0
      %3009 = vmatmul.mubr.f32.gmra.mrb[0].mxu0 %v2784
      %v3010 = vpop.f32.mrb[0].mxu0
      %v3011 = vadd.f32 0.0, %v3010
      %v3012 = vpop.f32.mrb[0].mxu0
      %3013 = vdwg.mxu0
      %v3014 = vadd.f32 %v2623, %v2856
      %v3015 = vadd.f32 %v2624, %v2861
      %v3016 = vadd.f32 %v2625, %v2866
      %v3017 = vadd.f32 %v2626, %v2871
      %v3018 = vadd.f32 %v2627, %v2876
      %v3019 = vadd.f32 %v2628, %v2881
      %v3020 = vadd.f32 %v2629, %v2886
      %v3021 = vadd.f32 %v2630, %v2891
      %v3022 = vadd.f32 %v2631, %v2896
      %v3023 = vadd.f32 %v2632, %v2901
      %v3024 = vadd.f32 %v2633, %v2906
      %v3025 = vadd.f32 %v2634, %v2911
      %v3026 = vadd.f32 %v2635, %v2916
      %v3027 = vadd.f32 %v2636, %v2921
      %v3028 = vadd.f32 %v2637, %v2926
      %v3029 = vadd.f32 %v2638, %v2931
      %v3030 = vadd.f32 %v2639, %v2936
      %v3031 = vadd.f32 %v2640, %v2941
      %v3032 = vadd.f32 %v2641, %v2946
      %v3033 = vadd.f32 %v2642, %v2951
      %v3034 = vadd.f32 %v2643, %v2956
      %v3035 = vadd.f32 %v2644, %v2961
      %v3036 = vadd.f32 %v2645, %v2966
      %v3037 = vadd.f32 %v2646, %v2971
      %v3038 = vadd.f32 %v2647, %v2976
      %v3039 = vadd.f32 %v2648, %v2981
      %v3040 = vadd.f32 %v2649, %v2986
      %v3041 = vadd.f32 %v2650, %v2991
      %v3042 = vadd.f32 %v2651, %v2996
      %v3043 = vadd.f32 %v2652, %v3001
      %v3044 = vadd.f32 %v2653, %v3006
      %v3045 = vadd.f32 %v2654, %v3011
      %v3046 = vld [vmem:[%s2655 + $0x1] sm:$0xff]
      %v3047 = vld [vmem:[%s2655 + $0x9] sm:$0xff]
      %v3048 = vld [vmem:[%s2655 + $0x19] sm:$0xff]
      %v3049 = vld [vmem:[%s2655 + $0x21] sm:$0xff]
      %v3050 = vld [vmem:[%s2655 + $0x31] sm:$0xff]
      %v3051 = vld [vmem:[%s2655 + $0x39] sm:$0xff]
      %v3052 = vld [vmem:[%s2655 + $0x49] sm:$0xff]
      %v3053 = vld [vmem:[%s2655 + $0x51] sm:$0xff]
      %v3054 = vld [vmem:[%s2655 + $0x61] sm:$0xff]
      %v3055 = vld [vmem:[%s2655 + $0x69] sm:$0xff]
      %v3056 = vld [vmem:[%s2655 + $0x79] sm:$0xff]
      %v3057 = vld [vmem:[%s2655 + $0x81] sm:$0xff]
      %v3058 = vld [vmem:[%s2655 + $0x91] sm:$0xff]
      %v3059 = vld [vmem:[%s2655 + $0x99] sm:$0xff]
      %v3060 = vld [vmem:[%s2655 + $0xa9] sm:$0xff]
      %v3061 = vld [vmem:[%s2655 + $0xb1] sm:$0xff]
      %v3062 = vld [vmem:[%s2655 + $0xc1] sm:$0xff]
      %v3063 = vld [vmem:[%s2655 + $0xc9] sm:$0xff]
      %v3064 = vld [vmem:[%s2655 + $0xd9] sm:$0xff]
      %v3065 = vld [vmem:[%s2655 + $0xe1] sm:$0xff]
      %v3066 = vld [vmem:[%s2655 + $0xf1] sm:$0xff]
      %v3067 = vld [vmem:[%s2655 + $0xf9] sm:$0xff]
      %v3068 = vld [vmem:[%s2655 + $0x109] sm:$0xff]
      %v3069 = vld [vmem:[%s2655 + $0x111] sm:$0xff]
      %v3070 = vld [vmem:[%s2655 + $0x121] sm:$0xff]
      %v3071 = vld [vmem:[%s2655 + $0x129] sm:$0xff]
      %v3072 = vld [vmem:[%s2655 + $0x139] sm:$0xff]
      %v3073 = vld [vmem:[%s2655 + $0x141] sm:$0xff]
      %v3074 = vld [vmem:[%s2655 + $0x151] sm:$0xff]
      %v3075 = vld [vmem:[%s2655 + $0x159] sm:$0xff]
      %v3076 = vld [vmem:[%s2655 + $0x169] sm:$0xff]
      %v3077 = vld [vmem:[%s2655 + $0x171] sm:$0xff]
      %s3078 = scalar_lea.vmem %s1, 28
      %v3079 = vld [vmem:[%s3078] sm:$0xf]
      %v3081 = vsel %vm225, %v3046, 0
      %v3084 = vsel %vm225, %v3047, 0
      %v3087 = vsel %vm225, %v3048, 0
      %v3090 = vsel %vm225, %v3049, 0
      %v3093 = vsel %vm225, %v3050, 0
      %v3096 = vsel %vm225, %v3051, 0
      %v3099 = vsel %vm225, %v3052, 0
      %v3102 = vsel %vm225, %v3053, 0
      %v3105 = vsel %vm225, %v3054, 0
      %v3108 = vsel %vm225, %v3055, 0
      %v3111 = vsel %vm225, %v3056, 0
      %v3114 = vsel %vm225, %v3057, 0
      %v3117 = vsel %vm225, %v3058, 0
      %v3120 = vsel %vm225, %v3059, 0
      %v3123 = vsel %vm225, %v3060, 0
      %v3126 = vsel %vm225, %v3061, 0
      %v3129 = vsel %vm225, %v3062, 0
      %v3132 = vsel %vm225, %v3063, 0
      %v3135 = vsel %vm225, %v3064, 0
      %v3138 = vsel %vm225, %v3065, 0
      %v3141 = vsel %vm225, %v3066, 0
      %v3144 = vsel %vm225, %v3067, 0
      %v3147 = vsel %vm225, %v3068, 0
      %v3150 = vsel %vm225, %v3069, 0
      %v3153 = vsel %vm225, %v3070, 0
      %v3156 = vsel %vm225, %v3071, 0
      %v3159 = vsel %vm225, %v3072, 0
      %v3162 = vsel %vm225, %v3073, 0
      %v3165 = vsel %vm225, %v3074, 0
      %v3168 = vsel %vm225, %v3075, 0
      %v3171 = vsel %vm225, %v3076, 0
      %v3174 = vsel %vm225, %v3077, 0
      %v3177 = vsel %vm542, %v3079, 0
      %3179 = vmatprep.subr.mxu0 0.0
      %3180 = vmatpush1.msra.mxu0 %v3177
      %3181 = vmatprep.subr.mxu0 0.0
      %3182 = vmatpush1.msra.mxu0 0.0
      %3183 = vmatprep.subr.mxu0 0.0
      %3184 = vmatpush1.msra.mxu0 0.0
      %3185 = vmatprep.subr.mxu0 0.0
      %3186 = vmatpush1.msra.mxu0 0.0
      %3187 = vmatprep.subr.mxu0 0.0
      %3188 = vmatpush1.msra.mxu0 0.0
      %3189 = vmatprep.subr.mxu0 0.0
      %3190 = vmatpush1.msra.mxu0 0.0
      %3191 = vmatprep.subr.mxu0 0.0
      %3192 = vmatpush1.msra.mxu0 0.0
      %3193 = vmatprep.subr.mxu0 0.0
      %3194 = vmatpush1.msra.mxu0 0.0
      %3195 = vmatprep.subr.mxu0 0.0
      %3196 = vmatpush1.msra.mxu0 0.0
      %3197 = vmatprep.subr.mxu0 0.0
      %3198 = vmatpush1.msra.mxu0 0.0
      %3199 = vmatprep.subr.mxu0 0.0
      %3200 = vmatpush1.msra.mxu0 0.0
      %3201 = vmatprep.subr.mxu0 0.0
      %3202 = vmatpush1.msra.mxu0 0.0
      %3203 = vmatprep.subr.mxu0 0.0
      %3204 = vmatpush1.msra.mxu0 0.0
      %3205 = vmatprep.subr.mxu0 0.0
      %3206 = vmatpush1.msra.mxu0 0.0
      %3207 = vmatprep.subr.mxu0 0.0
      %3208 = vmatpush1.msra.mxu0 0.0
      %3209 = vmatprep.subr.mxu0 0.0
      %3210 = vmatpush1.msra.mxu0 0.0
      %3211 = vmatprep.subr.mxu0 0.0
      %3212 = vmatpush1.msra.mxu0 0.0
      %3213 = vmatprep.subr.mxu0 0.0
      %3214 = vmatpush1.msra.mxu0 0.0
      %3215 = vmatprep.subr.mxu0 0.0
      %3216 = vmatpush1.msra.mxu0 0.0
      %3217 = vmatprep.subr.mxu0 0.0
      %3218 = vmatpush1.msra.mxu0 0.0
      %3219 = vmatprep.subr.mxu0 0.0
      %3220 = vmatpush1.msra.mxu0 0.0
      %3221 = vmatprep.subr.mxu0 0.0
      %3222 = vmatpush1.msra.mxu0 0.0
      %3223 = vmatprep.subr.mxu0 0.0
      %3224 = vmatpush1.msra.mxu0 0.0
      %3225 = vmatprep.subr.mxu0 0.0
      %3226 = vmatpush1.msra.mxu0 0.0
      %3227 = vmatprep.subr.mxu0 0.0
      %3228 = vmatpush1.msra.mxu0 0.0
      %3229 = vmatprep.subr.mxu0 0.0
      %3230 = vmatpush1.msra.mxu0 0.0
      %3231 = vmatprep.subr.mxu0 0.0
      %3232 = vmatpush1.msra.mxu0 0.0
      %3233 = vmatprep.subr.mxu0 0.0
      %3234 = vmatpush1.msra.mxu0 0.0
      %3235 = vmatprep.subr.mxu0 0.0
      %3236 = vmatpush1.msra.mxu0 0.0
      %3237 = vmatprep.subr.mxu0 0.0
      %3238 = vmatpush1.msra.mxu0 0.0
      %3239 = vmatprep.subr.mxu0 0.0
      %3240 = vmatpush1.msra.mxu0 0.0
      %3241 = vmatprep.subr.mxu0 0.0
      %3242 = vmatpush1.msra.mxu0 0.0
      %3243 = vmatprep.mubr.f32.mxu0 0.0
      %3244 = vmatmul.mubr.f32.gmra.mrb[0].mxu0 %v3081
      %v3245 = vpop.f32.mrb[0].mxu0
      %v3246 = vadd.f32 0.0, %v3245
      %v3247 = vpop.f32.mrb[0].mxu0
      %3248 = vmatprep.mubr.f32.mxu0 0.0
      %3249 = vmatmul.mubr.f32.gmra.mrb[0].mxu0 %v3084
      %v3250 = vpop.f32.mrb[0].mxu0
      %v3251 = vadd.f32 0.0, %v3250
      %v3252 = vpop.f32.mrb[0].mxu0
      %3253 = vmatprep.mubr.f32.mxu0 0.0
      %3254 = vmatmul.mubr.f32.gmra.mrb[0].mxu0 %v3087
      %v3255 = vpop.f32.mrb[0].mxu0
      %v3256 = vadd.f32 0.0, %v3255
      %v3257 = vpop.f32.mrb[0].mxu0
      %3258 = vmatprep.mubr.f32.mxu0 0.0
      %3259 = vmatmul.mubr.f32.gmra.mrb[0].mxu0 %v3090
      %v3260 = vpop.f32.mrb[0].mxu0
      %v3261 = vadd.f32 0.0, %v3260
      %v3262 = vpop.f32.mrb[0].mxu0
      %3263 = vmatprep.mubr.f32.mxu0 0.0
      %3264 = vmatmul.mubr.f32.gmra.mrb[0].mxu0 %v3093
      %v3265 = vpop.f32.mrb[0].mxu0
      %v3266 = vadd.f32 0.0, %v3265
      %v3267 = vpop.f32.mrb[0].mxu0
      %3268 = vmatprep.mubr.f32.mxu0 0.0
      %3269 = vmatmul.mubr.f32.gmra.mrb[0].mxu0 %v3096
      %v3270 = vpop.f32.mrb[0].mxu0
      %v3271 = vadd.f32 0.0, %v3270
      %v3272 = vpop.f32.mrb[0].mxu0
      %3273 = vmatprep.mubr.f32.mxu0 0.0
      %3274 = vmatmul.mubr.f32.gmra.mrb[0].mxu0 %v3099
      %v3275 = vpop.f32.mrb[0].mxu0
      %v3276 = vadd.f32 0.0, %v3275
      %v3277 = vpop.f32.mrb[0].mxu0
      %3278 = vmatprep.mubr.f32.mxu0 0.0
      %3279 = vmatmul.mubr.f32.gmra.mrb[0].mxu0 %v3102
      %v3280 = vpop.f32.mrb[0].mxu0
      %v3281 = vadd.f32 0.0, %v3280
      %v3282 = vpop.f32.mrb[0].mxu0
      %3283 = vmatprep.mubr.f32.mxu0 0.0
      %3284 = vmatmul.mubr.f32.gmra.mrb[0].mxu0 %v3105
      %v3285 = vpop.f32.mrb[0].mxu0
      %v3286 = vadd.f32 0.0, %v3285
      %v3287 = vpop.f32.mrb[0].mxu0
      %3288 = vmatprep.mubr.f32.mxu0 0.0
      %3289 = vmatmul.mubr.f32.gmra.mrb[0].mxu0 %v3108
      %v3290 = vpop.f32.mrb[0].mxu0
      %v3291 = vadd.f32 0.0, %v3290
      %v3292 = vpop.f32.mrb[0].mxu0
      %3293 = vmatprep.mubr.f32.mxu0 0.0
      %3294 = vmatmul.mubr.f32.gmra.mrb[0].mxu0 %v3111
      %v3295 = vpop.f32.mrb[0].mxu0
      %v3296 = vadd.f32 0.0, %v3295
      %v3297 = vpop.f32.mrb[0].mxu0
      %3298 = vmatprep.mubr.f32.mxu0 0.0
      %3299 = vmatmul.mubr.f32.gmra.mrb[0].mxu0 %v3114
      %v3300 = vpop.f32.mrb[0].mxu0
      %v3301 = vadd.f32 0.0, %v3300
      %v3302 = vpop.f32.mrb[0].mxu0
      %3303 = vmatprep.mubr.f32.mxu0 0.0
      %3304 = vmatmul.mubr.f32.gmra.mrb[0].mxu0 %v3117
      %v3305 = vpop.f32.mrb[0].mxu0
      %v3306 = vadd.f32 0.0, %v3305
      %v3307 = vpop.f32.mrb[0].mxu0
      %3308 = vmatprep.mubr.f32.mxu0 0.0
      %3309 = vmatmul.mubr.f32.gmra.mrb[0].mxu0 %v3120
      %v3310 = vpop.f32.mrb[0].mxu0
      %v3311 = vadd.f32 0.0, %v3310
      %v3312 = vpop.f32.mrb[0].mxu0
      %3313 = vmatprep.mubr.f32.mxu0 0.0
      %3314 = vmatmul.mubr.f32.gmra.mrb[0].mxu0 %v3123
      %v3315 = vpop.f32.mrb[0].mxu0
      %v3316 = vadd.f32 0.0, %v3315
      %v3317 = vpop.f32.mrb[0].mxu0
      %3318 = vmatprep.mubr.f32.mxu0 0.0
      %3319 = vmatmul.mubr.f32.gmra.mrb[0].mxu0 %v3126
      %v3320 = vpop.f32.mrb[0].mxu0
      %v3321 = vadd.f32 0.0, %v3320
      %v3322 = vpop.f32.mrb[0].mxu0
      %3323 = vmatprep.mubr.f32.mxu0 0.0
      %3324 = vmatmul.mubr.f32.gmra.mrb[0].mxu0 %v3129
      %v3325 = vpop.f32.mrb[0].mxu0
      %v3326 = vadd.f32 0.0, %v3325
      %v3327 = vpop.f32.mrb[0].mxu0
      %3328 = vmatprep.mubr.f32.mxu0 0.0
      %3329 = vmatmul.mubr.f32.gmra.mrb[0].mxu0 %v3132
      %v3330 = vpop.f32.mrb[0].mxu0
      %v3331 = vadd.f32 0.0, %v3330
      %v3332 = vpop.f32.mrb[0].mxu0
      %3333 = vmatprep.mubr.f32.mxu0 0.0
      %3334 = vmatmul.mubr.f32.gmra.mrb[0].mxu0 %v3135
      %v3335 = vpop.f32.mrb[0].mxu0
      %v3336 = vadd.f32 0.0, %v3335
      %v3337 = vpop.f32.mrb[0].mxu0
      %3338 = vmatprep.mubr.f32.mxu0 0.0
      %3339 = vmatmul.mubr.f32.gmra.mrb[0].mxu0 %v3138
      %v3340 = vpop.f32.mrb[0].mxu0
      %v3341 = vadd.f32 0.0, %v3340
      %v3342 = vpop.f32.mrb[0].mxu0
      %3343 = vmatprep.mubr.f32.mxu0 0.0
      %3344 = vmatmul.mubr.f32.gmra.mrb[0].mxu0 %v3141
      %v3345 = vpop.f32.mrb[0].mxu0
      %v3346 = vadd.f32 0.0, %v3345
      %v3347 = vpop.f32.mrb[0].mxu0
      %3348 = vmatprep.mubr.f32.mxu0 0.0
      %3349 = vmatmul.mubr.f32.gmra.mrb[0].mxu0 %v3144
      %v3350 = vpop.f32.mrb[0].mxu0
      %v3351 = vadd.f32 0.0, %v3350
      %v3352 = vpop.f32.mrb[0].mxu0
      %3353 = vmatprep.mubr.f32.mxu0 0.0
      %3354 = vmatmul.mubr.f32.gmra.mrb[0].mxu0 %v3147
      %v3355 = vpop.f32.mrb[0].mxu0
      %v3356 = vadd.f32 0.0, %v3355
      %v3357 = vpop.f32.mrb[0].mxu0
      %3358 = vmatprep.mubr.f32.mxu0 0.0
      %3359 = vmatmul.mubr.f32.gmra.mrb[0].mxu0 %v3150
      %v3360 = vpop.f32.mrb[0].mxu0
      %v3361 = vadd.f32 0.0, %v3360
      %v3362 = vpop.f32.mrb[0].mxu0
      %3363 = vmatprep.mubr.f32.mxu0 0.0
      %3364 = vmatmul.mubr.f32.gmra.mrb[0].mxu0 %v3153
      %v3365 = vpop.f32.mrb[0].mxu0
      %v3366 = vadd.f32 0.0, %v3365
      %v3367 = vpop.f32.mrb[0].mxu0
      %3368 = vmatprep.mubr.f32.mxu0 0.0
      %3369 = vmatmul.mubr.f32.gmra.mrb[0].mxu0 %v3156
      %v3370 = vpop.f32.mrb[0].mxu0
      %v3371 = vadd.f32 0.0, %v3370
      %v3372 = vpop.f32.mrb[0].mxu0
      %3373 = vmatprep.mubr.f32.mxu0 0.0
      %3374 = vmatmul.mubr.f32.gmra.mrb[0].mxu0 %v3159
      %v3375 = vpop.f32.mrb[0].mxu0
      %v3376 = vadd.f32 0.0, %v3375
      %v3377 = vpop.f32.mrb[0].mxu0
      %3378 = vmatprep.mubr.f32.mxu0 0.0
      %3379 = vmatmul.mubr.f32.gmra.mrb[0].mxu0 %v3162
      %v3380 = vpop.f32.mrb[0].mxu0
      %v3381 = vadd.f32 0.0, %v3380
      %v3382 = vpop.f32.mrb[0].mxu0
      %3383 = vmatprep.mubr.f32.mxu0 0.0
      %3384 = vmatmul.mubr.f32.gmra.mrb[0].mxu0 %v3165
      %v3385 = vpop.f32.mrb[0].mxu0
      %v3386 = vadd.f32 0.0, %v3385
      %v3387 = vpop.f32.mrb[0].mxu0
      %3388 = vmatprep.mubr.f32.mxu0 0.0
      %3389 = vmatmul.mubr.f32.gmra.mrb[0].mxu0 %v3168
      %v3390 = vpop.f32.mrb[0].mxu0
      %v3391 = vadd.f32 0.0, %v3390
      %v3392 = vpop.f32.mrb[0].mxu0
      %3393 = vmatprep.mubr.f32.mxu0 0.0
      %3394 = vmatmul.mubr.f32.gmra.mrb[0].mxu0 %v3171
      %v3395 = vpop.f32.mrb[0].mxu0
      %v3396 = vadd.f32 0.0, %v3395
      %v3397 = vpop.f32.mrb[0].mxu0
      %3398 = vmatprep.mubr.f32.mxu0 0.0
      %3399 = vmatmul.mubr.f32.gmra.mrb[0].mxu0 %v3174
      %v3400 = vpop.f32.mrb[0].mxu0
      %v3401 = vadd.f32 0.0, %v3400
      %v3402 = vpop.f32.mrb[0].mxu0
      %3403 = vdwg.mxu0
      %v3404 = vadd.f32 %v3014, %v3246
      %v3405 = vadd.f32 %v3015, %v3251
      %v3406 = vadd.f32 %v3016, %v3256
      %v3407 = vadd.f32 %v3017, %v3261
      %v3408 = vadd.f32 %v3018, %v3266
      %v3409 = vadd.f32 %v3019, %v3271
      %v3410 = vadd.f32 %v3020, %v3276
      %v3411 = vadd.f32 %v3021, %v3281
      %v3412 = vadd.f32 %v3022, %v3286
      %v3413 = vadd.f32 %v3023, %v3291
      %v3414 = vadd.f32 %v3024, %v3296
      %v3415 = vadd.f32 %v3025, %v3301
      %v3416 = vadd.f32 %v3026, %v3306
      %v3417 = vadd.f32 %v3027, %v3311
      %v3418 = vadd.f32 %v3028, %v3316
      %v3419 = vadd.f32 %v3029, %v3321
      %v3420 = vadd.f32 %v3030, %v3326
      %v3421 = vadd.f32 %v3031, %v3331
      %v3422 = vadd.f32 %v3032, %v3336
      %v3423 = vadd.f32 %v3033, %v3341
      %v3424 = vadd.f32 %v3034, %v3346
      %v3425 = vadd.f32 %v3035, %v3351
      %v3426 = vadd.f32 %v3036, %v3356
      %v3427 = vadd.f32 %v3037, %v3361
      %v3428 = vadd.f32 %v3038, %v3366
      %v3429 = vadd.f32 %v3039, %v3371
      %v3430 = vadd.f32 %v3040, %v3376
      %v3431 = vadd.f32 %v3041, %v3381
      %v3432 = vadd.f32 %v3042, %v3386
      %v3433 = vadd.f32 %v3043, %v3391
      %v3434 = vadd.f32 %v3044, %v3396
      %v3435 = vadd.f32 %v3045, %v3401
      %v3436 = vld [vmem:[%s2655 + $0x2] sm:$0xff]
      %v3437 = vld [vmem:[%s2655 + $0xa] sm:$0xff]
      %v3438 = vld [vmem:[%s2655 + $0x1a] sm:$0xff]
      %v3439 = vld [vmem:[%s2655 + $0x22] sm:$0xff]
      %v3440 = vld [vmem:[%s2655 + $0x32] sm:$0xff]
      %v3441 = vld [vmem:[%s2655 + $0x3a] sm:$0xff]
      %v3442 = vld [vmem:[%s2655 + $0x4a] sm:$0xff]
      %v3443 = vld [vmem:[%s2655 + $0x52] sm:$0xff]
      %v3444 = vld [vmem:[%s2655 + $0x62] sm:$0xff]
      %v3445 = vld [vmem:[%s2655 + $0x6a] sm:$0xff]
      %v3446 = vld [vmem:[%s2655 + $0x7a] sm:$0xff]
      %v3447 = vld [vmem:[%s2655 + $0x82] sm:$0xff]
      %v3448 = vld [vmem:[%s2655 + $0x92] sm:$0xff]
      %v3449 = vld [vmem:[%s2655 + $0x9a] sm:$0xff]
      %v3450 = vld [vmem:[%s2655 + $0xaa] sm:$0xff]
      %v3451 = vld [vmem:[%s2655 + $0xb2] sm:$0xff]
      %v3452 = vld [vmem:[%s2655 + $0xc2] sm:$0xff]
      %v3453 = vld [vmem:[%s2655 + $0xca] sm:$0xff]
      %v3454 = vld [vmem:[%s2655 + $0xda] sm:$0xff]
      %v3455 = vld [vmem:[%s2655 + $0xe2] sm:$0xff]
      %v3456 = vld [vmem:[%s2655 + $0xf2] sm:$0xff]
      %v3457 = vld [vmem:[%s2655 + $0xfa] sm:$0xff]
      %v3458 = vld [vmem:[%s2655 + $0x10a] sm:$0xff]
      %v3459 = vld [vmem:[%s2655 + $0x112] sm:$0xff]
      %v3460 = vld [vmem:[%s2655 + $0x122] sm:$0xff]
      %v3461 = vld [vmem:[%s2655 + $0x12a] sm:$0xff]
      %v3462 = vld [vmem:[%s2655 + $0x13a] sm:$0xff]
      %v3463 = vld [vmem:[%s2655 + $0x142] sm:$0xff]
      %v3464 = vld [vmem:[%s2655 + $0x152] sm:$0xff]
      %v3465 = vld [vmem:[%s2655 + $0x15a] sm:$0xff]
      %v3466 = vld [vmem:[%s2655 + $0x16a] sm:$0xff]
      %v3467 = vld [vmem:[%s2655 + $0x172] sm:$0xff]
      %s3468 = scalar_lea.vmem %s1, 32
      %v3469 = vld [vmem:[%s3468] sm:$0xf]
      %v3471 = vsel %vm225, %v3436, 0
      %v3474 = vsel %vm225, %v3437, 0
      %v3477 = vsel %vm225, %v3438, 0
      %v3480 = vsel %vm225, %v3439, 0
      %v3483 = vsel %vm225, %v3440, 0
      %v3486 = vsel %vm225, %v3441, 0
      %v3489 = vsel %vm225, %v3442, 0
      %v3492 = vsel %vm225, %v3443, 0
      %v3495 = vsel %vm225, %v3444, 0
      %v3498 = vsel %vm225, %v3445, 0
      %v3501 = vsel %vm225, %v3446, 0
      %v3504 = vsel %vm225, %v3447, 0
      %v3507 = vsel %vm225, %v3448, 0
      %v3510 = vsel %vm225, %v3449, 0
      %v3513 = vsel %vm225, %v3450, 0
      %v3516 = vsel %vm225, %v3451, 0
      %v3519 = vsel %vm225, %v3452, 0
      %v3522 = vsel %vm225, %v3453, 0
      %v3525 = vsel %vm225, %v3454, 0
      %v3528 = vsel %vm225, %v3455, 0
      %v3531 = vsel %vm225, %v3456, 0
      %v3534 = vsel %vm225, %v3457, 0
      %v3537 = vsel %vm225, %v3458, 0
      %v3540 = vsel %vm225, %v3459, 0
      %v3543 = vsel %vm225, %v3460, 0
      %v3546 = vsel %vm225, %v3461, 0
      %v3549 = vsel %vm225, %v3462, 0
      %v3552 = vsel %vm225, %v3463, 0
      %v3555 = vsel %vm225, %v3464, 0
      %v3558 = vsel %vm225, %v3465, 0
      %v3561 = vsel %vm225, %v3466, 0
      %v3564 = vsel %vm225, %v3467, 0
      %v3567 = vsel %vm542, %v3469, 0
      %3569 = vmatprep.subr.mxu0 0.0
      %3570 = vmatpush1.msra.mxu0 %v3567
      %3571 = vmatprep.subr.mxu0 0.0
      %3572 = vmatpush1.msra.mxu0 0.0
      %3573 = vmatprep.subr.mxu0 0.0
      %3574 = vmatpush1.msra.mxu0 0.0
      %3575 = vmatprep.subr.mxu0 0.0
      %3576 = vmatpush1.msra.mxu0 0.0
      %3577 = vmatprep.subr.mxu0 0.0
      %3578 = vmatpush1.msra.mxu0 0.0
      %3579 = vmatprep.subr.mxu0 0.0
      %3580 = vmatpush1.msra.mxu0 0.0
      %3581 = vmatprep.subr.mxu0 0.0
      %3582 = vmatpush1.msra.mxu0 0.0
      %3583 = vmatprep.subr.mxu0 0.0
      %3584 = vmatpush1.msra.mxu0 0.0
      %3585 = vmatprep.subr.mxu0 0.0
      %3586 = vmatpush1.msra.mxu0 0.0
      %3587 = vmatprep.subr.mxu0 0.0
      %3588 = vmatpush1.msra.mxu0 0.0
      %3589 = vmatprep.subr.mxu0 0.0
      %3590 = vmatpush1.msra.mxu0 0.0
      %3591 = vmatprep.subr.mxu0 0.0
      %3592 = vmatpush1.msra.mxu0 0.0
      %3593 = vmatprep.subr.mxu0 0.0
      %3594 = vmatpush1.msra.mxu0 0.0
      %3595 = vmatprep.subr.mxu0 0.0
      %3596 = vmatpush1.msra.mxu0 0.0
      %3597 = vmatprep.subr.mxu0 0.0
      %3598 = vmatpush1.msra.mxu0 0.0
      %3599 = vmatprep.subr.mxu0 0.0
      %3600 = vmatpush1.msra.mxu0 0.0
      %3601 = vmatprep.subr.mxu0 0.0
      %3602 = vmatpush1.msra.mxu0 0.0
      %3603 = vmatprep.subr.mxu0 0.0
      %3604 = vmatpush1.msra.mxu0 0.0
      %3605 = vmatprep.subr.mxu0 0.0
      %3606 = vmatpush1.msra.mxu0 0.0
      %3607 = vmatprep.subr.mxu0 0.0
      %3608 = vmatpush1.msra.mxu0 0.0
      %3609 = vmatprep.subr.mxu0 0.0
      %3610 = vmatpush1.msra.mxu0 0.0
      %3611 = vmatprep.subr.mxu0 0.0
      %3612 = vmatpush1.msra.mxu0 0.0
      %3613 = vmatprep.subr.mxu0 0.0
      %3614 = vmatpush1.msra.mxu0 0.0
      %3615 = vmatprep.subr.mxu0 0.0
      %3616 = vmatpush1.msra.mxu0 0.0
      %3617 = vmatprep.subr.mxu0 0.0
      %3618 = vmatpush1.msra.mxu0 0.0
      %3619 = vmatprep.subr.mxu0 0.0
      %3620 = vmatpush1.msra.mxu0 0.0
      %3621 = vmatprep.subr.mxu0 0.0
      %3622 = vmatpush1.msra.mxu0 0.0
      %3623 = vmatprep.subr.mxu0 0.0
      %3624 = vmatpush1.msra.mxu0 0.0
      %3625 = vmatprep.subr.mxu0 0.0
      %3626 = vmatpush1.msra.mxu0 0.0
      %3627 = vmatprep.subr.mxu0 0.0
      %3628 = vmatpush1.msra.mxu0 0.0
      %3629 = vmatprep.subr.mxu0 0.0
      %3630 = vmatpush1.msra.mxu0 0.0
      %3631 = vmatprep.subr.mxu0 0.0
      %3632 = vmatpush1.msra.mxu0 0.0
      %3633 = vmatprep.mubr.f32.mxu0 0.0
      %3634 = vmatmul.mubr.f32.gmra.mrb[0].mxu0 %v3471
      %v3635 = vpop.f32.mrb[0].mxu0
      %v3636 = vadd.f32 0.0, %v3635
      %v3637 = vpop.f32.mrb[0].mxu0
      %3638 = vmatprep.mubr.f32.mxu0 0.0
      %3639 = vmatmul.mubr.f32.gmra.mrb[0].mxu0 %v3474
      %v3640 = vpop.f32.mrb[0].mxu0
      %v3641 = vadd.f32 0.0, %v3640
      %v3642 = vpop.f32.mrb[0].mxu0
      %3643 = vmatprep.mubr.f32.mxu0 0.0
      %3644 = vmatmul.mubr.f32.gmra.mrb[0].mxu0 %v3477
      %v3645 = vpop.f32.mrb[0].mxu0
      %v3646 = vadd.f32 0.0, %v3645
      %v3647 = vpop.f32.mrb[0].mxu0
      %3648 = vmatprep.mubr.f32.mxu0 0.0
      %3649 = vmatmul.mubr.f32.gmra.mrb[0].mxu0 %v3480
      %v3650 = vpop.f32.mrb[0].mxu0
      %v3651 = vadd.f32 0.0, %v3650
      %v3652 = vpop.f32.mrb[0].mxu0
      %3653 = vmatprep.mubr.f32.mxu0 0.0
      %3654 = vmatmul.mubr.f32.gmra.mrb[0].mxu0 %v3483
      %v3655 = vpop.f32.mrb[0].mxu0
      %v3656 = vadd.f32 0.0, %v3655
      %v3657 = vpop.f32.mrb[0].mxu0
      %3658 = vmatprep.mubr.f32.mxu0 0.0
      %3659 = vmatmul.mubr.f32.gmra.mrb[0].mxu0 %v3486
      %v3660 = vpop.f32.mrb[0].mxu0
      %v3661 = vadd.f32 0.0, %v3660
      %v3662 = vpop.f32.mrb[0].mxu0
      %3663 = vmatprep.mubr.f32.mxu0 0.0
      %3664 = vmatmul.mubr.f32.gmra.mrb[0].mxu0 %v3489
      %v3665 = vpop.f32.mrb[0].mxu0
      %v3666 = vadd.f32 0.0, %v3665
      %v3667 = vpop.f32.mrb[0].mxu0
      %3668 = vmatprep.mubr.f32.mxu0 0.0
      %3669 = vmatmul.mubr.f32.gmra.mrb[0].mxu0 %v3492
      %v3670 = vpop.f32.mrb[0].mxu0
      %v3671 = vadd.f32 0.0, %v3670
      %v3672 = vpop.f32.mrb[0].mxu0
      %3673 = vmatprep.mubr.f32.mxu0 0.0
      %3674 = vmatmul.mubr.f32.gmra.mrb[0].mxu0 %v3495
      %v3675 = vpop.f32.mrb[0].mxu0
      %v3676 = vadd.f32 0.0, %v3675
      %v3677 = vpop.f32.mrb[0].mxu0
      %3678 = vmatprep.mubr.f32.mxu0 0.0
      %3679 = vmatmul.mubr.f32.gmra.mrb[0].mxu0 %v3498
      %v3680 = vpop.f32.mrb[0].mxu0
      %v3681 = vadd.f32 0.0, %v3680
      %v3682 = vpop.f32.mrb[0].mxu0
      %3683 = vmatprep.mubr.f32.mxu0 0.0
      %3684 = vmatmul.mubr.f32.gmra.mrb[0].mxu0 %v3501
      %v3685 = vpop.f32.mrb[0].mxu0
      %v3686 = vadd.f32 0.0, %v3685
      %v3687 = vpop.f32.mrb[0].mxu0
      %3688 = vmatprep.mubr.f32.mxu0 0.0
      %3689 = vmatmul.mubr.f32.gmra.mrb[0].mxu0 %v3504
      %v3690 = vpop.f32.mrb[0].mxu0
      %v3691 = vadd.f32 0.0, %v3690
      %v3692 = vpop.f32.mrb[0].mxu0
      %3693 = vmatprep.mubr.f32.mxu0 0.0
      %3694 = vmatmul.mubr.f32.gmra.mrb[0].mxu0 %v3507
      %v3695 = vpop.f32.mrb[0].mxu0
      %v3696 = vadd.f32 0.0, %v3695
      %v3697 = vpop.f32.mrb[0].mxu0
      %3698 = vmatprep.mubr.f32.mxu0 0.0
      %3699 = vmatmul.mubr.f32.gmra.mrb[0].mxu0 %v3510
      %v3700 = vpop.f32.mrb[0].mxu0
      %v3701 = vadd.f32 0.0, %v3700
      %v3702 = vpop.f32.mrb[0].mxu0
      %3703 = vmatprep.mubr.f32.mxu0 0.0
      %3704 = vmatmul.mubr.f32.gmra.mrb[0].mxu0 %v3513
      %v3705 = vpop.f32.mrb[0].mxu0
      %v3706 = vadd.f32 0.0, %v3705
      %v3707 = vpop.f32.mrb[0].mxu0
      %3708 = vmatprep.mubr.f32.mxu0 0.0
      %3709 = vmatmul.mubr.f32.gmra.mrb[0].mxu0 %v3516
      %v3710 = vpop.f32.mrb[0].mxu0
      %v3711 = vadd.f32 0.0, %v3710
      %v3712 = vpop.f32.mrb[0].mxu0
      %3713 = vmatprep.mubr.f32.mxu0 0.0
      %3714 = vmatmul.mubr.f32.gmra.mrb[0].mxu0 %v3519
      %v3715 = vpop.f32.mrb[0].mxu0
      %v3716 = vadd.f32 0.0, %v3715
      %v3717 = vpop.f32.mrb[0].mxu0
      %3718 = vmatprep.mubr.f32.mxu0 0.0
      %3719 = vmatmul.mubr.f32.gmra.mrb[0].mxu0 %v3522
      %v3720 = vpop.f32.mrb[0].mxu0
      %v3721 = vadd.f32 0.0, %v3720
      %v3722 = vpop.f32.mrb[0].mxu0
      %3723 = vmatprep.mubr.f32.mxu0 0.0
      %3724 = vmatmul.mubr.f32.gmra.mrb[0].mxu0 %v3525
      %v3725 = vpop.f32.mrb[0].mxu0
      %v3726 = vadd.f32 0.0, %v3725
      %v3727 = vpop.f32.mrb[0].mxu0
      %3728 = vmatprep.mubr.f32.mxu0 0.0
      %3729 = vmatmul.mubr.f32.gmra.mrb[0].mxu0 %v3528
      %v3730 = vpop.f32.mrb[0].mxu0
      %v3731 = vadd.f32 0.0, %v3730
      %v3732 = vpop.f32.mrb[0].mxu0
      %3733 = vmatprep.mubr.f32.mxu0 0.0
      %3734 = vmatmul.mubr.f32.gmra.mrb[0].mxu0 %v3531
      %v3735 = vpop.f32.mrb[0].mxu0
      %v3736 = vadd.f32 0.0, %v3735
      %v3737 = vpop.f32.mrb[0].mxu0
      %3738 = vmatprep.mubr.f32.mxu0 0.0
      %3739 = vmatmul.mubr.f32.gmra.mrb[0].mxu0 %v3534
      %v3740 = vpop.f32.mrb[0].mxu0
      %v3741 = vadd.f32 0.0, %v3740
      %v3742 = vpop.f32.mrb[0].mxu0
      %3743 = vmatprep.mubr.f32.mxu0 0.0
      %3744 = vmatmul.mubr.f32.gmra.mrb[0].mxu0 %v3537
      %v3745 = vpop.f32.mrb[0].mxu0
      %v3746 = vadd.f32 0.0, %v3745
      %v3747 = vpop.f32.mrb[0].mxu0
      %3748 = vmatprep.mubr.f32.mxu0 0.0
      %3749 = vmatmul.mubr.f32.gmra.mrb[0].mxu0 %v3540
      %v3750 = vpop.f32.mrb[0].mxu0
      %v3751 = vadd.f32 0.0, %v3750
      %v3752 = vpop.f32.mrb[0].mxu0
      %3753 = vmatprep.mubr.f32.mxu0 0.0
      %3754 = vmatmul.mubr.f32.gmra.mrb[0].mxu0 %v3543
      %v3755 = vpop.f32.mrb[0].mxu0
      %v3756 = vadd.f32 0.0, %v3755
      %v3757 = vpop.f32.mrb[0].mxu0
      %3758 = vmatprep.mubr.f32.mxu0 0.0
      %3759 = vmatmul.mubr.f32.gmra.mrb[0].mxu0 %v3546
      %v3760 = vpop.f32.mrb[0].mxu0
      %v3761 = vadd.f32 0.0, %v3760
      %v3762 = vpop.f32.mrb[0].mxu0
      %3763 = vmatprep.mubr.f32.mxu0 0.0
      %3764 = vmatmul.mubr.f32.gmra.mrb[0].mxu0 %v3549
      %v3765 = vpop.f32.mrb[0].mxu0
      %v3766 = vadd.f32 0.0, %v3765
      %v3767 = vpop.f32.mrb[0].mxu0
      %3768 = vmatprep.mubr.f32.mxu0 0.0
      %3769 = vmatmul.mubr.f32.gmra.mrb[0].mxu0 %v3552
      %v3770 = vpop.f32.mrb[0].mxu0
      %v3771 = vadd.f32 0.0, %v3770
      %v3772 = vpop.f32.mrb[0].mxu0
      %3773 = vmatprep.mubr.f32.mxu0 0.0
      %3774 = vmatmul.mubr.f32.gmra.mrb[0].mxu0 %v3555
      %v3775 = vpop.f32.mrb[0].mxu0
      %v3776 = vadd.f32 0.0, %v3775
      %v3777 = vpop.f32.mrb[0].mxu0
      %3778 = vmatprep.mubr.f32.mxu0 0.0
      %3779 = vmatmul.mubr.f32.gmra.mrb[0].mxu0 %v3558
      %v3780 = vpop.f32.mrb[0].mxu0
      %v3781 = vadd.f32 0.0, %v3780
      %v3782 = vpop.f32.mrb[0].mxu0
      %3783 = vmatprep.mubr.f32.mxu0 0.0
      %3784 = vmatmul.mubr.f32.gmra.mrb[0].mxu0 %v3561
      %v3785 = vpop.f32.mrb[0].mxu0
      %v3786 = vadd.f32 0.0, %v3785
      %v3787 = vpop.f32.mrb[0].mxu0
      %3788 = vmatprep.mubr.f32.mxu0 0.0
      %3789 = vmatmul.mubr.f32.gmra.mrb[0].mxu0 %v3564
      %v3790 = vpop.f32.mrb[0].mxu0
      %v3791 = vadd.f32 0.0, %v3790
      %v3792 = vpop.f32.mrb[0].mxu0
      %3793 = vdwg.mxu0
      %v3794 = vadd.f32 %v3404, %v3636
      %v3795 = vadd.f32 %v3405, %v3641
      %v3796 = vadd.f32 %v3406, %v3646
      %v3797 = vadd.f32 %v3407, %v3651
      %v3798 = vadd.f32 %v3408, %v3656
      %v3799 = vadd.f32 %v3409, %v3661
      %v3800 = vadd.f32 %v3410, %v3666
      %v3801 = vadd.f32 %v3411, %v3671
      %v3802 = vadd.f32 %v3412, %v3676
      %v3803 = vadd.f32 %v3413, %v3681
      %v3804 = vadd.f32 %v3414, %v3686
      %v3805 = vadd.f32 %v3415, %v3691
      %v3806 = vadd.f32 %v3416, %v3696
      %v3807 = vadd.f32 %v3417, %v3701
      %v3808 = vadd.f32 %v3418, %v3706
      %v3809 = vadd.f32 %v3419, %v3711
      %v3810 = vadd.f32 %v3420, %v3716
      %v3811 = vadd.f32 %v3421, %v3721
      %v3812 = vadd.f32 %v3422, %v3726
      %v3813 = vadd.f32 %v3423, %v3731
      %v3814 = vadd.f32 %v3424, %v3736
      %v3815 = vadd.f32 %v3425, %v3741
      %v3816 = vadd.f32 %v3426, %v3746
      %v3817 = vadd.f32 %v3427, %v3751
      %v3818 = vadd.f32 %v3428, %v3756
      %v3819 = vadd.f32 %v3429, %v3761
      %v3820 = vadd.f32 %v3430, %v3766
      %v3821 = vadd.f32 %v3431, %v3771
      %v3822 = vadd.f32 %v3432, %v3776
      %v3823 = vadd.f32 %v3433, %v3781
      %v3824 = vadd.f32 %v3434, %v3786
      %v3825 = vadd.f32 %v3435, %v3791
      %v3826 = vld [vmem:[%s2] sm:$0x1]
      %v3828 = vlaneseq
      %v3829 = vshrl.u32 %v3828, 7
      %v3830 = vsub.s32 0, %v3829
      %v3831 = vrot.slane %v3826, %v3830
      %v3833 = vadd.f32 %v3794, %v3831
      %v3834 = vadd.f32 %v3795, %v3831
      %v3835 = vadd.f32 %v3796, %v3831
      %v3836 = vadd.f32 %v3797, %v3831
      %v3837 = vadd.f32 %v3798, %v3831
      %v3838 = vadd.f32 %v3799, %v3831
      %v3839 = vadd.f32 %v3800, %v3831
      %v3840 = vadd.f32 %v3801, %v3831
      %v3841 = vadd.f32 %v3802, %v3831
      %v3842 = vadd.f32 %v3803, %v3831
      %v3843 = vadd.f32 %v3804, %v3831
      %v3844 = vadd.f32 %v3805, %v3831
      %v3845 = vadd.f32 %v3806, %v3831
      %v3846 = vadd.f32 %v3807, %v3831
      %v3847 = vadd.f32 %v3808, %v3831
      %v3848 = vadd.f32 %v3809, %v3831
      %v3849 = vadd.f32 %v3810, %v3831
      %v3850 = vadd.f32 %v3811, %v3831
      %v3851 = vadd.f32 %v3812, %v3831
      %v3852 = vadd.f32 %v3813, %v3831
      %v3853 = vadd.f32 %v3814, %v3831
      %v3854 = vadd.f32 %v3815, %v3831
      %v3855 = vadd.f32 %v3816, %v3831
      %v3856 = vadd.f32 %v3817, %v3831
      %v3857 = vadd.f32 %v3818, %v3831
      %v3858 = vadd.f32 %v3819, %v3831
      %v3859 = vadd.f32 %v3820, %v3831
      %v3860 = vadd.f32 %v3821, %v3831
      %v3861 = vadd.f32 %v3822, %v3831
      %v3862 = vadd.f32 %v3823, %v3831
      %v3863 = vadd.f32 %v3824, %v3831
      %v3864 = vadd.f32 %v3825, %v3831
      %v3865 = vmax.f32 %v3833, 0.0
      %v3866 = vmax.f32 %v3834, 0.0
      %v3867 = vmax.f32 %v3835, 0.0
      %v3868 = vmax.f32 %v3836, 0.0
      %v3869 = vmax.f32 %v3837, 0.0
      %v3870 = vmax.f32 %v3838, 0.0
      %v3871 = vmax.f32 %v3839, 0.0
      %v3872 = vmax.f32 %v3840, 0.0
      %v3873 = vmax.f32 %v3841, 0.0
      %v3874 = vmax.f32 %v3842, 0.0
      %v3875 = vmax.f32 %v3843, 0.0
      %v3876 = vmax.f32 %v3844, 0.0
      %v3877 = vmax.f32 %v3845, 0.0
      %v3878 = vmax.f32 %v3846, 0.0
      %v3879 = vmax.f32 %v3847, 0.0
      %v3880 = vmax.f32 %v3848, 0.0
      %v3881 = vmax.f32 %v3849, 0.0
      %v3882 = vmax.f32 %v3850, 0.0
      %v3883 = vmax.f32 %v3851, 0.0
      %v3884 = vmax.f32 %v3852, 0.0
      %v3885 = vmax.f32 %v3853, 0.0
      %v3886 = vmax.f32 %v3854, 0.0
      %v3887 = vmax.f32 %v3855, 0.0
      %v3888 = vmax.f32 %v3856, 0.0
      %v3889 = vmax.f32 %v3857, 0.0
      %v3890 = vmax.f32 %v3858, 0.0
      %v3891 = vmax.f32 %v3859, 0.0
      %v3892 = vmax.f32 %v3860, 0.0
      %v3893 = vmax.f32 %v3861, 0.0
      %v3894 = vmax.f32 %v3862, 0.0
      %v3895 = vmax.f32 %v3863, 0.0
      %v3896 = vmax.f32 %v3864, 0.0
      %s3897 = scalar_lea.vmem [#allocation3], 24
      %3898 = vst.msk [vmem:[%s3897 + $0x1] sm:$0xff] %vm225, %v3865
      %3899 = vst.msk [vmem:[%s3897 + $0x9] sm:$0xff] %vm225, %v3866
      %3900 = vst.msk [vmem:[%s3897 + $0x19] sm:$0xff] %vm225, %v3867
      %3901 = vst.msk [vmem:[%s3897 + $0x21] sm:$0xff] %vm225, %v3868
      %3902 = vst.msk [vmem:[%s3897 + $0x31] sm:$0xff] %vm225, %v3869
      %3903 = vst.msk [vmem:[%s3897 + $0x39] sm:$0xff] %vm225, %v3870
      %3904 = vst.msk [vmem:[%s3897 + $0x49] sm:$0xff] %vm225, %v3871
      %3905 = vst.msk [vmem:[%s3897 + $0x51] sm:$0xff] %vm225, %v3872
      %3906 = vst.msk [vmem:[%s3897 + $0x61] sm:$0xff] %vm225, %v3873
      %3907 = vst.msk [vmem:[%s3897 + $0x69] sm:$0xff] %vm225, %v3874
      %3908 = vst.msk [vmem:[%s3897 + $0x79] sm:$0xff] %vm225, %v3875
      %3909 = vst.msk [vmem:[%s3897 + $0x81] sm:$0xff] %vm225, %v3876
      %3910 = vst.msk [vmem:[%s3897 + $0x91] sm:$0xff] %vm225, %v3877
      %3911 = vst.msk [vmem:[%s3897 + $0x99] sm:$0xff] %vm225, %v3878
      %3912 = vst.msk [vmem:[%s3897 + $0xa9] sm:$0xff] %vm225, %v3879
      %3913 = vst.msk [vmem:[%s3897 + $0xb1] sm:$0xff] %vm225, %v3880
      %3914 = vst.msk [vmem:[%s3897 + $0xc1] sm:$0xff] %vm225, %v3881
      %3915 = vst.msk [vmem:[%s3897 + $0xc9] sm:$0xff] %vm225, %v3882
      %3916 = vst.msk [vmem:[%s3897 + $0xd9] sm:$0xff] %vm225, %v3883
      %3917 = vst.msk [vmem:[%s3897 + $0xe1] sm:$0xff] %vm225, %v3884
      %3918 = vst.msk [vmem:[%s3897 + $0xf1] sm:$0xff] %vm225, %v3885
      %3919 = vst.msk [vmem:[%s3897 + $0xf9] sm:$0xff] %vm225, %v3886
      %3920 = vst.msk [vmem:[%s3897 + $0x109] sm:$0xff] %vm225, %v3887
      %3921 = vst.msk [vmem:[%s3897 + $0x111] sm:$0xff] %vm225, %v3888
      %3922 = vst.msk [vmem:[%s3897 + $0x121] sm:$0xff] %vm225, %v3889
      %3923 = vst.msk [vmem:[%s3897 + $0x129] sm:$0xff] %vm225, %v3890
      %3924 = vst.msk [vmem:[%s3897 + $0x139] sm:$0xff] %vm225, %v3891
      %3925 = vst.msk [vmem:[%s3897 + $0x141] sm:$0xff] %vm225, %v3892
      %3926 = vst.msk [vmem:[%s3897 + $0x151] sm:$0xff] %vm225, %v3893
      %3927 = vst.msk [vmem:[%s3897 + $0x159] sm:$0xff] %vm225, %v3894
      %3928 = vst.msk [vmem:[%s3897 + $0x169] sm:$0xff] %vm225, %v3895
      %3929 = vst.msk [vmem:[%s3897 + $0x171] sm:$0xff] %vm225, %v3896
      %v3930 = vld [vmem:[#allocation3] sm:$0xff]
      %v3931 = vld [vmem:[#allocation3 + $0x8] sm:$0xff]
      %v3932 = vld [vmem:[#allocation3 + $0x18] sm:$0xff]
      %v3933 = vld [vmem:[#allocation3 + $0x20] sm:$0xff]
      %v3934 = vld [vmem:[#allocation3 + $0x30] sm:$0xff]
      %v3935 = vld [vmem:[#allocation3 + $0x38] sm:$0xff]
      %v3936 = vld [vmem:[#allocation3 + $0x48] sm:$0xff]
      %v3937 = vld [vmem:[#allocation3 + $0x50] sm:$0xff]
      %v3938 = vld [vmem:[#allocation3 + $0x60] sm:$0xff]
      %v3939 = vld [vmem:[#allocation3 + $0x68] sm:$0xff]
      %v3940 = vld [vmem:[#allocation3 + $0x78] sm:$0xff]
      %v3941 = vld [vmem:[#allocation3 + $0x80] sm:$0xff]
      %v3942 = vld [vmem:[#allocation3 + $0x90] sm:$0xff]
      %v3943 = vld [vmem:[#allocation3 + $0x98] sm:$0xff]
      %v3944 = vld [vmem:[#allocation3 + $0xa8] sm:$0xff]
      %v3945 = vld [vmem:[#allocation3 + $0xb0] sm:$0xff]
      %v3946 = vld [vmem:[#allocation3 + $0xc0] sm:$0xff]
      %v3947 = vld [vmem:[#allocation3 + $0xc8] sm:$0xff]
      %v3948 = vld [vmem:[#allocation3 + $0xd8] sm:$0xff]
      %v3949 = vld [vmem:[#allocation3 + $0xe0] sm:$0xff]
      %v3950 = vld [vmem:[#allocation3 + $0xf0] sm:$0xff]
      %v3951 = vld [vmem:[#allocation3 + $0xf8] sm:$0xff]
      %v3952 = vld [vmem:[#allocation3 + $0x108] sm:$0xff]
      %v3953 = vld [vmem:[#allocation3 + $0x110] sm:$0xff]
      %v3954 = vld [vmem:[#allocation3 + $0x120] sm:$0xff]
      %v3955 = vld [vmem:[#allocation3 + $0x128] sm:$0xff]
      %v3956 = vld [vmem:[#allocation3 + $0x138] sm:$0xff]
      %v3957 = vld [vmem:[#allocation3 + $0x140] sm:$0xff]
      %v3958 = vld [vmem:[#allocation3 + $0x150] sm:$0xff]
      %v3959 = vld [vmem:[#allocation3 + $0x158] sm:$0xff]
      %v3960 = vld [vmem:[#allocation3 + $0x168] sm:$0xff]
      %v3961 = vld [vmem:[#allocation3 + $0x170] sm:$0xff]
      %v3962 = vld [vmem:[%s3] sm:$0xf]
      %v3963 = vld [vmem:[#allocation3 + $0x1] sm:$0xff]
      %v3964 = vld [vmem:[#allocation3 + $0x9] sm:$0xff]
      %v3965 = vld [vmem:[#allocation3 + $0x19] sm:$0xff]
      %v3966 = vld [vmem:[#allocation3 + $0x21] sm:$0xff]
      %v3967 = vld [vmem:[#allocation3 + $0x31] sm:$0xff]
      %v3968 = vld [vmem:[#allocation3 + $0x39] sm:$0xff]
      %v3969 = vld [vmem:[#allocation3 + $0x49] sm:$0xff]
      %v3970 = vld [vmem:[#allocation3 + $0x51] sm:$0xff]
      %v3971 = vld [vmem:[#allocation3 + $0x61] sm:$0xff]
      %v3972 = vld [vmem:[#allocation3 + $0x69] sm:$0xff]
      %v3973 = vld [vmem:[#allocation3 + $0x79] sm:$0xff]
      %v3974 = vld [vmem:[#allocation3 + $0x81] sm:$0xff]
      %v3975 = vld [vmem:[#allocation3 + $0x91] sm:$0xff]
      %v3976 = vld [vmem:[#allocation3 + $0x99] sm:$0xff]
      %v3977 = vld [vmem:[#allocation3 + $0xa9] sm:$0xff]
      %v3978 = vld [vmem:[#allocation3 + $0xb1] sm:$0xff]
      %v3979 = vld [vmem:[#allocation3 + $0xc1] sm:$0xff]
      %v3980 = vld [vmem:[#allocation3 + $0xc9] sm:$0xff]
      %v3981 = vld [vmem:[#allocation3 + $0xd9] sm:$0xff]
      %v3982 = vld [vmem:[#allocation3 + $0xe1] sm:$0xff]
      %v3983 = vld [vmem:[#allocation3 + $0xf1] sm:$0xff]
      %v3984 = vld [vmem:[#allocation3 + $0xf9] sm:$0xff]
      %v3985 = vld [vmem:[#allocation3 + $0x109] sm:$0xff]
      %v3986 = vld [vmem:[#allocation3 + $0x111] sm:$0xff]
      %v3987 = vld [vmem:[#allocation3 + $0x121] sm:$0xff]
      %v3988 = vld [vmem:[#allocation3 + $0x129] sm:$0xff]
      %v3989 = vld [vmem:[#allocation3 + $0x139] sm:$0xff]
      %v3990 = vld [vmem:[#allocation3 + $0x141] sm:$0xff]
      %v3991 = vld [vmem:[#allocation3 + $0x151] sm:$0xff]
      %v3992 = vld [vmem:[#allocation3 + $0x159] sm:$0xff]
      %v3993 = vld [vmem:[#allocation3 + $0x169] sm:$0xff]
      %v3994 = vld [vmem:[#allocation3 + $0x171] sm:$0xff]
      %s3995 = scalar_lea.vmem %s3, 4
      %v3996 = vld [vmem:[%s3995] sm:$0xf]
      %v3998 = vsel %vm225, %v3963, 0
      %v4001 = vsel %vm225, %v3964, 0
      %v4004 = vsel %vm225, %v3965, 0
      %v4007 = vsel %vm225, %v3966, 0
      %v4010 = vsel %vm225, %v3967, 0
      %v4013 = vsel %vm225, %v3968, 0
      %v4016 = vsel %vm225, %v3969, 0
      %v4019 = vsel %vm225, %v3970, 0
      %v4022 = vsel %vm225, %v3971, 0
      %v4025 = vsel %vm225, %v3972, 0
      %v4028 = vsel %vm225, %v3973, 0
      %v4031 = vsel %vm225, %v3974, 0
      %v4034 = vsel %vm225, %v3975, 0
      %v4037 = vsel %vm225, %v3976, 0
      %v4040 = vsel %vm225, %v3977, 0
      %v4043 = vsel %vm225, %v3978, 0
      %v4046 = vsel %vm225, %v3979, 0
      %v4049 = vsel %vm225, %v3980, 0
      %v4052 = vsel %vm225, %v3981, 0
      %v4055 = vsel %vm225, %v3982, 0
      %v4058 = vsel %vm225, %v3983, 0
      %v4061 = vsel %vm225, %v3984, 0
      %v4064 = vsel %vm225, %v3985, 0
      %v4067 = vsel %vm225, %v3986, 0
      %v4070 = vsel %vm225, %v3987, 0
      %v4073 = vsel %vm225, %v3988, 0
      %v4076 = vsel %vm225, %v3989, 0
      %v4079 = vsel %vm225, %v3990, 0
      %v4082 = vsel %vm225, %v3991, 0
      %v4085 = vsel %vm225, %v3992, 0
      %v4088 = vsel %vm225, %v3993, 0
      %v4091 = vsel %vm225, %v3994, 0
      %v4094 = vsel %vm542, %v3996, 0
      %4096 = vmatprep.subr.mxu0 0.0
      %4097 = vmatpush1.msra.mxu0 %v4094
      %4098 = vmatprep.subr.mxu0 0.0
      %4099 = vmatpush1.msra.mxu0 0.0
      %4100 = vmatprep.subr.mxu0 0.0
      %4101 = vmatpush1.msra.mxu0 0.0
      %4102 = vmatprep.subr.mxu0 0.0
      %4103 = vmatpush1.msra.mxu0 0.0
      %4104 = vmatprep.subr.mxu0 0.0
      %4105 = vmatpush1.msra.mxu0 0.0
      %4106 = vmatprep.subr.mxu0 0.0
      %4107 = vmatpush1.msra.mxu0 0.0
      %4108 = vmatprep.subr.mxu0 0.0
      %4109 = vmatpush1.msra.mxu0 0.0
      %4110 = vmatprep.subr.mxu0 0.0
      %4111 = vmatpush1.msra.mxu0 0.0
      %4112 = vmatprep.subr.mxu0 0.0
      %4113 = vmatpush1.msra.mxu0 0.0
      %4114 = vmatprep.subr.mxu0 0.0
      %4115 = vmatpush1.msra.mxu0 0.0
      %4116 = vmatprep.subr.mxu0 0.0
      %4117 = vmatpush1.msra.mxu0 0.0
      %4118 = vmatprep.subr.mxu0 0.0
      %4119 = vmatpush1.msra.mxu0 0.0
      %4120 = vmatprep.subr.mxu0 0.0
      %4121 = vmatpush1.msra.mxu0 0.0
      %4122 = vmatprep.subr.mxu0 0.0
      %4123 = vmatpush1.msra.mxu0 0.0
      %4124 = vmatprep.subr.mxu0 0.0
      %4125 = vmatpush1.msra.mxu0 0.0
      %4126 = vmatprep.subr.mxu0 0.0
      %4127 = vmatpush1.msra.mxu0 0.0
      %4128 = vmatprep.subr.mxu0 0.0
      %4129 = vmatpush1.msra.mxu0 0.0
      %4130 = vmatprep.subr.mxu0 0.0
      %4131 = vmatpush1.msra.mxu0 0.0
      %4132 = vmatprep.subr.mxu0 0.0
      %4133 = vmatpush1.msra.mxu0 0.0
      %4134 = vmatprep.subr.mxu0 0.0
      %4135 = vmatpush1.msra.mxu0 0.0
      %4136 = vmatprep.subr.mxu0 0.0
      %4137 = vmatpush1.msra.mxu0 0.0
      %4138 = vmatprep.subr.mxu0 0.0
      %4139 = vmatpush1.msra.mxu0 0.0
      %4140 = vmatprep.subr.mxu0 0.0
      %4141 = vmatpush1.msra.mxu0 0.0
      %4142 = vmatprep.subr.mxu0 0.0
      %4143 = vmatpush1.msra.mxu0 0.0
      %4144 = vmatprep.subr.mxu0 0.0
      %4145 = vmatpush1.msra.mxu0 0.0
      %4146 = vmatprep.subr.mxu0 0.0
      %4147 = vmatpush1.msra.mxu0 0.0
      %4148 = vmatprep.subr.mxu0 0.0
      %4149 = vmatpush1.msra.mxu0 0.0
      %4150 = vmatprep.subr.mxu0 0.0
      %4151 = vmatpush1.msra.mxu0 0.0
      %4152 = vmatprep.subr.mxu0 0.0
      %4153 = vmatpush1.msra.mxu0 0.0
      %4154 = vmatprep.subr.mxu0 0.0
      %4155 = vmatpush1.msra.mxu0 0.0
      %4156 = vmatprep.subr.mxu0 0.0
      %4157 = vmatpush1.msra.mxu0 0.0
      %4158 = vmatprep.subr.mxu0 0.0
      %4159 = vmatpush1.msra.mxu0 0.0
      %4160 = vmatprep.mubr.f32.mxu0 0.0
      %4161 = vmatmul.mubr.f32.gmra.mrb[0].mxu0 %v3998
      %v4162 = vpop.f32.mrb[0].mxu0
      %v4163 = vadd.f32 0.0, %v4162
      %v4164 = vpop.f32.mrb[0].mxu0
      %4165 = vmatprep.mubr.f32.mxu0 0.0
      %4166 = vmatmul.mubr.f32.gmra.mrb[0].mxu0 %v4001
      %v4167 = vpop.f32.mrb[0].mxu0
      %v4168 = vadd.f32 0.0, %v4167
      %v4169 = vpop.f32.mrb[0].mxu0
      %4170 = vmatprep.mubr.f32.mxu0 0.0
      %4171 = vmatmul.mubr.f32.gmra.mrb[0].mxu0 %v4004
      %v4172 = vpop.f32.mrb[0].mxu0
      %v4173 = vadd.f32 0.0, %v4172
      %v4174 = vpop.f32.mrb[0].mxu0
      %4175 = vmatprep.mubr.f32.mxu0 0.0
      %4176 = vmatmul.mubr.f32.gmra.mrb[0].mxu0 %v4007
      %v4177 = vpop.f32.mrb[0].mxu0
      %v4178 = vadd.f32 0.0, %v4177
      %v4179 = vpop.f32.mrb[0].mxu0
      %4180 = vmatprep.mubr.f32.mxu0 0.0
      %4181 = vmatmul.mubr.f32.gmra.mrb[0].mxu0 %v4010
      %v4182 = vpop.f32.mrb[0].mxu0
      %v4183 = vadd.f32 0.0, %v4182
      %v4184 = vpop.f32.mrb[0].mxu0
      %4185 = vmatprep.mubr.f32.mxu0 0.0
      %4186 = vmatmul.mubr.f32.gmra.mrb[0].mxu0 %v4013
      %v4187 = vpop.f32.mrb[0].mxu0
      %v4188 = vadd.f32 0.0, %v4187
      %v4189 = vpop.f32.mrb[0].mxu0
      %4190 = vmatprep.mubr.f32.mxu0 0.0
      %4191 = vmatmul.mubr.f32.gmra.mrb[0].mxu0 %v4016
      %v4192 = vpop.f32.mrb[0].mxu0
      %v4193 = vadd.f32 0.0, %v4192
      %v4194 = vpop.f32.mrb[0].mxu0
      %4195 = vmatprep.mubr.f32.mxu0 0.0
      %4196 = vmatmul.mubr.f32.gmra.mrb[0].mxu0 %v4019
      %v4197 = vpop.f32.mrb[0].mxu0
      %v4198 = vadd.f32 0.0, %v4197
      %v4199 = vpop.f32.mrb[0].mxu0
      %4200 = vmatprep.mubr.f32.mxu0 0.0
      %4201 = vmatmul.mubr.f32.gmra.mrb[0].mxu0 %v4022
      %v4202 = vpop.f32.mrb[0].mxu0
      %v4203 = vadd.f32 0.0, %v4202
      %v4204 = vpop.f32.mrb[0].mxu0
      %4205 = vmatprep.mubr.f32.mxu0 0.0
      %4206 = vmatmul.mubr.f32.gmra.mrb[0].mxu0 %v4025
      %v4207 = vpop.f32.mrb[0].mxu0
      %v4208 = vadd.f32 0.0, %v4207
      %v4209 = vpop.f32.mrb[0].mxu0
      %4210 = vmatprep.mubr.f32.mxu0 0.0
      %4211 = vmatmul.mubr.f32.gmra.mrb[0].mxu0 %v4028
      %v4212 = vpop.f32.mrb[0].mxu0
      %v4213 = vadd.f32 0.0, %v4212
      %v4214 = vpop.f32.mrb[0].mxu0
      %4215 = vmatprep.mubr.f32.mxu0 0.0
      %4216 = vmatmul.mubr.f32.gmra.mrb[0].mxu0 %v4031
      %v4217 = vpop.f32.mrb[0].mxu0
      %v4218 = vadd.f32 0.0, %v4217
      %v4219 = vpop.f32.mrb[0].mxu0
      %4220 = vmatprep.mubr.f32.mxu0 0.0
      %4221 = vmatmul.mubr.f32.gmra.mrb[0].mxu0 %v4034
      %v4222 = vpop.f32.mrb[0].mxu0
      %v4223 = vadd.f32 0.0, %v4222
      %v4224 = vpop.f32.mrb[0].mxu0
      %4225 = vmatprep.mubr.f32.mxu0 0.0
      %4226 = vmatmul.mubr.f32.gmra.mrb[0].mxu0 %v4037
      %v4227 = vpop.f32.mrb[0].mxu0
      %v4228 = vadd.f32 0.0, %v4227
      %v4229 = vpop.f32.mrb[0].mxu0
      %4230 = vmatprep.mubr.f32.mxu0 0.0
      %4231 = vmatmul.mubr.f32.gmra.mrb[0].mxu0 %v4040
      %v4232 = vpop.f32.mrb[0].mxu0
      %v4233 = vadd.f32 0.0, %v4232
      %v4234 = vpop.f32.mrb[0].mxu0
      %4235 = vmatprep.mubr.f32.mxu0 0.0
      %4236 = vmatmul.mubr.f32.gmra.mrb[0].mxu0 %v4043
      %v4237 = vpop.f32.mrb[0].mxu0
      %v4238 = vadd.f32 0.0, %v4237
      %v4239 = vpop.f32.mrb[0].mxu0
      %4240 = vmatprep.mubr.f32.mxu0 0.0
      %4241 = vmatmul.mubr.f32.gmra.mrb[0].mxu0 %v4046
      %v4242 = vpop.f32.mrb[0].mxu0
      %v4243 = vadd.f32 0.0, %v4242
      %v4244 = vpop.f32.mrb[0].mxu0
      %4245 = vmatprep.mubr.f32.mxu0 0.0
      %4246 = vmatmul.mubr.f32.gmra.mrb[0].mxu0 %v4049
      %v4247 = vpop.f32.mrb[0].mxu0
      %v4248 = vadd.f32 0.0, %v4247
      %v4249 = vpop.f32.mrb[0].mxu0
      %4250 = vmatprep.mubr.f32.mxu0 0.0
      %4251 = vmatmul.mubr.f32.gmra.mrb[0].mxu0 %v4052
      %v4252 = vpop.f32.mrb[0].mxu0
      %v4253 = vadd.f32 0.0, %v4252
      %v4254 = vpop.f32.mrb[0].mxu0
      %4255 = vmatprep.mubr.f32.mxu0 0.0
      %4256 = vmatmul.mubr.f32.gmra.mrb[0].mxu0 %v4055
      %v4257 = vpop.f32.mrb[0].mxu0
      %v4258 = vadd.f32 0.0, %v4257
      %v4259 = vpop.f32.mrb[0].mxu0
      %4260 = vmatprep.mubr.f32.mxu0 0.0
      %4261 = vmatmul.mubr.f32.gmra.mrb[0].mxu0 %v4058
      %v4262 = vpop.f32.mrb[0].mxu0
      %v4263 = vadd.f32 0.0, %v4262
      %v4264 = vpop.f32.mrb[0].mxu0
      %4265 = vmatprep.mubr.f32.mxu0 0.0
      %4266 = vmatmul.mubr.f32.gmra.mrb[0].mxu0 %v4061
      %v4267 = vpop.f32.mrb[0].mxu0
      %v4268 = vadd.f32 0.0, %v4267
      %v4269 = vpop.f32.mrb[0].mxu0
      %4270 = vmatprep.mubr.f32.mxu0 0.0
      %4271 = vmatmul.mubr.f32.gmra.mrb[0].mxu0 %v4064
      %v4272 = vpop.f32.mrb[0].mxu0
      %v4273 = vadd.f32 0.0, %v4272
      %v4274 = vpop.f32.mrb[0].mxu0
      %4275 = vmatprep.mubr.f32.mxu0 0.0
      %4276 = vmatmul.mubr.f32.gmra.mrb[0].mxu0 %v4067
      %v4277 = vpop.f32.mrb[0].mxu0
      %v4278 = vadd.f32 0.0, %v4277
      %v4279 = vpop.f32.mrb[0].mxu0
      %4280 = vmatprep.mubr.f32.mxu0 0.0
      %4281 = vmatmul.mubr.f32.gmra.mrb[0].mxu0 %v4070
      %v4282 = vpop.f32.mrb[0].mxu0
      %v4283 = vadd.f32 0.0, %v4282
      %v4284 = vpop.f32.mrb[0].mxu0
      %4285 = vmatprep.mubr.f32.mxu0 0.0
      %4286 = vmatmul.mubr.f32.gmra.mrb[0].mxu0 %v4073
      %v4287 = vpop.f32.mrb[0].mxu0
      %v4288 = vadd.f32 0.0, %v4287
      %v4289 = vpop.f32.mrb[0].mxu0
      %4290 = vmatprep.mubr.f32.mxu0 0.0
      %4291 = vmatmul.mubr.f32.gmra.mrb[0].mxu0 %v4076
      %v4292 = vpop.f32.mrb[0].mxu0
      %v4293 = vadd.f32 0.0, %v4292
      %v4294 = vpop.f32.mrb[0].mxu0
      %4295 = vmatprep.mubr.f32.mxu0 0.0
      %4296 = vmatmul.mubr.f32.gmra.mrb[0].mxu0 %v4079
      %v4297 = vpop.f32.mrb[0].mxu0
      %v4298 = vadd.f32 0.0, %v4297
      %v4299 = vpop.f32.mrb[0].mxu0
      %4300 = vmatprep.mubr.f32.mxu0 0.0
      %4301 = vmatmul.mubr.f32.gmra.mrb[0].mxu0 %v4082
      %v4302 = vpop.f32.mrb[0].mxu0
      %v4303 = vadd.f32 0.0, %v4302
      %v4304 = vpop.f32.mrb[0].mxu0
      %4305 = vmatprep.mubr.f32.mxu0 0.0
      %4306 = vmatmul.mubr.f32.gmra.mrb[0].mxu0 %v4085
      %v4307 = vpop.f32.mrb[0].mxu0
      %v4308 = vadd.f32 0.0, %v4307
      %v4309 = vpop.f32.mrb[0].mxu0
      %4310 = vmatprep.mubr.f32.mxu0 0.0
      %4311 = vmatmul.mubr.f32.gmra.mrb[0].mxu0 %v4088
      %v4312 = vpop.f32.mrb[0].mxu0
      %v4313 = vadd.f32 0.0, %v4312
      %v4314 = vpop.f32.mrb[0].mxu0
      %4315 = vmatprep.mubr.f32.mxu0 0.0
      %4316 = vmatmul.mubr.f32.gmra.mrb[0].mxu0 %v4091
      %v4317 = vpop.f32.mrb[0].mxu0
      %v4318 = vadd.f32 0.0, %v4317
      %v4319 = vpop.f32.mrb[0].mxu0
      %4320 = vdwg.mxu0
      %v4322 = vsel %vm225, %v3930, 0
      %v4325 = vsel %vm225, %v3931, 0
      %v4328 = vsel %vm225, %v3932, 0
      %v4331 = vsel %vm225, %v3933, 0
      %v4334 = vsel %vm225, %v3934, 0
      %v4337 = vsel %vm225, %v3935, 0
      %v4340 = vsel %vm225, %v3936, 0
      %v4343 = vsel %vm225, %v3937, 0
      %v4346 = vsel %vm225, %v3938, 0
      %v4349 = vsel %vm225, %v3939, 0
      %v4352 = vsel %vm225, %v3940, 0
      %v4355 = vsel %vm225, %v3941, 0
      %v4358 = vsel %vm225, %v3942, 0
      %v4361 = vsel %vm225, %v3943, 0
      %v4364 = vsel %vm225, %v3944, 0
      %v4367 = vsel %vm225, %v3945, 0
      %v4370 = vsel %vm225, %v3946, 0
      %v4373 = vsel %vm225, %v3947, 0
      %v4376 = vsel %vm225, %v3948, 0
      %v4379 = vsel %vm225, %v3949, 0
      %v4382 = vsel %vm225, %v3950, 0
      %v4385 = vsel %vm225, %v3951, 0
      %v4388 = vsel %vm225, %v3952, 0
      %v4391 = vsel %vm225, %v3953, 0
      %v4394 = vsel %vm225, %v3954, 0
      %v4397 = vsel %vm225, %v3955, 0
      %v4400 = vsel %vm225, %v3956, 0
      %v4403 = vsel %vm225, %v3957, 0
      %v4406 = vsel %vm225, %v3958, 0
      %v4409 = vsel %vm225, %v3959, 0
      %v4412 = vsel %vm225, %v3960, 0
      %v4415 = vsel %vm225, %v3961, 0
      %v4418 = vsel %vm542, %v3962, 0
      %4420 = vmatprep.subr.mxu0 0.0
      %4421 = vmatpush1.msra.mxu0 %v4418
      %4422 = vmatprep.subr.mxu0 0.0
      %4423 = vmatpush1.msra.mxu0 0.0
      %4424 = vmatprep.subr.mxu0 0.0
      %4425 = vmatpush1.msra.mxu0 0.0
      %4426 = vmatprep.subr.mxu0 0.0
      %4427 = vmatpush1.msra.mxu0 0.0
      %4428 = vmatprep.subr.mxu0 0.0
      %4429 = vmatpush1.msra.mxu0 0.0
      %4430 = vmatprep.subr.mxu0 0.0
      %4431 = vmatpush1.msra.mxu0 0.0
      %4432 = vmatprep.subr.mxu0 0.0
      %4433 = vmatpush1.msra.mxu0 0.0
      %4434 = vmatprep.subr.mxu0 0.0
      %4435 = vmatpush1.msra.mxu0 0.0
      %4436 = vmatprep.subr.mxu0 0.0
      %4437 = vmatpush1.msra.mxu0 0.0
      %4438 = vmatprep.subr.mxu0 0.0
      %4439 = vmatpush1.msra.mxu0 0.0
      %4440 = vmatprep.subr.mxu0 0.0
      %4441 = vmatpush1.msra.mxu0 0.0
      %4442 = vmatprep.subr.mxu0 0.0
      %4443 = vmatpush1.msra.mxu0 0.0
      %4444 = vmatprep.subr.mxu0 0.0
      %4445 = vmatpush1.msra.mxu0 0.0
      %4446 = vmatprep.subr.mxu0 0.0
      %4447 = vmatpush1.msra.mxu0 0.0
      %4448 = vmatprep.subr.mxu0 0.0
      %4449 = vmatpush1.msra.mxu0 0.0
      %4450 = vmatprep.subr.mxu0 0.0
      %4451 = vmatpush1.msra.mxu0 0.0
      %4452 = vmatprep.subr.mxu0 0.0
      %4453 = vmatpush1.msra.mxu0 0.0
      %4454 = vmatprep.subr.mxu0 0.0
      %4455 = vmatpush1.msra.mxu0 0.0
      %4456 = vmatprep.subr.mxu0 0.0
      %4457 = vmatpush1.msra.mxu0 0.0
      %4458 = vmatprep.subr.mxu0 0.0
      %4459 = vmatpush1.msra.mxu0 0.0
      %4460 = vmatprep.subr.mxu0 0.0
      %4461 = vmatpush1.msra.mxu0 0.0
      %4462 = vmatprep.subr.mxu0 0.0
      %4463 = vmatpush1.msra.mxu0 0.0
      %4464 = vmatprep.subr.mxu0 0.0
      %4465 = vmatpush1.msra.mxu0 0.0
      %4466 = vmatprep.subr.mxu0 0.0
      %4467 = vmatpush1.msra.mxu0 0.0
      %4468 = vmatprep.subr.mxu0 0.0
      %4469 = vmatpush1.msra.mxu0 0.0
      %4470 = vmatprep.subr.mxu0 0.0
      %4471 = vmatpush1.msra.mxu0 0.0
      %4472 = vmatprep.subr.mxu0 0.0
      %4473 = vmatpush1.msra.mxu0 0.0
      %4474 = vmatprep.subr.mxu0 0.0
      %4475 = vmatpush1.msra.mxu0 0.0
      %4476 = vmatprep.subr.mxu0 0.0
      %4477 = vmatpush1.msra.mxu0 0.0
      %4478 = vmatprep.subr.mxu0 0.0
      %4479 = vmatpush1.msra.mxu0 0.0
      %4480 = vmatprep.subr.mxu0 0.0
      %4481 = vmatpush1.msra.mxu0 0.0
      %4482 = vmatprep.subr.mxu0 0.0
      %4483 = vmatpush1.msra.mxu0 0.0
      %4484 = vmatprep.mubr.f32.mxu0 0.0
      %4485 = vmatmul.mubr.f32.gmra.mrb[0].mxu0 %v4322
      %v4486 = vpop.f32.mrb[0].mxu0
      %v4487 = vadd.f32 %v4163, %v4486
      %v4488 = vpop.f32.mrb[0].mxu0
      %4489 = vmatprep.mubr.f32.mxu0 0.0
      %4490 = vmatmul.mubr.f32.gmra.mrb[0].mxu0 %v4325
      %v4491 = vpop.f32.mrb[0].mxu0
      %v4492 = vadd.f32 %v4168, %v4491
      %v4493 = vpop.f32.mrb[0].mxu0
      %4494 = vmatprep.mubr.f32.mxu0 0.0
      %4495 = vmatmul.mubr.f32.gmra.mrb[0].mxu0 %v4328
      %v4496 = vpop.f32.mrb[0].mxu0
      %v4497 = vadd.f32 %v4173, %v4496
      %v4498 = vpop.f32.mrb[0].mxu0
      %4499 = vmatprep.mubr.f32.mxu0 0.0
      %4500 = vmatmul.mubr.f32.gmra.mrb[0].mxu0 %v4331
      %v4501 = vpop.f32.mrb[0].mxu0
      %v4502 = vadd.f32 %v4178, %v4501
      %v4503 = vpop.f32.mrb[0].mxu0
      %4504 = vmatprep.mubr.f32.mxu0 0.0
      %4505 = vmatmul.mubr.f32.gmra.mrb[0].mxu0 %v4334
      %v4506 = vpop.f32.mrb[0].mxu0
      %v4507 = vadd.f32 %v4183, %v4506
      %v4508 = vpop.f32.mrb[0].mxu0
      %4509 = vmatprep.mubr.f32.mxu0 0.0
      %4510 = vmatmul.mubr.f32.gmra.mrb[0].mxu0 %v4337
      %v4511 = vpop.f32.mrb[0].mxu0
      %v4512 = vadd.f32 %v4188, %v4511
      %v4513 = vpop.f32.mrb[0].mxu0
      %4514 = vmatprep.mubr.f32.mxu0 0.0
      %4515 = vmatmul.mubr.f32.gmra.mrb[0].mxu0 %v4340
      %v4516 = vpop.f32.mrb[0].mxu0
      %v4517 = vadd.f32 %v4193, %v4516
      %v4518 = vpop.f32.mrb[0].mxu0
      %4519 = vmatprep.mubr.f32.mxu0 0.0
      %4520 = vmatmul.mubr.f32.gmra.mrb[0].mxu0 %v4343
      %v4521 = vpop.f32.mrb[0].mxu0
      %v4522 = vadd.f32 %v4198, %v4521
      %v4523 = vpop.f32.mrb[0].mxu0
      %4524 = vmatprep.mubr.f32.mxu0 0.0
      %4525 = vmatmul.mubr.f32.gmra.mrb[0].mxu0 %v4346
      %v4526 = vpop.f32.mrb[0].mxu0
      %v4527 = vadd.f32 %v4203, %v4526
      %v4528 = vpop.f32.mrb[0].mxu0
      %4529 = vmatprep.mubr.f32.mxu0 0.0
      %4530 = vmatmul.mubr.f32.gmra.mrb[0].mxu0 %v4349
      %v4531 = vpop.f32.mrb[0].mxu0
      %v4532 = vadd.f32 %v4208, %v4531
      %v4533 = vpop.f32.mrb[0].mxu0
      %4534 = vmatprep.mubr.f32.mxu0 0.0
      %4535 = vmatmul.mubr.f32.gmra.mrb[0].mxu0 %v4352
      %v4536 = vpop.f32.mrb[0].mxu0
      %v4537 = vadd.f32 %v4213, %v4536
      %v4538 = vpop.f32.mrb[0].mxu0
      %4539 = vmatprep.mubr.f32.mxu0 0.0
      %4540 = vmatmul.mubr.f32.gmra.mrb[0].mxu0 %v4355
      %v4541 = vpop.f32.mrb[0].mxu0
      %v4542 = vadd.f32 %v4218, %v4541
      %v4543 = vpop.f32.mrb[0].mxu0
      %4544 = vmatprep.mubr.f32.mxu0 0.0
      %4545 = vmatmul.mubr.f32.gmra.mrb[0].mxu0 %v4358
      %v4546 = vpop.f32.mrb[0].mxu0
      %v4547 = vadd.f32 %v4223, %v4546
      %v4548 = vpop.f32.mrb[0].mxu0
      %4549 = vmatprep.mubr.f32.mxu0 0.0
      %4550 = vmatmul.mubr.f32.gmra.mrb[0].mxu0 %v4361
      %v4551 = vpop.f32.mrb[0].mxu0
      %v4552 = vadd.f32 %v4228, %v4551
      %v4553 = vpop.f32.mrb[0].mxu0
      %4554 = vmatprep.mubr.f32.mxu0 0.0
      %4555 = vmatmul.mubr.f32.gmra.mrb[0].mxu0 %v4364
      %v4556 = vpop.f32.mrb[0].mxu0
      %v4557 = vadd.f32 %v4233, %v4556
      %v4558 = vpop.f32.mrb[0].mxu0
      %4559 = vmatprep.mubr.f32.mxu0 0.0
      %4560 = vmatmul.mubr.f32.gmra.mrb[0].mxu0 %v4367
      %v4561 = vpop.f32.mrb[0].mxu0
      %v4562 = vadd.f32 %v4238, %v4561
      %v4563 = vpop.f32.mrb[0].mxu0
      %4564 = vmatprep.mubr.f32.mxu0 0.0
      %4565 = vmatmul.mubr.f32.gmra.mrb[0].mxu0 %v4370
      %v4566 = vpop.f32.mrb[0].mxu0
      %v4567 = vadd.f32 %v4243, %v4566
      %v4568 = vpop.f32.mrb[0].mxu0
      %4569 = vmatprep.mubr.f32.mxu0 0.0
      %4570 = vmatmul.mubr.f32.gmra.mrb[0].mxu0 %v4373
      %v4571 = vpop.f32.mrb[0].mxu0
      %v4572 = vadd.f32 %v4248, %v4571
      %v4573 = vpop.f32.mrb[0].mxu0
      %4574 = vmatprep.mubr.f32.mxu0 0.0
      %4575 = vmatmul.mubr.f32.gmra.mrb[0].mxu0 %v4376
      %v4576 = vpop.f32.mrb[0].mxu0
      %v4577 = vadd.f32 %v4253, %v4576
      %v4578 = vpop.f32.mrb[0].mxu0
      %4579 = vmatprep.mubr.f32.mxu0 0.0
      %4580 = vmatmul.mubr.f32.gmra.mrb[0].mxu0 %v4379
      %v4581 = vpop.f32.mrb[0].mxu0
      %v4582 = vadd.f32 %v4258, %v4581
      %v4583 = vpop.f32.mrb[0].mxu0
      %4584 = vmatprep.mubr.f32.mxu0 0.0
      %4585 = vmatmul.mubr.f32.gmra.mrb[0].mxu0 %v4382
      %v4586 = vpop.f32.mrb[0].mxu0
      %v4587 = vadd.f32 %v4263, %v4586
      %v4588 = vpop.f32.mrb[0].mxu0
      %4589 = vmatprep.mubr.f32.mxu0 0.0
      %4590 = vmatmul.mubr.f32.gmra.mrb[0].mxu0 %v4385
      %v4591 = vpop.f32.mrb[0].mxu0
      %v4592 = vadd.f32 %v4268, %v4591
      %v4593 = vpop.f32.mrb[0].mxu0
      %4594 = vmatprep.mubr.f32.mxu0 0.0
      %4595 = vmatmul.mubr.f32.gmra.mrb[0].mxu0 %v4388
      %v4596 = vpop.f32.mrb[0].mxu0
      %v4597 = vadd.f32 %v4273, %v4596
      %v4598 = vpop.f32.mrb[0].mxu0
      %4599 = vmatprep.mubr.f32.mxu0 0.0
      %4600 = vmatmul.mubr.f32.gmra.mrb[0].mxu0 %v4391
      %v4601 = vpop.f32.mrb[0].mxu0
      %v4602 = vadd.f32 %v4278, %v4601
      %v4603 = vpop.f32.mrb[0].mxu0
      %4604 = vmatprep.mubr.f32.mxu0 0.0
      %4605 = vmatmul.mubr.f32.gmra.mrb[0].mxu0 %v4394
      %v4606 = vpop.f32.mrb[0].mxu0
      %v4607 = vadd.f32 %v4283, %v4606
      %v4608 = vpop.f32.mrb[0].mxu0
      %4609 = vmatprep.mubr.f32.mxu0 0.0
      %4610 = vmatmul.mubr.f32.gmra.mrb[0].mxu0 %v4397
      %v4611 = vpop.f32.mrb[0].mxu0
      %v4612 = vadd.f32 %v4288, %v4611
      %v4613 = vpop.f32.mrb[0].mxu0
      %4614 = vmatprep.mubr.f32.mxu0 0.0
      %4615 = vmatmul.mubr.f32.gmra.mrb[0].mxu0 %v4400
      %v4616 = vpop.f32.mrb[0].mxu0
      %v4617 = vadd.f32 %v4293, %v4616
      %v4618 = vpop.f32.mrb[0].mxu0
      %4619 = vmatprep.mubr.f32.mxu0 0.0
      %4620 = vmatmul.mubr.f32.gmra.mrb[0].mxu0 %v4403
      %v4621 = vpop.f32.mrb[0].mxu0
      %v4622 = vadd.f32 %v4298, %v4621
      %v4623 = vpop.f32.mrb[0].mxu0
      %4624 = vmatprep.mubr.f32.mxu0 0.0
      %4625 = vmatmul.mubr.f32.gmra.mrb[0].mxu0 %v4406
      %v4626 = vpop.f32.mrb[0].mxu0
      %v4627 = vadd.f32 %v4303, %v4626
      %v4628 = vpop.f32.mrb[0].mxu0
      %4629 = vmatprep.mubr.f32.mxu0 0.0
      %4630 = vmatmul.mubr.f32.gmra.mrb[0].mxu0 %v4409
      %v4631 = vpop.f32.mrb[0].mxu0
      %v4632 = vadd.f32 %v4308, %v4631
      %v4633 = vpop.f32.mrb[0].mxu0
      %4634 = vmatprep.mubr.f32.mxu0 0.0
      %4635 = vmatmul.mubr.f32.gmra.mrb[0].mxu0 %v4412
      %v4636 = vpop.f32.mrb[0].mxu0
      %v4637 = vadd.f32 %v4313, %v4636
      %v4638 = vpop.f32.mrb[0].mxu0
      %4639 = vmatprep.mubr.f32.mxu0 0.0
      %4640 = vmatmul.mubr.f32.gmra.mrb[0].mxu0 %v4415
      %v4641 = vpop.f32.mrb[0].mxu0
      %v4642 = vadd.f32 %v4318, %v4641
      %v4643 = vpop.f32.mrb[0].mxu0
      %4644 = vdwg.mxu0
      %v4645 = vld [vmem:[#allocation3 + $0x2] sm:$0xff]
      %v4646 = vld [vmem:[#allocation3 + $0xa] sm:$0xff]
      %v4647 = vld [vmem:[#allocation3 + $0x1a] sm:$0xff]
      %v4648 = vld [vmem:[#allocation3 + $0x22] sm:$0xff]
      %v4649 = vld [vmem:[#allocation3 + $0x32] sm:$0xff]
      %v4650 = vld [vmem:[#allocation3 + $0x3a] sm:$0xff]
      %v4651 = vld [vmem:[#allocation3 + $0x4a] sm:$0xff]
      %v4652 = vld [vmem:[#allocation3 + $0x52] sm:$0xff]
      %v4653 = vld [vmem:[#allocation3 + $0x62] sm:$0xff]
      %v4654 = vld [vmem:[#allocation3 + $0x6a] sm:$0xff]
      %v4655 = vld [vmem:[#allocation3 + $0x7a] sm:$0xff]
      %v4656 = vld [vmem:[#allocation3 + $0x82] sm:$0xff]
      %v4657 = vld [vmem:[#allocation3 + $0x92] sm:$0xff]
      %v4658 = vld [vmem:[#allocation3 + $0x9a] sm:$0xff]
      %v4659 = vld [vmem:[#allocation3 + $0xaa] sm:$0xff]
      %v4660 = vld [vmem:[#allocation3 + $0xb2] sm:$0xff]
      %v4661 = vld [vmem:[#allocation3 + $0xc2] sm:$0xff]
      %v4662 = vld [vmem:[#allocation3 + $0xca] sm:$0xff]
      %v4663 = vld [vmem:[#allocation3 + $0xda] sm:$0xff]
      %v4664 = vld [vmem:[#allocation3 + $0xe2] sm:$0xff]
      %v4665 = vld [vmem:[#allocation3 + $0xf2] sm:$0xff]
      %v4666 = vld [vmem:[#allocation3 + $0xfa] sm:$0xff]
      %v4667 = vld [vmem:[#allocation3 + $0x10a] sm:$0xff]
      %v4668 = vld [vmem:[#allocation3 + $0x112] sm:$0xff]
      %v4669 = vld [vmem:[#allocation3 + $0x122] sm:$0xff]
      %v4670 = vld [vmem:[#allocation3 + $0x12a] sm:$0xff]
      %v4671 = vld [vmem:[#allocation3 + $0x13a] sm:$0xff]
      %v4672 = vld [vmem:[#allocation3 + $0x142] sm:$0xff]
      %v4673 = vld [vmem:[#allocation3 + $0x152] sm:$0xff]
      %v4674 = vld [vmem:[#allocation3 + $0x15a] sm:$0xff]
      %v4675 = vld [vmem:[#allocation3 + $0x16a] sm:$0xff]
      %v4676 = vld [vmem:[#allocation3 + $0x172] sm:$0xff]
      %s4677 = scalar_lea.vmem %s3, 8
      %v4678 = vld [vmem:[%s4677] sm:$0xf]
      %v4680 = vsel %vm225, %v4645, 0
      %v4683 = vsel %vm225, %v4646, 0
      %v4686 = vsel %vm225, %v4647, 0
      %v4689 = vsel %vm225, %v4648, 0
      %v4692 = vsel %vm225, %v4649, 0
      %v4695 = vsel %vm225, %v4650, 0
      %v4698 = vsel %vm225, %v4651, 0
      %v4701 = vsel %vm225, %v4652, 0
      %v4704 = vsel %vm225, %v4653, 0
      %v4707 = vsel %vm225, %v4654, 0
      %v4710 = vsel %vm225, %v4655, 0
      %v4713 = vsel %vm225, %v4656, 0
      %v4716 = vsel %vm225, %v4657, 0
      %v4719 = vsel %vm225, %v4658, 0
      %v4722 = vsel %vm225, %v4659, 0
      %v4725 = vsel %vm225, %v4660, 0
      %v4728 = vsel %vm225, %v4661, 0
      %v4731 = vsel %vm225, %v4662, 0
      %v4734 = vsel %vm225, %v4663, 0
      %v4737 = vsel %vm225, %v4664, 0
      %v4740 = vsel %vm225, %v4665, 0
      %v4743 = vsel %vm225, %v4666, 0
      %v4746 = vsel %vm225, %v4667, 0
      %v4749 = vsel %vm225, %v4668, 0
      %v4752 = vsel %vm225, %v4669, 0
      %v4755 = vsel %vm225, %v4670, 0
      %v4758 = vsel %vm225, %v4671, 0
      %v4761 = vsel %vm225, %v4672, 0
      %v4764 = vsel %vm225, %v4673, 0
      %v4767 = vsel %vm225, %v4674, 0
      %v4770 = vsel %vm225, %v4675, 0
      %v4773 = vsel %vm225, %v4676, 0
      %v4776 = vsel %vm542, %v4678, 0
      %4778 = vmatprep.subr.mxu0 0.0
      %4779 = vmatpush1.msra.mxu0 %v4776
      %4780 = vmatprep.subr.mxu0 0.0
      %4781 = vmatpush1.msra.mxu0 0.0
      %4782 = vmatprep.subr.mxu0 0.0
      %4783 = vmatpush1.msra.mxu0 0.0
      %4784 = vmatprep.subr.mxu0 0.0
      %4785 = vmatpush1.msra.mxu0 0.0
      %4786 = vmatprep.subr.mxu0 0.0
      %4787 = vmatpush1.msra.mxu0 0.0
      %4788 = vmatprep.subr.mxu0 0.0
      %4789 = vmatpush1.msra.mxu0 0.0
      %4790 = vmatprep.subr.mxu0 0.0
      %4791 = vmatpush1.msra.mxu0 0.0
      %4792 = vmatprep.subr.mxu0 0.0
      %4793 = vmatpush1.msra.mxu0 0.0
      %4794 = vmatprep.subr.mxu0 0.0
      %4795 = vmatpush1.msra.mxu0 0.0
      %4796 = vmatprep.subr.mxu0 0.0
      %4797 = vmatpush1.msra.mxu0 0.0
      %4798 = vmatprep.subr.mxu0 0.0
      %4799 = vmatpush1.msra.mxu0 0.0
      %4800 = vmatprep.subr.mxu0 0.0
      %4801 = vmatpush1.msra.mxu0 0.0
      %4802 = vmatprep.subr.mxu0 0.0
      %4803 = vmatpush1.msra.mxu0 0.0
      %4804 = vmatprep.subr.mxu0 0.0
      %4805 = vmatpush1.msra.mxu0 0.0
      %4806 = vmatprep.subr.mxu0 0.0
      %4807 = vmatpush1.msra.mxu0 0.0
      %4808 = vmatprep.subr.mxu0 0.0
      %4809 = vmatpush1.msra.mxu0 0.0
      %4810 = vmatprep.subr.mxu0 0.0
      %4811 = vmatpush1.msra.mxu0 0.0
      %4812 = vmatprep.subr.mxu0 0.0
      %4813 = vmatpush1.msra.mxu0 0.0
      %4814 = vmatprep.subr.mxu0 0.0
      %4815 = vmatpush1.msra.mxu0 0.0
      %4816 = vmatprep.subr.mxu0 0.0
      %4817 = vmatpush1.msra.mxu0 0.0
      %4818 = vmatprep.subr.mxu0 0.0
      %4819 = vmatpush1.msra.mxu0 0.0
      %4820 = vmatprep.subr.mxu0 0.0
      %4821 = vmatpush1.msra.mxu0 0.0
      %4822 = vmatprep.subr.mxu0 0.0
      %4823 = vmatpush1.msra.mxu0 0.0
      %4824 = vmatprep.subr.mxu0 0.0
      %4825 = vmatpush1.msra.mxu0 0.0
      %4826 = vmatprep.subr.mxu0 0.0
      %4827 = vmatpush1.msra.mxu0 0.0
      %4828 = vmatprep.subr.mxu0 0.0
      %4829 = vmatpush1.msra.mxu0 0.0
      %4830 = vmatprep.subr.mxu0 0.0
      %4831 = vmatpush1.msra.mxu0 0.0
      %4832 = vmatprep.subr.mxu0 0.0
      %4833 = vmatpush1.msra.mxu0 0.0
      %4834 = vmatprep.subr.mxu0 0.0
      %4835 = vmatpush1.msra.mxu0 0.0
      %4836 = vmatprep.subr.mxu0 0.0
      %4837 = vmatpush1.msra.mxu0 0.0
      %4838 = vmatprep.subr.mxu0 0.0
      %4839 = vmatpush1.msra.mxu0 0.0
      %4840 = vmatprep.subr.mxu0 0.0
      %4841 = vmatpush1.msra.mxu0 0.0
      %4842 = vmatprep.mubr.f32.mxu0 0.0
      %4843 = vmatmul.mubr.f32.gmra.mrb[0].mxu0 %v4680
      %v4844 = vpop.f32.mrb[0].mxu0
      %v4845 = vadd.f32 0.0, %v4844
      %v4846 = vpop.f32.mrb[0].mxu0
      %4847 = vmatprep.mubr.f32.mxu0 0.0
      %4848 = vmatmul.mubr.f32.gmra.mrb[0].mxu0 %v4683
      %v4849 = vpop.f32.mrb[0].mxu0
      %v4850 = vadd.f32 0.0, %v4849
      %v4851 = vpop.f32.mrb[0].mxu0
      %4852 = vmatprep.mubr.f32.mxu0 0.0
      %4853 = vmatmul.mubr.f32.gmra.mrb[0].mxu0 %v4686
      %v4854 = vpop.f32.mrb[0].mxu0
      %v4855 = vadd.f32 0.0, %v4854
      %v4856 = vpop.f32.mrb[0].mxu0
      %4857 = vmatprep.mubr.f32.mxu0 0.0
      %4858 = vmatmul.mubr.f32.gmra.mrb[0].mxu0 %v4689
      %v4859 = vpop.f32.mrb[0].mxu0
      %v4860 = vadd.f32 0.0, %v4859
      %v4861 = vpop.f32.mrb[0].mxu0
      %4862 = vmatprep.mubr.f32.mxu0 0.0
      %4863 = vmatmul.mubr.f32.gmra.mrb[0].mxu0 %v4692
      %v4864 = vpop.f32.mrb[0].mxu0
      %v4865 = vadd.f32 0.0, %v4864
      %v4866 = vpop.f32.mrb[0].mxu0
      %4867 = vmatprep.mubr.f32.mxu0 0.0
      %4868 = vmatmul.mubr.f32.gmra.mrb[0].mxu0 %v4695
      %v4869 = vpop.f32.mrb[0].mxu0
      %v4870 = vadd.f32 0.0, %v4869
      %v4871 = vpop.f32.mrb[0].mxu0
      %4872 = vmatprep.mubr.f32.mxu0 0.0
      %4873 = vmatmul.mubr.f32.gmra.mrb[0].mxu0 %v4698
      %v4874 = vpop.f32.mrb[0].mxu0
      %v4875 = vadd.f32 0.0, %v4874
      %v4876 = vpop.f32.mrb[0].mxu0
      %4877 = vmatprep.mubr.f32.mxu0 0.0
      %4878 = vmatmul.mubr.f32.gmra.mrb[0].mxu0 %v4701
      %v4879 = vpop.f32.mrb[0].mxu0
      %v4880 = vadd.f32 0.0, %v4879
      %v4881 = vpop.f32.mrb[0].mxu0
      %4882 = vmatprep.mubr.f32.mxu0 0.0
      %4883 = vmatmul.mubr.f32.gmra.mrb[0].mxu0 %v4704
      %v4884 = vpop.f32.mrb[0].mxu0
      %v4885 = vadd.f32 0.0, %v4884
      %v4886 = vpop.f32.mrb[0].mxu0
      %4887 = vmatprep.mubr.f32.mxu0 0.0
      %4888 = vmatmul.mubr.f32.gmra.mrb[0].mxu0 %v4707
      %v4889 = vpop.f32.mrb[0].mxu0
      %v4890 = vadd.f32 0.0, %v4889
      %v4891 = vpop.f32.mrb[0].mxu0
      %4892 = vmatprep.mubr.f32.mxu0 0.0
      %4893 = vmatmul.mubr.f32.gmra.mrb[0].mxu0 %v4710
      %v4894 = vpop.f32.mrb[0].mxu0
      %v4895 = vadd.f32 0.0, %v4894
      %v4896 = vpop.f32.mrb[0].mxu0
      %4897 = vmatprep.mubr.f32.mxu0 0.0
      %4898 = vmatmul.mubr.f32.gmra.mrb[0].mxu0 %v4713
      %v4899 = vpop.f32.mrb[0].mxu0
      %v4900 = vadd.f32 0.0, %v4899
      %v4901 = vpop.f32.mrb[0].mxu0
      %4902 = vmatprep.mubr.f32.mxu0 0.0
      %4903 = vmatmul.mubr.f32.gmra.mrb[0].mxu0 %v4716
      %v4904 = vpop.f32.mrb[0].mxu0
      %v4905 = vadd.f32 0.0, %v4904
      %v4906 = vpop.f32.mrb[0].mxu0
      %4907 = vmatprep.mubr.f32.mxu0 0.0
      %4908 = vmatmul.mubr.f32.gmra.mrb[0].mxu0 %v4719
      %v4909 = vpop.f32.mrb[0].mxu0
      %v4910 = vadd.f32 0.0, %v4909
      %v4911 = vpop.f32.mrb[0].mxu0
      %4912 = vmatprep.mubr.f32.mxu0 0.0
      %4913 = vmatmul.mubr.f32.gmra.mrb[0].mxu0 %v4722
      %v4914 = vpop.f32.mrb[0].mxu0
      %v4915 = vadd.f32 0.0, %v4914
      %v4916 = vpop.f32.mrb[0].mxu0
      %4917 = vmatprep.mubr.f32.mxu0 0.0
      %4918 = vmatmul.mubr.f32.gmra.mrb[0].mxu0 %v4725
      %v4919 = vpop.f32.mrb[0].mxu0
      %v4920 = vadd.f32 0.0, %v4919
      %v4921 = vpop.f32.mrb[0].mxu0
      %4922 = vmatprep.mubr.f32.mxu0 0.0
      %4923 = vmatmul.mubr.f32.gmra.mrb[0].mxu0 %v4728
      %v4924 = vpop.f32.mrb[0].mxu0
      %v4925 = vadd.f32 0.0, %v4924
      %v4926 = vpop.f32.mrb[0].mxu0
      %4927 = vmatprep.mubr.f32.mxu0 0.0
      %4928 = vmatmul.mubr.f32.gmra.mrb[0].mxu0 %v4731
      %v4929 = vpop.f32.mrb[0].mxu0
      %v4930 = vadd.f32 0.0, %v4929
      %v4931 = vpop.f32.mrb[0].mxu0
      %4932 = vmatprep.mubr.f32.mxu0 0.0
      %4933 = vmatmul.mubr.f32.gmra.mrb[0].mxu0 %v4734
      %v4934 = vpop.f32.mrb[0].mxu0
      %v4935 = vadd.f32 0.0, %v4934
      %v4936 = vpop.f32.mrb[0].mxu0
      %4937 = vmatprep.mubr.f32.mxu0 0.0
      %4938 = vmatmul.mubr.f32.gmra.mrb[0].mxu0 %v4737
      %v4939 = vpop.f32.mrb[0].mxu0
      %v4940 = vadd.f32 0.0, %v4939
      %v4941 = vpop.f32.mrb[0].mxu0
      %4942 = vmatprep.mubr.f32.mxu0 0.0
      %4943 = vmatmul.mubr.f32.gmra.mrb[0].mxu0 %v4740
      %v4944 = vpop.f32.mrb[0].mxu0
      %v4945 = vadd.f32 0.0, %v4944
      %v4946 = vpop.f32.mrb[0].mxu0
      %4947 = vmatprep.mubr.f32.mxu0 0.0
      %4948 = vmatmul.mubr.f32.gmra.mrb[0].mxu0 %v4743
      %v4949 = vpop.f32.mrb[0].mxu0
      %v4950 = vadd.f32 0.0, %v4949
      %v4951 = vpop.f32.mrb[0].mxu0
      %4952 = vmatprep.mubr.f32.mxu0 0.0
      %4953 = vmatmul.mubr.f32.gmra.mrb[0].mxu0 %v4746
      %v4954 = vpop.f32.mrb[0].mxu0
      %v4955 = vadd.f32 0.0, %v4954
      %v4956 = vpop.f32.mrb[0].mxu0
      %4957 = vmatprep.mubr.f32.mxu0 0.0
      %4958 = vmatmul.mubr.f32.gmra.mrb[0].mxu0 %v4749
      %v4959 = vpop.f32.mrb[0].mxu0
      %v4960 = vadd.f32 0.0, %v4959
      %v4961 = vpop.f32.mrb[0].mxu0
      %4962 = vmatprep.mubr.f32.mxu0 0.0
      %4963 = vmatmul.mubr.f32.gmra.mrb[0].mxu0 %v4752
      %v4964 = vpop.f32.mrb[0].mxu0
      %v4965 = vadd.f32 0.0, %v4964
      %v4966 = vpop.f32.mrb[0].mxu0
      %4967 = vmatprep.mubr.f32.mxu0 0.0
      %4968 = vmatmul.mubr.f32.gmra.mrb[0].mxu0 %v4755
      %v4969 = vpop.f32.mrb[0].mxu0
      %v4970 = vadd.f32 0.0, %v4969
      %v4971 = vpop.f32.mrb[0].mxu0
      %4972 = vmatprep.mubr.f32.mxu0 0.0
      %4973 = vmatmul.mubr.f32.gmra.mrb[0].mxu0 %v4758
      %v4974 = vpop.f32.mrb[0].mxu0
      %v4975 = vadd.f32 0.0, %v4974
      %v4976 = vpop.f32.mrb[0].mxu0
      %4977 = vmatprep.mubr.f32.mxu0 0.0
      %4978 = vmatmul.mubr.f32.gmra.mrb[0].mxu0 %v4761
      %v4979 = vpop.f32.mrb[0].mxu0
      %v4980 = vadd.f32 0.0, %v4979
      %v4981 = vpop.f32.mrb[0].mxu0
      %4982 = vmatprep.mubr.f32.mxu0 0.0
      %4983 = vmatmul.mubr.f32.gmra.mrb[0].mxu0 %v4764
      %v4984 = vpop.f32.mrb[0].mxu0
      %v4985 = vadd.f32 0.0, %v4984
      %v4986 = vpop.f32.mrb[0].mxu0
      %4987 = vmatprep.mubr.f32.mxu0 0.0
      %4988 = vmatmul.mubr.f32.gmra.mrb[0].mxu0 %v4767
      %v4989 = vpop.f32.mrb[0].mxu0
      %v4990 = vadd.f32 0.0, %v4989
      %v4991 = vpop.f32.mrb[0].mxu0
      %4992 = vmatprep.mubr.f32.mxu0 0.0
      %4993 = vmatmul.mubr.f32.gmra.mrb[0].mxu0 %v4770
      %v4994 = vpop.f32.mrb[0].mxu0
      %v4995 = vadd.f32 0.0, %v4994
      %v4996 = vpop.f32.mrb[0].mxu0
      %4997 = vmatprep.mubr.f32.mxu0 0.0
      %4998 = vmatmul.mubr.f32.gmra.mrb[0].mxu0 %v4773
      %v4999 = vpop.f32.mrb[0].mxu0
      %v5000 = vadd.f32 0.0, %v4999
      %v5001 = vpop.f32.mrb[0].mxu0
      %5002 = vdwg.mxu0
      %v5003 = vadd.f32 %v4487, %v4845
      %v5004 = vadd.f32 %v4492, %v4850
      %v5005 = vadd.f32 %v4497, %v4855
      %v5006 = vadd.f32 %v4502, %v4860
      %v5007 = vadd.f32 %v4507, %v4865
      %v5008 = vadd.f32 %v4512, %v4870
      %v5009 = vadd.f32 %v4517, %v4875
      %v5010 = vadd.f32 %v4522, %v4880
      %v5011 = vadd.f32 %v4527, %v4885
      %v5012 = vadd.f32 %v4532, %v4890
      %v5013 = vadd.f32 %v4537, %v4895
      %v5014 = vadd.f32 %v4542, %v4900
      %v5015 = vadd.f32 %v4547, %v4905
      %v5016 = vadd.f32 %v4552, %v4910
      %v5017 = vadd.f32 %v4557, %v4915
      %v5018 = vadd.f32 %v4562, %v4920
      %v5019 = vadd.f32 %v4567, %v4925
      %v5020 = vadd.f32 %v4572, %v4930
      %v5021 = vadd.f32 %v4577, %v4935
      %v5022 = vadd.f32 %v4582, %v4940
      %v5023 = vadd.f32 %v4587, %v4945
      %v5024 = vadd.f32 %v4592, %v4950
      %v5025 = vadd.f32 %v4597, %v4955
      %v5026 = vadd.f32 %v4602, %v4960
      %v5027 = vadd.f32 %v4607, %v4965
      %v5028 = vadd.f32 %v4612, %v4970
      %v5029 = vadd.f32 %v4617, %v4975
      %v5030 = vadd.f32 %v4622, %v4980
      %v5031 = vadd.f32 %v4627, %v4985
      %v5032 = vadd.f32 %v4632, %v4990
      %v5033 = vadd.f32 %v4637, %v4995
      %v5034 = vadd.f32 %v4642, %v5000
      %v5035 = vld [vmem:[%s3897] sm:$0xff]
      %v5036 = vld [vmem:[%s3897 + $0x8] sm:$0xff]
      %v5037 = vld [vmem:[%s3897 + $0x18] sm:$0xff]
      %v5038 = vld [vmem:[%s3897 + $0x20] sm:$0xff]
      %v5039 = vld [vmem:[%s3897 + $0x30] sm:$0xff]
      %v5040 = vld [vmem:[%s3897 + $0x38] sm:$0xff]
      %v5041 = vld [vmem:[%s3897 + $0x48] sm:$0xff]
      %v5042 = vld [vmem:[%s3897 + $0x50] sm:$0xff]
      %v5043 = vld [vmem:[%s3897 + $0x60] sm:$0xff]
      %v5044 = vld [vmem:[%s3897 + $0x68] sm:$0xff]
      %v5045 = vld [vmem:[%s3897 + $0x78] sm:$0xff]
      %v5046 = vld [vmem:[%s3897 + $0x80] sm:$0xff]
      %v5047 = vld [vmem:[%s3897 + $0x90] sm:$0xff]
      %v5048 = vld [vmem:[%s3897 + $0x98] sm:$0xff]
      %v5049 = vld [vmem:[%s3897 + $0xa8] sm:$0xff]
      %v5050 = vld [vmem:[%s3897 + $0xb0] sm:$0xff]
      %v5051 = vld [vmem:[%s3897 + $0xc0] sm:$0xff]
      %v5052 = vld [vmem:[%s3897 + $0xc8] sm:$0xff]
      %v5053 = vld [vmem:[%s3897 + $0xd8] sm:$0xff]
      %v5054 = vld [vmem:[%s3897 + $0xe0] sm:$0xff]
      %v5055 = vld [vmem:[%s3897 + $0xf0] sm:$0xff]
      %v5056 = vld [vmem:[%s3897 + $0xf8] sm:$0xff]
      %v5057 = vld [vmem:[%s3897 + $0x108] sm:$0xff]
      %v5058 = vld [vmem:[%s3897 + $0x110] sm:$0xff]
      %v5059 = vld [vmem:[%s3897 + $0x120] sm:$0xff]
      %v5060 = vld [vmem:[%s3897 + $0x128] sm:$0xff]
      %v5061 = vld [vmem:[%s3897 + $0x138] sm:$0xff]
      %v5062 = vld [vmem:[%s3897 + $0x140] sm:$0xff]
      %v5063 = vld [vmem:[%s3897 + $0x150] sm:$0xff]
      %v5064 = vld [vmem:[%s3897 + $0x158] sm:$0xff]
      %v5065 = vld [vmem:[%s3897 + $0x168] sm:$0xff]
      %v5066 = vld [vmem:[%s3897 + $0x170] sm:$0xff]
      %s5067 = scalar_lea.vmem %s3, 12
      %v5068 = vld [vmem:[%s5067] sm:$0xf]
      %v5070 = vsel %vm225, %v5035, 0
      %v5073 = vsel %vm225, %v5036, 0
      %v5076 = vsel %vm225, %v5037, 0
      %v5079 = vsel %vm225, %v5038, 0
      %v5082 = vsel %vm225, %v5039, 0
      %v5085 = vsel %vm225, %v5040, 0
      %v5088 = vsel %vm225, %v5041, 0
      %v5091 = vsel %vm225, %v5042, 0
      %v5094 = vsel %vm225, %v5043, 0
      %v5097 = vsel %vm225, %v5044, 0
      %v5100 = vsel %vm225, %v5045, 0
      %v5103 = vsel %vm225, %v5046, 0
      %v5106 = vsel %vm225, %v5047, 0
      %v5109 = vsel %vm225, %v5048, 0
      %v5112 = vsel %vm225, %v5049, 0
      %v5115 = vsel %vm225, %v5050, 0
      %v5118 = vsel %vm225, %v5051, 0
      %v5121 = vsel %vm225, %v5052, 0
      %v5124 = vsel %vm225, %v5053, 0
      %v5127 = vsel %vm225, %v5054, 0
      %v5130 = vsel %vm225, %v5055, 0
      %v5133 = vsel %vm225, %v5056, 0
      %v5136 = vsel %vm225, %v5057, 0
      %v5139 = vsel %vm225, %v5058, 0
      %v5142 = vsel %vm225, %v5059, 0
      %v5145 = vsel %vm225, %v5060, 0
      %v5148 = vsel %vm225, %v5061, 0
      %v5151 = vsel %vm225, %v5062, 0
      %v5154 = vsel %vm225, %v5063, 0
      %v5157 = vsel %vm225, %v5064, 0
      %v5160 = vsel %vm225, %v5065, 0
      %v5163 = vsel %vm225, %v5066, 0
      %v5166 = vsel %vm542, %v5068, 0
      %5168 = vmatprep.subr.mxu0 0.0
      %5169 = vmatpush1.msra.mxu0 %v5166
      %5170 = vmatprep.subr.mxu0 0.0
      %5171 = vmatpush1.msra.mxu0 0.0
      %5172 = vmatprep.subr.mxu0 0.0
      %5173 = vmatpush1.msra.mxu0 0.0
      %5174 = vmatprep.subr.mxu0 0.0
      %5175 = vmatpush1.msra.mxu0 0.0
      %5176 = vmatprep.subr.mxu0 0.0
      %5177 = vmatpush1.msra.mxu0 0.0
      %5178 = vmatprep.subr.mxu0 0.0
      %5179 = vmatpush1.msra.mxu0 0.0
      %5180 = vmatprep.subr.mxu0 0.0
      %5181 = vmatpush1.msra.mxu0 0.0
      %5182 = vmatprep.subr.mxu0 0.0
      %5183 = vmatpush1.msra.mxu0 0.0
      %5184 = vmatprep.subr.mxu0 0.0
      %5185 = vmatpush1.msra.mxu0 0.0
      %5186 = vmatprep.subr.mxu0 0.0
      %5187 = vmatpush1.msra.mxu0 0.0
      %5188 = vmatprep.subr.mxu0 0.0
      %5189 = vmatpush1.msra.mxu0 0.0
      %5190 = vmatprep.subr.mxu0 0.0
      %5191 = vmatpush1.msra.mxu0 0.0
      %5192 = vmatprep.subr.mxu0 0.0
      %5193 = vmatpush1.msra.mxu0 0.0
      %5194 = vmatprep.subr.mxu0 0.0
      %5195 = vmatpush1.msra.mxu0 0.0
      %5196 = vmatprep.subr.mxu0 0.0
      %5197 = vmatpush1.msra.mxu0 0.0
      %5198 = vmatprep.subr.mxu0 0.0
      %5199 = vmatpush1.msra.mxu0 0.0
      %5200 = vmatprep.subr.mxu0 0.0
      %5201 = vmatpush1.msra.mxu0 0.0
      %5202 = vmatprep.subr.mxu0 0.0
      %5203 = vmatpush1.msra.mxu0 0.0
      %5204 = vmatprep.subr.mxu0 0.0
      %5205 = vmatpush1.msra.mxu0 0.0
      %5206 = vmatprep.subr.mxu0 0.0
      %5207 = vmatpush1.msra.mxu0 0.0
      %5208 = vmatprep.subr.mxu0 0.0
      %5209 = vmatpush1.msra.mxu0 0.0
      %5210 = vmatprep.subr.mxu0 0.0
      %5211 = vmatpush1.msra.mxu0 0.0
      %5212 = vmatprep.subr.mxu0 0.0
      %5213 = vmatpush1.msra.mxu0 0.0
      %5214 = vmatprep.subr.mxu0 0.0
      %5215 = vmatpush1.msra.mxu0 0.0
      %5216 = vmatprep.subr.mxu0 0.0
      %5217 = vmatpush1.msra.mxu0 0.0
      %5218 = vmatprep.subr.mxu0 0.0
      %5219 = vmatpush1.msra.mxu0 0.0
      %5220 = vmatprep.subr.mxu0 0.0
      %5221 = vmatpush1.msra.mxu0 0.0
      %5222 = vmatprep.subr.mxu0 0.0
      %5223 = vmatpush1.msra.mxu0 0.0
      %5224 = vmatprep.subr.mxu0 0.0
      %5225 = vmatpush1.msra.mxu0 0.0
      %5226 = vmatprep.subr.mxu0 0.0
      %5227 = vmatpush1.msra.mxu0 0.0
      %5228 = vmatprep.subr.mxu0 0.0
      %5229 = vmatpush1.msra.mxu0 0.0
      %5230 = vmatprep.subr.mxu0 0.0
      %5231 = vmatpush1.msra.mxu0 0.0
      %5232 = vmatprep.mubr.f32.mxu0 0.0
      %5233 = vmatmul.mubr.f32.gmra.mrb[0].mxu0 %v5070
      %v5234 = vpop.f32.mrb[0].mxu0
      %v5235 = vadd.f32 0.0, %v5234
      %v5236 = vpop.f32.mrb[0].mxu0
      %5237 = vmatprep.mubr.f32.mxu0 0.0
      %5238 = vmatmul.mubr.f32.gmra.mrb[0].mxu0 %v5073
      %v5239 = vpop.f32.mrb[0].mxu0
      %v5240 = vadd.f32 0.0, %v5239
      %v5241 = vpop.f32.mrb[0].mxu0
      %5242 = vmatprep.mubr.f32.mxu0 0.0
      %5243 = vmatmul.mubr.f32.gmra.mrb[0].mxu0 %v5076
      %v5244 = vpop.f32.mrb[0].mxu0
      %v5245 = vadd.f32 0.0, %v5244
      %v5246 = vpop.f32.mrb[0].mxu0
      %5247 = vmatprep.mubr.f32.mxu0 0.0
      %5248 = vmatmul.mubr.f32.gmra.mrb[0].mxu0 %v5079
      %v5249 = vpop.f32.mrb[0].mxu0
      %v5250 = vadd.f32 0.0, %v5249
      %v5251 = vpop.f32.mrb[0].mxu0
      %5252 = vmatprep.mubr.f32.mxu0 0.0
      %5253 = vmatmul.mubr.f32.gmra.mrb[0].mxu0 %v5082
      %v5254 = vpop.f32.mrb[0].mxu0
      %v5255 = vadd.f32 0.0, %v5254
      %v5256 = vpop.f32.mrb[0].mxu0
      %5257 = vmatprep.mubr.f32.mxu0 0.0
      %5258 = vmatmul.mubr.f32.gmra.mrb[0].mxu0 %v5085
      %v5259 = vpop.f32.mrb[0].mxu0
      %v5260 = vadd.f32 0.0, %v5259
      %v5261 = vpop.f32.mrb[0].mxu0
      %5262 = vmatprep.mubr.f32.mxu0 0.0
      %5263 = vmatmul.mubr.f32.gmra.mrb[0].mxu0 %v5088
      %v5264 = vpop.f32.mrb[0].mxu0
      %v5265 = vadd.f32 0.0, %v5264
      %v5266 = vpop.f32.mrb[0].mxu0
      %5267 = vmatprep.mubr.f32.mxu0 0.0
      %5268 = vmatmul.mubr.f32.gmra.mrb[0].mxu0 %v5091
      %v5269 = vpop.f32.mrb[0].mxu0
      %v5270 = vadd.f32 0.0, %v5269
      %v5271 = vpop.f32.mrb[0].mxu0
      %5272 = vmatprep.mubr.f32.mxu0 0.0
      %5273 = vmatmul.mubr.f32.gmra.mrb[0].mxu0 %v5094
      %v5274 = vpop.f32.mrb[0].mxu0
      %v5275 = vadd.f32 0.0, %v5274
      %v5276 = vpop.f32.mrb[0].mxu0
      %5277 = vmatprep.mubr.f32.mxu0 0.0
      %5278 = vmatmul.mubr.f32.gmra.mrb[0].mxu0 %v5097
      %v5279 = vpop.f32.mrb[0].mxu0
      %v5280 = vadd.f32 0.0, %v5279
      %v5281 = vpop.f32.mrb[0].mxu0
      %5282 = vmatprep.mubr.f32.mxu0 0.0
      %5283 = vmatmul.mubr.f32.gmra.mrb[0].mxu0 %v5100
      %v5284 = vpop.f32.mrb[0].mxu0
      %v5285 = vadd.f32 0.0, %v5284
      %v5286 = vpop.f32.mrb[0].mxu0
      %5287 = vmatprep.mubr.f32.mxu0 0.0
      %5288 = vmatmul.mubr.f32.gmra.mrb[0].mxu0 %v5103
      %v5289 = vpop.f32.mrb[0].mxu0
      %v5290 = vadd.f32 0.0, %v5289
      %v5291 = vpop.f32.mrb[0].mxu0
      %5292 = vmatprep.mubr.f32.mxu0 0.0
      %5293 = vmatmul.mubr.f32.gmra.mrb[0].mxu0 %v5106
      %v5294 = vpop.f32.mrb[0].mxu0
      %v5295 = vadd.f32 0.0, %v5294
      %v5296 = vpop.f32.mrb[0].mxu0
      %5297 = vmatprep.mubr.f32.mxu0 0.0
      %5298 = vmatmul.mubr.f32.gmra.mrb[0].mxu0 %v5109
      %v5299 = vpop.f32.mrb[0].mxu0
      %v5300 = vadd.f32 0.0, %v5299
      %v5301 = vpop.f32.mrb[0].mxu0
      %5302 = vmatprep.mubr.f32.mxu0 0.0
      %5303 = vmatmul.mubr.f32.gmra.mrb[0].mxu0 %v5112
      %v5304 = vpop.f32.mrb[0].mxu0
      %v5305 = vadd.f32 0.0, %v5304
      %v5306 = vpop.f32.mrb[0].mxu0
      %5307 = vmatprep.mubr.f32.mxu0 0.0
      %5308 = vmatmul.mubr.f32.gmra.mrb[0].mxu0 %v5115
      %v5309 = vpop.f32.mrb[0].mxu0
      %v5310 = vadd.f32 0.0, %v5309
      %v5311 = vpop.f32.mrb[0].mxu0
      %5312 = vmatprep.mubr.f32.mxu0 0.0
      %5313 = vmatmul.mubr.f32.gmra.mrb[0].mxu0 %v5118
      %v5314 = vpop.f32.mrb[0].mxu0
      %v5315 = vadd.f32 0.0, %v5314
      %v5316 = vpop.f32.mrb[0].mxu0
      %5317 = vmatprep.mubr.f32.mxu0 0.0
      %5318 = vmatmul.mubr.f32.gmra.mrb[0].mxu0 %v5121
      %v5319 = vpop.f32.mrb[0].mxu0
      %v5320 = vadd.f32 0.0, %v5319
      %v5321 = vpop.f32.mrb[0].mxu0
      %5322 = vmatprep.mubr.f32.mxu0 0.0
      %5323 = vmatmul.mubr.f32.gmra.mrb[0].mxu0 %v5124
      %v5324 = vpop.f32.mrb[0].mxu0
      %v5325 = vadd.f32 0.0, %v5324
      %v5326 = vpop.f32.mrb[0].mxu0
      %5327 = vmatprep.mubr.f32.mxu0 0.0
      %5328 = vmatmul.mubr.f32.gmra.mrb[0].mxu0 %v5127
      %v5329 = vpop.f32.mrb[0].mxu0
      %v5330 = vadd.f32 0.0, %v5329
      %v5331 = vpop.f32.mrb[0].mxu0
      %5332 = vmatprep.mubr.f32.mxu0 0.0
      %5333 = vmatmul.mubr.f32.gmra.mrb[0].mxu0 %v5130
      %v5334 = vpop.f32.mrb[0].mxu0
      %v5335 = vadd.f32 0.0, %v5334
      %v5336 = vpop.f32.mrb[0].mxu0
      %5337 = vmatprep.mubr.f32.mxu0 0.0
      %5338 = vmatmul.mubr.f32.gmra.mrb[0].mxu0 %v5133
      %v5339 = vpop.f32.mrb[0].mxu0
      %v5340 = vadd.f32 0.0, %v5339
      %v5341 = vpop.f32.mrb[0].mxu0
      %5342 = vmatprep.mubr.f32.mxu0 0.0
      %5343 = vmatmul.mubr.f32.gmra.mrb[0].mxu0 %v5136
      %v5344 = vpop.f32.mrb[0].mxu0
      %v5345 = vadd.f32 0.0, %v5344
      %v5346 = vpop.f32.mrb[0].mxu0
      %5347 = vmatprep.mubr.f32.mxu0 0.0
      %5348 = vmatmul.mubr.f32.gmra.mrb[0].mxu0 %v5139
      %v5349 = vpop.f32.mrb[0].mxu0
      %v5350 = vadd.f32 0.0, %v5349
      %v5351 = vpop.f32.mrb[0].mxu0
      %5352 = vmatprep.mubr.f32.mxu0 0.0
      %5353 = vmatmul.mubr.f32.gmra.mrb[0].mxu0 %v5142
      %v5354 = vpop.f32.mrb[0].mxu0
      %v5355 = vadd.f32 0.0, %v5354
      %v5356 = vpop.f32.mrb[0].mxu0
      %5357 = vmatprep.mubr.f32.mxu0 0.0
      %5358 = vmatmul.mubr.f32.gmra.mrb[0].mxu0 %v5145
      %v5359 = vpop.f32.mrb[0].mxu0
      %v5360 = vadd.f32 0.0, %v5359
      %v5361 = vpop.f32.mrb[0].mxu0
      %5362 = vmatprep.mubr.f32.mxu0 0.0
      %5363 = vmatmul.mubr.f32.gmra.mrb[0].mxu0 %v5148
      %v5364 = vpop.f32.mrb[0].mxu0
      %v5365 = vadd.f32 0.0, %v5364
      %v5366 = vpop.f32.mrb[0].mxu0
      %5367 = vmatprep.mubr.f32.mxu0 0.0
      %5368 = vmatmul.mubr.f32.gmra.mrb[0].mxu0 %v5151
      %v5369 = vpop.f32.mrb[0].mxu0
      %v5370 = vadd.f32 0.0, %v5369
      %v5371 = vpop.f32.mrb[0].mxu0
      %5372 = vmatprep.mubr.f32.mxu0 0.0
      %5373 = vmatmul.mubr.f32.gmra.mrb[0].mxu0 %v5154
      %v5374 = vpop.f32.mrb[0].mxu0
      %v5375 = vadd.f32 0.0, %v5374
      %v5376 = vpop.f32.mrb[0].mxu0
      %5377 = vmatprep.mubr.f32.mxu0 0.0
      %5378 = vmatmul.mubr.f32.gmra.mrb[0].mxu0 %v5157
      %v5379 = vpop.f32.mrb[0].mxu0
      %v5380 = vadd.f32 0.0, %v5379
      %v5381 = vpop.f32.mrb[0].mxu0
      %5382 = vmatprep.mubr.f32.mxu0 0.0
      %5383 = vmatmul.mubr.f32.gmra.mrb[0].mxu0 %v5160
      %v5384 = vpop.f32.mrb[0].mxu0
      %v5385 = vadd.f32 0.0, %v5384
      %v5386 = vpop.f32.mrb[0].mxu0
      %5387 = vmatprep.mubr.f32.mxu0 0.0
      %5388 = vmatmul.mubr.f32.gmra.mrb[0].mxu0 %v5163
      %v5389 = vpop.f32.mrb[0].mxu0
      %v5390 = vadd.f32 0.0, %v5389
      %v5391 = vpop.f32.mrb[0].mxu0
      %5392 = vdwg.mxu0
      %v5393 = vadd.f32 %v5003, %v5235
      %v5394 = vadd.f32 %v5004, %v5240
      %v5395 = vadd.f32 %v5005, %v5245
      %v5396 = vadd.f32 %v5006, %v5250
      %v5397 = vadd.f32 %v5007, %v5255
      %v5398 = vadd.f32 %v5008, %v5260
      %v5399 = vadd.f32 %v5009, %v5265
      %v5400 = vadd.f32 %v5010, %v5270
      %v5401 = vadd.f32 %v5011, %v5275
      %v5402 = vadd.f32 %v5012, %v5280
      %v5403 = vadd.f32 %v5013, %v5285
      %v5404 = vadd.f32 %v5014, %v5290
      %v5405 = vadd.f32 %v5015, %v5295
      %v5406 = vadd.f32 %v5016, %v5300
      %v5407 = vadd.f32 %v5017, %v5305
      %v5408 = vadd.f32 %v5018, %v5310
      %v5409 = vadd.f32 %v5019, %v5315
      %v5410 = vadd.f32 %v5020, %v5320
      %v5411 = vadd.f32 %v5021, %v5325
      %v5412 = vadd.f32 %v5022, %v5330
      %v5413 = vadd.f32 %v5023, %v5335
      %v5414 = vadd.f32 %v5024, %v5340
      %v5415 = vadd.f32 %v5025, %v5345
      %v5416 = vadd.f32 %v5026, %v5350
      %v5417 = vadd.f32 %v5027, %v5355
      %v5418 = vadd.f32 %v5028, %v5360
      %v5419 = vadd.f32 %v5029, %v5365
      %v5420 = vadd.f32 %v5030, %v5370
      %v5421 = vadd.f32 %v5031, %v5375
      %v5422 = vadd.f32 %v5032, %v5380
      %v5423 = vadd.f32 %v5033, %v5385
      %v5424 = vadd.f32 %v5034, %v5390
      %v5425 = vld [vmem:[%s3897 + $0x1] sm:$0xff]
      %v5426 = vld [vmem:[%s3897 + $0x9] sm:$0xff]
      %v5427 = vld [vmem:[%s3897 + $0x19] sm:$0xff]
      %v5428 = vld [vmem:[%s3897 + $0x21] sm:$0xff]
      %v5429 = vld [vmem:[%s3897 + $0x31] sm:$0xff]
      %v5430 = vld [vmem:[%s3897 + $0x39] sm:$0xff]
      %v5431 = vld [vmem:[%s3897 + $0x49] sm:$0xff]
      %v5432 = vld [vmem:[%s3897 + $0x51] sm:$0xff]
      %v5433 = vld [vmem:[%s3897 + $0x61] sm:$0xff]
      %v5434 = vld [vmem:[%s3897 + $0x69] sm:$0xff]
      %v5435 = vld [vmem:[%s3897 + $0x79] sm:$0xff]
      %v5436 = vld [vmem:[%s3897 + $0x81] sm:$0xff]
      %v5437 = vld [vmem:[%s3897 + $0x91] sm:$0xff]
      %v5438 = vld [vmem:[%s3897 + $0x99] sm:$0xff]
      %v5439 = vld [vmem:[%s3897 + $0xa9] sm:$0xff]
      %v5440 = vld [vmem:[%s3897 + $0xb1] sm:$0xff]
      %v5441 = vld [vmem:[%s3897 + $0xc1] sm:$0xff]
      %v5442 = vld [vmem:[%s3897 + $0xc9] sm:$0xff]
      %v5443 = vld [vmem:[%s3897 + $0xd9] sm:$0xff]
      %v5444 = vld [vmem:[%s3897 + $0xe1] sm:$0xff]
      %v5445 = vld [vmem:[%s3897 + $0xf1] sm:$0xff]
      %v5446 = vld [vmem:[%s3897 + $0xf9] sm:$0xff]
      %v5447 = vld [vmem:[%s3897 + $0x109] sm:$0xff]
      %v5448 = vld [vmem:[%s3897 + $0x111] sm:$0xff]
      %v5449 = vld [vmem:[%s3897 + $0x121] sm:$0xff]
      %v5450 = vld [vmem:[%s3897 + $0x129] sm:$0xff]
      %v5451 = vld [vmem:[%s3897 + $0x139] sm:$0xff]
      %v5452 = vld [vmem:[%s3897 + $0x141] sm:$0xff]
      %v5453 = vld [vmem:[%s3897 + $0x151] sm:$0xff]
      %v5454 = vld [vmem:[%s3897 + $0x159] sm:$0xff]
      %v5455 = vld [vmem:[%s3897 + $0x169] sm:$0xff]
      %v5456 = vld [vmem:[%s3897 + $0x171] sm:$0xff]
      %s5457 = scalar_lea.vmem %s3, 16
      %v5458 = vld [vmem:[%s5457] sm:$0xf]
      %v5460 = vsel %vm225, %v5425, 0
      %v5463 = vsel %vm225, %v5426, 0
      %v5466 = vsel %vm225, %v5427, 0
      %v5469 = vsel %vm225, %v5428, 0
      %v5472 = vsel %vm225, %v5429, 0
      %v5475 = vsel %vm225, %v5430, 0
      %v5478 = vsel %vm225, %v5431, 0
      %v5481 = vsel %vm225, %v5432, 0
      %v5484 = vsel %vm225, %v5433, 0
      %v5487 = vsel %vm225, %v5434, 0
      %v5490 = vsel %vm225, %v5435, 0
      %v5493 = vsel %vm225, %v5436, 0
      %v5496 = vsel %vm225, %v5437, 0
      %v5499 = vsel %vm225, %v5438, 0
      %v5502 = vsel %vm225, %v5439, 0
      %v5505 = vsel %vm225, %v5440, 0
      %v5508 = vsel %vm225, %v5441, 0
      %v5511 = vsel %vm225, %v5442, 0
      %v5514 = vsel %vm225, %v5443, 0
      %v5517 = vsel %vm225, %v5444, 0
      %v5520 = vsel %vm225, %v5445, 0
      %v5523 = vsel %vm225, %v5446, 0
      %v5526 = vsel %vm225, %v5447, 0
      %v5529 = vsel %vm225, %v5448, 0
      %v5532 = vsel %vm225, %v5449, 0
      %v5535 = vsel %vm225, %v5450, 0
      %v5538 = vsel %vm225, %v5451, 0
      %v5541 = vsel %vm225, %v5452, 0
      %v5544 = vsel %vm225, %v5453, 0
      %v5547 = vsel %vm225, %v5454, 0
      %v5550 = vsel %vm225, %v5455, 0
      %v5553 = vsel %vm225, %v5456, 0
      %v5556 = vsel %vm542, %v5458, 0
      %5558 = vmatprep.subr.mxu0 0.0
      %5559 = vmatpush1.msra.mxu0 %v5556
      %5560 = vmatprep.subr.mxu0 0.0
      %5561 = vmatpush1.msra.mxu0 0.0
      %5562 = vmatprep.subr.mxu0 0.0
      %5563 = vmatpush1.msra.mxu0 0.0
      %5564 = vmatprep.subr.mxu0 0.0
      %5565 = vmatpush1.msra.mxu0 0.0
      %5566 = vmatprep.subr.mxu0 0.0
      %5567 = vmatpush1.msra.mxu0 0.0
      %5568 = vmatprep.subr.mxu0 0.0
      %5569 = vmatpush1.msra.mxu0 0.0
      %5570 = vmatprep.subr.mxu0 0.0
      %5571 = vmatpush1.msra.mxu0 0.0
      %5572 = vmatprep.subr.mxu0 0.0
      %5573 = vmatpush1.msra.mxu0 0.0
      %5574 = vmatprep.subr.mxu0 0.0
      %5575 = vmatpush1.msra.mxu0 0.0
      %5576 = vmatprep.subr.mxu0 0.0
      %5577 = vmatpush1.msra.mxu0 0.0
      %5578 = vmatprep.subr.mxu0 0.0
      %5579 = vmatpush1.msra.mxu0 0.0
      %5580 = vmatprep.subr.mxu0 0.0
      %5581 = vmatpush1.msra.mxu0 0.0
      %5582 = vmatprep.subr.mxu0 0.0
      %5583 = vmatpush1.msra.mxu0 0.0
      %5584 = vmatprep.subr.mxu0 0.0
      %5585 = vmatpush1.msra.mxu0 0.0
      %5586 = vmatprep.subr.mxu0 0.0
      %5587 = vmatpush1.msra.mxu0 0.0
      %5588 = vmatprep.subr.mxu0 0.0
      %5589 = vmatpush1.msra.mxu0 0.0
      %5590 = vmatprep.subr.mxu0 0.0
      %5591 = vmatpush1.msra.mxu0 0.0
      %5592 = vmatprep.subr.mxu0 0.0
      %5593 = vmatpush1.msra.mxu0 0.0
      %5594 = vmatprep.subr.mxu0 0.0
      %5595 = vmatpush1.msra.mxu0 0.0
      %5596 = vmatprep.subr.mxu0 0.0
      %5597 = vmatpush1.msra.mxu0 0.0
      %5598 = vmatprep.subr.mxu0 0.0
      %5599 = vmatpush1.msra.mxu0 0.0
      %5600 = vmatprep.subr.mxu0 0.0
      %5601 = vmatpush1.msra.mxu0 0.0
      %5602 = vmatprep.subr.mxu0 0.0
      %5603 = vmatpush1.msra.mxu0 0.0
      %5604 = vmatprep.subr.mxu0 0.0
      %5605 = vmatpush1.msra.mxu0 0.0
      %5606 = vmatprep.subr.mxu0 0.0
      %5607 = vmatpush1.msra.mxu0 0.0
      %5608 = vmatprep.subr.mxu0 0.0
      %5609 = vmatpush1.msra.mxu0 0.0
      %5610 = vmatprep.subr.mxu0 0.0
      %5611 = vmatpush1.msra.mxu0 0.0
      %5612 = vmatprep.subr.mxu0 0.0
      %5613 = vmatpush1.msra.mxu0 0.0
      %5614 = vmatprep.subr.mxu0 0.0
      %5615 = vmatpush1.msra.mxu0 0.0
      %5616 = vmatprep.subr.mxu0 0.0
      %5617 = vmatpush1.msra.mxu0 0.0
      %5618 = vmatprep.subr.mxu0 0.0
      %5619 = vmatpush1.msra.mxu0 0.0
      %5620 = vmatprep.subr.mxu0 0.0
      %5621 = vmatpush1.msra.mxu0 0.0
      %5622 = vmatprep.mubr.f32.mxu0 0.0
      %5623 = vmatmul.mubr.f32.gmra.mrb[0].mxu0 %v5460
      %v5624 = vpop.f32.mrb[0].mxu0
      %v5625 = vadd.f32 0.0, %v5624
      %v5626 = vpop.f32.mrb[0].mxu0
      %5627 = vmatprep.mubr.f32.mxu0 0.0
      %5628 = vmatmul.mubr.f32.gmra.mrb[0].mxu0 %v5463
      %v5629 = vpop.f32.mrb[0].mxu0
      %v5630 = vadd.f32 0.0, %v5629
      %v5631 = vpop.f32.mrb[0].mxu0
      %5632 = vmatprep.mubr.f32.mxu0 0.0
      %5633 = vmatmul.mubr.f32.gmra.mrb[0].mxu0 %v5466
      %v5634 = vpop.f32.mrb[0].mxu0
      %v5635 = vadd.f32 0.0, %v5634
      %v5636 = vpop.f32.mrb[0].mxu0
      %5637 = vmatprep.mubr.f32.mxu0 0.0
      %5638 = vmatmul.mubr.f32.gmra.mrb[0].mxu0 %v5469
      %v5639 = vpop.f32.mrb[0].mxu0
      %v5640 = vadd.f32 0.0, %v5639
      %v5641 = vpop.f32.mrb[0].mxu0
      %5642 = vmatprep.mubr.f32.mxu0 0.0
      %5643 = vmatmul.mubr.f32.gmra.mrb[0].mxu0 %v5472
      %v5644 = vpop.f32.mrb[0].mxu0
      %v5645 = vadd.f32 0.0, %v5644
      %v5646 = vpop.f32.mrb[0].mxu0
      %5647 = vmatprep.mubr.f32.mxu0 0.0
      %5648 = vmatmul.mubr.f32.gmra.mrb[0].mxu0 %v5475
      %v5649 = vpop.f32.mrb[0].mxu0
      %v5650 = vadd.f32 0.0, %v5649
      %v5651 = vpop.f32.mrb[0].mxu0
      %5652 = vmatprep.mubr.f32.mxu0 0.0
      %5653 = vmatmul.mubr.f32.gmra.mrb[0].mxu0 %v5478
      %v5654 = vpop.f32.mrb[0].mxu0
      %v5655 = vadd.f32 0.0, %v5654
      %v5656 = vpop.f32.mrb[0].mxu0
      %5657 = vmatprep.mubr.f32.mxu0 0.0
      %5658 = vmatmul.mubr.f32.gmra.mrb[0].mxu0 %v5481
      %v5659 = vpop.f32.mrb[0].mxu0
      %v5660 = vadd.f32 0.0, %v5659
      %v5661 = vpop.f32.mrb[0].mxu0
      %5662 = vmatprep.mubr.f32.mxu0 0.0
      %5663 = vmatmul.mubr.f32.gmra.mrb[0].mxu0 %v5484
      %v5664 = vpop.f32.mrb[0].mxu0
      %v5665 = vadd.f32 0.0, %v5664
      %v5666 = vpop.f32.mrb[0].mxu0
      %5667 = vmatprep.mubr.f32.mxu0 0.0
      %5668 = vmatmul.mubr.f32.gmra.mrb[0].mxu0 %v5487
      %v5669 = vpop.f32.mrb[0].mxu0
      %v5670 = vadd.f32 0.0, %v5669
      %v5671 = vpop.f32.mrb[0].mxu0
      %5672 = vmatprep.mubr.f32.mxu0 0.0
      %5673 = vmatmul.mubr.f32.gmra.mrb[0].mxu0 %v5490
      %v5674 = vpop.f32.mrb[0].mxu0
      %v5675 = vadd.f32 0.0, %v5674
      %v5676 = vpop.f32.mrb[0].mxu0
      %5677 = vmatprep.mubr.f32.mxu0 0.0
      %5678 = vmatmul.mubr.f32.gmra.mrb[0].mxu0 %v5493
      %v5679 = vpop.f32.mrb[0].mxu0
      %v5680 = vadd.f32 0.0, %v5679
      %v5681 = vpop.f32.mrb[0].mxu0
      %5682 = vmatprep.mubr.f32.mxu0 0.0
      %5683 = vmatmul.mubr.f32.gmra.mrb[0].mxu0 %v5496
      %v5684 = vpop.f32.mrb[0].mxu0
      %v5685 = vadd.f32 0.0, %v5684
      %v5686 = vpop.f32.mrb[0].mxu0
      %5687 = vmatprep.mubr.f32.mxu0 0.0
      %5688 = vmatmul.mubr.f32.gmra.mrb[0].mxu0 %v5499
      %v5689 = vpop.f32.mrb[0].mxu0
      %v5690 = vadd.f32 0.0, %v5689
      %v5691 = vpop.f32.mrb[0].mxu0
      %5692 = vmatprep.mubr.f32.mxu0 0.0
      %5693 = vmatmul.mubr.f32.gmra.mrb[0].mxu0 %v5502
      %v5694 = vpop.f32.mrb[0].mxu0
      %v5695 = vadd.f32 0.0, %v5694
      %v5696 = vpop.f32.mrb[0].mxu0
      %5697 = vmatprep.mubr.f32.mxu0 0.0
      %5698 = vmatmul.mubr.f32.gmra.mrb[0].mxu0 %v5505
      %v5699 = vpop.f32.mrb[0].mxu0
      %v5700 = vadd.f32 0.0, %v5699
      %v5701 = vpop.f32.mrb[0].mxu0
      %5702 = vmatprep.mubr.f32.mxu0 0.0
      %5703 = vmatmul.mubr.f32.gmra.mrb[0].mxu0 %v5508
      %v5704 = vpop.f32.mrb[0].mxu0
      %v5705 = vadd.f32 0.0, %v5704
      %v5706 = vpop.f32.mrb[0].mxu0
      %5707 = vmatprep.mubr.f32.mxu0 0.0
      %5708 = vmatmul.mubr.f32.gmra.mrb[0].mxu0 %v5511
      %v5709 = vpop.f32.mrb[0].mxu0
      %v5710 = vadd.f32 0.0, %v5709
      %v5711 = vpop.f32.mrb[0].mxu0
      %5712 = vmatprep.mubr.f32.mxu0 0.0
      %5713 = vmatmul.mubr.f32.gmra.mrb[0].mxu0 %v5514
      %v5714 = vpop.f32.mrb[0].mxu0
      %v5715 = vadd.f32 0.0, %v5714
      %v5716 = vpop.f32.mrb[0].mxu0
      %5717 = vmatprep.mubr.f32.mxu0 0.0
      %5718 = vmatmul.mubr.f32.gmra.mrb[0].mxu0 %v5517
      %v5719 = vpop.f32.mrb[0].mxu0
      %v5720 = vadd.f32 0.0, %v5719
      %v5721 = vpop.f32.mrb[0].mxu0
      %5722 = vmatprep.mubr.f32.mxu0 0.0
      %5723 = vmatmul.mubr.f32.gmra.mrb[0].mxu0 %v5520
      %v5724 = vpop.f32.mrb[0].mxu0
      %v5725 = vadd.f32 0.0, %v5724
      %v5726 = vpop.f32.mrb[0].mxu0
      %5727 = vmatprep.mubr.f32.mxu0 0.0
      %5728 = vmatmul.mubr.f32.gmra.mrb[0].mxu0 %v5523
      %v5729 = vpop.f32.mrb[0].mxu0
      %v5730 = vadd.f32 0.0, %v5729
      %v5731 = vpop.f32.mrb[0].mxu0
      %5732 = vmatprep.mubr.f32.mxu0 0.0
      %5733 = vmatmul.mubr.f32.gmra.mrb[0].mxu0 %v5526
      %v5734 = vpop.f32.mrb[0].mxu0
      %v5735 = vadd.f32 0.0, %v5734
      %v5736 = vpop.f32.mrb[0].mxu0
      %5737 = vmatprep.mubr.f32.mxu0 0.0
      %5738 = vmatmul.mubr.f32.gmra.mrb[0].mxu0 %v5529
      %v5739 = vpop.f32.mrb[0].mxu0
      %v5740 = vadd.f32 0.0, %v5739
      %v5741 = vpop.f32.mrb[0].mxu0
      %5742 = vmatprep.mubr.f32.mxu0 0.0
      %5743 = vmatmul.mubr.f32.gmra.mrb[0].mxu0 %v5532
      %v5744 = vpop.f32.mrb[0].mxu0
      %v5745 = vadd.f32 0.0, %v5744
      %v5746 = vpop.f32.mrb[0].mxu0
      %5747 = vmatprep.mubr.f32.mxu0 0.0
      %5748 = vmatmul.mubr.f32.gmra.mrb[0].mxu0 %v5535
      %v5749 = vpop.f32.mrb[0].mxu0
      %v5750 = vadd.f32 0.0, %v5749
      %v5751 = vpop.f32.mrb[0].mxu0
      %5752 = vmatprep.mubr.f32.mxu0 0.0
      %5753 = vmatmul.mubr.f32.gmra.mrb[0].mxu0 %v5538
      %v5754 = vpop.f32.mrb[0].mxu0
      %v5755 = vadd.f32 0.0, %v5754
      %v5756 = vpop.f32.mrb[0].mxu0
      %5757 = vmatprep.mubr.f32.mxu0 0.0
      %5758 = vmatmul.mubr.f32.gmra.mrb[0].mxu0 %v5541
      %v5759 = vpop.f32.mrb[0].mxu0
      %v5760 = vadd.f32 0.0, %v5759
      %v5761 = vpop.f32.mrb[0].mxu0
      %5762 = vmatprep.mubr.f32.mxu0 0.0
      %5763 = vmatmul.mubr.f32.gmra.mrb[0].mxu0 %v5544
      %v5764 = vpop.f32.mrb[0].mxu0
      %v5765 = vadd.f32 0.0, %v5764
      %v5766 = vpop.f32.mrb[0].mxu0
      %5767 = vmatprep.mubr.f32.mxu0 0.0
      %5768 = vmatmul.mubr.f32.gmra.mrb[0].mxu0 %v5547
      %v5769 = vpop.f32.mrb[0].mxu0
      %v5770 = vadd.f32 0.0, %v5769
      %v5771 = vpop.f32.mrb[0].mxu0
      %5772 = vmatprep.mubr.f32.mxu0 0.0
      %5773 = vmatmul.mubr.f32.gmra.mrb[0].mxu0 %v5550
      %v5774 = vpop.f32.mrb[0].mxu0
      %v5775 = vadd.f32 0.0, %v5774
      %v5776 = vpop.f32.mrb[0].mxu0
      %5777 = vmatprep.mubr.f32.mxu0 0.0
      %5778 = vmatmul.mubr.f32.gmra.mrb[0].mxu0 %v5553
      %v5779 = vpop.f32.mrb[0].mxu0
      %v5780 = vadd.f32 0.0, %v5779
      %v5781 = vpop.f32.mrb[0].mxu0
      %5782 = vdwg.mxu0
      %v5783 = vadd.f32 %v5393, %v5625
      %v5784 = vadd.f32 %v5394, %v5630
      %v5785 = vadd.f32 %v5395, %v5635
      %v5786 = vadd.f32 %v5396, %v5640
      %v5787 = vadd.f32 %v5397, %v5645
      %v5788 = vadd.f32 %v5398, %v5650
      %v5789 = vadd.f32 %v5399, %v5655
      %v5790 = vadd.f32 %v5400, %v5660
      %v5791 = vadd.f32 %v5401, %v5665
      %v5792 = vadd.f32 %v5402, %v5670
      %v5793 = vadd.f32 %v5403, %v5675
      %v5794 = vadd.f32 %v5404, %v5680
      %v5795 = vadd.f32 %v5405, %v5685
      %v5796 = vadd.f32 %v5406, %v5690
      %v5797 = vadd.f32 %v5407, %v5695
      %v5798 = vadd.f32 %v5408, %v5700
      %v5799 = vadd.f32 %v5409, %v5705
      %v5800 = vadd.f32 %v5410, %v5710
      %v5801 = vadd.f32 %v5411, %v5715
      %v5802 = vadd.f32 %v5412, %v5720
      %v5803 = vadd.f32 %v5413, %v5725
      %v5804 = vadd.f32 %v5414, %v5730
      %v5805 = vadd.f32 %v5415, %v5735
      %v5806 = vadd.f32 %v5416, %v5740
      %v5807 = vadd.f32 %v5417, %v5745
      %v5808 = vadd.f32 %v5418, %v5750
      %v5809 = vadd.f32 %v5419, %v5755
      %v5810 = vadd.f32 %v5420, %v5760
      %v5811 = vadd.f32 %v5421, %v5765
      %v5812 = vadd.f32 %v5422, %v5770
      %v5813 = vadd.f32 %v5423, %v5775
      %v5814 = vadd.f32 %v5424, %v5780
      %v5815 = vld [vmem:[%s3897 + $0x2] sm:$0xff]
      %v5816 = vld [vmem:[%s3897 + $0xa] sm:$0xff]
      %v5817 = vld [vmem:[%s3897 + $0x1a] sm:$0xff]
      %v5818 = vld [vmem:[%s3897 + $0x22] sm:$0xff]
      %v5819 = vld [vmem:[%s3897 + $0x32] sm:$0xff]
      %v5820 = vld [vmem:[%s3897 + $0x3a] sm:$0xff]
      %v5821 = vld [vmem:[%s3897 + $0x4a] sm:$0xff]
      %v5822 = vld [vmem:[%s3897 + $0x52] sm:$0xff]
      %v5823 = vld [vmem:[%s3897 + $0x62] sm:$0xff]
      %v5824 = vld [vmem:[%s3897 + $0x6a] sm:$0xff]
      %v5825 = vld [vmem:[%s3897 + $0x7a] sm:$0xff]
      %v5826 = vld [vmem:[%s3897 + $0x82] sm:$0xff]
      %v5827 = vld [vmem:[%s3897 + $0x92] sm:$0xff]
      %v5828 = vld [vmem:[%s3897 + $0x9a] sm:$0xff]
      %v5829 = vld [vmem:[%s3897 + $0xaa] sm:$0xff]
      %v5830 = vld [vmem:[%s3897 + $0xb2] sm:$0xff]
      %v5831 = vld [vmem:[%s3897 + $0xc2] sm:$0xff]
      %v5832 = vld [vmem:[%s3897 + $0xca] sm:$0xff]
      %v5833 = vld [vmem:[%s3897 + $0xda] sm:$0xff]
      %v5834 = vld [vmem:[%s3897 + $0xe2] sm:$0xff]
      %v5835 = vld [vmem:[%s3897 + $0xf2] sm:$0xff]
      %v5836 = vld [vmem:[%s3897 + $0xfa] sm:$0xff]
      %v5837 = vld [vmem:[%s3897 + $0x10a] sm:$0xff]
      %v5838 = vld [vmem:[%s3897 + $0x112] sm:$0xff]
      %v5839 = vld [vmem:[%s3897 + $0x122] sm:$0xff]
      %v5840 = vld [vmem:[%s3897 + $0x12a] sm:$0xff]
      %v5841 = vld [vmem:[%s3897 + $0x13a] sm:$0xff]
      %v5842 = vld [vmem:[%s3897 + $0x142] sm:$0xff]
      %v5843 = vld [vmem:[%s3897 + $0x152] sm:$0xff]
      %v5844 = vld [vmem:[%s3897 + $0x15a] sm:$0xff]
      %v5845 = vld [vmem:[%s3897 + $0x16a] sm:$0xff]
      %v5846 = vld [vmem:[%s3897 + $0x172] sm:$0xff]
      %s5847 = scalar_lea.vmem %s3, 20
      %v5848 = vld [vmem:[%s5847] sm:$0xf]
      %v5850 = vsel %vm225, %v5815, 0
      %v5853 = vsel %vm225, %v5816, 0
      %v5856 = vsel %vm225, %v5817, 0
      %v5859 = vsel %vm225, %v5818, 0
      %v5862 = vsel %vm225, %v5819, 0
      %v5865 = vsel %vm225, %v5820, 0
      %v5868 = vsel %vm225, %v5821, 0
      %v5871 = vsel %vm225, %v5822, 0
      %v5874 = vsel %vm225, %v5823, 0
      %v5877 = vsel %vm225, %v5824, 0
      %v5880 = vsel %vm225, %v5825, 0
      %v5883 = vsel %vm225, %v5826, 0
      %v5886 = vsel %vm225, %v5827, 0
      %v5889 = vsel %vm225, %v5828, 0
      %v5892 = vsel %vm225, %v5829, 0
      %v5895 = vsel %vm225, %v5830, 0
      %v5898 = vsel %vm225, %v5831, 0
      %v5901 = vsel %vm225, %v5832, 0
      %v5904 = vsel %vm225, %v5833, 0
      %v5907 = vsel %vm225, %v5834, 0
      %v5910 = vsel %vm225, %v5835, 0
      %v5913 = vsel %vm225, %v5836, 0
      %v5916 = vsel %vm225, %v5837, 0
      %v5919 = vsel %vm225, %v5838, 0
      %v5922 = vsel %vm225, %v5839, 0
      %v5925 = vsel %vm225, %v5840, 0
      %v5928 = vsel %vm225, %v5841, 0
      %v5931 = vsel %vm225, %v5842, 0
      %v5934 = vsel %vm225, %v5843, 0
      %v5937 = vsel %vm225, %v5844, 0
      %v5940 = vsel %vm225, %v5845, 0
      %v5943 = vsel %vm225, %v5846, 0
      %v5946 = vsel %vm542, %v5848, 0
      %5948 = vmatprep.subr.mxu0 0.0
      %5949 = vmatpush1.msra.mxu0 %v5946
      %5950 = vmatprep.subr.mxu0 0.0
      %5951 = vmatpush1.msra.mxu0 0.0
      %5952 = vmatprep.subr.mxu0 0.0
      %5953 = vmatpush1.msra.mxu0 0.0
      %5954 = vmatprep.subr.mxu0 0.0
      %5955 = vmatpush1.msra.mxu0 0.0
      %5956 = vmatprep.subr.mxu0 0.0
      %5957 = vmatpush1.msra.mxu0 0.0
      %5958 = vmatprep.subr.mxu0 0.0
      %5959 = vmatpush1.msra.mxu0 0.0
      %5960 = vmatprep.subr.mxu0 0.0
      %5961 = vmatpush1.msra.mxu0 0.0
      %5962 = vmatprep.subr.mxu0 0.0
      %5963 = vmatpush1.msra.mxu0 0.0
      %5964 = vmatprep.subr.mxu0 0.0
      %5965 = vmatpush1.msra.mxu0 0.0
      %5966 = vmatprep.subr.mxu0 0.0
      %5967 = vmatpush1.msra.mxu0 0.0
      %5968 = vmatprep.subr.mxu0 0.0
      %5969 = vmatpush1.msra.mxu0 0.0
      %5970 = vmatprep.subr.mxu0 0.0
      %5971 = vmatpush1.msra.mxu0 0.0
      %5972 = vmatprep.subr.mxu0 0.0
      %5973 = vmatpush1.msra.mxu0 0.0
      %5974 = vmatprep.subr.mxu0 0.0
      %5975 = vmatpush1.msra.mxu0 0.0
      %5976 = vmatprep.subr.mxu0 0.0
      %5977 = vmatpush1.msra.mxu0 0.0
      %5978 = vmatprep.subr.mxu0 0.0
      %5979 = vmatpush1.msra.mxu0 0.0
      %5980 = vmatprep.subr.mxu0 0.0
      %5981 = vmatpush1.msra.mxu0 0.0
      %5982 = vmatprep.subr.mxu0 0.0
      %5983 = vmatpush1.msra.mxu0 0.0
      %5984 = vmatprep.subr.mxu0 0.0
      %5985 = vmatpush1.msra.mxu0 0.0
      %5986 = vmatprep.subr.mxu0 0.0
      %5987 = vmatpush1.msra.mxu0 0.0
      %5988 = vmatprep.subr.mxu0 0.0
      %5989 = vmatpush1.msra.mxu0 0.0
      %5990 = vmatprep.subr.mxu0 0.0
      %5991 = vmatpush1.msra.mxu0 0.0
      %5992 = vmatprep.subr.mxu0 0.0
      %5993 = vmatpush1.msra.mxu0 0.0
      %5994 = vmatprep.subr.mxu0 0.0
      %5995 = vmatpush1.msra.mxu0 0.0
      %5996 = vmatprep.subr.mxu0 0.0
      %5997 = vmatpush1.msra.mxu0 0.0
      %5998 = vmatprep.subr.mxu0 0.0
      %5999 = vmatpush1.msra.mxu0 0.0
      %6000 = vmatprep.subr.mxu0 0.0
      %6001 = vmatpush1.msra.mxu0 0.0
      %6002 = vmatprep.subr.mxu0 0.0
      %6003 = vmatpush1.msra.mxu0 0.0
      %6004 = vmatprep.subr.mxu0 0.0
      %6005 = vmatpush1.msra.mxu0 0.0
      %6006 = vmatprep.subr.mxu0 0.0
      %6007 = vmatpush1.msra.mxu0 0.0
      %6008 = vmatprep.subr.mxu0 0.0
      %6009 = vmatpush1.msra.mxu0 0.0
      %6010 = vmatprep.subr.mxu0 0.0
      %6011 = vmatpush1.msra.mxu0 0.0
      %6012 = vmatprep.mubr.f32.mxu0 0.0
      %6013 = vmatmul.mubr.f32.gmra.mrb[0].mxu0 %v5850
      %v6014 = vpop.f32.mrb[0].mxu0
      %v6015 = vadd.f32 0.0, %v6014
      %v6016 = vpop.f32.mrb[0].mxu0
      %6017 = vmatprep.mubr.f32.mxu0 0.0
      %6018 = vmatmul.mubr.f32.gmra.mrb[0].mxu0 %v5853
      %v6019 = vpop.f32.mrb[0].mxu0
      %v6020 = vadd.f32 0.0, %v6019
      %v6021 = vpop.f32.mrb[0].mxu0
      %6022 = vmatprep.mubr.f32.mxu0 0.0
      %6023 = vmatmul.mubr.f32.gmra.mrb[0].mxu0 %v5856
      %v6024 = vpop.f32.mrb[0].mxu0
      %v6025 = vadd.f32 0.0, %v6024
      %v6026 = vpop.f32.mrb[0].mxu0
      %6027 = vmatprep.mubr.f32.mxu0 0.0
      %6028 = vmatmul.mubr.f32.gmra.mrb[0].mxu0 %v5859
      %v6029 = vpop.f32.mrb[0].mxu0
      %v6030 = vadd.f32 0.0, %v6029
      %v6031 = vpop.f32.mrb[0].mxu0
      %6032 = vmatprep.mubr.f32.mxu0 0.0
      %6033 = vmatmul.mubr.f32.gmra.mrb[0].mxu0 %v5862
      %v6034 = vpop.f32.mrb[0].mxu0
      %v6035 = vadd.f32 0.0, %v6034
      %v6036 = vpop.f32.mrb[0].mxu0
      %6037 = vmatprep.mubr.f32.mxu0 0.0
      %6038 = vmatmul.mubr.f32.gmra.mrb[0].mxu0 %v5865
      %v6039 = vpop.f32.mrb[0].mxu0
      %v6040 = vadd.f32 0.0, %v6039
      %v6041 = vpop.f32.mrb[0].mxu0
      %6042 = vmatprep.mubr.f32.mxu0 0.0
      %6043 = vmatmul.mubr.f32.gmra.mrb[0].mxu0 %v5868
      %v6044 = vpop.f32.mrb[0].mxu0
      %v6045 = vadd.f32 0.0, %v6044
      %v6046 = vpop.f32.mrb[0].mxu0
      %6047 = vmatprep.mubr.f32.mxu0 0.0
      %6048 = vmatmul.mubr.f32.gmra.mrb[0].mxu0 %v5871
      %v6049 = vpop.f32.mrb[0].mxu0
      %v6050 = vadd.f32 0.0, %v6049
      %v6051 = vpop.f32.mrb[0].mxu0
      %6052 = vmatprep.mubr.f32.mxu0 0.0
      %6053 = vmatmul.mubr.f32.gmra.mrb[0].mxu0 %v5874
      %v6054 = vpop.f32.mrb[0].mxu0
      %v6055 = vadd.f32 0.0, %v6054
      %v6056 = vpop.f32.mrb[0].mxu0
      %6057 = vmatprep.mubr.f32.mxu0 0.0
      %6058 = vmatmul.mubr.f32.gmra.mrb[0].mxu0 %v5877
      %v6059 = vpop.f32.mrb[0].mxu0
      %v6060 = vadd.f32 0.0, %v6059
      %v6061 = vpop.f32.mrb[0].mxu0
      %6062 = vmatprep.mubr.f32.mxu0 0.0
      %6063 = vmatmul.mubr.f32.gmra.mrb[0].mxu0 %v5880
      %v6064 = vpop.f32.mrb[0].mxu0
      %v6065 = vadd.f32 0.0, %v6064
      %v6066 = vpop.f32.mrb[0].mxu0
      %6067 = vmatprep.mubr.f32.mxu0 0.0
      %6068 = vmatmul.mubr.f32.gmra.mrb[0].mxu0 %v5883
      %v6069 = vpop.f32.mrb[0].mxu0
      %v6070 = vadd.f32 0.0, %v6069
      %v6071 = vpop.f32.mrb[0].mxu0
      %6072 = vmatprep.mubr.f32.mxu0 0.0
      %6073 = vmatmul.mubr.f32.gmra.mrb[0].mxu0 %v5886
      %v6074 = vpop.f32.mrb[0].mxu0
      %v6075 = vadd.f32 0.0, %v6074
      %v6076 = vpop.f32.mrb[0].mxu0
      %6077 = vmatprep.mubr.f32.mxu0 0.0
      %6078 = vmatmul.mubr.f32.gmra.mrb[0].mxu0 %v5889
      %v6079 = vpop.f32.mrb[0].mxu0
      %v6080 = vadd.f32 0.0, %v6079
      %v6081 = vpop.f32.mrb[0].mxu0
      %6082 = vmatprep.mubr.f32.mxu0 0.0
      %6083 = vmatmul.mubr.f32.gmra.mrb[0].mxu0 %v5892
      %v6084 = vpop.f32.mrb[0].mxu0
      %v6085 = vadd.f32 0.0, %v6084
      %v6086 = vpop.f32.mrb[0].mxu0
      %6087 = vmatprep.mubr.f32.mxu0 0.0
      %6088 = vmatmul.mubr.f32.gmra.mrb[0].mxu0 %v5895
      %v6089 = vpop.f32.mrb[0].mxu0
      %v6090 = vadd.f32 0.0, %v6089
      %v6091 = vpop.f32.mrb[0].mxu0
      %6092 = vmatprep.mubr.f32.mxu0 0.0
      %6093 = vmatmul.mubr.f32.gmra.mrb[0].mxu0 %v5898
      %v6094 = vpop.f32.mrb[0].mxu0
      %v6095 = vadd.f32 0.0, %v6094
      %v6096 = vpop.f32.mrb[0].mxu0
      %6097 = vmatprep.mubr.f32.mxu0 0.0
      %6098 = vmatmul.mubr.f32.gmra.mrb[0].mxu0 %v5901
      %v6099 = vpop.f32.mrb[0].mxu0
      %v6100 = vadd.f32 0.0, %v6099
      %v6101 = vpop.f32.mrb[0].mxu0
      %6102 = vmatprep.mubr.f32.mxu0 0.0
      %6103 = vmatmul.mubr.f32.gmra.mrb[0].mxu0 %v5904
      %v6104 = vpop.f32.mrb[0].mxu0
      %v6105 = vadd.f32 0.0, %v6104
      %v6106 = vpop.f32.mrb[0].mxu0
      %6107 = vmatprep.mubr.f32.mxu0 0.0
      %6108 = vmatmul.mubr.f32.gmra.mrb[0].mxu0 %v5907
      %v6109 = vpop.f32.mrb[0].mxu0
      %v6110 = vadd.f32 0.0, %v6109
      %v6111 = vpop.f32.mrb[0].mxu0
      %6112 = vmatprep.mubr.f32.mxu0 0.0
      %6113 = vmatmul.mubr.f32.gmra.mrb[0].mxu0 %v5910
      %v6114 = vpop.f32.mrb[0].mxu0
      %v6115 = vadd.f32 0.0, %v6114
      %v6116 = vpop.f32.mrb[0].mxu0
      %6117 = vmatprep.mubr.f32.mxu0 0.0
      %6118 = vmatmul.mubr.f32.gmra.mrb[0].mxu0 %v5913
      %v6119 = vpop.f32.mrb[0].mxu0
      %v6120 = vadd.f32 0.0, %v6119
      %v6121 = vpop.f32.mrb[0].mxu0
      %6122 = vmatprep.mubr.f32.mxu0 0.0
      %6123 = vmatmul.mubr.f32.gmra.mrb[0].mxu0 %v5916
      %v6124 = vpop.f32.mrb[0].mxu0
      %v6125 = vadd.f32 0.0, %v6124
      %v6126 = vpop.f32.mrb[0].mxu0
      %6127 = vmatprep.mubr.f32.mxu0 0.0
      %6128 = vmatmul.mubr.f32.gmra.mrb[0].mxu0 %v5919
      %v6129 = vpop.f32.mrb[0].mxu0
      %v6130 = vadd.f32 0.0, %v6129
      %v6131 = vpop.f32.mrb[0].mxu0
      %6132 = vmatprep.mubr.f32.mxu0 0.0
      %6133 = vmatmul.mubr.f32.gmra.mrb[0].mxu0 %v5922
      %v6134 = vpop.f32.mrb[0].mxu0
      %v6135 = vadd.f32 0.0, %v6134
      %v6136 = vpop.f32.mrb[0].mxu0
      %6137 = vmatprep.mubr.f32.mxu0 0.0
      %6138 = vmatmul.mubr.f32.gmra.mrb[0].mxu0 %v5925
      %v6139 = vpop.f32.mrb[0].mxu0
      %v6140 = vadd.f32 0.0, %v6139
      %v6141 = vpop.f32.mrb[0].mxu0
      %6142 = vmatprep.mubr.f32.mxu0 0.0
      %6143 = vmatmul.mubr.f32.gmra.mrb[0].mxu0 %v5928
      %v6144 = vpop.f32.mrb[0].mxu0
      %v6145 = vadd.f32 0.0, %v6144
      %v6146 = vpop.f32.mrb[0].mxu0
      %6147 = vmatprep.mubr.f32.mxu0 0.0
      %6148 = vmatmul.mubr.f32.gmra.mrb[0].mxu0 %v5931
      %v6149 = vpop.f32.mrb[0].mxu0
      %v6150 = vadd.f32 0.0, %v6149
      %v6151 = vpop.f32.mrb[0].mxu0
      %6152 = vmatprep.mubr.f32.mxu0 0.0
      %6153 = vmatmul.mubr.f32.gmra.mrb[0].mxu0 %v5934
      %v6154 = vpop.f32.mrb[0].mxu0
      %v6155 = vadd.f32 0.0, %v6154
      %v6156 = vpop.f32.mrb[0].mxu0
      %6157 = vmatprep.mubr.f32.mxu0 0.0
      %6158 = vmatmul.mubr.f32.gmra.mrb[0].mxu0 %v5937
      %v6159 = vpop.f32.mrb[0].mxu0
      %v6160 = vadd.f32 0.0, %v6159
      %v6161 = vpop.f32.mrb[0].mxu0
      %6162 = vmatprep.mubr.f32.mxu0 0.0
      %6163 = vmatmul.mubr.f32.gmra.mrb[0].mxu0 %v5940
      %v6164 = vpop.f32.mrb[0].mxu0
      %v6165 = vadd.f32 0.0, %v6164
      %v6166 = vpop.f32.mrb[0].mxu0
      %6167 = vmatprep.mubr.f32.mxu0 0.0
      %6168 = vmatmul.mubr.f32.gmra.mrb[0].mxu0 %v5943
      %v6169 = vpop.f32.mrb[0].mxu0
      %v6170 = vadd.f32 0.0, %v6169
      %v6171 = vpop.f32.mrb[0].mxu0
      %6172 = vdwg.mxu0
      %v6173 = vadd.f32 %v5783, %v6015
      %v6174 = vadd.f32 %v5784, %v6020
      %v6175 = vadd.f32 %v5785, %v6025
      %v6176 = vadd.f32 %v5786, %v6030
      %v6177 = vadd.f32 %v5787, %v6035
      %v6178 = vadd.f32 %v5788, %v6040
      %v6179 = vadd.f32 %v5789, %v6045
      %v6180 = vadd.f32 %v5790, %v6050
      %v6181 = vadd.f32 %v5791, %v6055
      %v6182 = vadd.f32 %v5792, %v6060
      %v6183 = vadd.f32 %v5793, %v6065
      %v6184 = vadd.f32 %v5794, %v6070
      %v6185 = vadd.f32 %v5795, %v6075
      %v6186 = vadd.f32 %v5796, %v6080
      %v6187 = vadd.f32 %v5797, %v6085
      %v6188 = vadd.f32 %v5798, %v6090
      %v6189 = vadd.f32 %v5799, %v6095
      %v6190 = vadd.f32 %v5800, %v6100
      %v6191 = vadd.f32 %v5801, %v6105
      %v6192 = vadd.f32 %v5802, %v6110
      %v6193 = vadd.f32 %v5803, %v6115
      %v6194 = vadd.f32 %v5804, %v6120
      %v6195 = vadd.f32 %v5805, %v6125
      %v6196 = vadd.f32 %v5806, %v6130
      %v6197 = vadd.f32 %v5807, %v6135
      %v6198 = vadd.f32 %v5808, %v6140
      %v6199 = vadd.f32 %v5809, %v6145
      %v6200 = vadd.f32 %v5810, %v6150
      %v6201 = vadd.f32 %v5811, %v6155
      %v6202 = vadd.f32 %v5812, %v6160
      %v6203 = vadd.f32 %v5813, %v6165
      %v6204 = vadd.f32 %v5814, %v6170
      %s6205 = scalar_lea.vmem [#allocation3], 48
      %v6206 = vld [vmem:[%s6205] sm:$0xff]
      %v6207 = vld [vmem:[%s6205 + $0x8] sm:$0xff]
      %v6208 = vld [vmem:[%s6205 + $0x18] sm:$0xff]
      %v6209 = vld [vmem:[%s6205 + $0x20] sm:$0xff]
      %v6210 = vld [vmem:[%s6205 + $0x30] sm:$0xff]
      %v6211 = vld [vmem:[%s6205 + $0x38] sm:$0xff]
      %v6212 = vld [vmem:[%s6205 + $0x48] sm:$0xff]
      %v6213 = vld [vmem:[%s6205 + $0x50] sm:$0xff]
      %v6214 = vld [vmem:[%s6205 + $0x60] sm:$0xff]
      %v6215 = vld [vmem:[%s6205 + $0x68] sm:$0xff]
      %v6216 = vld [vmem:[%s6205 + $0x78] sm:$0xff]
      %v6217 = vld [vmem:[%s6205 + $0x80] sm:$0xff]
      %v6218 = vld [vmem:[%s6205 + $0x90] sm:$0xff]
      %v6219 = vld [vmem:[%s6205 + $0x98] sm:$0xff]
      %v6220 = vld [vmem:[%s6205 + $0xa8] sm:$0xff]
      %v6221 = vld [vmem:[%s6205 + $0xb0] sm:$0xff]
      %v6222 = vld [vmem:[%s6205 + $0xc0] sm:$0xff]
      %v6223 = vld [vmem:[%s6205 + $0xc8] sm:$0xff]
      %v6224 = vld [vmem:[%s6205 + $0xd8] sm:$0xff]
      %v6225 = vld [vmem:[%s6205 + $0xe0] sm:$0xff]
      %v6226 = vld [vmem:[%s6205 + $0xf0] sm:$0xff]
      %v6227 = vld [vmem:[%s6205 + $0xf8] sm:$0xff]
      %v6228 = vld [vmem:[%s6205 + $0x108] sm:$0xff]
      %v6229 = vld [vmem:[%s6205 + $0x110] sm:$0xff]
      %v6230 = vld [vmem:[%s6205 + $0x120] sm:$0xff]
      %v6231 = vld [vmem:[%s6205 + $0x128] sm:$0xff]
      %v6232 = vld [vmem:[%s6205 + $0x138] sm:$0xff]
      %v6233 = vld [vmem:[%s6205 + $0x140] sm:$0xff]
      %v6234 = vld [vmem:[%s6205 + $0x150] sm:$0xff]
      %v6235 = vld [vmem:[%s6205 + $0x158] sm:$0xff]
      %v6236 = vld [vmem:[%s6205 + $0x168] sm:$0xff]
      %v6237 = vld [vmem:[%s6205 + $0x170] sm:$0xff]
      %s6238 = scalar_lea.vmem %s3, 24
      %v6239 = vld [vmem:[%s6238] sm:$0xf]
      %v6241 = vsel %vm225, %v6206, 0
      %v6244 = vsel %vm225, %v6207, 0
      %v6247 = vsel %vm225, %v6208, 0
      %v6250 = vsel %vm225, %v6209, 0
      %v6253 = vsel %vm225, %v6210, 0
      %v6256 = vsel %vm225, %v6211, 0
      %v6259 = vsel %vm225, %v6212, 0
      %v6262 = vsel %vm225, %v6213, 0
      %v6265 = vsel %vm225, %v6214, 0
      %v6268 = vsel %vm225, %v6215, 0
      %v6271 = vsel %vm225, %v6216, 0
      %v6274 = vsel %vm225, %v6217, 0
      %v6277 = vsel %vm225, %v6218, 0
      %v6280 = vsel %vm225, %v6219, 0
      %v6283 = vsel %vm225, %v6220, 0
      %v6286 = vsel %vm225, %v6221, 0
      %v6289 = vsel %vm225, %v6222, 0
      %v6292 = vsel %vm225, %v6223, 0
      %v6295 = vsel %vm225, %v6224, 0
      %v6298 = vsel %vm225, %v6225, 0
      %v6301 = vsel %vm225, %v6226, 0
      %v6304 = vsel %vm225, %v6227, 0
      %v6307 = vsel %vm225, %v6228, 0
      %v6310 = vsel %vm225, %v6229, 0
      %v6313 = vsel %vm225, %v6230, 0
      %v6316 = vsel %vm225, %v6231, 0
      %v6319 = vsel %vm225, %v6232, 0
      %v6322 = vsel %vm225, %v6233, 0
      %v6325 = vsel %vm225, %v6234, 0
      %v6328 = vsel %vm225, %v6235, 0
      %v6331 = vsel %vm225, %v6236, 0
      %v6334 = vsel %vm225, %v6237, 0
      %v6337 = vsel %vm542, %v6239, 0
      %6339 = vmatprep.subr.mxu0 0.0
      %6340 = vmatpush1.msra.mxu0 %v6337
      %6341 = vmatprep.subr.mxu0 0.0
      %6342 = vmatpush1.msra.mxu0 0.0
      %6343 = vmatprep.subr.mxu0 0.0
      %6344 = vmatpush1.msra.mxu0 0.0
      %6345 = vmatprep.subr.mxu0 0.0
      %6346 = vmatpush1.msra.mxu0 0.0
      %6347 = vmatprep.subr.mxu0 0.0
      %6348 = vmatpush1.msra.mxu0 0.0
      %6349 = vmatprep.subr.mxu0 0.0
      %6350 = vmatpush1.msra.mxu0 0.0
      %6351 = vmatprep.subr.mxu0 0.0
      %6352 = vmatpush1.msra.mxu0 0.0
      %6353 = vmatprep.subr.mxu0 0.0
      %6354 = vmatpush1.msra.mxu0 0.0
      %6355 = vmatprep.subr.mxu0 0.0
      %6356 = vmatpush1.msra.mxu0 0.0
      %6357 = vmatprep.subr.mxu0 0.0
      %6358 = vmatpush1.msra.mxu0 0.0
      %6359 = vmatprep.subr.mxu0 0.0
      %6360 = vmatpush1.msra.mxu0 0.0
      %6361 = vmatprep.subr.mxu0 0.0
      %6362 = vmatpush1.msra.mxu0 0.0
      %6363 = vmatprep.subr.mxu0 0.0
      %6364 = vmatpush1.msra.mxu0 0.0
      %6365 = vmatprep.subr.mxu0 0.0
      %6366 = vmatpush1.msra.mxu0 0.0
      %6367 = vmatprep.subr.mxu0 0.0
      %6368 = vmatpush1.msra.mxu0 0.0
      %6369 = vmatprep.subr.mxu0 0.0
      %6370 = vmatpush1.msra.mxu0 0.0
      %6371 = vmatprep.subr.mxu0 0.0
      %6372 = vmatpush1.msra.mxu0 0.0
      %6373 = vmatprep.subr.mxu0 0.0
      %6374 = vmatpush1.msra.mxu0 0.0
      %6375 = vmatprep.subr.mxu0 0.0
      %6376 = vmatpush1.msra.mxu0 0.0
      %6377 = vmatprep.subr.mxu0 0.0
      %6378 = vmatpush1.msra.mxu0 0.0
      %6379 = vmatprep.subr.mxu0 0.0
      %6380 = vmatpush1.msra.mxu0 0.0
      %6381 = vmatprep.subr.mxu0 0.0
      %6382 = vmatpush1.msra.mxu0 0.0
      %6383 = vmatprep.subr.mxu0 0.0
      %6384 = vmatpush1.msra.mxu0 0.0
      %6385 = vmatprep.subr.mxu0 0.0
      %6386 = vmatpush1.msra.mxu0 0.0
      %6387 = vmatprep.subr.mxu0 0.0
      %6388 = vmatpush1.msra.mxu0 0.0
      %6389 = vmatprep.subr.mxu0 0.0
      %6390 = vmatpush1.msra.mxu0 0.0
      %6391 = vmatprep.subr.mxu0 0.0
      %6392 = vmatpush1.msra.mxu0 0.0
      %6393 = vmatprep.subr.mxu0 0.0
      %6394 = vmatpush1.msra.mxu0 0.0
      %6395 = vmatprep.subr.mxu0 0.0
      %6396 = vmatpush1.msra.mxu0 0.0
      %6397 = vmatprep.subr.mxu0 0.0
      %6398 = vmatpush1.msra.mxu0 0.0
      %6399 = vmatprep.subr.mxu0 0.0
      %6400 = vmatpush1.msra.mxu0 0.0
      %6401 = vmatprep.subr.mxu0 0.0
      %6402 = vmatpush1.msra.mxu0 0.0
      %6403 = vmatprep.mubr.f32.mxu0 0.0
      %6404 = vmatmul.mubr.f32.gmra.mrb[0].mxu0 %v6241
      %v6405 = vpop.f32.mrb[0].mxu0
      %v6406 = vadd.f32 0.0, %v6405
      %v6407 = vpop.f32.mrb[0].mxu0
      %6408 = vmatprep.mubr.f32.mxu0 0.0
      %6409 = vmatmul.mubr.f32.gmra.mrb[0].mxu0 %v6244
      %v6410 = vpop.f32.mrb[0].mxu0
      %v6411 = vadd.f32 0.0, %v6410
      %v6412 = vpop.f32.mrb[0].mxu0
      %6413 = vmatprep.mubr.f32.mxu0 0.0
      %6414 = vmatmul.mubr.f32.gmra.mrb[0].mxu0 %v6247
      %v6415 = vpop.f32.mrb[0].mxu0
      %v6416 = vadd.f32 0.0, %v6415
      %v6417 = vpop.f32.mrb[0].mxu0
      %6418 = vmatprep.mubr.f32.mxu0 0.0
      %6419 = vmatmul.mubr.f32.gmra.mrb[0].mxu0 %v6250
      %v6420 = vpop.f32.mrb[0].mxu0
      %v6421 = vadd.f32 0.0, %v6420
      %v6422 = vpop.f32.mrb[0].mxu0
      %6423 = vmatprep.mubr.f32.mxu0 0.0
      %6424 = vmatmul.mubr.f32.gmra.mrb[0].mxu0 %v6253
      %v6425 = vpop.f32.mrb[0].mxu0
      %v6426 = vadd.f32 0.0, %v6425
      %v6427 = vpop.f32.mrb[0].mxu0
      %6428 = vmatprep.mubr.f32.mxu0 0.0
      %6429 = vmatmul.mubr.f32.gmra.mrb[0].mxu0 %v6256
      %v6430 = vpop.f32.mrb[0].mxu0
      %v6431 = vadd.f32 0.0, %v6430
      %v6432 = vpop.f32.mrb[0].mxu0
      %6433 = vmatprep.mubr.f32.mxu0 0.0
      %6434 = vmatmul.mubr.f32.gmra.mrb[0].mxu0 %v6259
      %v6435 = vpop.f32.mrb[0].mxu0
      %v6436 = vadd.f32 0.0, %v6435
      %v6437 = vpop.f32.mrb[0].mxu0
      %6438 = vmatprep.mubr.f32.mxu0 0.0
      %6439 = vmatmul.mubr.f32.gmra.mrb[0].mxu0 %v6262
      %v6440 = vpop.f32.mrb[0].mxu0
      %v6441 = vadd.f32 0.0, %v6440
      %v6442 = vpop.f32.mrb[0].mxu0
      %6443 = vmatprep.mubr.f32.mxu0 0.0
      %6444 = vmatmul.mubr.f32.gmra.mrb[0].mxu0 %v6265
      %v6445 = vpop.f32.mrb[0].mxu0
      %v6446 = vadd.f32 0.0, %v6445
      %v6447 = vpop.f32.mrb[0].mxu0
      %6448 = vmatprep.mubr.f32.mxu0 0.0
      %6449 = vmatmul.mubr.f32.gmra.mrb[0].mxu0 %v6268
      %v6450 = vpop.f32.mrb[0].mxu0
      %v6451 = vadd.f32 0.0, %v6450
      %v6452 = vpop.f32.mrb[0].mxu0
      %6453 = vmatprep.mubr.f32.mxu0 0.0
      %6454 = vmatmul.mubr.f32.gmra.mrb[0].mxu0 %v6271
      %v6455 = vpop.f32.mrb[0].mxu0
      %v6456 = vadd.f32 0.0, %v6455
      %v6457 = vpop.f32.mrb[0].mxu0
      %6458 = vmatprep.mubr.f32.mxu0 0.0
      %6459 = vmatmul.mubr.f32.gmra.mrb[0].mxu0 %v6274
      %v6460 = vpop.f32.mrb[0].mxu0
      %v6461 = vadd.f32 0.0, %v6460
      %v6462 = vpop.f32.mrb[0].mxu0
      %6463 = vmatprep.mubr.f32.mxu0 0.0
      %6464 = vmatmul.mubr.f32.gmra.mrb[0].mxu0 %v6277
      %v6465 = vpop.f32.mrb[0].mxu0
      %v6466 = vadd.f32 0.0, %v6465
      %v6467 = vpop.f32.mrb[0].mxu0
      %6468 = vmatprep.mubr.f32.mxu0 0.0
      %6469 = vmatmul.mubr.f32.gmra.mrb[0].mxu0 %v6280
      %v6470 = vpop.f32.mrb[0].mxu0
      %v6471 = vadd.f32 0.0, %v6470
      %v6472 = vpop.f32.mrb[0].mxu0
      %6473 = vmatprep.mubr.f32.mxu0 0.0
      %6474 = vmatmul.mubr.f32.gmra.mrb[0].mxu0 %v6283
      %v6475 = vpop.f32.mrb[0].mxu0
      %v6476 = vadd.f32 0.0, %v6475
      %v6477 = vpop.f32.mrb[0].mxu0
      %6478 = vmatprep.mubr.f32.mxu0 0.0
      %6479 = vmatmul.mubr.f32.gmra.mrb[0].mxu0 %v6286
      %v6480 = vpop.f32.mrb[0].mxu0
      %v6481 = vadd.f32 0.0, %v6480
      %v6482 = vpop.f32.mrb[0].mxu0
      %6483 = vmatprep.mubr.f32.mxu0 0.0
      %6484 = vmatmul.mubr.f32.gmra.mrb[0].mxu0 %v6289
      %v6485 = vpop.f32.mrb[0].mxu0
      %v6486 = vadd.f32 0.0, %v6485
      %v6487 = vpop.f32.mrb[0].mxu0
      %6488 = vmatprep.mubr.f32.mxu0 0.0
      %6489 = vmatmul.mubr.f32.gmra.mrb[0].mxu0 %v6292
      %v6490 = vpop.f32.mrb[0].mxu0
      %v6491 = vadd.f32 0.0, %v6490
      %v6492 = vpop.f32.mrb[0].mxu0
      %6493 = vmatprep.mubr.f32.mxu0 0.0
      %6494 = vmatmul.mubr.f32.gmra.mrb[0].mxu0 %v6295
      %v6495 = vpop.f32.mrb[0].mxu0
      %v6496 = vadd.f32 0.0, %v6495
      %v6497 = vpop.f32.mrb[0].mxu0
      %6498 = vmatprep.mubr.f32.mxu0 0.0
      %6499 = vmatmul.mubr.f32.gmra.mrb[0].mxu0 %v6298
      %v6500 = vpop.f32.mrb[0].mxu0
      %v6501 = vadd.f32 0.0, %v6500
      %v6502 = vpop.f32.mrb[0].mxu0
      %6503 = vmatprep.mubr.f32.mxu0 0.0
      %6504 = vmatmul.mubr.f32.gmra.mrb[0].mxu0 %v6301
      %v6505 = vpop.f32.mrb[0].mxu0
      %v6506 = vadd.f32 0.0, %v6505
      %v6507 = vpop.f32.mrb[0].mxu0
      %6508 = vmatprep.mubr.f32.mxu0 0.0
      %6509 = vmatmul.mubr.f32.gmra.mrb[0].mxu0 %v6304
      %v6510 = vpop.f32.mrb[0].mxu0
      %v6511 = vadd.f32 0.0, %v6510
      %v6512 = vpop.f32.mrb[0].mxu0
      %6513 = vmatprep.mubr.f32.mxu0 0.0
      %6514 = vmatmul.mubr.f32.gmra.mrb[0].mxu0 %v6307
      %v6515 = vpop.f32.mrb[0].mxu0
      %v6516 = vadd.f32 0.0, %v6515
      %v6517 = vpop.f32.mrb[0].mxu0
      %6518 = vmatprep.mubr.f32.mxu0 0.0
      %6519 = vmatmul.mubr.f32.gmra.mrb[0].mxu0 %v6310
      %v6520 = vpop.f32.mrb[0].mxu0
      %v6521 = vadd.f32 0.0, %v6520
      %v6522 = vpop.f32.mrb[0].mxu0
      %6523 = vmatprep.mubr.f32.mxu0 0.0
      %6524 = vmatmul.mubr.f32.gmra.mrb[0].mxu0 %v6313
      %v6525 = vpop.f32.mrb[0].mxu0
      %v6526 = vadd.f32 0.0, %v6525
      %v6527 = vpop.f32.mrb[0].mxu0
      %6528 = vmatprep.mubr.f32.mxu0 0.0
      %6529 = vmatmul.mubr.f32.gmra.mrb[0].mxu0 %v6316
      %v6530 = vpop.f32.mrb[0].mxu0
      %v6531 = vadd.f32 0.0, %v6530
      %v6532 = vpop.f32.mrb[0].mxu0
      %6533 = vmatprep.mubr.f32.mxu0 0.0
      %6534 = vmatmul.mubr.f32.gmra.mrb[0].mxu0 %v6319
      %v6535 = vpop.f32.mrb[0].mxu0
      %v6536 = vadd.f32 0.0, %v6535
      %v6537 = vpop.f32.mrb[0].mxu0
      %6538 = vmatprep.mubr.f32.mxu0 0.0
      %6539 = vmatmul.mubr.f32.gmra.mrb[0].mxu0 %v6322
      %v6540 = vpop.f32.mrb[0].mxu0
      %v6541 = vadd.f32 0.0, %v6540
      %v6542 = vpop.f32.mrb[0].mxu0
      %6543 = vmatprep.mubr.f32.mxu0 0.0
      %6544 = vmatmul.mubr.f32.gmra.mrb[0].mxu0 %v6325
      %v6545 = vpop.f32.mrb[0].mxu0
      %v6546 = vadd.f32 0.0, %v6545
      %v6547 = vpop.f32.mrb[0].mxu0
      %6548 = vmatprep.mubr.f32.mxu0 0.0
      %6549 = vmatmul.mubr.f32.gmra.mrb[0].mxu0 %v6328
      %v6550 = vpop.f32.mrb[0].mxu0
      %v6551 = vadd.f32 0.0, %v6550
      %v6552 = vpop.f32.mrb[0].mxu0
      %6553 = vmatprep.mubr.f32.mxu0 0.0
      %6554 = vmatmul.mubr.f32.gmra.mrb[0].mxu0 %v6331
      %v6555 = vpop.f32.mrb[0].mxu0
      %v6556 = vadd.f32 0.0, %v6555
      %v6557 = vpop.f32.mrb[0].mxu0
      %6558 = vmatprep.mubr.f32.mxu0 0.0
      %6559 = vmatmul.mubr.f32.gmra.mrb[0].mxu0 %v6334
      %v6560 = vpop.f32.mrb[0].mxu0
      %v6561 = vadd.f32 0.0, %v6560
      %v6562 = vpop.f32.mrb[0].mxu0
      %6563 = vdwg.mxu0
      %v6564 = vadd.f32 %v6173, %v6406
      %v6565 = vadd.f32 %v6174, %v6411
      %v6566 = vadd.f32 %v6175, %v6416
      %v6567 = vadd.f32 %v6176, %v6421
      %v6568 = vadd.f32 %v6177, %v6426
      %v6569 = vadd.f32 %v6178, %v6431
      %v6570 = vadd.f32 %v6179, %v6436
      %v6571 = vadd.f32 %v6180, %v6441
      %v6572 = vadd.f32 %v6181, %v6446
      %v6573 = vadd.f32 %v6182, %v6451
      %v6574 = vadd.f32 %v6183, %v6456
      %v6575 = vadd.f32 %v6184, %v6461
      %v6576 = vadd.f32 %v6185, %v6466
      %v6577 = vadd.f32 %v6186, %v6471
      %v6578 = vadd.f32 %v6187, %v6476
      %v6579 = vadd.f32 %v6188, %v6481
      %v6580 = vadd.f32 %v6189, %v6486
      %v6581 = vadd.f32 %v6190, %v6491
      %v6582 = vadd.f32 %v6191, %v6496
      %v6583 = vadd.f32 %v6192, %v6501
      %v6584 = vadd.f32 %v6193, %v6506
      %v6585 = vadd.f32 %v6194, %v6511
      %v6586 = vadd.f32 %v6195, %v6516
      %v6587 = vadd.f32 %v6196, %v6521
      %v6588 = vadd.f32 %v6197, %v6526
      %v6589 = vadd.f32 %v6198, %v6531
      %v6590 = vadd.f32 %v6199, %v6536
      %v6591 = vadd.f32 %v6200, %v6541
      %v6592 = vadd.f32 %v6201, %v6546
      %v6593 = vadd.f32 %v6202, %v6551
      %v6594 = vadd.f32 %v6203, %v6556
      %v6595 = vadd.f32 %v6204, %v6561
      %v6596 = vld [vmem:[%s6205 + $0x1] sm:$0xff]
      %v6597 = vld [vmem:[%s6205 + $0x9] sm:$0xff]
      %v6598 = vld [vmem:[%s6205 + $0x19] sm:$0xff]
      %v6599 = vld [vmem:[%s6205 + $0x21] sm:$0xff]
      %v6600 = vld [vmem:[%s6205 + $0x31] sm:$0xff]
      %v6601 = vld [vmem:[%s6205 + $0x39] sm:$0xff]
      %v6602 = vld [vmem:[%s6205 + $0x49] sm:$0xff]
      %v6603 = vld [vmem:[%s6205 + $0x51] sm:$0xff]
      %v6604 = vld [vmem:[%s6205 + $0x61] sm:$0xff]
      %v6605 = vld [vmem:[%s6205 + $0x69] sm:$0xff]
      %v6606 = vld [vmem:[%s6205 + $0x79] sm:$0xff]
      %v6607 = vld [vmem:[%s6205 + $0x81] sm:$0xff]
      %v6608 = vld [vmem:[%s6205 + $0x91] sm:$0xff]
      %v6609 = vld [vmem:[%s6205 + $0x99] sm:$0xff]
      %v6610 = vld [vmem:[%s6205 + $0xa9] sm:$0xff]
      %v6611 = vld [vmem:[%s6205 + $0xb1] sm:$0xff]
      %v6612 = vld [vmem:[%s6205 + $0xc1] sm:$0xff]
      %v6613 = vld [vmem:[%s6205 + $0xc9] sm:$0xff]
      %v6614 = vld [vmem:[%s6205 + $0xd9] sm:$0xff]
      %v6615 = vld [vmem:[%s6205 + $0xe1] sm:$0xff]
      %v6616 = vld [vmem:[%s6205 + $0xf1] sm:$0xff]
      %v6617 = vld [vmem:[%s6205 + $0xf9] sm:$0xff]
      %v6618 = vld [vmem:[%s6205 + $0x109] sm:$0xff]
      %v6619 = vld [vmem:[%s6205 + $0x111] sm:$0xff]
      %v6620 = vld [vmem:[%s6205 + $0x121] sm:$0xff]
      %v6621 = vld [vmem:[%s6205 + $0x129] sm:$0xff]
      %v6622 = vld [vmem:[%s6205 + $0x139] sm:$0xff]
      %v6623 = vld [vmem:[%s6205 + $0x141] sm:$0xff]
      %v6624 = vld [vmem:[%s6205 + $0x151] sm:$0xff]
      %v6625 = vld [vmem:[%s6205 + $0x159] sm:$0xff]
      %v6626 = vld [vmem:[%s6205 + $0x169] sm:$0xff]
      %v6627 = vld [vmem:[%s6205 + $0x171] sm:$0xff]
      %s6628 = scalar_lea.vmem %s3, 28
      %v6629 = vld [vmem:[%s6628] sm:$0xf]
      %v6631 = vsel %vm225, %v6596, 0
      %v6634 = vsel %vm225, %v6597, 0
      %v6637 = vsel %vm225, %v6598, 0
      %v6640 = vsel %vm225, %v6599, 0
      %v6643 = vsel %vm225, %v6600, 0
      %v6646 = vsel %vm225, %v6601, 0
      %v6649 = vsel %vm225, %v6602, 0
      %v6652 = vsel %vm225, %v6603, 0
      %v6655 = vsel %vm225, %v6604, 0
      %v6658 = vsel %vm225, %v6605, 0
      %v6661 = vsel %vm225, %v6606, 0
      %v6664 = vsel %vm225, %v6607, 0
      %v6667 = vsel %vm225, %v6608, 0
      %v6670 = vsel %vm225, %v6609, 0
      %v6673 = vsel %vm225, %v6610, 0
      %v6676 = vsel %vm225, %v6611, 0
      %v6679 = vsel %vm225, %v6612, 0
      %v6682 = vsel %vm225, %v6613, 0
      %v6685 = vsel %vm225, %v6614, 0
      %v6688 = vsel %vm225, %v6615, 0
      %v6691 = vsel %vm225, %v6616, 0
      %v6694 = vsel %vm225, %v6617, 0
      %v6697 = vsel %vm225, %v6618, 0
      %v6700 = vsel %vm225, %v6619, 0
      %v6703 = vsel %vm225, %v6620, 0
      %v6706 = vsel %vm225, %v6621, 0
      %v6709 = vsel %vm225, %v6622, 0
      %v6712 = vsel %vm225, %v6623, 0
      %v6715 = vsel %vm225, %v6624, 0
      %v6718 = vsel %vm225, %v6625, 0
      %v6721 = vsel %vm225, %v6626, 0
      %v6724 = vsel %vm225, %v6627, 0
      %v6727 = vsel %vm542, %v6629, 0
      %6729 = vmatprep.subr.mxu0 0.0
      %6730 = vmatpush1.msra.mxu0 %v6727
      %6731 = vmatprep.subr.mxu0 0.0
      %6732 = vmatpush1.msra.mxu0 0.0
      %6733 = vmatprep.subr.mxu0 0.0
      %6734 = vmatpush1.msra.mxu0 0.0
      %6735 = vmatprep.subr.mxu0 0.0
      %6736 = vmatpush1.msra.mxu0 0.0
      %6737 = vmatprep.subr.mxu0 0.0
      %6738 = vmatpush1.msra.mxu0 0.0
      %6739 = vmatprep.subr.mxu0 0.0
      %6740 = vmatpush1.msra.mxu0 0.0
      %6741 = vmatprep.subr.mxu0 0.0
      %6742 = vmatpush1.msra.mxu0 0.0
      %6743 = vmatprep.subr.mxu0 0.0
      %6744 = vmatpush1.msra.mxu0 0.0
      %6745 = vmatprep.subr.mxu0 0.0
      %6746 = vmatpush1.msra.mxu0 0.0
      %6747 = vmatprep.subr.mxu0 0.0
      %6748 = vmatpush1.msra.mxu0 0.0
      %6749 = vmatprep.subr.mxu0 0.0
      %6750 = vmatpush1.msra.mxu0 0.0
      %6751 = vmatprep.subr.mxu0 0.0
      %6752 = vmatpush1.msra.mxu0 0.0
      %6753 = vmatprep.subr.mxu0 0.0
      %6754 = vmatpush1.msra.mxu0 0.0
      %6755 = vmatprep.subr.mxu0 0.0
      %6756 = vmatpush1.msra.mxu0 0.0
      %6757 = vmatprep.subr.mxu0 0.0
      %6758 = vmatpush1.msra.mxu0 0.0
      %6759 = vmatprep.subr.mxu0 0.0
      %6760 = vmatpush1.msra.mxu0 0.0
      %6761 = vmatprep.subr.mxu0 0.0
      %6762 = vmatpush1.msra.mxu0 0.0
      %6763 = vmatprep.subr.mxu0 0.0
      %6764 = vmatpush1.msra.mxu0 0.0
      %6765 = vmatprep.subr.mxu0 0.0
      %6766 = vmatpush1.msra.mxu0 0.0
      %6767 = vmatprep.subr.mxu0 0.0
      %6768 = vmatpush1.msra.mxu0 0.0
      %6769 = vmatprep.subr.mxu0 0.0
      %6770 = vmatpush1.msra.mxu0 0.0
      %6771 = vmatprep.subr.mxu0 0.0
      %6772 = vmatpush1.msra.mxu0 0.0
      %6773 = vmatprep.subr.mxu0 0.0
      %6774 = vmatpush1.msra.mxu0 0.0
      %6775 = vmatprep.subr.mxu0 0.0
      %6776 = vmatpush1.msra.mxu0 0.0
      %6777 = vmatprep.subr.mxu0 0.0
      %6778 = vmatpush1.msra.mxu0 0.0
      %6779 = vmatprep.subr.mxu0 0.0
      %6780 = vmatpush1.msra.mxu0 0.0
      %6781 = vmatprep.subr.mxu0 0.0
      %6782 = vmatpush1.msra.mxu0 0.0
      %6783 = vmatprep.subr.mxu0 0.0
      %6784 = vmatpush1.msra.mxu0 0.0
      %6785 = vmatprep.subr.mxu0 0.0
      %6786 = vmatpush1.msra.mxu0 0.0
      %6787 = vmatprep.subr.mxu0 0.0
      %6788 = vmatpush1.msra.mxu0 0.0
      %6789 = vmatprep.subr.mxu0 0.0
      %6790 = vmatpush1.msra.mxu0 0.0
      %6791 = vmatprep.subr.mxu0 0.0
      %6792 = vmatpush1.msra.mxu0 0.0
      %6793 = vmatprep.mubr.f32.mxu0 0.0
      %6794 = vmatmul.mubr.f32.gmra.mrb[0].mxu0 %v6631
      %v6795 = vpop.f32.mrb[0].mxu0
      %v6796 = vadd.f32 0.0, %v6795
      %v6797 = vpop.f32.mrb[0].mxu0
      %6798 = vmatprep.mubr.f32.mxu0 0.0
      %6799 = vmatmul.mubr.f32.gmra.mrb[0].mxu0 %v6634
      %v6800 = vpop.f32.mrb[0].mxu0
      %v6801 = vadd.f32 0.0, %v6800
      %v6802 = vpop.f32.mrb[0].mxu0
      %6803 = vmatprep.mubr.f32.mxu0 0.0
      %6804 = vmatmul.mubr.f32.gmra.mrb[0].mxu0 %v6637
      %v6805 = vpop.f32.mrb[0].mxu0
      %v6806 = vadd.f32 0.0, %v6805
      %v6807 = vpop.f32.mrb[0].mxu0
      %6808 = vmatprep.mubr.f32.mxu0 0.0
      %6809 = vmatmul.mubr.f32.gmra.mrb[0].mxu0 %v6640
      %v6810 = vpop.f32.mrb[0].mxu0
      %v6811 = vadd.f32 0.0, %v6810
      %v6812 = vpop.f32.mrb[0].mxu0
      %6813 = vmatprep.mubr.f32.mxu0 0.0
      %6814 = vmatmul.mubr.f32.gmra.mrb[0].mxu0 %v6643
      %v6815 = vpop.f32.mrb[0].mxu0
      %v6816 = vadd.f32 0.0, %v6815
      %v6817 = vpop.f32.mrb[0].mxu0
      %6818 = vmatprep.mubr.f32.mxu0 0.0
      %6819 = vmatmul.mubr.f32.gmra.mrb[0].mxu0 %v6646
      %v6820 = vpop.f32.mrb[0].mxu0
      %v6821 = vadd.f32 0.0, %v6820
      %v6822 = vpop.f32.mrb[0].mxu0
      %6823 = vmatprep.mubr.f32.mxu0 0.0
      %6824 = vmatmul.mubr.f32.gmra.mrb[0].mxu0 %v6649
      %v6825 = vpop.f32.mrb[0].mxu0
      %v6826 = vadd.f32 0.0, %v6825
      %v6827 = vpop.f32.mrb[0].mxu0
      %6828 = vmatprep.mubr.f32.mxu0 0.0
      %6829 = vmatmul.mubr.f32.gmra.mrb[0].mxu0 %v6652
      %v6830 = vpop.f32.mrb[0].mxu0
      %v6831 = vadd.f32 0.0, %v6830
      %v6832 = vpop.f32.mrb[0].mxu0
      %6833 = vmatprep.mubr.f32.mxu0 0.0
      %6834 = vmatmul.mubr.f32.gmra.mrb[0].mxu0 %v6655
      %v6835 = vpop.f32.mrb[0].mxu0
      %v6836 = vadd.f32 0.0, %v6835
      %v6837 = vpop.f32.mrb[0].mxu0
      %6838 = vmatprep.mubr.f32.mxu0 0.0
      %6839 = vmatmul.mubr.f32.gmra.mrb[0].mxu0 %v6658
      %v6840 = vpop.f32.mrb[0].mxu0
      %v6841 = vadd.f32 0.0, %v6840
      %v6842 = vpop.f32.mrb[0].mxu0
      %6843 = vmatprep.mubr.f32.mxu0 0.0
      %6844 = vmatmul.mubr.f32.gmra.mrb[0].mxu0 %v6661
      %v6845 = vpop.f32.mrb[0].mxu0
      %v6846 = vadd.f32 0.0, %v6845
      %v6847 = vpop.f32.mrb[0].mxu0
      %6848 = vmatprep.mubr.f32.mxu0 0.0
      %6849 = vmatmul.mubr.f32.gmra.mrb[0].mxu0 %v6664
      %v6850 = vpop.f32.mrb[0].mxu0
      %v6851 = vadd.f32 0.0, %v6850
      %v6852 = vpop.f32.mrb[0].mxu0
      %6853 = vmatprep.mubr.f32.mxu0 0.0
      %6854 = vmatmul.mubr.f32.gmra.mrb[0].mxu0 %v6667
      %v6855 = vpop.f32.mrb[0].mxu0
      %v6856 = vadd.f32 0.0, %v6855
      %v6857 = vpop.f32.mrb[0].mxu0
      %6858 = vmatprep.mubr.f32.mxu0 0.0
      %6859 = vmatmul.mubr.f32.gmra.mrb[0].mxu0 %v6670
      %v6860 = vpop.f32.mrb[0].mxu0
      %v6861 = vadd.f32 0.0, %v6860
      %v6862 = vpop.f32.mrb[0].mxu0
      %6863 = vmatprep.mubr.f32.mxu0 0.0
      %6864 = vmatmul.mubr.f32.gmra.mrb[0].mxu0 %v6673
      %v6865 = vpop.f32.mrb[0].mxu0
      %v6866 = vadd.f32 0.0, %v6865
      %v6867 = vpop.f32.mrb[0].mxu0
      %6868 = vmatprep.mubr.f32.mxu0 0.0
      %6869 = vmatmul.mubr.f32.gmra.mrb[0].mxu0 %v6676
      %v6870 = vpop.f32.mrb[0].mxu0
      %v6871 = vadd.f32 0.0, %v6870
      %v6872 = vpop.f32.mrb[0].mxu0
      %6873 = vmatprep.mubr.f32.mxu0 0.0
      %6874 = vmatmul.mubr.f32.gmra.mrb[0].mxu0 %v6679
      %v6875 = vpop.f32.mrb[0].mxu0
      %v6876 = vadd.f32 0.0, %v6875
      %v6877 = vpop.f32.mrb[0].mxu0
      %6878 = vmatprep.mubr.f32.mxu0 0.0
      %6879 = vmatmul.mubr.f32.gmra.mrb[0].mxu0 %v6682
      %v6880 = vpop.f32.mrb[0].mxu0
      %v6881 = vadd.f32 0.0, %v6880
      %v6882 = vpop.f32.mrb[0].mxu0
      %6883 = vmatprep.mubr.f32.mxu0 0.0
      %6884 = vmatmul.mubr.f32.gmra.mrb[0].mxu0 %v6685
      %v6885 = vpop.f32.mrb[0].mxu0
      %v6886 = vadd.f32 0.0, %v6885
      %v6887 = vpop.f32.mrb[0].mxu0
      %6888 = vmatprep.mubr.f32.mxu0 0.0
      %6889 = vmatmul.mubr.f32.gmra.mrb[0].mxu0 %v6688
      %v6890 = vpop.f32.mrb[0].mxu0
      %v6891 = vadd.f32 0.0, %v6890
      %v6892 = vpop.f32.mrb[0].mxu0
      %6893 = vmatprep.mubr.f32.mxu0 0.0
      %6894 = vmatmul.mubr.f32.gmra.mrb[0].mxu0 %v6691
      %v6895 = vpop.f32.mrb[0].mxu0
      %v6896 = vadd.f32 0.0, %v6895
      %v6897 = vpop.f32.mrb[0].mxu0
      %6898 = vmatprep.mubr.f32.mxu0 0.0
      %6899 = vmatmul.mubr.f32.gmra.mrb[0].mxu0 %v6694
      %v6900 = vpop.f32.mrb[0].mxu0
      %v6901 = vadd.f32 0.0, %v6900
      %v6902 = vpop.f32.mrb[0].mxu0
      %6903 = vmatprep.mubr.f32.mxu0 0.0
      %6904 = vmatmul.mubr.f32.gmra.mrb[0].mxu0 %v6697
      %v6905 = vpop.f32.mrb[0].mxu0
      %v6906 = vadd.f32 0.0, %v6905
      %v6907 = vpop.f32.mrb[0].mxu0
      %6908 = vmatprep.mubr.f32.mxu0 0.0
      %6909 = vmatmul.mubr.f32.gmra.mrb[0].mxu0 %v6700
      %v6910 = vpop.f32.mrb[0].mxu0
      %v6911 = vadd.f32 0.0, %v6910
      %v6912 = vpop.f32.mrb[0].mxu0
      %6913 = vmatprep.mubr.f32.mxu0 0.0
      %6914 = vmatmul.mubr.f32.gmra.mrb[0].mxu0 %v6703
      %v6915 = vpop.f32.mrb[0].mxu0
      %v6916 = vadd.f32 0.0, %v6915
      %v6917 = vpop.f32.mrb[0].mxu0
      %6918 = vmatprep.mubr.f32.mxu0 0.0
      %6919 = vmatmul.mubr.f32.gmra.mrb[0].mxu0 %v6706
      %v6920 = vpop.f32.mrb[0].mxu0
      %v6921 = vadd.f32 0.0, %v6920
      %v6922 = vpop.f32.mrb[0].mxu0
      %6923 = vmatprep.mubr.f32.mxu0 0.0
      %6924 = vmatmul.mubr.f32.gmra.mrb[0].mxu0 %v6709
      %v6925 = vpop.f32.mrb[0].mxu0
      %v6926 = vadd.f32 0.0, %v6925
      %v6927 = vpop.f32.mrb[0].mxu0
      %6928 = vmatprep.mubr.f32.mxu0 0.0
      %6929 = vmatmul.mubr.f32.gmra.mrb[0].mxu0 %v6712
      %v6930 = vpop.f32.mrb[0].mxu0
      %v6931 = vadd.f32 0.0, %v6930
      %v6932 = vpop.f32.mrb[0].mxu0
      %6933 = vmatprep.mubr.f32.mxu0 0.0
      %6934 = vmatmul.mubr.f32.gmra.mrb[0].mxu0 %v6715
      %v6935 = vpop.f32.mrb[0].mxu0
      %v6936 = vadd.f32 0.0, %v6935
      %v6937 = vpop.f32.mrb[0].mxu0
      %6938 = vmatprep.mubr.f32.mxu0 0.0
      %6939 = vmatmul.mubr.f32.gmra.mrb[0].mxu0 %v6718
      %v6940 = vpop.f32.mrb[0].mxu0
      %v6941 = vadd.f32 0.0, %v6940
      %v6942 = vpop.f32.mrb[0].mxu0
      %6943 = vmatprep.mubr.f32.mxu0 0.0
      %6944 = vmatmul.mubr.f32.gmra.mrb[0].mxu0 %v6721
      %v6945 = vpop.f32.mrb[0].mxu0
      %v6946 = vadd.f32 0.0, %v6945
      %v6947 = vpop.f32.mrb[0].mxu0
      %6948 = vmatprep.mubr.f32.mxu0 0.0
      %6949 = vmatmul.mubr.f32.gmra.mrb[0].mxu0 %v6724
      %v6950 = vpop.f32.mrb[0].mxu0
      %v6951 = vadd.f32 0.0, %v6950
      %v6952 = vpop.f32.mrb[0].mxu0
      %6953 = vdwg.mxu0
      %v6954 = vadd.f32 %v6564, %v6796
      %v6955 = vadd.f32 %v6565, %v6801
      %v6956 = vadd.f32 %v6566, %v6806
      %v6957 = vadd.f32 %v6567, %v6811
      %v6958 = vadd.f32 %v6568, %v6816
      %v6959 = vadd.f32 %v6569, %v6821
      %v6960 = vadd.f32 %v6570, %v6826
      %v6961 = vadd.f32 %v6571, %v6831
      %v6962 = vadd.f32 %v6572, %v6836
      %v6963 = vadd.f32 %v6573, %v6841
      %v6964 = vadd.f32 %v6574, %v6846
      %v6965 = vadd.f32 %v6575, %v6851
      %v6966 = vadd.f32 %v6576, %v6856
      %v6967 = vadd.f32 %v6577, %v6861
      %v6968 = vadd.f32 %v6578, %v6866
      %v6969 = vadd.f32 %v6579, %v6871
      %v6970 = vadd.f32 %v6580, %v6876
      %v6971 = vadd.f32 %v6581, %v6881
      %v6972 = vadd.f32 %v6582, %v6886
      %v6973 = vadd.f32 %v6583, %v6891
      %v6974 = vadd.f32 %v6584, %v6896
      %v6975 = vadd.f32 %v6585, %v6901
      %v6976 = vadd.f32 %v6586, %v6906
      %v6977 = vadd.f32 %v6587, %v6911
      %v6978 = vadd.f32 %v6588, %v6916
      %v6979 = vadd.f32 %v6589, %v6921
      %v6980 = vadd.f32 %v6590, %v6926
      %v6981 = vadd.f32 %v6591, %v6931
      %v6982 = vadd.f32 %v6592, %v6936
      %v6983 = vadd.f32 %v6593, %v6941
      %v6984 = vadd.f32 %v6594, %v6946
      %v6985 = vadd.f32 %v6595, %v6951
      %v6986 = vld [vmem:[%s6205 + $0x2] sm:$0xff]
      %v6987 = vld [vmem:[%s6205 + $0xa] sm:$0xff]
      %v6988 = vld [vmem:[%s6205 + $0x1a] sm:$0xff]
      %v6989 = vld [vmem:[%s6205 + $0x22] sm:$0xff]
      %v6990 = vld [vmem:[%s6205 + $0x32] sm:$0xff]
      %v6991 = vld [vmem:[%s6205 + $0x3a] sm:$0xff]
      %v6992 = vld [vmem:[%s6205 + $0x4a] sm:$0xff]
      %v6993 = vld [vmem:[%s6205 + $0x52] sm:$0xff]
      %v6994 = vld [vmem:[%s6205 + $0x62] sm:$0xff]
      %v6995 = vld [vmem:[%s6205 + $0x6a] sm:$0xff]
      %v6996 = vld [vmem:[%s6205 + $0x7a] sm:$0xff]
      %v6997 = vld [vmem:[%s6205 + $0x82] sm:$0xff]
      %v6998 = vld [vmem:[%s6205 + $0x92] sm:$0xff]
      %v6999 = vld [vmem:[%s6205 + $0x9a] sm:$0xff]
      %v7000 = vld [vmem:[%s6205 + $0xaa] sm:$0xff]
      %v7001 = vld [vmem:[%s6205 + $0xb2] sm:$0xff]
      %v7002 = vld [vmem:[%s6205 + $0xc2] sm:$0xff]
      %v7003 = vld [vmem:[%s6205 + $0xca] sm:$0xff]
      %v7004 = vld [vmem:[%s6205 + $0xda] sm:$0xff]
      %v7005 = vld [vmem:[%s6205 + $0xe2] sm:$0xff]
      %v7006 = vld [vmem:[%s6205 + $0xf2] sm:$0xff]
      %v7007 = vld [vmem:[%s6205 + $0xfa] sm:$0xff]
      %v7008 = vld [vmem:[%s6205 + $0x10a] sm:$0xff]
      %v7009 = vld [vmem:[%s6205 + $0x112] sm:$0xff]
      %v7010 = vld [vmem:[%s6205 + $0x122] sm:$0xff]
      %v7011 = vld [vmem:[%s6205 + $0x12a] sm:$0xff]
      %v7012 = vld [vmem:[%s6205 + $0x13a] sm:$0xff]
      %v7013 = vld [vmem:[%s6205 + $0x142] sm:$0xff]
      %v7014 = vld [vmem:[%s6205 + $0x152] sm:$0xff]
      %v7015 = vld [vmem:[%s6205 + $0x15a] sm:$0xff]
      %v7016 = vld [vmem:[%s6205 + $0x16a] sm:$0xff]
      %v7017 = vld [vmem:[%s6205 + $0x172] sm:$0xff]
      %s7018 = scalar_lea.vmem %s3, 32
      %v7019 = vld [vmem:[%s7018] sm:$0xf]
      %v7021 = vsel %vm225, %v6986, 0
      %v7024 = vsel %vm225, %v6987, 0
      %v7027 = vsel %vm225, %v6988, 0
      %v7030 = vsel %vm225, %v6989, 0
      %v7033 = vsel %vm225, %v6990, 0
      %v7036 = vsel %vm225, %v6991, 0
      %v7039 = vsel %vm225, %v6992, 0
      %v7042 = vsel %vm225, %v6993, 0
      %v7045 = vsel %vm225, %v6994, 0
      %v7048 = vsel %vm225, %v6995, 0
      %v7051 = vsel %vm225, %v6996, 0
      %v7054 = vsel %vm225, %v6997, 0
      %v7057 = vsel %vm225, %v6998, 0
      %v7060 = vsel %vm225, %v6999, 0
      %v7063 = vsel %vm225, %v7000, 0
      %v7066 = vsel %vm225, %v7001, 0
      %v7069 = vsel %vm225, %v7002, 0
      %v7072 = vsel %vm225, %v7003, 0
      %v7075 = vsel %vm225, %v7004, 0
      %v7078 = vsel %vm225, %v7005, 0
      %v7081 = vsel %vm225, %v7006, 0
      %v7084 = vsel %vm225, %v7007, 0
      %v7087 = vsel %vm225, %v7008, 0
      %v7090 = vsel %vm225, %v7009, 0
      %v7093 = vsel %vm225, %v7010, 0
      %v7096 = vsel %vm225, %v7011, 0
      %v7099 = vsel %vm225, %v7012, 0
      %v7102 = vsel %vm225, %v7013, 0
      %v7105 = vsel %vm225, %v7014, 0
      %v7108 = vsel %vm225, %v7015, 0
      %v7111 = vsel %vm225, %v7016, 0
      %v7114 = vsel %vm225, %v7017, 0
      %v7117 = vsel %vm542, %v7019, 0
      %7119 = vmatprep.subr.mxu0 0.0
      %7120 = vmatpush1.msra.mxu0 %v7117
      %7121 = vmatprep.subr.mxu0 0.0
      %7122 = vmatpush1.msra.mxu0 0.0
      %7123 = vmatprep.subr.mxu0 0.0
      %7124 = vmatpush1.msra.mxu0 0.0
      %7125 = vmatprep.subr.mxu0 0.0
      %7126 = vmatpush1.msra.mxu0 0.0
      %7127 = vmatprep.subr.mxu0 0.0
      %7128 = vmatpush1.msra.mxu0 0.0
      %7129 = vmatprep.subr.mxu0 0.0
      %7130 = vmatpush1.msra.mxu0 0.0
      %7131 = vmatprep.subr.mxu0 0.0
      %7132 = vmatpush1.msra.mxu0 0.0
      %7133 = vmatprep.subr.mxu0 0.0
      %7134 = vmatpush1.msra.mxu0 0.0
      %7135 = vmatprep.subr.mxu0 0.0
      %7136 = vmatpush1.msra.mxu0 0.0
      %7137 = vmatprep.subr.mxu0 0.0
      %7138 = vmatpush1.msra.mxu0 0.0
      %7139 = vmatprep.subr.mxu0 0.0
      %7140 = vmatpush1.msra.mxu0 0.0
      %7141 = vmatprep.subr.mxu0 0.0
      %7142 = vmatpush1.msra.mxu0 0.0
      %7143 = vmatprep.subr.mxu0 0.0
      %7144 = vmatpush1.msra.mxu0 0.0
      %7145 = vmatprep.subr.mxu0 0.0
      %7146 = vmatpush1.msra.mxu0 0.0
      %7147 = vmatprep.subr.mxu0 0.0
      %7148 = vmatpush1.msra.mxu0 0.0
      %7149 = vmatprep.subr.mxu0 0.0
      %7150 = vmatpush1.msra.mxu0 0.0
      %7151 = vmatprep.subr.mxu0 0.0
      %7152 = vmatpush1.msra.mxu0 0.0
      %7153 = vmatprep.subr.mxu0 0.0
      %7154 = vmatpush1.msra.mxu0 0.0
      %7155 = vmatprep.subr.mxu0 0.0
      %7156 = vmatpush1.msra.mxu0 0.0
      %7157 = vmatprep.subr.mxu0 0.0
      %7158 = vmatpush1.msra.mxu0 0.0
      %7159 = vmatprep.subr.mxu0 0.0
      %7160 = vmatpush1.msra.mxu0 0.0
      %7161 = vmatprep.subr.mxu0 0.0
      %7162 = vmatpush1.msra.mxu0 0.0
      %7163 = vmatprep.subr.mxu0 0.0
      %7164 = vmatpush1.msra.mxu0 0.0
      %7165 = vmatprep.subr.mxu0 0.0
      %7166 = vmatpush1.msra.mxu0 0.0
      %7167 = vmatprep.subr.mxu0 0.0
      %7168 = vmatpush1.msra.mxu0 0.0
      %7169 = vmatprep.subr.mxu0 0.0
      %7170 = vmatpush1.msra.mxu0 0.0
      %7171 = vmatprep.subr.mxu0 0.0
      %7172 = vmatpush1.msra.mxu0 0.0
      %7173 = vmatprep.subr.mxu0 0.0
      %7174 = vmatpush1.msra.mxu0 0.0
      %7175 = vmatprep.subr.mxu0 0.0
      %7176 = vmatpush1.msra.mxu0 0.0
      %7177 = vmatprep.subr.mxu0 0.0
      %7178 = vmatpush1.msra.mxu0 0.0
      %7179 = vmatprep.subr.mxu0 0.0
      %7180 = vmatpush1.msra.mxu0 0.0
      %7181 = vmatprep.subr.mxu0 0.0
      %7182 = vmatpush1.msra.mxu0 0.0
      %7183 = vmatprep.mubr.f32.mxu0 0.0
      %7184 = vmatmul.mubr.f32.gmra.mrb[0].mxu0 %v7021
      %v7185 = vpop.f32.mrb[0].mxu0
      %v7186 = vadd.f32 0.0, %v7185
      %v7187 = vpop.f32.mrb[0].mxu0
      %7188 = vmatprep.mubr.f32.mxu0 0.0
      %7189 = vmatmul.mubr.f32.gmra.mrb[0].mxu0 %v7024
      %v7190 = vpop.f32.mrb[0].mxu0
      %v7191 = vadd.f32 0.0, %v7190
      %v7192 = vpop.f32.mrb[0].mxu0
      %7193 = vmatprep.mubr.f32.mxu0 0.0
      %7194 = vmatmul.mubr.f32.gmra.mrb[0].mxu0 %v7027
      %v7195 = vpop.f32.mrb[0].mxu0
      %v7196 = vadd.f32 0.0, %v7195
      %v7197 = vpop.f32.mrb[0].mxu0
      %7198 = vmatprep.mubr.f32.mxu0 0.0
      %7199 = vmatmul.mubr.f32.gmra.mrb[0].mxu0 %v7030
      %v7200 = vpop.f32.mrb[0].mxu0
      %v7201 = vadd.f32 0.0, %v7200
      %v7202 = vpop.f32.mrb[0].mxu0
      %7203 = vmatprep.mubr.f32.mxu0 0.0
      %7204 = vmatmul.mubr.f32.gmra.mrb[0].mxu0 %v7033
      %v7205 = vpop.f32.mrb[0].mxu0
      %v7206 = vadd.f32 0.0, %v7205
      %v7207 = vpop.f32.mrb[0].mxu0
      %7208 = vmatprep.mubr.f32.mxu0 0.0
      %7209 = vmatmul.mubr.f32.gmra.mrb[0].mxu0 %v7036
      %v7210 = vpop.f32.mrb[0].mxu0
      %v7211 = vadd.f32 0.0, %v7210
      %v7212 = vpop.f32.mrb[0].mxu0
      %7213 = vmatprep.mubr.f32.mxu0 0.0
      %7214 = vmatmul.mubr.f32.gmra.mrb[0].mxu0 %v7039
      %v7215 = vpop.f32.mrb[0].mxu0
      %v7216 = vadd.f32 0.0, %v7215
      %v7217 = vpop.f32.mrb[0].mxu0
      %7218 = vmatprep.mubr.f32.mxu0 0.0
      %7219 = vmatmul.mubr.f32.gmra.mrb[0].mxu0 %v7042
      %v7220 = vpop.f32.mrb[0].mxu0
      %v7221 = vadd.f32 0.0, %v7220
      %v7222 = vpop.f32.mrb[0].mxu0
      %7223 = vmatprep.mubr.f32.mxu0 0.0
      %7224 = vmatmul.mubr.f32.gmra.mrb[0].mxu0 %v7045
      %v7225 = vpop.f32.mrb[0].mxu0
      %v7226 = vadd.f32 0.0, %v7225
      %v7227 = vpop.f32.mrb[0].mxu0
      %7228 = vmatprep.mubr.f32.mxu0 0.0
      %7229 = vmatmul.mubr.f32.gmra.mrb[0].mxu0 %v7048
      %v7230 = vpop.f32.mrb[0].mxu0
      %v7231 = vadd.f32 0.0, %v7230
      %v7232 = vpop.f32.mrb[0].mxu0
      %7233 = vmatprep.mubr.f32.mxu0 0.0
      %7234 = vmatmul.mubr.f32.gmra.mrb[0].mxu0 %v7051
      %v7235 = vpop.f32.mrb[0].mxu0
      %v7236 = vadd.f32 0.0, %v7235
      %v7237 = vpop.f32.mrb[0].mxu0
      %7238 = vmatprep.mubr.f32.mxu0 0.0
      %7239 = vmatmul.mubr.f32.gmra.mrb[0].mxu0 %v7054
      %v7240 = vpop.f32.mrb[0].mxu0
      %v7241 = vadd.f32 0.0, %v7240
      %v7242 = vpop.f32.mrb[0].mxu0
      %7243 = vmatprep.mubr.f32.mxu0 0.0
      %7244 = vmatmul.mubr.f32.gmra.mrb[0].mxu0 %v7057
      %v7245 = vpop.f32.mrb[0].mxu0
      %v7246 = vadd.f32 0.0, %v7245
      %v7247 = vpop.f32.mrb[0].mxu0
      %7248 = vmatprep.mubr.f32.mxu0 0.0
      %7249 = vmatmul.mubr.f32.gmra.mrb[0].mxu0 %v7060
      %v7250 = vpop.f32.mrb[0].mxu0
      %v7251 = vadd.f32 0.0, %v7250
      %v7252 = vpop.f32.mrb[0].mxu0
      %7253 = vmatprep.mubr.f32.mxu0 0.0
      %7254 = vmatmul.mubr.f32.gmra.mrb[0].mxu0 %v7063
      %v7255 = vpop.f32.mrb[0].mxu0
      %v7256 = vadd.f32 0.0, %v7255
      %v7257 = vpop.f32.mrb[0].mxu0
      %7258 = vmatprep.mubr.f32.mxu0 0.0
      %7259 = vmatmul.mubr.f32.gmra.mrb[0].mxu0 %v7066
      %v7260 = vpop.f32.mrb[0].mxu0
      %v7261 = vadd.f32 0.0, %v7260
      %v7262 = vpop.f32.mrb[0].mxu0
      %7263 = vmatprep.mubr.f32.mxu0 0.0
      %7264 = vmatmul.mubr.f32.gmra.mrb[0].mxu0 %v7069
      %v7265 = vpop.f32.mrb[0].mxu0
      %v7266 = vadd.f32 0.0, %v7265
      %v7267 = vpop.f32.mrb[0].mxu0
      %7268 = vmatprep.mubr.f32.mxu0 0.0
      %7269 = vmatmul.mubr.f32.gmra.mrb[0].mxu0 %v7072
      %v7270 = vpop.f32.mrb[0].mxu0
      %v7271 = vadd.f32 0.0, %v7270
      %v7272 = vpop.f32.mrb[0].mxu0
      %7273 = vmatprep.mubr.f32.mxu0 0.0
      %7274 = vmatmul.mubr.f32.gmra.mrb[0].mxu0 %v7075
      %v7275 = vpop.f32.mrb[0].mxu0
      %v7276 = vadd.f32 0.0, %v7275
      %v7277 = vpop.f32.mrb[0].mxu0
      %7278 = vmatprep.mubr.f32.mxu0 0.0
      %7279 = vmatmul.mubr.f32.gmra.mrb[0].mxu0 %v7078
      %v7280 = vpop.f32.mrb[0].mxu0
      %v7281 = vadd.f32 0.0, %v7280
      %v7282 = vpop.f32.mrb[0].mxu0
      %7283 = vmatprep.mubr.f32.mxu0 0.0
      %7284 = vmatmul.mubr.f32.gmra.mrb[0].mxu0 %v7081
      %v7285 = vpop.f32.mrb[0].mxu0
      %v7286 = vadd.f32 0.0, %v7285
      %v7287 = vpop.f32.mrb[0].mxu0
      %7288 = vmatprep.mubr.f32.mxu0 0.0
      %7289 = vmatmul.mubr.f32.gmra.mrb[0].mxu0 %v7084
      %v7290 = vpop.f32.mrb[0].mxu0
      %v7291 = vadd.f32 0.0, %v7290
      %v7292 = vpop.f32.mrb[0].mxu0
      %7293 = vmatprep.mubr.f32.mxu0 0.0
      %7294 = vmatmul.mubr.f32.gmra.mrb[0].mxu0 %v7087
      %v7295 = vpop.f32.mrb[0].mxu0
      %v7296 = vadd.f32 0.0, %v7295
      %v7297 = vpop.f32.mrb[0].mxu0
      %7298 = vmatprep.mubr.f32.mxu0 0.0
      %7299 = vmatmul.mubr.f32.gmra.mrb[0].mxu0 %v7090
      %v7300 = vpop.f32.mrb[0].mxu0
      %v7301 = vadd.f32 0.0, %v7300
      %v7302 = vpop.f32.mrb[0].mxu0
      %7303 = vmatprep.mubr.f32.mxu0 0.0
      %7304 = vmatmul.mubr.f32.gmra.mrb[0].mxu0 %v7093
      %v7305 = vpop.f32.mrb[0].mxu0
      %v7306 = vadd.f32 0.0, %v7305
      %v7307 = vpop.f32.mrb[0].mxu0
      %7308 = vmatprep.mubr.f32.mxu0 0.0
      %7309 = vmatmul.mubr.f32.gmra.mrb[0].mxu0 %v7096
      %v7310 = vpop.f32.mrb[0].mxu0
      %v7311 = vadd.f32 0.0, %v7310
      %v7312 = vpop.f32.mrb[0].mxu0
      %7313 = vmatprep.mubr.f32.mxu0 0.0
      %7314 = vmatmul.mubr.f32.gmra.mrb[0].mxu0 %v7099
      %v7315 = vpop.f32.mrb[0].mxu0
      %v7316 = vadd.f32 0.0, %v7315
      %v7317 = vpop.f32.mrb[0].mxu0
      %7318 = vmatprep.mubr.f32.mxu0 0.0
      %7319 = vmatmul.mubr.f32.gmra.mrb[0].mxu0 %v7102
      %v7320 = vpop.f32.mrb[0].mxu0
      %v7321 = vadd.f32 0.0, %v7320
      %v7322 = vpop.f32.mrb[0].mxu0
      %7323 = vmatprep.mubr.f32.mxu0 0.0
      %7324 = vmatmul.mubr.f32.gmra.mrb[0].mxu0 %v7105
      %v7325 = vpop.f32.mrb[0].mxu0
      %v7326 = vadd.f32 0.0, %v7325
      %v7327 = vpop.f32.mrb[0].mxu0
      %7328 = vmatprep.mubr.f32.mxu0 0.0
      %7329 = vmatmul.mubr.f32.gmra.mrb[0].mxu0 %v7108
      %v7330 = vpop.f32.mrb[0].mxu0
      %v7331 = vadd.f32 0.0, %v7330
      %v7332 = vpop.f32.mrb[0].mxu0
      %7333 = vmatprep.mubr.f32.mxu0 0.0
      %7334 = vmatmul.mubr.f32.gmra.mrb[0].mxu0 %v7111
      %v7335 = vpop.f32.mrb[0].mxu0
      %v7336 = vadd.f32 0.0, %v7335
      %v7337 = vpop.f32.mrb[0].mxu0
      %7338 = vmatprep.mubr.f32.mxu0 0.0
      %7339 = vmatmul.mubr.f32.gmra.mrb[0].mxu0 %v7114
      %v7340 = vpop.f32.mrb[0].mxu0
      %v7341 = vadd.f32 0.0, %v7340
      %v7342 = vpop.f32.mrb[0].mxu0
      %7343 = vdwg.mxu0
      %v7344 = vadd.f32 %v6954, %v7186
      %v7345 = vadd.f32 %v6955, %v7191
      %v7346 = vadd.f32 %v6956, %v7196
      %v7347 = vadd.f32 %v6957, %v7201
      %v7348 = vadd.f32 %v6958, %v7206
      %v7349 = vadd.f32 %v6959, %v7211
      %v7350 = vadd.f32 %v6960, %v7216
      %v7351 = vadd.f32 %v6961, %v7221
      %v7352 = vadd.f32 %v6962, %v7226
      %v7353 = vadd.f32 %v6963, %v7231
      %v7354 = vadd.f32 %v6964, %v7236
      %v7355 = vadd.f32 %v6965, %v7241
      %v7356 = vadd.f32 %v6966, %v7246
      %v7357 = vadd.f32 %v6967, %v7251
      %v7358 = vadd.f32 %v6968, %v7256
      %v7359 = vadd.f32 %v6969, %v7261
      %v7360 = vadd.f32 %v6970, %v7266
      %v7361 = vadd.f32 %v6971, %v7271
      %v7362 = vadd.f32 %v6972, %v7276
      %v7363 = vadd.f32 %v6973, %v7281
      %v7364 = vadd.f32 %v6974, %v7286
      %v7365 = vadd.f32 %v6975, %v7291
      %v7366 = vadd.f32 %v6976, %v7296
      %v7367 = vadd.f32 %v6977, %v7301
      %v7368 = vadd.f32 %v6978, %v7306
      %v7369 = vadd.f32 %v6979, %v7311
      %v7370 = vadd.f32 %v6980, %v7316
      %v7371 = vadd.f32 %v6981, %v7321
      %v7372 = vadd.f32 %v6982, %v7326
      %v7373 = vadd.f32 %v6983, %v7331
      %v7374 = vadd.f32 %v6984, %v7336
      %v7375 = vadd.f32 %v6985, %v7341
      %v7376 = vld [vmem:[%s4] sm:$0x1]
      %v7378 = vlaneseq
      %v7379 = vshrl.u32 %v7378, 7
      %v7380 = vsub.s32 0, %v7379
      %v7381 = vrot.slane %v7376, %v7380
      %v7383 = vadd.f32 %v7344, %v7381
      %v7384 = vadd.f32 %v7345, %v7381
      %v7385 = vadd.f32 %v7346, %v7381
      %v7386 = vadd.f32 %v7347, %v7381
      %v7387 = vadd.f32 %v7348, %v7381
      %v7388 = vadd.f32 %v7349, %v7381
      %v7389 = vadd.f32 %v7350, %v7381
      %v7390 = vadd.f32 %v7351, %v7381
      %v7391 = vadd.f32 %v7352, %v7381
      %v7392 = vadd.f32 %v7353, %v7381
      %v7393 = vadd.f32 %v7354, %v7381
      %v7394 = vadd.f32 %v7355, %v7381
      %v7395 = vadd.f32 %v7356, %v7381
      %v7396 = vadd.f32 %v7357, %v7381
      %v7397 = vadd.f32 %v7358, %v7381
      %v7398 = vadd.f32 %v7359, %v7381
      %v7399 = vadd.f32 %v7360, %v7381
      %v7400 = vadd.f32 %v7361, %v7381
      %v7401 = vadd.f32 %v7362, %v7381
      %v7402 = vadd.f32 %v7363, %v7381
      %v7403 = vadd.f32 %v7364, %v7381
      %v7404 = vadd.f32 %v7365, %v7381
      %v7405 = vadd.f32 %v7366, %v7381
      %v7406 = vadd.f32 %v7367, %v7381
      %v7407 = vadd.f32 %v7368, %v7381
      %v7408 = vadd.f32 %v7369, %v7381
      %v7409 = vadd.f32 %v7370, %v7381
      %v7410 = vadd.f32 %v7371, %v7381
      %v7411 = vadd.f32 %v7372, %v7381
      %v7412 = vadd.f32 %v7373, %v7381
      %v7413 = vadd.f32 %v7374, %v7381
      %v7414 = vadd.f32 %v7375, %v7381
      %v7415 = vmul.f32 %v7383, 0.1
      %v7416 = vmul.f32 %v7384, 0.1
      %v7417 = vmul.f32 %v7385, 0.1
      %v7418 = vmul.f32 %v7386, 0.1
      %v7419 = vmul.f32 %v7387, 0.1
      %v7420 = vmul.f32 %v7388, 0.1
      %v7421 = vmul.f32 %v7389, 0.1
      %v7422 = vmul.f32 %v7390, 0.1
      %v7423 = vmul.f32 %v7391, 0.1
      %v7424 = vmul.f32 %v7392, 0.1
      %v7425 = vmul.f32 %v7393, 0.1
      %v7426 = vmul.f32 %v7394, 0.1
      %v7427 = vmul.f32 %v7395, 0.1
      %v7428 = vmul.f32 %v7396, 0.1
      %v7429 = vmul.f32 %v7397, 0.1
      %v7430 = vmul.f32 %v7398, 0.1
      %v7431 = vmul.f32 %v7399, 0.1
      %v7432 = vmul.f32 %v7400, 0.1
      %v7433 = vmul.f32 %v7401, 0.1
      %v7434 = vmul.f32 %v7402, 0.1
      %v7435 = vmul.f32 %v7403, 0.1
      %v7436 = vmul.f32 %v7404, 0.1
      %v7437 = vmul.f32 %v7405, 0.1
      %v7438 = vmul.f32 %v7406, 0.1
      %v7439 = vmul.f32 %v7407, 0.1
      %v7440 = vmul.f32 %v7408, 0.1
      %v7441 = vmul.f32 %v7409, 0.1
      %v7442 = vmul.f32 %v7410, 0.1
      %v7443 = vmul.f32 %v7411, 0.1
      %v7444 = vmul.f32 %v7412, 0.1
      %v7445 = vmul.f32 %v7413, 0.1
      %v7446 = vmul.f32 %v7414, 0.1
      %v7447 = vadd.f32 %v7415, %v314
      %v7448 = vadd.f32 %v7416, %v315
      %v7449 = vadd.f32 %v7417, %v316
      %v7450 = vadd.f32 %v7418, %v317
      %v7451 = vadd.f32 %v7419, %v318
      %v7452 = vadd.f32 %v7420, %v319
      %v7453 = vadd.f32 %v7421, %v320
      %v7454 = vadd.f32 %v7422, %v321
      %v7455 = vadd.f32 %v7423, %v322
      %v7456 = vadd.f32 %v7424, %v323
      %v7457 = vadd.f32 %v7425, %v324
      %v7458 = vadd.f32 %v7426, %v325
      %v7459 = vadd.f32 %v7427, %v326
      %v7460 = vadd.f32 %v7428, %v327
      %v7461 = vadd.f32 %v7429, %v328
      %v7462 = vadd.f32 %v7430, %v329
      %v7463 = vadd.f32 %v7431, %v330
      %v7464 = vadd.f32 %v7432, %v331
      %v7465 = vadd.f32 %v7433, %v332
      %v7466 = vadd.f32 %v7434, %v333
      %v7467 = vadd.f32 %v7435, %v334
      %v7468 = vadd.f32 %v7436, %v335
      %v7469 = vadd.f32 %v7437, %v336
      %v7470 = vadd.f32 %v7438, %v337
      %v7471 = vadd.f32 %v7439, %v338
      %v7472 = vadd.f32 %v7440, %v339
      %v7473 = vadd.f32 %v7441, %v340
      %v7474 = vadd.f32 %v7442, %v341
      %v7475 = vadd.f32 %v7443, %v342
      %v7476 = vadd.f32 %v7444, %v343
      %v7477 = vadd.f32 %v7445, %v344
      %v7478 = vadd.f32 %v7446, %v345
      %7479 = vst.msk [vmem:[%s224] sm:$0xff] %vm225, %v7447
      %7480 = vst.msk [vmem:[%s224 + $0x8] sm:$0xff] %vm225, %v7448
      %7481 = vst.msk [vmem:[%s224 + $0x10] sm:$0xff] %vm225, %v7449
      %7482 = vst.msk [vmem:[%s224 + $0x18] sm:$0xff] %vm225, %v7450
      %7483 = vst.msk [vmem:[%s224 + $0x20] sm:$0xff] %vm225, %v7451
      %7484 = vst.msk [vmem:[%s224 + $0x28] sm:$0xff] %vm225, %v7452
      %7485 = vst.msk [vmem:[%s224 + $0x30] sm:$0xff] %vm225, %v7453
      %7486 = vst.msk [vmem:[%s224 + $0x38] sm:$0xff] %vm225, %v7454
      %7487 = vst.msk [vmem:[%s224 + $0x40] sm:$0xff] %vm225, %v7455
      %7488 = vst.msk [vmem:[%s224 + $0x48] sm:$0xff] %vm225, %v7456
      %7489 = vst.msk [vmem:[%s224 + $0x50] sm:$0xff] %vm225, %v7457
      %7490 = vst.msk [vmem:[%s224 + $0x58] sm:$0xff] %vm225, %v7458
      %7491 = vst.msk [vmem:[%s224 + $0x60] sm:$0xff] %vm225, %v7459
      %7492 = vst.msk [vmem:[%s224 + $0x68] sm:$0xff] %vm225, %v7460
      %7493 = vst.msk [vmem:[%s224 + $0x70] sm:$0xff] %vm225, %v7461
      %7494 = vst.msk [vmem:[%s224 + $0x78] sm:$0xff] %vm225, %v7462
      %7495 = vst.msk [vmem:[%s224 + $0x80] sm:$0xff] %vm225, %v7463
      %7496 = vst.msk [vmem:[%s224 + $0x88] sm:$0xff] %vm225, %v7464
      %7497 = vst.msk [vmem:[%s224 + $0x90] sm:$0xff] %vm225, %v7465
      %7498 = vst.msk [vmem:[%s224 + $0x98] sm:$0xff] %vm225, %v7466
      %7499 = vst.msk [vmem:[%s224 + $0xa0] sm:$0xff] %vm225, %v7467
      %7500 = vst.msk [vmem:[%s224 + $0xa8] sm:$0xff] %vm225, %v7468
      %7501 = vst.msk [vmem:[%s224 + $0xb0] sm:$0xff] %vm225, %v7469
      %7502 = vst.msk [vmem:[%s224 + $0xb8] sm:$0xff] %vm225, %v7470
      %7503 = vst.msk [vmem:[%s224 + $0xc0] sm:$0xff] %vm225, %v7471
      %7504 = vst.msk [vmem:[%s224 + $0xc8] sm:$0xff] %vm225, %v7472
      %7505 = vst.msk [vmem:[%s224 + $0xd0] sm:$0xff] %vm225, %v7473
      %7506 = vst.msk [vmem:[%s224 + $0xd8] sm:$0xff] %vm225, %v7474
      %7507 = vst.msk [vmem:[%s224 + $0xe0] sm:$0xff] %vm225, %v7475
      %7508 = vst.msk [vmem:[%s224 + $0xe8] sm:$0xff] %vm225, %v7476
      %7509 = vst.msk [vmem:[%s224 + $0xf0] sm:$0xff] %vm225, %v7477
      %7510 = vst.msk [vmem:[%s224 + $0xf8] sm:$0xff] %vm225, %v7478
      %p7511 = scmp.lt.s32.totalorder %s16, 1
      %s7512 = scalar_select %p7511, %s16, 1
      %s7513 = smul.addr %s7512, 32
      %s7514 = smul.addr %s7513, 8
      %s7515 = scalar_lea.vmem %s5, %s7514
      // Predicated region
      $region41: #{tpu_custom_call.1} parent=39 // pred_check
        %p7516 = pneg %p144
      $region42: #{tpu_custom_call.1} parent=39 // pred_check_branch
        %7518 = sbr.rel (%p7516) target = $region44
      $region43: #{tpu_custom_call.1} parent=39 // pred_region
        _
      $region44: #{tpu_custom_call.1} parent=39 // pred_fallthru
        _
    $region40: #{tpu_custom_call.1} parent=5 // pred_fallthru
      _
    %p7519 = scmp.le.s32.totalorder 2, %s11
    // Predicated region
    $region45: #{tpu_custom_call.1} parent=5 // pred_check
      %p7520 = pneg %p7519
    $region46: #{tpu_custom_call.1} parent=5 // pred_check_branch
      %7522 = sbr.rel (%p7520) target = $region48
    $region47: #{tpu_custom_call.1} parent=5 // pred_region
      %s7523 = ssub.s32 %s11, 2
      // Predicated region
      $region49: #{tpu_custom_call.1} parent=47 // pred_check
        %p7524 = pneg %p150
      $region50: #{tpu_custom_call.1} parent=47 // pred_check_branch
        %7526 = sbr.rel (%p7524) target = $region52
      $region51: #{tpu_custom_call.1} parent=47 // pred_region
        %p7527 = scmp.lt.s32.totalorder %s17, 1
        %s7528 = scalar_select %p7527, %s17, 1
        %s7529 = smul.addr %s7528, 32
        %s7530 = smul.addr %s7529, 8
        %s7531 = scalar_lea.vmem %s5, %s7530
      $region52: #{tpu_custom_call.1} parent=47 // pred_fallthru
        _
    $region48: #{tpu_custom_call.1} parent=5 // pred_fallthru
      _
  $region6: #{tpu_custom_call.1} parent=0 // loop_footer
    %s15 = sadd.s32 1, %s11
  $region7: #{tpu_custom_call.1} parent=0 // loop_footer_branch
    %10 = sbr.rel target = $region3
  $region8: #{tpu_custom_call.1} parent=0 // loop_exit
    _

</llo_original>
